<compile_context>
chip_gen: v5e
topology: v5e:2x2
jax: 0.10.0
libtpu: 0.0.40
codegen_flags: <defaults>
</compile_context>

<pallas_src>
import functools

import jax
import jax.numpy as jnp
import numpy as np
from jax.experimental import pallas as pl
from jax.experimental.pallas import tpu as pltpu

# ----------------------------- configuration --------------------------------
B = 2          # batch
T_IN = 8       # num_time_steps_in
T_OUT = 4      # num_time_steps_out
N = 8          # num_nodes
C_IN = 2       # in_channels
HID = 16       # hidden_dims
CHEB_K = 2     # cheb_k
EMBED = 4      # embed_dim
C_OUT = 2      # out_channels
SEG_LEN = 4    # seg_len   # TODO(synk): Crossformer-style segment embedding not reproducible (source missing)
D_MODEL = 32
N_HEADS = 4
DROPOUT = 0.1  # TODO(synk): dropout is identity at inference; omitted in kernel
N_LAYERS = 1

DH = D_MODEL // N_HEADS
_LN_EPS = 1e-5

_PER_LAYER = 16   # wq,bq,wk,bk,wv,bv,wo,bo,ln1g,ln1b,wf1,bf1,wf2,bf2,ln2g,ln2b


def _layer_norm(z, g, b):
    m = jnp.mean(z, axis=-1, keepdims=True)
    v = jnp.mean((z - m) ** 2, axis=-1, keepdims=True)
    return (z - m) * jax.lax.rsqrt(v + _LN_EPS) * g + b


def _full_spec(shape):
    nd = len(shape)
    return pl.BlockSpec(shape, lambda *_: (0,) * nd)


# ------------------------------ fused kernel ---------------------------------
def fused_kernel(x_blk_ref, w_emb_ref, b_emb_ref, *refs,
                 n_layers, n_heads, groups, t_len):
    nlay = _PER_LAYER * n_layers
    layer_refs = refs[:nlay]
    w13_ref, ub_ref, w2t_ref, ob_ref, out_ref, attn_ref = refs[nlay:nlay + 6]

    rows = groups * t_len
    d_model = w_emb_ref.shape[-1]

    # ---- DAGCN graph conv + token embedding: ONE (rows, N*P)@(N*P, D) dot ---
    # x_blk is block-diagonal (built in the wrapper), so the dot output rows
    # are already token rows in (b, n, t) order; b_emb is the matching
    # per-row bias.  No concatenates / relayouts needed.
    e = jnp.dot(x_blk_ref[...], w_emb_ref[...],
                preferred_element_type=jnp.float32) + b_emb_ref[...]

    # ----------------------- transformer encoder layers ----------------------
    for l in range(n_layers):
        (wq, bq, wk, bk, wv, bv, wo, bo, ln1g, ln1b,
         wf1, bf1, wf2, bf2, ln2g, ln2b) = \
            layer_refs[_PER_LAYER * l:_PER_LAYER * (l + 1)]

        ctx_sum = None
        for h in range(n_heads):               # static, unrolled; no slices/concats
            qh = (jnp.dot(e, wq[h], preferred_element_type=jnp.float32)
                  + bq[h]).reshape(groups, t_len, -1)          # scale pre-folded
            kh = (jnp.dot(e, wk[h], preferred_element_type=jnp.float32)
                  + bk[h]).reshape(groups, t_len, -1)
            vh = (jnp.dot(e, wv[h], preferred_element_type=jnp.float32)
                  + bv[h]).reshape(groups, t_len, -1)

            s = jnp.einsum("gqd,gkd->gqk", qh, kh,
                           preferred_element_type=jnp.float32)   # (B*N, T, T)
            s = s - jnp.max(s, axis=-1, keepdims=True)
            ex = jnp.exp(s)
            p = ex * pl.reciprocal(jnp.sum(ex, axis=-1, keepdims=True), approx=True)

            if l == n_layers - 1:
                attn_ref[h] = p.astype(attn_ref.dtype)           # one block store

            ctx = jnp.einsum("gqk,gkd->gqd", p, vh,
                             preferred_element_type=jnp.float32).reshape(rows, -1)
            contrib = jnp.dot(ctx, wo[h], preferred_element_type=jnp.float32)
            ctx_sum = contrib if ctx_sum is None else ctx_sum + contrib

        z1 = _layer_norm(e + ctx_sum + bo[...], ln1g[...], ln1b[...])
        hdn = jnp.maximum(
            jnp.dot(z1, wf1[...], preferred_element_type=jnp.float32) + bf1[...], 0.0)
        ff = jnp.dot(hdn, wf2[...], preferred_element_type=jnp.float32) + bf2[...]
        e = _layer_norm(z1 + ff, ln2g[...], ln2b[...])

    # --------------------------- folded MLP head -----------------------------
    u = jnp.dot(w13_ref[...], e, preferred_element_type=jnp.float32) + ub_ref[...]
    out = jnp.dot(u, w2t_ref[...], preferred_element_type=jnp.float32) + ob_ref[...]
    out_ref[...] = out.astype(out_ref.dtype)


# ------------------------------ model wrapper --------------------------------
def _dagcn_derived(dp):
    e = dp["E"]
    a = jax.nn.softmax(jax.nn.relu(e @ e.T), axis=-1)                 # (N, N)
    supports = [jnp.eye(e.shape[0], dtype=jnp.float32)]
    if CHEB_K > 1:
        supports.append(a)
    for _ in range(2, CHEB_K):
        supports.append(2.0 * a @ supports[-1] - supports[-2])
    sup = jnp.stack(supports, axis=0)                                 # (K, N, N)
    w = jnp.einsum("ne,ekch->nkch", e, dp["W_pool"])                  # (N, K, C, H)
    bias = (e @ dp["b_pool"])[:, None, :]                             # (N, 1, H)
    return a, sup, w, bias


@jax.jit
def dagct_bls_forward(x, params):
    # x: (B, T_in, N, C_in)
    dp, tp, mp = params["dagcn"], params["transformer"], params["mlp_head"]
    a, sup, w, bias = _dagcn_derived(dp)
    spatial_attn = a

    # ---- param-only folding (tiny, once per call in XLA) ----
    # DAGCN + token embedding fold:  W_emb[n] = (sum_k sup[k,n,:] (x) w[n,k]) @ We
    w_eff = jnp.einsum("knm,nkch->nmch", sup, w).reshape(N, N * C_IN, HID)
    w_emb = jnp.einsum("nph,hd->npd", w_eff, tp["We"])                # (N, N*C, D)
    w_big = w_emb.reshape(N * N * C_IN, D_MODEL)                      # (N*P, D)
    b_node = bias[:, 0, :] @ tp["We"] + tp["be"]                      # (N, D)
    b_rows = jnp.tile(jnp.repeat(b_node, T_IN, axis=0), (B, 1))       # (B*N*T, D)

    # Block-diagonal input expansion -> dot output rows in (b, n, t) order.
    xf = x.reshape(B, T_IN, N * C_IN)
    x_blk = (jnp.eye(N, dtype=jnp.float32)[None, :, None, :, None]
             * xf[:, None, :, None, :]).reshape(B * N * T_IN, N * N * C_IN)

    # MLP head fold (block-diagonal over the folded batch): two dots.
    w1, w2 = mp["W1"], mp["W2"]
    w3v = mp["W3"][0]                                                  # (N,)
    m3 = jnp.kron(w3v[None, :], jnp.eye(T_IN, dtype=jnp.float32))      # (T_in, N*T_in)
    w13 = w1 @ m3                                                      # (T_out, N*T_in)
    w13_blk = jnp.kron(jnp.eye(B, dtype=jnp.float32), w13)             # (B*T_out, B*N*T_in)
    s3 = jnp.sum(w3v)
    ub = jnp.tile((s3 * mp["b1"])[:, None], (B, 1))                    # (B*T_out, 1)
    w2t = w2.T                                                         # (D, C_out)
    ob = (s3 * mp["b2"] + mp["b3"][0])[None, :]                        # (1, C_out)

    # Per-layer per-head weight split + softmax-scale fold (param-only).
    scale = 1.0 / (float(DH) ** 0.5)
    layer_args = []
    for lp in tp["layers"]:
        wqkv, bqkv = lp["wqkv"], lp["bqkv"]

        def _heads(mat):   # (D, D) -> (H, D, dh)
            return mat.reshape(D_MODEL, N_HEADS, DH).transpose(1, 0, 2)

        def _bheads(vec):  # (1, D) -> (H, 1, dh)
            return vec.reshape(1, N_HEADS, DH).transpose(1, 0, 2)

        wq = _heads(wqkv[:, :D_MODEL] * scale)
        bq = _bheads(bqkv[:, :D_MODEL] * scale)
        wk = _heads(wqkv[:, D_MODEL:2 * D_MODEL])
        bk = _bheads(bqkv[:, D_MODEL:2 * D_MODEL])
        wv = _heads(wqkv[:, 2 * D_MODEL:])
        bv = _bheads(bqkv[:, 2 * D_MODEL:])
        wo = lp["wo"].reshape(N_HEADS, DH, D_MODEL)                    # (H, dh, D)
        layer_args += [wq, bq, wk, bk, wv, bv, wo, lp["bo"],
                       lp["ln1g"], lp["ln1b"], lp["wf1"], lp["bf1"],
                       lp["wf2"], lp["bf2"], lp["ln2g"], lp["ln2b"]]

    inputs = [x_blk, w_big, b_rows] + layer_args + [w13_blk, ub, w2t, ob]
    in_specs = [_full_spec(arr.shape) for arr in inputs]

    kernel = functools.partial(fused_kernel, n_layers=N_LAYERS, n_heads=N_HEADS,
                               groups=B * N, t_len=T_IN)

    out_flat, attn_raw = pl.pallas_call(
        kernel,
        out_shape=(jax.ShapeDtypeStruct((B * T_OUT, C_OUT), jnp.float32),
                   jax.ShapeDtypeStruct((N_HEADS, B * N, T_IN, T_IN), jnp.float32)),
        grid=(1,),
        in_specs=in_specs,
        out_specs=(_full_spec((B * T_OUT, C_OUT)),
                   _full_spec((N_HEADS, B * N, T_IN, T_IN))),
        compiler_params=pltpu.CompilerParams(dimension_semantics=("arbitrary",)),
    )(*inputs)

    out = out_flat.reshape(B, T_OUT, C_OUT)
    temporal_attn = attn_raw.reshape(N_HEADS, B, N, T_IN, T_IN).transpose(1, 2, 0, 3, 4)
    return out, spatial_attn, temporal_attn


# -------------------------- pure-JAX reference -------------------------------
def _encoder_layer_ref(e, lp, n_heads):
    s_, t_, d_ = e.shape
    dh = d_ // n_heads
    qkv = e @ lp["wqkv"] + lp["bqkv"]

    def split(arr):
        return arr.reshape(s_, t_, n_heads, dh).transpose(0, 2, 1, 3)

    q, k, v = split(qkv[..., :d_]), split(qkv[..., d_:2 * d_]), split(qkv[..., 2 * d_:])
    scores = jnp.einsum("shqd,shkd->shqk", q, k) / (dh ** 0.5)
    scores = scores - jnp.max(scores, axis=-1, keepdims=True)
    p = jnp.exp(scores)
    p = p / jnp.sum(p, axis=-1, keepdims=True)
    o = jnp.einsum("shqk,shkd->shqd", p, v).transpose(0, 2, 1, 3).reshape(s_, t_, d_)
    z1 = _layer_norm(e + (o @ lp["wo"] + lp["bo"]), lp["ln1g"], lp["ln1b"])
    hdn = jnp.maximum(z1 @ lp["wf1"] + lp["bf1"], 0.0)
    z2 = _layer_norm(z1 + (hdn @ lp["wf2"] + lp["bf2"]), lp["ln2g"], lp["ln2b"])
    return z2, p


def dagct_bls_forward_ref(x, params):
    a, sup, w, bias = _dagcn_derived(params["dagcn"])
    xp = jnp.transpose(x, (0, 2, 1, 3))
    xg = jnp.einsum("knm,bmtc->bkntc", sup, xp)
    x_s = jnp.einsum("bkntc,nkch->bnth", xg, w) + bias[None]

    x_t_in = jnp.transpose(x_s, (0, 2, 1, 3))
    b_, t_, n_, h_ = x_t_in.shape
    seq = jnp.transpose(x_t_in, (0, 2, 1, 3)).reshape(b_ * n_, t_, h_)
    tp = params["transformer"]
    e = seq @ tp["We"] + tp["be"]
    attn = None
    for lp in tp["layers"]:
        e, attn = _encoder_layer_ref(e, lp, N_HEADS)
    d_ = e.shape[-1]
    x_t = e.reshape(b_, n_, t_, d_)
    temporal_attn = attn.reshape(b_, n_, N_HEADS, t_, t_)

    mp = params["mlp_head"]
    out1 = jnp.einsum("bntd,ot->bndo", x_t, mp["W1"]) + mp["b1"]
    out2 = jnp.einsum("bndo,cd->bnoc", out1, mp["W2"]) + mp["b2"]
    out3 = jnp.einsum("bnoc,n->boc", out2, mp["W3"][0]) + mp["b3"][0]
    return out3, a, temporal_attn


# --------------------------------- params ------------------------------------
def init_params(key):
    keys = list(jax.random.split(key, 32))
    it = iter(keys)

    def rnd(shape, scale=0.2):
        return (scale * jax.random.normal(next(it), shape)).astype(jnp.float32)

    params = {
        "dagcn": dict(E=rnd((N, EMBED)),
                      W_pool=rnd((EMBED, CHEB_K, C_IN, HID)),
                      b_pool=rnd((EMBED, HID))),
        "transformer": dict(
            We=rnd((HID, D_MODEL)), be=rnd((1, D_MODEL)),
            layers=[dict(
                wqkv=rnd((D_MODEL, 3 * D_MODEL)), bqkv=rnd((1, 3 * D_MODEL)),
                wo=rnd((D_MODEL, D_MODEL)), bo=rnd((1, D_MODEL)),
                ln1g=jnp.ones((1, D_MODEL), jnp.float32),
                ln1b=jnp.zeros((1, D_MODEL), jnp.float32),
                wf1=rnd((D_MODEL, 4 * D_MODEL)), bf1=rnd((1, 4 * D_MODEL)),
                wf2=rnd((4 * D_MODEL, D_MODEL)), bf2=rnd((1, D_MODEL)),
                ln2g=jnp.ones((1, D_MODEL), jnp.float32),
                ln2b=jnp.zeros((1, D_MODEL), jnp.float32),
            ) for _ in range(N_LAYERS)]),
        "mlp_head": dict(W1=rnd((T_OUT, T_IN)), b1=rnd((T_OUT,)),
                         W2=rnd((C_OUT, D_MODEL)), b2=rnd((C_OUT,)),
                         W3=rnd((1, N)), b3=rnd((1,))),
    }
    return params


# ----------------------------------- main -------------------------------------
if __name__ == "__main__":
    root = jax.random.PRNGKey(0)
    k_x, k_p = jax.random.split(root)
    x = jax.random.normal(k_x, (B, T_IN, N, C_IN), dtype=jnp.float32)
    params = init_params(k_p)

    out, spatial_attn, temporal_attn = dagct_bls_forward(x, params)
    jax.block_until_ready((out, spatial_attn, temporal_attn))

    out_r, sa_r, ta_r = dagct_bls_forward_ref(x, params)
    np.testing.assert_allclose(np.asarray(out), np.asarray(out_r), rtol=2e-3, atol=2e-3)
    np.testing.assert_allclose(np.asarray(spatial_attn), np.asarray(sa_r), rtol=2e-3, atol=2e-3)
    np.testing.assert_allclose(np.asarray(temporal_attn), np.asarray(ta_r), rtol=2e-3, atol=2e-3)

    assert out.shape == (B, T_OUT, C_OUT)
    assert temporal_attn.shape == (B, N, N_HEADS, T_IN, T_IN)
    print("KERNEL_OK")
</pallas_src>

<mosaic_0001>
module attributes {stable_mosaic.version = 11 : i64} {
  func.func @fused_kernel(%arg0: i32, %arg1: memref<128x128xf32, #tpu.memory_space<vmem>>, %arg2: memref<128x32xf32, #tpu.memory_space<vmem>>, %arg3: memref<128x32xf32, #tpu.memory_space<vmem>>, %arg4: memref<4x32x8xf32, #tpu.memory_space<vmem>>, %arg5: memref<4x1x8xf32, #tpu.memory_space<vmem>>, %arg6: memref<4x32x8xf32, #tpu.memory_space<vmem>>, %arg7: memref<4x1x8xf32, #tpu.memory_space<vmem>>, %arg8: memref<4x32x8xf32, #tpu.memory_space<vmem>>, %arg9: memref<4x1x8xf32, #tpu.memory_space<vmem>>, %arg10: memref<4x8x32xf32, #tpu.memory_space<vmem>>, %arg11: memref<1x32xf32, #tpu.memory_space<vmem>>, %arg12: memref<1x32xf32, #tpu.memory_space<vmem>>, %arg13: memref<1x32xf32, #tpu.memory_space<vmem>>, %arg14: memref<32x128xf32, #tpu.memory_space<vmem>>, %arg15: memref<1x128xf32, #tpu.memory_space<vmem>>, %arg16: memref<128x32xf32, #tpu.memory_space<vmem>>, %arg17: memref<1x32xf32, #tpu.memory_space<vmem>>, %arg18: memref<1x32xf32, #tpu.memory_space<vmem>>, %arg19: memref<1x32xf32, #tpu.memory_space<vmem>>, %arg20: memref<8x128xf32, #tpu.memory_space<vmem>>, %arg21: memref<8x1xf32, #tpu.memory_space<vmem>>, %arg22: memref<32x2xf32, #tpu.memory_space<vmem>>, %arg23: memref<1x2xf32, #tpu.memory_space<vmem>>, %arg24: memref<8x2xf32, #tpu.memory_space<vmem>>, %arg25: memref<4x16x8x8xf32, #tpu.memory_space<vmem>>) attributes {dimension_semantics = [#tpu.dimension_semantics<arbitrary>], iteration_bounds = array<i64: 1>, scalar_prefetch = 0 : i64, scratch_operands = 0 : i64, tpu.core_type = #tpu.core_type<tc>, window_params = [{pipeline_mode = #tpu.pipeline_mode<synchronous>, transform_indices = @transform_0, window_bounds = array<i64: 128, 128>}, {pipeline_mode = #tpu.pipeline_mode<synchronous>, transform_indices = @transform_1, window_bounds = array<i64: 128, 32>}, {pipeline_mode = #tpu.pipeline_mode<synchronous>, transform_indices = @transform_2, window_bounds = array<i64: 128, 32>}, {pipeline_mode = #tpu.pipeline_mode<synchronous>, transform_indices = @transform_3, window_bounds = array<i64: 4, 32, 8>}, {pipeline_mode = #tpu.pipeline_mode<synchronous>, transform_indices = @transform_4, window_bounds = array<i64: 4, 1, 8>}, {pipeline_mode = #tpu.pipeline_mode<synchronous>, transform_indices = @transform_5, window_bounds = array<i64: 4, 32, 8>}, {pipeline_mode = #tpu.pipeline_mode<synchronous>, transform_indices = @transform_6, window_bounds = array<i64: 4, 1, 8>}, {pipeline_mode = #tpu.pipeline_mode<synchronous>, transform_indices = @transform_7, window_bounds = array<i64: 4, 32, 8>}, {pipeline_mode = #tpu.pipeline_mode<synchronous>, transform_indices = @transform_8, window_bounds = array<i64: 4, 1, 8>}, {pipeline_mode = #tpu.pipeline_mode<synchronous>, transform_indices = @transform_9, window_bounds = array<i64: 4, 8, 32>}, {pipeline_mode = #tpu.pipeline_mode<synchronous>, transform_indices = @transform_10, window_bounds = array<i64: 1, 32>}, {pipeline_mode = #tpu.pipeline_mode<synchronous>, transform_indices = @transform_11, window_bounds = array<i64: 1, 32>}, {pipeline_mode = #tpu.pipeline_mode<synchronous>, transform_indices = @transform_12, window_bounds = array<i64: 1, 32>}, {pipeline_mode = #tpu.pipeline_mode<synchronous>, transform_indices = @transform_13, window_bounds = array<i64: 32, 128>}, {pipeline_mode = #tpu.pipeline_mode<synchronous>, transform_indices = @transform_14, window_bounds = array<i64: 1, 128>}, {pipeline_mode = #tpu.pipeline_mode<synchronous>, transform_indices = @transform_15, window_bounds = array<i64: 128, 32>}, {pipeline_mode = #tpu.pipeline_mode<synchronous>, transform_indices = @transform_16, window_bounds = array<i64: 1, 32>}, {pipeline_mode = #tpu.pipeline_mode<synchronous>, transform_indices = @transform_17, window_bounds = array<i64: 1, 32>}, {pipeline_mode = #tpu.pipeline_mode<synchronous>, transform_indices = @transform_18, window_bounds = array<i64: 1, 32>}, {pipeline_mode = #tpu.pipeline_mode<synchronous>, transform_indices = @transform_19, window_bounds = array<i64: 8, 128>}, {pipeline_mode = #tpu.pipeline_mode<synchronous>, transform_indices = @transform_20, window_bounds = array<i64: 8, 1>}, {pipeline_mode = #tpu.pipeline_mode<synchronous>, transform_indices = @transform_21, window_bounds = array<i64: 32, 2>}, {pipeline_mode = #tpu.pipeline_mode<synchronous>, transform_indices = @transform_22, window_bounds = array<i64: 1, 2>}, {pipeline_mode = #tpu.pipeline_mode<synchronous>, transform_indices = @transform_23, window_bounds = array<i64: 8, 2>}, {pipeline_mode = #tpu.pipeline_mode<synchronous>, transform_indices = @transform_24, window_bounds = array<i64: 4, 16, 8, 8>}]} {
    %c0 = arith.constant 0 : index
    %c0_0 = arith.constant 0 : index
    %0 = vector.load %arg1[%c0, %c0_0] : memref<128x128xf32, #tpu.memory_space<vmem>>, vector<128x128xf32>
    %c0_1 = arith.constant 0 : index
    %c0_2 = arith.constant 0 : index
    %1 = vector.load %arg2[%c0_1, %c0_2] : memref<128x32xf32, #tpu.memory_space<vmem>>, vector<128x32xf32>
    %cst = arith.constant dense<0.000000e+00> : vector<128x32xf32>
    %2 = tpu.matmul %0, %1, %cst {dimension_numbers = #tpu.dot_dimension_numbers<[1], [0], [0], [1], [0, 0, 1, 1], [], []>} : vector<128x128xf32>, vector<128x32xf32>, vector<128x32xf32> -> vector<128x32xf32>
    %c0_3 = arith.constant 0 : index
    %c0_4 = arith.constant 0 : index
    %3 = vector.load %arg3[%c0_3, %c0_4] : memref<128x32xf32, #tpu.memory_space<vmem>>, vector<128x32xf32>
    %4 = arith.addf %2, %3 : vector<128x32xf32>
    %c0_5 = arith.constant 0 : index
    %c0_6 = arith.constant 0 : index
    %c0_7 = arith.constant 0 : index
    %5 = vector.load %arg4[%c0_5, %c0_6, %c0_7] : memref<4x32x8xf32, #tpu.memory_space<vmem>>, vector<1x32x8xf32>
    %6 = vector.shape_cast %5 : vector<1x32x8xf32> to vector<32x8xf32>
    %cst_8 = arith.constant dense<0.000000e+00> : vector<128x8xf32>
    %7 = tpu.matmul %4, %6, %cst_8 {dimension_numbers = #tpu.dot_dimension_numbers<[1], [0], [0], [1], [0, 0, 1, 1], [], []>} : vector<128x32xf32>, vector<32x8xf32>, vector<128x8xf32> -> vector<128x8xf32>
    %c0_9 = arith.constant 0 : index
    %c0_10 = arith.constant 0 : index
    %c0_11 = arith.constant 0 : index
    %8 = vector.load %arg5[%c0_9, %c0_10, %c0_11] : memref<4x1x8xf32, #tpu.memory_space<vmem>>, vector<1x1x8xf32>
    %9 = vector.shape_cast %8 : vector<1x1x8xf32> to vector<1x8xf32>
    %10 = vector.broadcast %9 : vector<1x8xf32> to vector<128x8xf32>
    %11 = arith.addf %7, %10 : vector<128x8xf32>
    %12 = vector.shape_cast %11 : vector<128x8xf32> to vector<16x8x8xf32>
    %c0_12 = arith.constant 0 : index
    %c0_13 = arith.constant 0 : index
    %c0_14 = arith.constant 0 : index
    %13 = vector.load %arg6[%c0_12, %c0_13, %c0_14] : memref<4x32x8xf32, #tpu.memory_space<vmem>>, vector<1x32x8xf32>
    %14 = vector.shape_cast %13 : vector<1x32x8xf32> to vector<32x8xf32>
    %cst_15 = arith.constant dense<0.000000e+00> : vector<128x8xf32>
    %15 = tpu.matmul %4, %14, %cst_15 {dimension_numbers = #tpu.dot_dimension_numbers<[1], [0], [0], [1], [0, 0, 1, 1], [], []>} : vector<128x32xf32>, vector<32x8xf32>, vector<128x8xf32> -> vector<128x8xf32>
    %c0_16 = arith.constant 0 : index
    %c0_17 = arith.constant 0 : index
    %c0_18 = arith.constant 0 : index
    %16 = vector.load %arg7[%c0_16, %c0_17, %c0_18] : memref<4x1x8xf32, #tpu.memory_space<vmem>>, vector<1x1x8xf32>
    %17 = vector.shape_cast %16 : vector<1x1x8xf32> to vector<1x8xf32>
    %18 = vector.broadcast %17 : vector<1x8xf32> to vector<128x8xf32>
    %19 = arith.addf %15, %18 : vector<128x8xf32>
    %20 = vector.shape_cast %19 : vector<128x8xf32> to vector<16x8x8xf32>
    %c0_19 = arith.constant 0 : index
    %c0_20 = arith.constant 0 : index
    %c0_21 = arith.constant 0 : index
    %21 = vector.load %arg8[%c0_19, %c0_20, %c0_21] : memref<4x32x8xf32, #tpu.memory_space<vmem>>, vector<1x32x8xf32>
    %22 = vector.shape_cast %21 : vector<1x32x8xf32> to vector<32x8xf32>
    %cst_22 = arith.constant dense<0.000000e+00> : vector<128x8xf32>
    %23 = tpu.matmul %4, %22, %cst_22 {dimension_numbers = #tpu.dot_dimension_numbers<[1], [0], [0], [1], [0, 0, 1, 1], [], []>} : vector<128x32xf32>, vector<32x8xf32>, vector<128x8xf32> -> vector<128x8xf32>
    %c0_23 = arith.constant 0 : index
    %c0_24 = arith.constant 0 : index
    %c0_25 = arith.constant 0 : index
    %24 = vector.load %arg9[%c0_23, %c0_24, %c0_25] : memref<4x1x8xf32, #tpu.memory_space<vmem>>, vector<1x1x8xf32>
    %25 = vector.shape_cast %24 : vector<1x1x8xf32> to vector<1x8xf32>
    %26 = vector.broadcast %25 : vector<1x8xf32> to vector<128x8xf32>
    %27 = arith.addf %23, %26 : vector<128x8xf32>
    %28 = vector.shape_cast %27 : vector<128x8xf32> to vector<16x8x8xf32>
    "tpu.trace_start"() <{level = 10 : i32, message = "gqd,gkd->gqk"}> : () -> ()
    %cst_26 = arith.constant dense<0.000000e+00> : vector<16x8x8xf32>
    %29 = tpu.matmul %12, %20, %cst_26 {dimension_numbers = #tpu.dot_dimension_numbers<[2], [2], [1], [1], [0, 0, 0, 1, 1, 1], [0], [0]>} : vector<16x8x8xf32>, vector<16x8x8xf32>, vector<16x8x8xf32> -> vector<16x8x8xf32>
    "tpu.trace_stop"() : () -> ()
    %cst_27 = arith.constant dense<0xFF800000> : vector<16x8xf32>
    %30 = vector.multi_reduction <maximumf>, %29, %cst_27 [2] : vector<16x8x8xf32> to vector<16x8xf32>
    %31 = vector.shape_cast %30 : vector<16x8xf32> to vector<16x8x1xf32>
    %32 = vector.broadcast %31 : vector<16x8x1xf32> to vector<16x8x8xf32>
    %33 = arith.subf %29, %32 : vector<16x8x8xf32>
    %34 = math.exp %33 : vector<16x8x8xf32>
    %cst_28 = arith.constant dense<0.000000e+00> : vector<16x8xf32>
    %35 = vector.multi_reduction <add>, %34, %cst_28 [2] : vector<16x8x8xf32> to vector<16x8xf32>
    %36 = vector.shape_cast %35 : vector<16x8xf32> to vector<16x8x1xf32>
    %37 = tpu.reciprocal %36 {approx = true} : vector<16x8x1xf32> -> vector<16x8x1xf32>
    %38 = vector.broadcast %37 : vector<16x8x1xf32> to vector<16x8x8xf32>
    %39 = arith.mulf %34, %38 : vector<16x8x8xf32>
    %c0_29 = arith.constant 0 : index
    %c0_30 = arith.constant 0 : index
    %c0_31 = arith.constant 0 : index
    %c0_32 = arith.constant 0 : index
    %40 = vector.load %arg25[%c0_29, %c0_30, %c0_31, %c0_32] : memref<4x16x8x8xf32, #tpu.memory_space<vmem>>, vector<1x16x8x8xf32>
    %41 = vector.shape_cast %40 : vector<1x16x8x8xf32> to vector<16x8x8xf32>
    %42 = vector.shape_cast %39 : vector<16x8x8xf32> to vector<1x16x8x8xf32>
    tpu.vector_store %arg25[%c0_29, %c0_30, %c0_31, %c0_32], %42 {strides = array<i32>} : memref<4x16x8x8xf32, #tpu.memory_space<vmem>>, vector<1x16x8x8xf32>,
    "tpu.trace_start"() <{level = 10 : i32, message = "gqk,gkd->gqd"}> : () -> ()
    %cst_33 = arith.constant dense<0.000000e+00> : vector<16x8x8xf32>
    %43 = tpu.matmul %39, %28, %cst_33 {dimension_numbers = #tpu.dot_dimension_numbers<[2], [1], [1], [2], [0, 0, 0, 1, 1, 2], [0], [0]>} : vector<16x8x8xf32>, vector<16x8x8xf32>, vector<16x8x8xf32> -> vector<16x8x8xf32>
    "tpu.trace_stop"() : () -> ()
    %44 = vector.shape_cast %43 : vector<16x8x8xf32> to vector<128x8xf32>
    %c0_34 = arith.constant 0 : index
    %c0_35 = arith.constant 0 : index
    %c0_36 = arith.constant 0 : index
    %45 = vector.load %arg10[%c0_34, %c0_35, %c0_36] : memref<4x8x32xf32, #tpu.memory_space<vmem>>, vector<1x8x32xf32>
    %46 = vector.shape_cast %45 : vector<1x8x32xf32> to vector<8x32xf32>
    %cst_37 = arith.constant dense<0.000000e+00> : vector<128x32xf32>
    %47 = tpu.matmul %44, %46, %cst_37 {dimension_numbers = #tpu.dot_dimension_numbers<[1], [0], [0], [1], [0, 0, 1, 1], [], []>} : vector<128x8xf32>, vector<8x32xf32>, vector<128x32xf32> -> vector<128x32xf32>
    %c1 = arith.constant 1 : index
    %c0_38 = arith.constant 0 : index
    %c0_39 = arith.constant 0 : index
    %48 = vector.load %arg4[%c1, %c0_38, %c0_39] : memref<4x32x8xf32, #tpu.memory_space<vmem>>, vector<1x32x8xf32>
    %49 = vector.shape_cast %48 : vector<1x32x8xf32> to vector<32x8xf32>
    %cst_40 = arith.constant dense<0.000000e+00> : vector<128x8xf32>
    %50 = tpu.matmul %4, %49, %cst_40 {dimension_numbers = #tpu.dot_dimension_numbers<[1], [0], [0], [1], [0, 0, 1, 1], [], []>} : vector<128x32xf32>, vector<32x8xf32>, vector<128x8xf32> -> vector<128x8xf32>
    %c1_41 = arith.constant 1 : index
    %c0_42 = arith.constant 0 : index
    %c0_43 = arith.constant 0 : index
    %51 = vector.load %arg5[%c1_41, %c0_42, %c0_43] : memref<4x1x8xf32, #tpu.memory_space<vmem>>, vector<1x1x8xf32>
    %52 = vector.shape_cast %51 : vector<1x1x8xf32> to vector<1x8xf32>
    %53 = vector.broadcast %52 : vector<1x8xf32> to vector<128x8xf32>
    %54 = arith.addf %50, %53 : vector<128x8xf32>
    %55 = vector.shape_cast %54 : vector<128x8xf32> to vector<16x8x8xf32>
    %c1_44 = arith.constant 1 : index
    %c0_45 = arith.constant 0 : index
    %c0_46 = arith.constant 0 : index
    %56 = vector.load %arg6[%c1_44, %c0_45, %c0_46] : memref<4x32x8xf32, #tpu.memory_space<vmem>>, vector<1x32x8xf32>
    %57 = vector.shape_cast %56 : vector<1x32x8xf32> to vector<32x8xf32>
    %cst_47 = arith.constant dense<0.000000e+00> : vector<128x8xf32>
    %58 = tpu.matmul %4, %57, %cst_47 {dimension_numbers = #tpu.dot_dimension_numbers<[1], [0], [0], [1], [0, 0, 1, 1], [], []>} : vector<128x32xf32>, vector<32x8xf32>, vector<128x8xf32> -> vector<128x8xf32>
    %c1_48 = arith.constant 1 : index
    %c0_49 = arith.constant 0 : index
    %c0_50 = arith.constant 0 : index
    %59 = vector.load %arg7[%c1_48, %c0_49, %c0_50] : memref<4x1x8xf32, #tpu.memory_space<vmem>>, vector<1x1x8xf32>
    %60 = vector.shape_cast %59 : vector<1x1x8xf32> to vector<1x8xf32>
    %61 = vector.broadcast %60 : vector<1x8xf32> to vector<128x8xf32>
    %62 = arith.addf %58, %61 : vector<128x8xf32>
    %63 = vector.shape_cast %62 : vector<128x8xf32> to vector<16x8x8xf32>
    %c1_51 = arith.constant 1 : index
    %c0_52 = arith.constant 0 : index
    %c0_53 = arith.constant 0 : index
    %64 = vector.load %arg8[%c1_51, %c0_52, %c0_53] : memref<4x32x8xf32, #tpu.memory_space<vmem>>, vector<1x32x8xf32>
    %65 = vector.shape_cast %64 : vector<1x32x8xf32> to vector<32x8xf32>
    %cst_54 = arith.constant dense<0.000000e+00> : vector<128x8xf32>
    %66 = tpu.matmul %4, %65, %cst_54 {dimension_numbers = #tpu.dot_dimension_numbers<[1], [0], [0], [1], [0, 0, 1, 1], [], []>} : vector<128x32xf32>, vector<32x8xf32>, vector<128x8xf32> -> vector<128x8xf32>
    %c1_55 = arith.constant 1 : index
    %c0_56 = arith.constant 0 : index
    %c0_57 = arith.constant 0 : index
    %67 = vector.load %arg9[%c1_55, %c0_56, %c0_57] : memref<4x1x8xf32, #tpu.memory_space<vmem>>, vector<1x1x8xf32>
    %68 = vector.shape_cast %67 : vector<1x1x8xf32> to vector<1x8xf32>
    %69 = vector.broadcast %68 : vector<1x8xf32> to vector<128x8xf32>
    %70 = arith.addf %66, %69 : vector<128x8xf32>
    %71 = vector.shape_cast %70 : vector<128x8xf32> to vector<16x8x8xf32>
    "tpu.trace_start"() <{level = 10 : i32, message = "gqd,gkd->gqk"}> : () -> ()
    %cst_58 = arith.constant dense<0.000000e+00> : vector<16x8x8xf32>
    %72 = tpu.matmul %55, %63, %cst_58 {dimension_numbers = #tpu.dot_dimension_numbers<[2], [2], [1], [1], [0, 0, 0, 1, 1, 1], [0], [0]>} : vector<16x8x8xf32>, vector<16x8x8xf32>, vector<16x8x8xf32> -> vector<16x8x8xf32>
    "tpu.trace_stop"() : () -> ()
    %cst_59 = arith.constant dense<0xFF800000> : vector<16x8xf32>
    %73 = vector.multi_reduction <maximumf>, %72, %cst_59 [2] : vector<16x8x8xf32> to vector<16x8xf32>
    %74 = vector.shape_cast %73 : vector<16x8xf32> to vector<16x8x1xf32>
    %75 = vector.broadcast %74 : vector<16x8x1xf32> to vector<16x8x8xf32>
    %76 = arith.subf %72, %75 : vector<16x8x8xf32>
    %77 = math.exp %76 : vector<16x8x8xf32>
    %cst_60 = arith.constant dense<0.000000e+00> : vector<16x8xf32>
    %78 = vector.multi_reduction <add>, %77, %cst_60 [2] : vector<16x8x8xf32> to vector<16x8xf32>
    %79 = vector.shape_cast %78 : vector<16x8xf32> to vector<16x8x1xf32>
    %80 = tpu.reciprocal %79 {approx = true} : vector<16x8x1xf32> -> vector<16x8x1xf32>
    %81 = vector.broadcast %80 : vector<16x8x1xf32> to vector<16x8x8xf32>
    %82 = arith.mulf %77, %81 : vector<16x8x8xf32>
    %c1_61 = arith.constant 1 : index
    %c0_62 = arith.constant 0 : index
    %c0_63 = arith.constant 0 : index
    %c0_64 = arith.constant 0 : index
    %83 = vector.load %arg25[%c1_61, %c0_62, %c0_63, %c0_64] : memref<4x16x8x8xf32, #tpu.memory_space<vmem>>, vector<1x16x8x8xf32>
    %84 = vector.shape_cast %83 : vector<1x16x8x8xf32> to vector<16x8x8xf32>
    %85 = vector.shape_cast %82 : vector<16x8x8xf32> to vector<1x16x8x8xf32>
    tpu.vector_store %arg25[%c1_61, %c0_62, %c0_63, %c0_64], %85 {strides = array<i32>} : memref<4x16x8x8xf32, #tpu.memory_space<vmem>>, vector<1x16x8x8xf32>,
    "tpu.trace_start"() <{level = 10 : i32, message = "gqk,gkd->gqd"}> : () -> ()
    %cst_65 = arith.constant dense<0.000000e+00> : vector<16x8x8xf32>
    %86 = tpu.matmul %82, %71, %cst_65 {dimension_numbers = #tpu.dot_dimension_numbers<[2], [1], [1], [2], [0, 0, 0, 1, 1, 2], [0], [0]>} : vector<16x8x8xf32>, vector<16x8x8xf32>, vector<16x8x8xf32> -> vector<16x8x8xf32>
    "tpu.trace_stop"() : () -> ()
    %87 = vector.shape_cast %86 : vector<16x8x8xf32> to vector<128x8xf32>
    %c1_66 = arith.constant 1 : index
    %c0_67 = arith.constant 0 : index
    %c0_68 = arith.constant 0 : index
    %88 = vector.load %arg10[%c1_66, %c0_67, %c0_68] : memref<4x8x32xf32, #tpu.memory_space<vmem>>, vector<1x8x32xf32>
    %89 = vector.shape_cast %88 : vector<1x8x32xf32> to vector<8x32xf32>
    %cst_69 = arith.constant dense<0.000000e+00> : vector<128x32xf32>
    %90 = tpu.matmul %87, %89, %cst_69 {dimension_numbers = #tpu.dot_dimension_numbers<[1], [0], [0], [1], [0, 0, 1, 1], [], []>} : vector<128x8xf32>, vector<8x32xf32>, vector<128x32xf32> -> vector<128x32xf32>
    %91 = arith.addf %47, %90 : vector<128x32xf32>
    %c2 = arith.constant 2 : index
    %c0_70 = arith.constant 0 : index
    %c0_71 = arith.constant 0 : index
    %92 = vector.load %arg4[%c2, %c0_70, %c0_71] : memref<4x32x8xf32, #tpu.memory_space<vmem>>, vector<1x32x8xf32>
    %93 = vector.shape_cast %92 : vector<1x32x8xf32> to vector<32x8xf32>
    %cst_72 = arith.constant dense<0.000000e+00> : vector<128x8xf32>
    %94 = tpu.matmul %4, %93, %cst_72 {dimension_numbers = #tpu.dot_dimension_numbers<[1], [0], [0], [1], [0, 0, 1, 1], [], []>} : vector<128x32xf32>, vector<32x8xf32>, vector<128x8xf32> -> vector<128x8xf32>
    %c2_73 = arith.constant 2 : index
    %c0_74 = arith.constant 0 : index
    %c0_75 = arith.constant 0 : index
    %95 = vector.load %arg5[%c2_73, %c0_74, %c0_75] : memref<4x1x8xf32, #tpu.memory_space<vmem>>, vector<1x1x8xf32>
    %96 = vector.shape_cast %95 : vector<1x1x8xf32> to vector<1x8xf32>
    %97 = vector.broadcast %96 : vector<1x8xf32> to vector<128x8xf32>
    %98 = arith.addf %94, %97 : vector<128x8xf32>
    %99 = vector.shape_cast %98 : vector<128x8xf32> to vector<16x8x8xf32>
    %c2_76 = arith.constant 2 : index
    %c0_77 = arith.constant 0 : index
    %c0_78 = arith.constant 0 : index
    %100 = vector.load %arg6[%c2_76, %c0_77, %c0_78] : memref<4x32x8xf32, #tpu.memory_space<vmem>>, vector<1x32x8xf32>
    %101 = vector.shape_cast %100 : vector<1x32x8xf32> to vector<32x8xf32>
    %cst_79 = arith.constant dense<0.000000e+00> : vector<128x8xf32>
    %102 = tpu.matmul %4, %101, %cst_79 {dimension_numbers = #tpu.dot_dimension_numbers<[1], [0], [0], [1], [0, 0, 1, 1], [], []>} : vector<128x32xf32>, vector<32x8xf32>, vector<128x8xf32> -> vector<128x8xf32>
    %c2_80 = arith.constant 2 : index
    %c0_81 = arith.constant 0 : index
    %c0_82 = arith.constant 0 : index
    %103 = vector.load %arg7[%c2_80, %c0_81, %c0_82] : memref<4x1x8xf32, #tpu.memory_space<vmem>>, vector<1x1x8xf32>
    %104 = vector.shape_cast %103 : vector<1x1x8xf32> to vector<1x8xf32>
    %105 = vector.broadcast %104 : vector<1x8xf32> to vector<128x8xf32>
    %106 = arith.addf %102, %105 : vector<128x8xf32>
    %107 = vector.shape_cast %106 : vector<128x8xf32> to vector<16x8x8xf32>
    %c2_83 = arith.constant 2 : index
    %c0_84 = arith.constant 0 : index
    %c0_85 = arith.constant 0 : index
    %108 = vector.load %arg8[%c2_83, %c0_84, %c0_85] : memref<4x32x8xf32, #tpu.memory_space<vmem>>, vector<1x32x8xf32>
    %109 = vector.shape_cast %108 : vector<1x32x8xf32> to vector<32x8xf32>
    %cst_86 = arith.constant dense<0.000000e+00> : vector<128x8xf32>
    %110 = tpu.matmul %4, %109, %cst_86 {dimension_numbers = #tpu.dot_dimension_numbers<[1], [0], [0], [1], [0, 0, 1, 1], [], []>} : vector<128x32xf32>, vector<32x8xf32>, vector<128x8xf32> -> vector<128x8xf32>
    %c2_87 = arith.constant 2 : index
    %c0_88 = arith.constant 0 : index
    %c0_89 = arith.constant 0 : index
    %111 = vector.load %arg9[%c2_87, %c0_88, %c0_89] : memref<4x1x8xf32, #tpu.memory_space<vmem>>, vector<1x1x8xf32>
    %112 = vector.shape_cast %111 : vector<1x1x8xf32> to vector<1x8xf32>
    %113 = vector.broadcast %112 : vector<1x8xf32> to vector<128x8xf32>
    %114 = arith.addf %110, %113 : vector<128x8xf32>
    %115 = vector.shape_cast %114 : vector<128x8xf32> to vector<16x8x8xf32>
    "tpu.trace_start"() <{level = 10 : i32, message = "gqd,gkd->gqk"}> : () -> ()
    %cst_90 = arith.constant dense<0.000000e+00> : vector<16x8x8xf32>
    %116 = tpu.matmul %99, %107, %cst_90 {dimension_numbers = #tpu.dot_dimension_numbers<[2], [2], [1], [1], [0, 0, 0, 1, 1, 1], [0], [0]>} : vector<16x8x8xf32>, vector<16x8x8xf32>, vector<16x8x8xf32> -> vector<16x8x8xf32>
    "tpu.trace_stop"() : () -> ()
    %cst_91 = arith.constant dense<0xFF800000> : vector<16x8xf32>
    %117 = vector.multi_reduction <maximumf>, %116, %cst_91 [2] : vector<16x8x8xf32> to vector<16x8xf32>
    %118 = vector.shape_cast %117 : vector<16x8xf32> to vector<16x8x1xf32>
    %119 = vector.broadcast %118 : vector<16x8x1xf32> to vector<16x8x8xf32>
    %120 = arith.subf %116, %119 : vector<16x8x8xf32>
    %121 = math.exp %120 : vector<16x8x8xf32>
    %cst_92 = arith.constant dense<0.000000e+00> : vector<16x8xf32>
    %122 = vector.multi_reduction <add>, %121, %cst_92 [2] : vector<16x8x8xf32> to vector<16x8xf32>
    %123 = vector.shape_cast %122 : vector<16x8xf32> to vector<16x8x1xf32>
    %124 = tpu.reciprocal %123 {approx = true} : vector<16x8x1xf32> -> vector<16x8x1xf32>
    %125 = vector.broadcast %124 : vector<16x8x1xf32> to vector<16x8x8xf32>
    %126 = arith.mulf %121, %125 : vector<16x8x8xf32>
    %c2_93 = arith.constant 2 : index
    %c0_94 = arith.constant 0 : index
    %c0_95 = arith.constant 0 : index
    %c0_96 = arith.constant 0 : index
    %127 = vector.load %arg25[%c2_93, %c0_94, %c0_95, %c0_96] : memref<4x16x8x8xf32, #tpu.memory_space<vmem>>, vector<1x16x8x8xf32>
    %128 = vector.shape_cast %127 : vector<1x16x8x8xf32> to vector<16x8x8xf32>
    %129 = vector.shape_cast %126 : vector<16x8x8xf32> to vector<1x16x8x8xf32>
    tpu.vector_store %arg25[%c2_93, %c0_94, %c0_95, %c0_96], %129 {strides = array<i32>} : memref<4x16x8x8xf32, #tpu.memory_space<vmem>>, vector<1x16x8x8xf32>,
    "tpu.trace_start"() <{level = 10 : i32, message = "gqk,gkd->gqd"}> : () -> ()
    %cst_97 = arith.constant dense<0.000000e+00> : vector<16x8x8xf32>
    %130 = tpu.matmul %126, %115, %cst_97 {dimension_numbers = #tpu.dot_dimension_numbers<[2], [1], [1], [2], [0, 0, 0, 1, 1, 2], [0], [0]>} : vector<16x8x8xf32>, vector<16x8x8xf32>, vector<16x8x8xf32> -> vector<16x8x8xf32>
    "tpu.trace_stop"() : () -> ()
    %131 = vector.shape_cast %130 : vector<16x8x8xf32> to vector<128x8xf32>
    %c2_98 = arith.constant 2 : index
    %c0_99 = arith.constant 0 : index
    %c0_100 = arith.constant 0 : index
    %132 = vector.load %arg10[%c2_98, %c0_99, %c0_100] : memref<4x8x32xf32, #tpu.memory_space<vmem>>, vector<1x8x32xf32>
    %133 = vector.shape_cast %132 : vector<1x8x32xf32> to vector<8x32xf32>
    %cst_101 = arith.constant dense<0.000000e+00> : vector<128x32xf32>
    %134 = tpu.matmul %131, %133, %cst_101 {dimension_numbers = #tpu.dot_dimension_numbers<[1], [0], [0], [1], [0, 0, 1, 1], [], []>} : vector<128x8xf32>, vector<8x32xf32>, vector<128x32xf32> -> vector<128x32xf32>
    %135 = arith.addf %91, %134 : vector<128x32xf32>
    %c3 = arith.constant 3 : index
    %c0_102 = arith.constant 0 : index
    %c0_103 = arith.constant 0 : index
    %136 = vector.load %arg4[%c3, %c0_102, %c0_103] : memref<4x32x8xf32, #tpu.memory_space<vmem>>, vector<1x32x8xf32>
    %137 = vector.shape_cast %136 : vector<1x32x8xf32> to vector<32x8xf32>
    %cst_104 = arith.constant dense<0.000000e+00> : vector<128x8xf32>
    %138 = tpu.matmul %4, %137, %cst_104 {dimension_numbers = #tpu.dot_dimension_numbers<[1], [0], [0], [1], [0, 0, 1, 1], [], []>} : vector<128x32xf32>, vector<32x8xf32>, vector<128x8xf32> -> vector<128x8xf32>
    %c3_105 = arith.constant 3 : index
    %c0_106 = arith.constant 0 : index
    %c0_107 = arith.constant 0 : index
    %139 = vector.load %arg5[%c3_105, %c0_106, %c0_107] : memref<4x1x8xf32, #tpu.memory_space<vmem>>, vector<1x1x8xf32>
    %140 = vector.shape_cast %139 : vector<1x1x8xf32> to vector<1x8xf32>
    %141 = vector.broadcast %140 : vector<1x8xf32> to vector<128x8xf32>
    %142 = arith.addf %138, %141 : vector<128x8xf32>
    %143 = vector.shape_cast %142 : vector<128x8xf32> to vector<16x8x8xf32>
    %c3_108 = arith.constant 3 : index
    %c0_109 = arith.constant 0 : index
    %c0_110 = arith.constant 0 : index
    %144 = vector.load %arg6[%c3_108, %c0_109, %c0_110] : memref<4x32x8xf32, #tpu.memory_space<vmem>>, vector<1x32x8xf32>
    %145 = vector.shape_cast %144 : vector<1x32x8xf32> to vector<32x8xf32>
    %cst_111 = arith.constant dense<0.000000e+00> : vector<128x8xf32>
    %146 = tpu.matmul %4, %145, %cst_111 {dimension_numbers = #tpu.dot_dimension_numbers<[1], [0], [0], [1], [0, 0, 1, 1], [], []>} : vector<128x32xf32>, vector<32x8xf32>, vector<128x8xf32> -> vector<128x8xf32>
    %c3_112 = arith.constant 3 : index
    %c0_113 = arith.constant 0 : index
    %c0_114 = arith.constant 0 : index
    %147 = vector.load %arg7[%c3_112, %c0_113, %c0_114] : memref<4x1x8xf32, #tpu.memory_space<vmem>>, vector<1x1x8xf32>
    %148 = vector.shape_cast %147 : vector<1x1x8xf32> to vector<1x8xf32>
    %149 = vector.broadcast %148 : vector<1x8xf32> to vector<128x8xf32>
    %150 = arith.addf %146, %149 : vector<128x8xf32>
    %151 = vector.shape_cast %150 : vector<128x8xf32> to vector<16x8x8xf32>
    %c3_115 = arith.constant 3 : index
    %c0_116 = arith.constant 0 : index
    %c0_117 = arith.constant 0 : index
    %152 = vector.load %arg8[%c3_115, %c0_116, %c0_117] : memref<4x32x8xf32, #tpu.memory_space<vmem>>, vector<1x32x8xf32>
    %153 = vector.shape_cast %152 : vector<1x32x8xf32> to vector<32x8xf32>
    %cst_118 = arith.constant dense<0.000000e+00> : vector<128x8xf32>
    %154 = tpu.matmul %4, %153, %cst_118 {dimension_numbers = #tpu.dot_dimension_numbers<[1], [0], [0], [1], [0, 0, 1, 1], [], []>} : vector<128x32xf32>, vector<32x8xf32>, vector<128x8xf32> -> vector<128x8xf32>
    %c3_119 = arith.constant 3 : index
    %c0_120 = arith.constant 0 : index
    %c0_121 = arith.constant 0 : index
    %155 = vector.load %arg9[%c3_119, %c0_120, %c0_121] : memref<4x1x8xf32, #tpu.memory_space<vmem>>, vector<1x1x8xf32>
    %156 = vector.shape_cast %155 : vector<1x1x8xf32> to vector<1x8xf32>
    %157 = vector.broadcast %156 : vector<1x8xf32> to vector<128x8xf32>
    %158 = arith.addf %154, %157 : vector<128x8xf32>
    %159 = vector.shape_cast %158 : vector<128x8xf32> to vector<16x8x8xf32>
    "tpu.trace_start"() <{level = 10 : i32, message = "gqd,gkd->gqk"}> : () -> ()
    %cst_122 = arith.constant dense<0.000000e+00> : vector<16x8x8xf32>
    %160 = tpu.matmul %143, %151, %cst_122 {dimension_numbers = #tpu.dot_dimension_numbers<[2], [2], [1], [1], [0, 0, 0, 1, 1, 1], [0], [0]>} : vector<16x8x8xf32>, vector<16x8x8xf32>, vector<16x8x8xf32> -> vector<16x8x8xf32>
    "tpu.trace_stop"() : () -> ()
    %cst_123 = arith.constant dense<0xFF800000> : vector<16x8xf32>
    %161 = vector.multi_reduction <maximumf>, %160, %cst_123 [2] : vector<16x8x8xf32> to vector<16x8xf32>
    %162 = vector.shape_cast %161 : vector<16x8xf32> to vector<16x8x1xf32>
    %163 = vector.broadcast %162 : vector<16x8x1xf32> to vector<16x8x8xf32>
    %164 = arith.subf %160, %163 : vector<16x8x8xf32>
    %165 = math.exp %164 : vector<16x8x8xf32>
    %cst_124 = arith.constant dense<0.000000e+00> : vector<16x8xf32>
    %166 = vector.multi_reduction <add>, %165, %cst_124 [2] : vector<16x8x8xf32> to vector<16x8xf32>
    %167 = vector.shape_cast %166 : vector<16x8xf32> to vector<16x8x1xf32>
    %168 = tpu.reciprocal %167 {approx = true} : vector<16x8x1xf32> -> vector<16x8x1xf32>
    %169 = vector.broadcast %168 : vector<16x8x1xf32> to vector<16x8x8xf32>
    %170 = arith.mulf %165, %169 : vector<16x8x8xf32>
    %c3_125 = arith.constant 3 : index
    %c0_126 = arith.constant 0 : index
    %c0_127 = arith.constant 0 : index
    %c0_128 = arith.constant 0 : index
    %171 = vector.load %arg25[%c3_125, %c0_126, %c0_127, %c0_128] : memref<4x16x8x8xf32, #tpu.memory_space<vmem>>, vector<1x16x8x8xf32>
    %172 = vector.shape_cast %171 : vector<1x16x8x8xf32> to vector<16x8x8xf32>
    %173 = vector.shape_cast %170 : vector<16x8x8xf32> to vector<1x16x8x8xf32>
    tpu.vector_store %arg25[%c3_125, %c0_126, %c0_127, %c0_128], %173 {strides = array<i32>} : memref<4x16x8x8xf32, #tpu.memory_space<vmem>>, vector<1x16x8x8xf32>,
    "tpu.trace_start"() <{level = 10 : i32, message = "gqk,gkd->gqd"}> : () -> ()
    %cst_129 = arith.constant dense<0.000000e+00> : vector<16x8x8xf32>
    %174 = tpu.matmul %170, %159, %cst_129 {dimension_numbers = #tpu.dot_dimension_numbers<[2], [1], [1], [2], [0, 0, 0, 1, 1, 2], [0], [0]>} : vector<16x8x8xf32>, vector<16x8x8xf32>, vector<16x8x8xf32> -> vector<16x8x8xf32>
    "tpu.trace_stop"() : () -> ()
    %175 = vector.shape_cast %174 : vector<16x8x8xf32> to vector<128x8xf32>
    %c3_130 = arith.constant 3 : index
    %c0_131 = arith.constant 0 : index
    %c0_132 = arith.constant 0 : index
    %176 = vector.load %arg10[%c3_130, %c0_131, %c0_132] : memref<4x8x32xf32, #tpu.memory_space<vmem>>, vector<1x8x32xf32>
    %177 = vector.shape_cast %176 : vector<1x8x32xf32> to vector<8x32xf32>
    %cst_133 = arith.constant dense<0.000000e+00> : vector<128x32xf32>
    %178 = tpu.matmul %175, %177, %cst_133 {dimension_numbers = #tpu.dot_dimension_numbers<[1], [0], [0], [1], [0, 0, 1, 1], [], []>} : vector<128x8xf32>, vector<8x32xf32>, vector<128x32xf32> -> vector<128x32xf32>
    %179 = arith.addf %135, %178 : vector<128x32xf32>
    %180 = arith.addf %4, %179 : vector<128x32xf32>
    %c0_134 = arith.constant 0 : index
    %c0_135 = arith.constant 0 : index
    %181 = vector.load %arg11[%c0_134, %c0_135] : memref<1x32xf32, #tpu.memory_space<vmem>>, vector<1x32xf32>
    %182 = vector.broadcast %181 : vector<1x32xf32> to vector<128x32xf32>
    %183 = arith.addf %180, %182 : vector<128x32xf32>
    %c0_136 = arith.constant 0 : index
    %c0_137 = arith.constant 0 : index
    %184 = vector.load %arg12[%c0_136, %c0_137] : memref<1x32xf32, #tpu.memory_space<vmem>>, vector<1x32xf32>
    %c0_138 = arith.constant 0 : index
    %c0_139 = arith.constant 0 : index
    %185 = vector.load %arg13[%c0_138, %c0_139] : memref<1x32xf32, #tpu.memory_space<vmem>>, vector<1x32xf32>
    %cst_140 = arith.constant dense<0.000000e+00> : vector<128xf32>
    %186 = vector.multi_reduction <add>, %183, %cst_140 [1] : vector<128x32xf32> to vector<128xf32>
    %187 = vector.shape_cast %186 : vector<128xf32> to vector<128x1xf32>
    %cst_141 = arith.constant 3.200000e+01 : f32
    %188 = vector.broadcast %cst_141 : f32 to vector<128x1xf32>
    %189 = arith.divf %187, %188 : vector<128x1xf32>
    %190 = vector.broadcast %189 : vector<128x1xf32> to vector<128x32xf32>
    %191 = arith.subf %183, %190 : vector<128x32xf32>
    %192 = arith.mulf %191, %191 : vector<128x32xf32>
    %cst_142 = arith.constant dense<0.000000e+00> : vector<128xf32>
    %193 = vector.multi_reduction <add>, %192, %cst_142 [1] : vector<128x32xf32> to vector<128xf32>
    %194 = vector.shape_cast %193 : vector<128xf32> to vector<128x1xf32>
    %cst_143 = arith.constant 3.200000e+01 : f32
    %195 = vector.broadcast %cst_143 : f32 to vector<128x1xf32>
    %196 = arith.divf %194, %195 : vector<128x1xf32>
    %197 = vector.broadcast %189 : vector<128x1xf32> to vector<128x32xf32>
    %198 = arith.subf %183, %197 : vector<128x32xf32>
    %cst_144 = arith.constant 9.99999974E-6 : f32
    %199 = vector.broadcast %cst_144 : f32 to vector<128x1xf32>
    %200 = arith.addf %196, %199 : vector<128x1xf32>
    %201 = math.rsqrt %200 : vector<128x1xf32>
    %202 = vector.broadcast %201 : vector<128x1xf32> to vector<128x32xf32>
    %203 = arith.mulf %198, %202 : vector<128x32xf32>
    %204 = vector.broadcast %184 : vector<1x32xf32> to vector<128x32xf32>
    %205 = arith.mulf %203, %204 : vector<128x32xf32>
    %206 = vector.broadcast %185 : vector<1x32xf32> to vector<128x32xf32>
    %207 = arith.addf %205, %206 : vector<128x32xf32>
    %c0_145 = arith.constant 0 : index
    %c0_146 = arith.constant 0 : index
    %208 = vector.load %arg14[%c0_145, %c0_146] : memref<32x128xf32, #tpu.memory_space<vmem>>, vector<32x128xf32>
    %cst_147 = arith.constant dense<0.000000e+00> : vector<128x128xf32>
    %209 = tpu.matmul %207, %208, %cst_147 {dimension_numbers = #tpu.dot_dimension_numbers<[1], [0], [0], [1], [0, 0, 1, 1], [], []>} : vector<128x32xf32>, vector<32x128xf32>, vector<128x128xf32> -> vector<128x128xf32>
    %c0_148 = arith.constant 0 : index
    %c0_149 = arith.constant 0 : index
    %210 = vector.load %arg15[%c0_148, %c0_149] : memref<1x128xf32, #tpu.memory_space<vmem>>, vector<1x128xf32>
    %211 = vector.broadcast %210 : vector<1x128xf32> to vector<128x128xf32>
    %212 = arith.addf %209, %211 : vector<128x128xf32>
    %cst_150 = arith.constant 0.000000e+00 : f32
    %213 = vector.broadcast %cst_150 : f32 to vector<128x128xf32>
    %214 = arith.maximumf %212, %213 : vector<128x128xf32>
    %c0_151 = arith.constant 0 : index
    %c0_152 = arith.constant 0 : index
    %215 = vector.load %arg16[%c0_151, %c0_152] : memref<128x32xf32, #tpu.memory_space<vmem>>, vector<128x32xf32>
    %cst_153 = arith.constant dense<0.000000e+00> : vector<128x32xf32>
    %216 = tpu.matmul %214, %215, %cst_153 {dimension_numbers = #tpu.dot_dimension_numbers<[1], [0], [0], [1], [0, 0, 1, 1], [], []>} : vector<128x128xf32>, vector<128x32xf32>, vector<128x32xf32> -> vector<128x32xf32>
    %c0_154 = arith.constant 0 : index
    %c0_155 = arith.constant 0 : index
    %217 = vector.load %arg17[%c0_154, %c0_155] : memref<1x32xf32, #tpu.memory_space<vmem>>, vector<1x32xf32>
    %218 = vector.broadcast %217 : vector<1x32xf32> to vector<128x32xf32>
    %219 = arith.addf %216, %218 : vector<128x32xf32>
    %220 = arith.addf %207, %219 : vector<128x32xf32>
    %c0_156 = arith.constant 0 : index
    %c0_157 = arith.constant 0 : index
    %221 = vector.load %arg18[%c0_156, %c0_157] : memref<1x32xf32, #tpu.memory_space<vmem>>, vector<1x32xf32>
    %c0_158 = arith.constant 0 : index
    %c0_159 = arith.constant 0 : index
    %222 = vector.load %arg19[%c0_158, %c0_159] : memref<1x32xf32, #tpu.memory_space<vmem>>, vector<1x32xf32>
    %cst_160 = arith.constant dense<0.000000e+00> : vector<128xf32>
    %223 = vector.multi_reduction <add>, %220, %cst_160 [1] : vector<128x32xf32> to vector<128xf32>
    %224 = vector.shape_cast %223 : vector<128xf32> to vector<128x1xf32>
    %cst_161 = arith.constant 3.200000e+01 : f32
    %225 = vector.broadcast %cst_161 : f32 to vector<128x1xf32>
    %226 = arith.divf %224, %225 : vector<128x1xf32>
    %227 = vector.broadcast %226 : vector<128x1xf32> to vector<128x32xf32>
    %228 = arith.subf %220, %227 : vector<128x32xf32>
    %229 = arith.mulf %228, %228 : vector<128x32xf32>
    %cst_162 = arith.constant dense<0.000000e+00> : vector<128xf32>
    %230 = vector.multi_reduction <add>, %229, %cst_162 [1] : vector<128x32xf32> to vector<128xf32>
    %231 = vector.shape_cast %230 : vector<128xf32> to vector<128x1xf32>
    %cst_163 = arith.constant 3.200000e+01 : f32
    %232 = vector.broadcast %cst_163 : f32 to vector<128x1xf32>
    %233 = arith.divf %231, %232 : vector<128x1xf32>
    %234 = vector.broadcast %226 : vector<128x1xf32> to vector<128x32xf32>
    %235 = arith.subf %220, %234 : vector<128x32xf32>
    %cst_164 = arith.constant 9.99999974E-6 : f32
    %236 = vector.broadcast %cst_164 : f32 to vector<128x1xf32>
    %237 = arith.addf %233, %236 : vector<128x1xf32>
    %238 = math.rsqrt %237 : vector<128x1xf32>
    %239 = vector.broadcast %238 : vector<128x1xf32> to vector<128x32xf32>
    %240 = arith.mulf %235, %239 : vector<128x32xf32>
    %241 = vector.broadcast %221 : vector<1x32xf32> to vector<128x32xf32>
    %242 = arith.mulf %240, %241 : vector<128x32xf32>
    %243 = vector.broadcast %222 : vector<1x32xf32> to vector<128x32xf32>
    %244 = arith.addf %242, %243 : vector<128x32xf32>
    %c0_165 = arith.constant 0 : index
    %c0_166 = arith.constant 0 : index
    %245 = vector.load %arg20[%c0_165, %c0_166] : memref<8x128xf32, #tpu.memory_space<vmem>>, vector<8x128xf32>
    %cst_167 = arith.constant dense<0.000000e+00> : vector<8x32xf32>
    %246 = tpu.matmul %245, %244, %cst_167 {dimension_numbers = #tpu.dot_dimension_numbers<[1], [0], [0], [1], [0, 0, 1, 1], [], []>} : vector<8x128xf32>, vector<128x32xf32>, vector<8x32xf32> -> vector<8x32xf32>
    %c0_168 = arith.constant 0 : index
    %c0_169 = arith.constant 0 : index
    %247 = vector.load %arg21[%c0_168, %c0_169] : memref<8x1xf32, #tpu.memory_space<vmem>>, vector<8x1xf32>
    %248 = vector.broadcast %247 : vector<8x1xf32> to vector<8x32xf32>
    %249 = arith.addf %246, %248 : vector<8x32xf32>
    %c0_170 = arith.constant 0 : index
    %c0_171 = arith.constant 0 : index
    %250 = vector.load %arg22[%c0_170, %c0_171] : memref<32x2xf32, #tpu.memory_space<vmem>>, vector<32x2xf32>
    %cst_172 = arith.constant dense<0.000000e+00> : vector<8x2xf32>
    %251 = tpu.matmul %249, %250, %cst_172 {dimension_numbers = #tpu.dot_dimension_numbers<[1], [0], [0], [1], [0, 0, 1, 1], [], []>} : vector<8x32xf32>, vector<32x2xf32>, vector<8x2xf32> -> vector<8x2xf32>
    %c0_173 = arith.constant 0 : index
    %c0_174 = arith.constant 0 : index
    %252 = vector.load %arg23[%c0_173, %c0_174] : memref<1x2xf32, #tpu.memory_space<vmem>>, vector<1x2xf32>
    %253 = vector.broadcast %252 : vector<1x2xf32> to vector<8x2xf32>
    %254 = arith.addf %251, %253 : vector<8x2xf32>
    %c0_175 = arith.constant 0 : index
    %c0_176 = arith.constant 0 : index
    %255 = vector.load %arg24[%c0_175, %c0_176] : memref<8x2xf32, #tpu.memory_space<vmem>>, vector<8x2xf32>
    tpu.vector_store %arg24[%c0_175, %c0_176], %254 {strides = array<i32>} : memref<8x2xf32, #tpu.memory_space<vmem>>, vector<8x2xf32>,
    return
  }
  func.func @transform_0(%arg0: i32) -> (i32, i32) {
    %c0_i32 = arith.constant 0 : i32
    %c0_i32_0 = arith.constant 0 : i32
    %c0_i32_1 = arith.constant 0 : i32
    return %c0_i32, %c0_i32_0 : i32, i32
  }
  func.func @transform_1(%arg0: i32) -> (i32, i32) {
    %c0_i32 = arith.constant 0 : i32
    %c0_i32_0 = arith.constant 0 : i32
    %c0_i32_1 = arith.constant 0 : i32
    return %c0_i32, %c0_i32_0 : i32, i32
  }
  func.func @transform_2(%arg0: i32) -> (i32, i32) {
    %c0_i32 = arith.constant 0 : i32
    %c0_i32_0 = arith.constant 0 : i32
    %c0_i32_1 = arith.constant 0 : i32
    return %c0_i32, %c0_i32_0 : i32, i32
  }
  func.func @transform_3(%arg0: i32) -> (i32, i32, i32) {
    %c0_i32 = arith.constant 0 : i32
    %c0_i32_0 = arith.constant 0 : i32
    %c0_i32_1 = arith.constant 0 : i32
    %c0_i32_2 = arith.constant 0 : i32
    return %c0_i32, %c0_i32_0, %c0_i32_1 : i32, i32, i32
  }
  func.func @transform_4(%arg0: i32) -> (i32, i32, i32) {
    %c0_i32 = arith.constant 0 : i32
    %c0_i32_0 = arith.constant 0 : i32
    %c0_i32_1 = arith.constant 0 : i32
    %c0_i32_2 = arith.constant 0 : i32
    return %c0_i32, %c0_i32_0, %c0_i32_1 : i32, i32, i32
  }
  func.func @transform_5(%arg0: i32) -> (i32, i32, i32) {
    %c0_i32 = arith.constant 0 : i32
    %c0_i32_0 = arith.constant 0 : i32
    %c0_i32_1 = arith.constant 0 : i32
    %c0_i32_2 = arith.constant 0 : i32
    return %c0_i32, %c0_i32_0, %c0_i32_1 : i32, i32, i32
  }
  func.func @transform_6(%arg0: i32) -> (i32, i32, i32) {
    %c0_i32 = arith.constant 0 : i32
    %c0_i32_0 = arith.constant 0 : i32
    %c0_i32_1 = arith.constant 0 : i32
    %c0_i32_2 = arith.constant 0 : i32
    return %c0_i32, %c0_i32_0, %c0_i32_1 : i32, i32, i32
  }
  func.func @transform_7(%arg0: i32) -> (i32, i32, i32) {
    %c0_i32 = arith.constant 0 : i32
    %c0_i32_0 = arith.constant 0 : i32
    %c0_i32_1 = arith.constant 0 : i32
    %c0_i32_2 = arith.constant 0 : i32
    return %c0_i32, %c0_i32_0, %c0_i32_1 : i32, i32, i32
  }
  func.func @transform_8(%arg0: i32) -> (i32, i32, i32) {
    %c0_i32 = arith.constant 0 : i32
    %c0_i32_0 = arith.constant 0 : i32
    %c0_i32_1 = arith.constant 0 : i32
    %c0_i32_2 = arith.constant 0 : i32
    return %c0_i32, %c0_i32_0, %c0_i32_1 : i32, i32, i32
  }
  func.func @transform_9(%arg0: i32) -> (i32, i32, i32) {
    %c0_i32 = arith.constant 0 : i32
    %c0_i32_0 = arith.constant 0 : i32
    %c0_i32_1 = arith.constant 0 : i32
    %c0_i32_2 = arith.constant 0 : i32
    return %c0_i32, %c0_i32_0, %c0_i32_1 : i32, i32, i32
  }
  func.func @transform_10(%arg0: i32) -> (i32, i32) {
    %c0_i32 = arith.constant 0 : i32
    %c0_i32_0 = arith.constant 0 : i32
    %c0_i32_1 = arith.constant 0 : i32
    return %c0_i32, %c0_i32_0 : i32, i32
  }
  func.func @transform_11(%arg0: i32) -> (i32, i32) {
    %c0_i32 = arith.constant 0 : i32
    %c0_i32_0 = arith.constant 0 : i32
    %c0_i32_1 = arith.constant 0 : i32
    return %c0_i32, %c0_i32_0 : i32, i32
  }
  func.func @transform_12(%arg0: i32) -> (i32, i32) {
    %c0_i32 = arith.constant 0 : i32
    %c0_i32_0 = arith.constant 0 : i32
    %c0_i32_1 = arith.constant 0 : i32
    return %c0_i32, %c0_i32_0 : i32, i32
  }
  func.func @transform_13(%arg0: i32) -> (i32, i32) {
    %c0_i32 = arith.constant 0 : i32
    %c0_i32_0 = arith.constant 0 : i32
    %c0_i32_1 = arith.constant 0 : i32
    return %c0_i32, %c0_i32_0 : i32, i32
  }
  func.func @transform_14(%arg0: i32) -> (i32, i32) {
    %c0_i32 = arith.constant 0 : i32
    %c0_i32_0 = arith.constant 0 : i32
    %c0_i32_1 = arith.constant 0 : i32
    return %c0_i32, %c0_i32_0 : i32, i32
  }
  func.func @transform_15(%arg0: i32) -> (i32, i32) {
    %c0_i32 = arith.constant 0 : i32
    %c0_i32_0 = arith.constant 0 : i32
    %c0_i32_1 = arith.constant 0 : i32
    return %c0_i32, %c0_i32_0 : i32, i32
  }
  func.func @transform_16(%arg0: i32) -> (i32, i32) {
    %c0_i32 = arith.constant 0 : i32
    %c0_i32_0 = arith.constant 0 : i32
    %c0_i32_1 = arith.constant 0 : i32
    return %c0_i32, %c0_i32_0 : i32, i32
  }
  func.func @transform_17(%arg0: i32) -> (i32, i32) {
    %c0_i32 = arith.constant 0 : i32
    %c0_i32_0 = arith.constant 0 : i32
    %c0_i32_1 = arith.constant 0 : i32
    return %c0_i32, %c0_i32_0 : i32, i32
  }
  func.func @transform_18(%arg0: i32) -> (i32, i32) {
    %c0_i32 = arith.constant 0 : i32
    %c0_i32_0 = arith.constant 0 : i32
    %c0_i32_1 = arith.constant 0 : i32
    return %c0_i32, %c0_i32_0 : i32, i32
  }
  func.func @transform_19(%arg0: i32) -> (i32, i32) {
    %c0_i32 = arith.constant 0 : i32
    %c0_i32_0 = arith.constant 0 : i32
    %c0_i32_1 = arith.constant 0 : i32
    return %c0_i32, %c0_i32_0 : i32, i32
  }
  func.func @transform_20(%arg0: i32) -> (i32, i32) {
    %c0_i32 = arith.constant 0 : i32
    %c0_i32_0 = arith.constant 0 : i32
    %c0_i32_1 = arith.constant 0 : i32
    return %c0_i32, %c0_i32_0 : i32, i32
  }
  func.func @transform_21(%arg0: i32) -> (i32, i32) {
    %c0_i32 = arith.constant 0 : i32
    %c0_i32_0 = arith.constant 0 : i32
    %c0_i32_1 = arith.constant 0 : i32
    return %c0_i32, %c0_i32_0 : i32, i32
  }
  func.func @transform_22(%arg0: i32) -> (i32, i32) {
    %c0_i32 = arith.constant 0 : i32
    %c0_i32_0 = arith.constant 0 : i32
    %c0_i32_1 = arith.constant 0 : i32
    return %c0_i32, %c0_i32_0 : i32, i32
  }
  func.func @transform_23(%arg0: i32) -> (i32, i32) {
    %c0_i32 = arith.constant 0 : i32
    %c0_i32_0 = arith.constant 0 : i32
    %c0_i32_1 = arith.constant 0 : i32
    return %c0_i32, %c0_i32_0 : i32, i32
  }
  func.func @transform_24(%arg0: i32) -> (i32, i32, i32, i32) {
    %c0_i32 = arith.constant 0 : i32
    %c0_i32_0 = arith.constant 0 : i32
    %c0_i32_1 = arith.constant 0 : i32
    %c0_i32_2 = arith.constant 0 : i32
    %c0_i32_3 = arith.constant 0 : i32
    return %c0_i32, %c0_i32_0, %c0_i32_1, %c0_i32_2 : i32, i32, i32, i32
  }
}

</mosaic_0001>

<llo_original>
// kernel: dagct_bls_forward.1
$region0: #{dagct_bls_forward.1}
  #allocation0 [shape = 'u32[]', space=smem, size = 0x4, offset = 0x4, fixed_abs, tag = 'smem constant byte address 0x4 - core index']
  #allocation1 [shape = 'u32[72,128]{1,0:T(1,128)}', space=vmem, size = 0x9000, scoped, tag = 'internal scratch']
  %s0 = inlined_call_operand.vmem [shape: f32[128,128], index: 0, kind: input, shape index: {}]
  %s1 = inlined_call_operand.vmem [shape: f32[128,32], index: 1, kind: input, shape index: {}]
  %s2 = inlined_call_operand.vmem [shape: f32[128,32], index: 2, kind: input, shape index: {}]
  %s3 = inlined_call_operand.vmem [shape: f32[4,32,8], index: 3, kind: input, shape index: {}]
  %s4 = inlined_call_operand.vmem [shape: f32[4,1,8], index: 4, kind: input, shape index: {}]
  %s5 = inlined_call_operand.vmem [shape: f32[4,32,8], index: 5, kind: input, shape index: {}]
  %s6 = inlined_call_operand.vmem [shape: f32[4,1,8], index: 6, kind: input, shape index: {}]
  %s7 = inlined_call_operand.vmem [shape: f32[4,32,8], index: 7, kind: input, shape index: {}]
  %s8 = inlined_call_operand.vmem [shape: f32[4,1,8], index: 8, kind: input, shape index: {}]
  %s9 = inlined_call_operand.vmem [shape: f32[4,8,32], index: 9, kind: input, shape index: {}]
  %s10 = inlined_call_operand.vmem [shape: f32[1,32], index: 10, kind: input, shape index: {}]
  %s11 = inlined_call_operand.vmem [shape: f32[1,32], index: 11, kind: input, shape index: {}]
  %s12 = inlined_call_operand.vmem [shape: f32[1,32], index: 12, kind: input, shape index: {}]
  %s13 = inlined_call_operand.vmem [shape: f32[32,128], index: 13, kind: input, shape index: {}]
  %s14 = inlined_call_operand.vmem [shape: f32[1,128], index: 14, kind: input, shape index: {}]
  %s15 = inlined_call_operand.vmem [shape: f32[128,32], index: 15, kind: input, shape index: {}]
  %s16 = inlined_call_operand.vmem [shape: f32[1,32], index: 16, kind: input, shape index: {}]
  %s17 = inlined_call_operand.vmem [shape: f32[1,32], index: 17, kind: input, shape index: {}]
  %s18 = inlined_call_operand.vmem [shape: f32[1,32], index: 18, kind: input, shape index: {}]
  %s19 = inlined_call_operand.vmem [shape: f32[8,128], index: 19, kind: input, shape index: {}]
  %s20 = inlined_call_operand.vmem [shape: f32[8,1], index: 20, kind: input, shape index: {}]
  %s21 = inlined_call_operand.vmem [shape: f32[32,2], index: 21, kind: input, shape index: {}]
  %s22 = inlined_call_operand.vmem [shape: f32[1,2], index: 22, kind: input, shape index: {}]
  %s23 = inlined_call_operand.vmem [shape: f32[8,2], index: 23, kind: output, shape index: {0}]
  %s24 = inlined_call_operand.vmem [shape: f32[4,16,8,8], index: 24, kind: output, shape index: {1}]
  %25 = xla_tuple %s23, %s24
  %s26 = sld [smem:[#allocation0]]
  $region110: #{dagct_bls_forward.1} parent=0
    _
  %s28 = ssub.s32 1, %s26
  %s29 = scalar_select 0, %s28, %s26
  // Predicated region
  $region2: #{dagct_bls_forward.1} parent=0 // pred_check
    _
  $region3: #{dagct_bls_forward.1} parent=0 // pred_check_branch
    %31 = sbr.rel (0) target = $region5
  $region4: #{dagct_bls_forward.1} parent=0 // pred_region
    _
  $region5: #{dagct_bls_forward.1} parent=0 // pred_fallthru
    _
  // Predicated region
  $region6: #{dagct_bls_forward.1} parent=0 // pred_check
    _
  $region7: #{dagct_bls_forward.1} parent=0 // pred_check_branch
    %33 = sbr.rel (0) target = $region9
  $region8: #{dagct_bls_forward.1} parent=0 // pred_region
    _
  $region9: #{dagct_bls_forward.1} parent=0 // pred_fallthru
    _
  // Predicated region
  $region10: #{dagct_bls_forward.1} parent=0 // pred_check
    _
  $region11: #{dagct_bls_forward.1} parent=0 // pred_check_branch
    %35 = sbr.rel (0) target = $region13
  $region12: #{dagct_bls_forward.1} parent=0 // pred_region
    _
  $region13: #{dagct_bls_forward.1} parent=0 // pred_fallthru
    _
  // Predicated region
  $region14: #{dagct_bls_forward.1} parent=0 // pred_check
    _
  $region15: #{dagct_bls_forward.1} parent=0 // pred_check_branch
    %37 = sbr.rel (0) target = $region17
  $region16: #{dagct_bls_forward.1} parent=0 // pred_region
    _
  $region17: #{dagct_bls_forward.1} parent=0 // pred_fallthru
    _
  // Predicated region
  $region18: #{dagct_bls_forward.1} parent=0 // pred_check
    _
  $region19: #{dagct_bls_forward.1} parent=0 // pred_check_branch
    %39 = sbr.rel (0) target = $region21
  $region20: #{dagct_bls_forward.1} parent=0 // pred_region
    _
  $region21: #{dagct_bls_forward.1} parent=0 // pred_fallthru
    _
  // Predicated region
  $region22: #{dagct_bls_forward.1} parent=0 // pred_check
    _
  $region23: #{dagct_bls_forward.1} parent=0 // pred_check_branch
    %41 = sbr.rel (0) target = $region25
  $region24: #{dagct_bls_forward.1} parent=0 // pred_region
    _
  $region25: #{dagct_bls_forward.1} parent=0 // pred_fallthru
    _
  // Predicated region
  $region26: #{dagct_bls_forward.1} parent=0 // pred_check
    _
  $region27: #{dagct_bls_forward.1} parent=0 // pred_check_branch
    %43 = sbr.rel (0) target = $region29
  $region28: #{dagct_bls_forward.1} parent=0 // pred_region
    _
  $region29: #{dagct_bls_forward.1} parent=0 // pred_fallthru
    _
  // Predicated region
  $region30: #{dagct_bls_forward.1} parent=0 // pred_check
    _
  $region31: #{dagct_bls_forward.1} parent=0 // pred_check_branch
    %45 = sbr.rel (0) target = $region33
  $region32: #{dagct_bls_forward.1} parent=0 // pred_region
    _
  $region33: #{dagct_bls_forward.1} parent=0 // pred_fallthru
    _
  // Predicated region
  $region34: #{dagct_bls_forward.1} parent=0 // pred_check
    _
  $region35: #{dagct_bls_forward.1} parent=0 // pred_check_branch
    %47 = sbr.rel (0) target = $region37
  $region36: #{dagct_bls_forward.1} parent=0 // pred_region
    _
  $region37: #{dagct_bls_forward.1} parent=0 // pred_fallthru
    _
  // Predicated region
  $region38: #{dagct_bls_forward.1} parent=0 // pred_check
    _
  $region39: #{dagct_bls_forward.1} parent=0 // pred_check_branch
    %49 = sbr.rel (0) target = $region41
  $region40: #{dagct_bls_forward.1} parent=0 // pred_region
    _
  $region41: #{dagct_bls_forward.1} parent=0 // pred_fallthru
    _
  // Predicated region
  $region42: #{dagct_bls_forward.1} parent=0 // pred_check
    _
  $region43: #{dagct_bls_forward.1} parent=0 // pred_check_branch
    %51 = sbr.rel (0) target = $region45
  $region44: #{dagct_bls_forward.1} parent=0 // pred_region
    _
  $region45: #{dagct_bls_forward.1} parent=0 // pred_fallthru
    _
  // Predicated region
  $region46: #{dagct_bls_forward.1} parent=0 // pred_check
    _
  $region47: #{dagct_bls_forward.1} parent=0 // pred_check_branch
    %53 = sbr.rel (0) target = $region49
  $region48: #{dagct_bls_forward.1} parent=0 // pred_region
    _
  $region49: #{dagct_bls_forward.1} parent=0 // pred_fallthru
    _
  // Predicated region
  $region50: #{dagct_bls_forward.1} parent=0 // pred_check
    _
  $region51: #{dagct_bls_forward.1} parent=0 // pred_check_branch
    %55 = sbr.rel (0) target = $region53
  $region52: #{dagct_bls_forward.1} parent=0 // pred_region
    _
  $region53: #{dagct_bls_forward.1} parent=0 // pred_fallthru
    _
  // Predicated region
  $region54: #{dagct_bls_forward.1} parent=0 // pred_check
    _
  $region55: #{dagct_bls_forward.1} parent=0 // pred_check_branch
    %57 = sbr.rel (0) target = $region57
  $region56: #{dagct_bls_forward.1} parent=0 // pred_region
    _
  $region57: #{dagct_bls_forward.1} parent=0 // pred_fallthru
    _
  // Predicated region
  $region58: #{dagct_bls_forward.1} parent=0 // pred_check
    _
  $region59: #{dagct_bls_forward.1} parent=0 // pred_check_branch
    %59 = sbr.rel (0) target = $region61
  $region60: #{dagct_bls_forward.1} parent=0 // pred_region
    _
  $region61: #{dagct_bls_forward.1} parent=0 // pred_fallthru
    _
  // Predicated region
  $region62: #{dagct_bls_forward.1} parent=0 // pred_check
    _
  $region63: #{dagct_bls_forward.1} parent=0 // pred_check_branch
    %61 = sbr.rel (0) target = $region65
  $region64: #{dagct_bls_forward.1} parent=0 // pred_region
    _
  $region65: #{dagct_bls_forward.1} parent=0 // pred_fallthru
    _
  // Predicated region
  $region66: #{dagct_bls_forward.1} parent=0 // pred_check
    _
  $region67: #{dagct_bls_forward.1} parent=0 // pred_check_branch
    %63 = sbr.rel (0) target = $region69
  $region68: #{dagct_bls_forward.1} parent=0 // pred_region
    _
  $region69: #{dagct_bls_forward.1} parent=0 // pred_fallthru
    _
  // Predicated region
  $region70: #{dagct_bls_forward.1} parent=0 // pred_check
    _
  $region71: #{dagct_bls_forward.1} parent=0 // pred_check_branch
    %65 = sbr.rel (0) target = $region73
  $region72: #{dagct_bls_forward.1} parent=0 // pred_region
    _
  $region73: #{dagct_bls_forward.1} parent=0 // pred_fallthru
    _
  // Predicated region
  $region74: #{dagct_bls_forward.1} parent=0 // pred_check
    _
  $region75: #{dagct_bls_forward.1} parent=0 // pred_check_branch
    %67 = sbr.rel (0) target = $region77
  $region76: #{dagct_bls_forward.1} parent=0 // pred_region
    _
  $region77: #{dagct_bls_forward.1} parent=0 // pred_fallthru
    _
  // Predicated region
  $region78: #{dagct_bls_forward.1} parent=0 // pred_check
    _
  $region79: #{dagct_bls_forward.1} parent=0 // pred_check_branch
    %69 = sbr.rel (0) target = $region81
  $region80: #{dagct_bls_forward.1} parent=0 // pred_region
    _
  $region81: #{dagct_bls_forward.1} parent=0 // pred_fallthru
    _
  // Predicated region
  $region82: #{dagct_bls_forward.1} parent=0 // pred_check
    _
  $region83: #{dagct_bls_forward.1} parent=0 // pred_check_branch
    %71 = sbr.rel (0) target = $region85
  $region84: #{dagct_bls_forward.1} parent=0 // pred_region
    _
  $region85: #{dagct_bls_forward.1} parent=0 // pred_fallthru
    _
  // Predicated region
  $region86: #{dagct_bls_forward.1} parent=0 // pred_check
    _
  $region87: #{dagct_bls_forward.1} parent=0 // pred_check_branch
    %73 = sbr.rel (0) target = $region89
  $region88: #{dagct_bls_forward.1} parent=0 // pred_region
    _
  $region89: #{dagct_bls_forward.1} parent=0 // pred_fallthru
    _
  // Predicated region
  $region90: #{dagct_bls_forward.1} parent=0 // pred_check
    _
  $region91: #{dagct_bls_forward.1} parent=0 // pred_check_branch
    %75 = sbr.rel (0) target = $region93
  $region92: #{dagct_bls_forward.1} parent=0 // pred_region
    _
  $region93: #{dagct_bls_forward.1} parent=0 // pred_fallthru
    _
  %v76 = vld [vmem:[%s0] sm:$0xff]
  %v77 = vld [vmem:[%s0 + $0x8] sm:$0xff]
  %v78 = vld [vmem:[%s0 + $0x10] sm:$0xff]
  %v79 = vld [vmem:[%s0 + $0x18] sm:$0xff]
  %v80 = vld [vmem:[%s0 + $0x20] sm:$0xff]
  %v81 = vld [vmem:[%s0 + $0x28] sm:$0xff]
  %v82 = vld [vmem:[%s0 + $0x30] sm:$0xff]
  %v83 = vld [vmem:[%s0 + $0x38] sm:$0xff]
  %v84 = vld [vmem:[%s0 + $0x40] sm:$0xff]
  %v85 = vld [vmem:[%s0 + $0x48] sm:$0xff]
  %v86 = vld [vmem:[%s0 + $0x50] sm:$0xff]
  %v87 = vld [vmem:[%s0 + $0x58] sm:$0xff]
  %v88 = vld [vmem:[%s0 + $0x60] sm:$0xff]
  %v89 = vld [vmem:[%s0 + $0x68] sm:$0xff]
  %v90 = vld [vmem:[%s0 + $0x70] sm:$0xff]
  %v91 = vld [vmem:[%s0 + $0x78] sm:$0xff]
  %v92 = vld [vmem:[%s1] sm:$0xff]
  %v93 = vld [vmem:[%s1 + $0x8] sm:$0xff]
  %v94 = vld [vmem:[%s1 + $0x10] sm:$0xff]
  %v95 = vld [vmem:[%s1 + $0x18] sm:$0xff]
  %v96 = vld [vmem:[%s1 + $0x20] sm:$0xff]
  %v97 = vld [vmem:[%s1 + $0x28] sm:$0xff]
  %v98 = vld [vmem:[%s1 + $0x30] sm:$0xff]
  %v99 = vld [vmem:[%s1 + $0x38] sm:$0xff]
  %v100 = vld [vmem:[%s1 + $0x40] sm:$0xff]
  %v101 = vld [vmem:[%s1 + $0x48] sm:$0xff]
  %v102 = vld [vmem:[%s1 + $0x50] sm:$0xff]
  %v103 = vld [vmem:[%s1 + $0x58] sm:$0xff]
  %v104 = vld [vmem:[%s1 + $0x60] sm:$0xff]
  %v105 = vld [vmem:[%s1 + $0x68] sm:$0xff]
  %v106 = vld [vmem:[%s1 + $0x70] sm:$0xff]
  %v107 = vld [vmem:[%s1 + $0x78] sm:$0xff]
  %v108 = vld [vmem:[%s2] sm:$0xff]
  %v109 = vld [vmem:[%s2 + $0x8] sm:$0xff]
  %v110 = vld [vmem:[%s2 + $0x10] sm:$0xff]
  %v111 = vld [vmem:[%s2 + $0x18] sm:$0xff]
  %v112 = vld [vmem:[%s2 + $0x20] sm:$0xff]
  %v113 = vld [vmem:[%s2 + $0x28] sm:$0xff]
  %v114 = vld [vmem:[%s2 + $0x30] sm:$0xff]
  %v115 = vld [vmem:[%s2 + $0x38] sm:$0xff]
  %v116 = vld [vmem:[%s2 + $0x40] sm:$0xff]
  %v117 = vld [vmem:[%s2 + $0x48] sm:$0xff]
  %v118 = vld [vmem:[%s2 + $0x50] sm:$0xff]
  %v119 = vld [vmem:[%s2 + $0x58] sm:$0xff]
  %v120 = vld [vmem:[%s2 + $0x60] sm:$0xff]
  %v121 = vld [vmem:[%s2 + $0x68] sm:$0xff]
  %v122 = vld [vmem:[%s2 + $0x70] sm:$0xff]
  %v123 = vld [vmem:[%s2 + $0x78] sm:$0xff]
  %124 = vmatpush.msra.mxu0 %v107
  %125 = vmatpush.msra.mxu0 %v106
  %126 = vmatpush.msra.mxu0 %v105
  %127 = vmatpush.msra.mxu0 %v104
  %128 = vmatpush.msra.mxu0 %v103
  %129 = vmatpush.msra.mxu0 %v102
  %130 = vmatpush.msra.mxu0 %v101
  %131 = vmatpush.msra.mxu0 %v100
  %132 = vmatpush.msra.mxu0 %v99
  %133 = vmatpush.msra.mxu0 %v98
  %134 = vmatpush.msra.mxu0 %v97
  %135 = vmatpush.msra.mxu0 %v96
  %136 = vmatpush.msra.mxu0 %v95
  %137 = vmatpush.msra.mxu0 %v94
  %138 = vmatpush.msra.mxu0 %v93
  %139 = vmatpush.msra.mxu0 %v92
  %140 = vmatmul.f32.gmra.mxu0 %v76
  %v141 = vpop.f32.mrf.mxu0
  %v142 = vadd.f32 %v108, %v141
  %143 = vmatmul.f32.gmra.mxu0 %v77
  %v144 = vpop.f32.mrf.mxu0
  %v145 = vadd.f32 %v109, %v144
  %146 = vmatmul.f32.gmra.mxu0 %v78
  %v147 = vpop.f32.mrf.mxu0
  %v148 = vadd.f32 %v110, %v147
  %149 = vmatmul.f32.gmra.mxu0 %v79
  %v150 = vpop.f32.mrf.mxu0
  %v151 = vadd.f32 %v111, %v150
  %152 = vmatmul.f32.gmra.mxu0 %v80
  %v153 = vpop.f32.mrf.mxu0
  %v154 = vadd.f32 %v112, %v153
  %155 = vmatmul.f32.gmra.mxu0 %v81
  %v156 = vpop.f32.mrf.mxu0
  %v157 = vadd.f32 %v113, %v156
  %158 = vmatmul.f32.gmra.mxu0 %v82
  %v159 = vpop.f32.mrf.mxu0
  %v160 = vadd.f32 %v114, %v159
  %161 = vmatmul.f32.gmra.mxu0 %v83
  %v162 = vpop.f32.mrf.mxu0
  %v163 = vadd.f32 %v115, %v162
  %164 = vmatmul.f32.gmra.mxu0 %v84
  %v165 = vpop.f32.mrf.mxu0
  %v166 = vadd.f32 %v116, %v165
  %167 = vmatmul.f32.gmra.mxu0 %v85
  %v168 = vpop.f32.mrf.mxu0
  %v169 = vadd.f32 %v117, %v168
  %170 = vmatmul.f32.gmra.mxu0 %v86
  %v171 = vpop.f32.mrf.mxu0
  %v172 = vadd.f32 %v118, %v171
  %173 = vmatmul.f32.gmra.mxu0 %v87
  %v174 = vpop.f32.mrf.mxu0
  %v175 = vadd.f32 %v119, %v174
  %176 = vmatmul.f32.gmra.mxu0 %v88
  %v177 = vpop.f32.mrf.mxu0
  %v178 = vadd.f32 %v120, %v177
  %179 = vmatmul.f32.gmra.mxu0 %v89
  %v180 = vpop.f32.mrf.mxu0
  %v181 = vadd.f32 %v121, %v180
  %182 = vmatmul.f32.gmra.mxu0 %v90
  %v183 = vpop.f32.mrf.mxu0
  %v184 = vadd.f32 %v122, %v183
  %185 = vmatmul.f32.gmra.mxu0 %v91
  %v186 = vpop.f32.mrf.mxu0
  %v187 = vadd.f32 %v123, %v186
  %188 = vdwg.mxu0
  %v189 = vld [vmem:[%s3] sm:$0xff]
  %v190 = vld [vmem:[%s3 + $0x8] sm:$0xff]
  %v191 = vld [vmem:[%s3 + $0x10] sm:$0xff]
  %v192 = vld [vmem:[%s3 + $0x18] sm:$0xff]
  %v193 = vld [vmem:[%s4] sm:$0x1]
  %v195 = vperm.slane %v193, 0
  %vm197 = vcmask 261120
  %v199 = vsel %vm197, %v142, 0
  %v202 = vsel %vm197, %v145, 0
  %v205 = vsel %vm197, %v148, 0
  %v208 = vsel %vm197, %v151, 0
  %v211 = vsel %vm197, %v154, 0
  %v214 = vsel %vm197, %v157, 0
  %v217 = vsel %vm197, %v160, 0
  %v220 = vsel %vm197, %v163, 0
  %v223 = vsel %vm197, %v166, 0
  %v226 = vsel %vm197, %v169, 0
  %v229 = vsel %vm197, %v172, 0
  %v232 = vsel %vm197, %v175, 0
  %v235 = vsel %vm197, %v178, 0
  %v238 = vsel %vm197, %v181, 0
  %v241 = vsel %vm197, %v184, 0
  %v244 = vsel %vm197, %v187, 0
  %246 = vmatpush.msra.mxu0 0.0
  %247 = vmatpush.msra.mxu0 0.0
  %248 = vmatpush.msra.mxu0 0.0
  %249 = vmatpush.msra.mxu0 0.0
  %250 = vmatpush.msra.mxu0 0.0
  %251 = vmatpush.msra.mxu0 0.0
  %252 = vmatpush.msra.mxu0 0.0
  %253 = vmatpush.msra.mxu0 0.0
  %254 = vmatpush.msra.mxu0 0.0
  %255 = vmatpush.msra.mxu0 0.0
  %256 = vmatpush.msra.mxu0 0.0
  %257 = vmatpush.msra.mxu0 0.0
  %258 = vmatpush.msra.mxu0 %v192
  %259 = vmatpush.msra.mxu0 %v191
  %260 = vmatpush.msra.mxu0 %v190
  %261 = vmatpush.msra.mxu0 %v189
  %262 = vmatmul.f32.gmra.mxu0 %v199
  %v263 = vpop.f32.mrf.mxu0
  %v264 = vadd.f32 %v195, %v263
  %265 = vmatmul.f32.gmra.mxu0 %v202
  %v266 = vpop.f32.mrf.mxu0
  %v267 = vadd.f32 %v195, %v266
  %268 = vmatmul.f32.gmra.mxu0 %v205
  %v269 = vpop.f32.mrf.mxu0
  %v270 = vadd.f32 %v195, %v269
  %271 = vmatmul.f32.gmra.mxu0 %v208
  %v272 = vpop.f32.mrf.mxu0
  %v273 = vadd.f32 %v195, %v272
  %274 = vmatmul.f32.gmra.mxu0 %v211
  %v275 = vpop.f32.mrf.mxu0
  %v276 = vadd.f32 %v195, %v275
  %277 = vmatmul.f32.gmra.mxu0 %v214
  %v278 = vpop.f32.mrf.mxu0
  %v279 = vadd.f32 %v195, %v278
  %280 = vmatmul.f32.gmra.mxu0 %v217
  %v281 = vpop.f32.mrf.mxu0
  %v282 = vadd.f32 %v195, %v281
  %283 = vmatmul.f32.gmra.mxu0 %v220
  %v284 = vpop.f32.mrf.mxu0
  %v285 = vadd.f32 %v195, %v284
  %286 = vmatmul.f32.gmra.mxu0 %v223
  %v287 = vpop.f32.mrf.mxu0
  %v288 = vadd.f32 %v195, %v287
  %289 = vmatmul.f32.gmra.mxu0 %v226
  %v290 = vpop.f32.mrf.mxu0
  %v291 = vadd.f32 %v195, %v290
  %292 = vmatmul.f32.gmra.mxu0 %v229
  %v293 = vpop.f32.mrf.mxu0
  %v294 = vadd.f32 %v195, %v293
  %295 = vmatmul.f32.gmra.mxu0 %v232
  %v296 = vpop.f32.mrf.mxu0
  %v297 = vadd.f32 %v195, %v296
  %298 = vmatmul.f32.gmra.mxu0 %v235
  %v299 = vpop.f32.mrf.mxu0
  %v300 = vadd.f32 %v195, %v299
  %301 = vmatmul.f32.gmra.mxu0 %v238
  %v302 = vpop.f32.mrf.mxu0
  %v303 = vadd.f32 %v195, %v302
  %304 = vmatmul.f32.gmra.mxu0 %v241
  %v305 = vpop.f32.mrf.mxu0
  %v306 = vadd.f32 %v195, %v305
  %307 = vmatmul.f32.gmra.mxu0 %v244
  %v308 = vpop.f32.mrf.mxu0
  %v309 = vadd.f32 %v195, %v308
  %310 = vdwg.mxu0
  %v311 = vld [vmem:[%s5] sm:$0xff]
  %v312 = vld [vmem:[%s5 + $0x8] sm:$0xff]
  %v313 = vld [vmem:[%s5 + $0x10] sm:$0xff]
  %v314 = vld [vmem:[%s5 + $0x18] sm:$0xff]
  %v315 = vld [vmem:[%s6] sm:$0x1]
  %v317 = vperm.slane %v315, 0
  %319 = vmatpush.msra.mxu0 0.0
  %320 = vmatpush.msra.mxu0 0.0
  %321 = vmatpush.msra.mxu0 0.0
  %322 = vmatpush.msra.mxu0 0.0
  %323 = vmatpush.msra.mxu0 0.0
  %324 = vmatpush.msra.mxu0 0.0
  %325 = vmatpush.msra.mxu0 0.0
  %326 = vmatpush.msra.mxu0 0.0
  %327 = vmatpush.msra.mxu0 0.0
  %328 = vmatpush.msra.mxu0 0.0
  %329 = vmatpush.msra.mxu0 0.0
  %330 = vmatpush.msra.mxu0 0.0
  %331 = vmatpush.msra.mxu0 %v314
  %332 = vmatpush.msra.mxu0 %v313
  %333 = vmatpush.msra.mxu0 %v312
  %334 = vmatpush.msra.mxu0 %v311
  %335 = vmatmul.f32.gmra.mxu0 %v199
  %v336 = vpop.f32.mrf.mxu0
  %v337 = vadd.f32 %v317, %v336
  %338 = vmatmul.f32.gmra.mxu0 %v202
  %v339 = vpop.f32.mrf.mxu0
  %v340 = vadd.f32 %v317, %v339
  %341 = vmatmul.f32.gmra.mxu0 %v205
  %v342 = vpop.f32.mrf.mxu0
  %v343 = vadd.f32 %v317, %v342
  %344 = vmatmul.f32.gmra.mxu0 %v208
  %v345 = vpop.f32.mrf.mxu0
  %v346 = vadd.f32 %v317, %v345
  %347 = vmatmul.f32.gmra.mxu0 %v211
  %v348 = vpop.f32.mrf.mxu0
  %v349 = vadd.f32 %v317, %v348
  %350 = vmatmul.f32.gmra.mxu0 %v214
  %v351 = vpop.f32.mrf.mxu0
  %v352 = vadd.f32 %v317, %v351
  %353 = vmatmul.f32.gmra.mxu0 %v217
  %v354 = vpop.f32.mrf.mxu0
  %v355 = vadd.f32 %v317, %v354
  %356 = vmatmul.f32.gmra.mxu0 %v220
  %v357 = vpop.f32.mrf.mxu0
  %v358 = vadd.f32 %v317, %v357
  %359 = vmatmul.f32.gmra.mxu0 %v223
  %v360 = vpop.f32.mrf.mxu0
  %v361 = vadd.f32 %v317, %v360
  %362 = vmatmul.f32.gmra.mxu0 %v226
  %v363 = vpop.f32.mrf.mxu0
  %v364 = vadd.f32 %v317, %v363
  %365 = vmatmul.f32.gmra.mxu0 %v229
  %v366 = vpop.f32.mrf.mxu0
  %v367 = vadd.f32 %v317, %v366
  %368 = vmatmul.f32.gmra.mxu0 %v232
  %v369 = vpop.f32.mrf.mxu0
  %v370 = vadd.f32 %v317, %v369
  %371 = vmatmul.f32.gmra.mxu0 %v235
  %v372 = vpop.f32.mrf.mxu0
  %v373 = vadd.f32 %v317, %v372
  %374 = vmatmul.f32.gmra.mxu0 %v238
  %v375 = vpop.f32.mrf.mxu0
  %v376 = vadd.f32 %v317, %v375
  %377 = vmatmul.f32.gmra.mxu0 %v241
  %v378 = vpop.f32.mrf.mxu0
  %v379 = vadd.f32 %v317, %v378
  %380 = vmatmul.f32.gmra.mxu0 %v244
  %v381 = vpop.f32.mrf.mxu0
  %v382 = vadd.f32 %v317, %v381
  %383 = vdwg.mxu0
  %v384 = vld [vmem:[%s7] sm:$0xff]
  %v385 = vld [vmem:[%s7 + $0x8] sm:$0xff]
  %v386 = vld [vmem:[%s7 + $0x10] sm:$0xff]
  %v387 = vld [vmem:[%s7 + $0x18] sm:$0xff]
  %v388 = vld [vmem:[%s8] sm:$0x1]
  %v390 = vperm.slane %v388, 0
  %392 = vmatpush.msra.mxu0 0.0
  %393 = vmatpush.msra.mxu0 0.0
  %394 = vmatpush.msra.mxu0 0.0
  %395 = vmatpush.msra.mxu0 0.0
  %396 = vmatpush.msra.mxu0 0.0
  %397 = vmatpush.msra.mxu0 0.0
  %398 = vmatpush.msra.mxu0 0.0
  %399 = vmatpush.msra.mxu0 0.0
  %400 = vmatpush.msra.mxu0 0.0
  %401 = vmatpush.msra.mxu0 0.0
  %402 = vmatpush.msra.mxu0 0.0
  %403 = vmatpush.msra.mxu0 0.0
  %404 = vmatpush.msra.mxu0 %v387
  %405 = vmatpush.msra.mxu0 %v386
  %406 = vmatpush.msra.mxu0 %v385
  %407 = vmatpush.msra.mxu0 %v384
  %408 = vmatmul.f32.gmra.mxu0 %v199
  %v409 = vpop.f32.mrf.mxu0
  %v410 = vadd.f32 %v390, %v409
  %411 = vmatmul.f32.gmra.mxu0 %v202
  %v412 = vpop.f32.mrf.mxu0
  %v413 = vadd.f32 %v390, %v412
  %414 = vmatmul.f32.gmra.mxu0 %v205
  %v415 = vpop.f32.mrf.mxu0
  %v416 = vadd.f32 %v390, %v415
  %417 = vmatmul.f32.gmra.mxu0 %v208
  %v418 = vpop.f32.mrf.mxu0
  %v419 = vadd.f32 %v390, %v418
  %420 = vmatmul.f32.gmra.mxu0 %v211
  %v421 = vpop.f32.mrf.mxu0
  %v422 = vadd.f32 %v390, %v421
  %423 = vmatmul.f32.gmra.mxu0 %v214
  %v424 = vpop.f32.mrf.mxu0
  %v425 = vadd.f32 %v390, %v424
  %426 = vmatmul.f32.gmra.mxu0 %v217
  %v427 = vpop.f32.mrf.mxu0
  %v428 = vadd.f32 %v390, %v427
  %429 = vmatmul.f32.gmra.mxu0 %v220
  %v430 = vpop.f32.mrf.mxu0
  %v431 = vadd.f32 %v390, %v430
  %432 = vmatmul.f32.gmra.mxu0 %v223
  %v433 = vpop.f32.mrf.mxu0
  %v434 = vadd.f32 %v390, %v433
  %435 = vmatmul.f32.gmra.mxu0 %v226
  %v436 = vpop.f32.mrf.mxu0
  %v437 = vadd.f32 %v390, %v436
  %438 = vmatmul.f32.gmra.mxu0 %v229
  %v439 = vpop.f32.mrf.mxu0
  %v440 = vadd.f32 %v390, %v439
  %441 = vmatmul.f32.gmra.mxu0 %v232
  %v442 = vpop.f32.mrf.mxu0
  %v443 = vadd.f32 %v390, %v442
  %444 = vmatmul.f32.gmra.mxu0 %v235
  %v445 = vpop.f32.mrf.mxu0
  %v446 = vadd.f32 %v390, %v445
  %447 = vmatmul.f32.gmra.mxu0 %v238
  %v448 = vpop.f32.mrf.mxu0
  %v449 = vadd.f32 %v390, %v448
  %450 = vmatmul.f32.gmra.mxu0 %v241
  %v451 = vpop.f32.mrf.mxu0
  %v452 = vadd.f32 %v390, %v451
  %453 = vmatmul.f32.gmra.mxu0 %v244
  %v454 = vpop.f32.mrf.mxu0
  %v455 = vadd.f32 %v390, %v454
  %456 = vdwg.mxu0
  %vm457 = vcmask 64512
  %v459 = vsel %vm457, %v264, 0
  %v462 = vsel %vm457, %v337, 0
  %464 = vmatpush.xpose.msra.mxu0 0.0
  %465 = vmatpush.xpose.msra.mxu0 0.0
  %466 = vmatpush.xpose.msra.mxu0 0.0
  %467 = vmatpush.xpose.msra.mxu0 0.0
  %468 = vmatpush.xpose.msra.mxu0 0.0
  %469 = vmatpush.xpose.msra.mxu0 0.0
  %470 = vmatpush.xpose.msra.mxu0 0.0
  %471 = vmatpush.xpose.msra.mxu0 0.0
  %472 = vmatpush.xpose.msra.mxu0 0.0
  %473 = vmatpush.xpose.msra.mxu0 0.0
  %474 = vmatpush.xpose.msra.mxu0 0.0
  %475 = vmatpush.xpose.msra.mxu0 0.0
  %476 = vmatpush.xpose.msra.mxu0 0.0
  %477 = vmatpush.xpose.msra.mxu0 0.0
  %478 = vmatpush.xpose.msra.mxu0 0.0
  %479 = vmatpush.xpose.msra.mxu0 %v462
  %480 = vmatmul.f32.gmra.mxu0 %v459
  %v481 = vpop.f32.mrf.mxu0
  %v482 = vadd.f32 0.0, %v481
  %483 = vdwg.mxu0
  %v485 = vsel %vm457, %v267, 0
  %v488 = vsel %vm457, %v340, 0
  %490 = vmatpush.xpose.msra.mxu0 0.0
  %491 = vmatpush.xpose.msra.mxu0 0.0
  %492 = vmatpush.xpose.msra.mxu0 0.0
  %493 = vmatpush.xpose.msra.mxu0 0.0
  %494 = vmatpush.xpose.msra.mxu0 0.0
  %495 = vmatpush.xpose.msra.mxu0 0.0
  %496 = vmatpush.xpose.msra.mxu0 0.0
  %497 = vmatpush.xpose.msra.mxu0 0.0
  %498 = vmatpush.xpose.msra.mxu0 0.0
  %499 = vmatpush.xpose.msra.mxu0 0.0
  %500 = vmatpush.xpose.msra.mxu0 0.0
  %501 = vmatpush.xpose.msra.mxu0 0.0
  %502 = vmatpush.xpose.msra.mxu0 0.0
  %503 = vmatpush.xpose.msra.mxu0 0.0
  %504 = vmatpush.xpose.msra.mxu0 0.0
  %505 = vmatpush.xpose.msra.mxu0 %v488
  %506 = vmatmul.f32.gmra.mxu0 %v485
  %v507 = vpop.f32.mrf.mxu0
  %v508 = vadd.f32 0.0, %v507
  %509 = vdwg.mxu0
  %v511 = vsel %vm457, %v270, 0
  %v514 = vsel %vm457, %v343, 0
  %516 = vmatpush.xpose.msra.mxu0 0.0
  %517 = vmatpush.xpose.msra.mxu0 0.0
  %518 = vmatpush.xpose.msra.mxu0 0.0
  %519 = vmatpush.xpose.msra.mxu0 0.0
  %520 = vmatpush.xpose.msra.mxu0 0.0
  %521 = vmatpush.xpose.msra.mxu0 0.0
  %522 = vmatpush.xpose.msra.mxu0 0.0
  %523 = vmatpush.xpose.msra.mxu0 0.0
  %524 = vmatpush.xpose.msra.mxu0 0.0
  %525 = vmatpush.xpose.msra.mxu0 0.0
  %526 = vmatpush.xpose.msra.mxu0 0.0
  %527 = vmatpush.xpose.msra.mxu0 0.0
  %528 = vmatpush.xpose.msra.mxu0 0.0
  %529 = vmatpush.xpose.msra.mxu0 0.0
  %530 = vmatpush.xpose.msra.mxu0 0.0
  %531 = vmatpush.xpose.msra.mxu0 %v514
  %532 = vmatmul.f32.gmra.mxu0 %v511
  %v533 = vpop.f32.mrf.mxu0
  %v534 = vadd.f32 0.0, %v533
  %535 = vdwg.mxu0
  %v537 = vsel %vm457, %v273, 0
  %v540 = vsel %vm457, %v346, 0
  %542 = vmatpush.xpose.msra.mxu0 0.0
  %543 = vmatpush.xpose.msra.mxu0 0.0
  %544 = vmatpush.xpose.msra.mxu0 0.0
  %545 = vmatpush.xpose.msra.mxu0 0.0
  %546 = vmatpush.xpose.msra.mxu0 0.0
  %547 = vmatpush.xpose.msra.mxu0 0.0
  %548 = vmatpush.xpose.msra.mxu0 0.0
  %549 = vmatpush.xpose.msra.mxu0 0.0
  %550 = vmatpush.xpose.msra.mxu0 0.0
  %551 = vmatpush.xpose.msra.mxu0 0.0
  %552 = vmatpush.xpose.msra.mxu0 0.0
  %553 = vmatpush.xpose.msra.mxu0 0.0
  %554 = vmatpush.xpose.msra.mxu0 0.0
  %555 = vmatpush.xpose.msra.mxu0 0.0
  %556 = vmatpush.xpose.msra.mxu0 0.0
  %557 = vmatpush.xpose.msra.mxu0 %v540
  %558 = vmatmul.f32.gmra.mxu0 %v537
  %v559 = vpop.f32.mrf.mxu0
  %v560 = vadd.f32 0.0, %v559
  %561 = vdwg.mxu0
  %v563 = vsel %vm457, %v276, 0
  %v566 = vsel %vm457, %v349, 0
  %568 = vmatpush.xpose.msra.mxu0 0.0
  %569 = vmatpush.xpose.msra.mxu0 0.0
  %570 = vmatpush.xpose.msra.mxu0 0.0
  %571 = vmatpush.xpose.msra.mxu0 0.0
  %572 = vmatpush.xpose.msra.mxu0 0.0
  %573 = vmatpush.xpose.msra.mxu0 0.0
  %574 = vmatpush.xpose.msra.mxu0 0.0
  %575 = vmatpush.xpose.msra.mxu0 0.0
  %576 = vmatpush.xpose.msra.mxu0 0.0
  %577 = vmatpush.xpose.msra.mxu0 0.0
  %578 = vmatpush.xpose.msra.mxu0 0.0
  %579 = vmatpush.xpose.msra.mxu0 0.0
  %580 = vmatpush.xpose.msra.mxu0 0.0
  %581 = vmatpush.xpose.msra.mxu0 0.0
  %582 = vmatpush.xpose.msra.mxu0 0.0
  %583 = vmatpush.xpose.msra.mxu0 %v566
  %584 = vmatmul.f32.gmra.mxu0 %v563
  %v585 = vpop.f32.mrf.mxu0
  %v586 = vadd.f32 0.0, %v585
  %587 = vdwg.mxu0
  %v589 = vsel %vm457, %v279, 0
  %v592 = vsel %vm457, %v352, 0
  %594 = vmatpush.xpose.msra.mxu0 0.0
  %595 = vmatpush.xpose.msra.mxu0 0.0
  %596 = vmatpush.xpose.msra.mxu0 0.0
  %597 = vmatpush.xpose.msra.mxu0 0.0
  %598 = vmatpush.xpose.msra.mxu0 0.0
  %599 = vmatpush.xpose.msra.mxu0 0.0
  %600 = vmatpush.xpose.msra.mxu0 0.0
  %601 = vmatpush.xpose.msra.mxu0 0.0
  %602 = vmatpush.xpose.msra.mxu0 0.0
  %603 = vmatpush.xpose.msra.mxu0 0.0
  %604 = vmatpush.xpose.msra.mxu0 0.0
  %605 = vmatpush.xpose.msra.mxu0 0.0
  %606 = vmatpush.xpose.msra.mxu0 0.0
  %607 = vmatpush.xpose.msra.mxu0 0.0
  %608 = vmatpush.xpose.msra.mxu0 0.0
  %609 = vmatpush.xpose.msra.mxu0 %v592
  %610 = vmatmul.f32.gmra.mxu0 %v589
  %v611 = vpop.f32.mrf.mxu0
  %v612 = vadd.f32 0.0, %v611
  %613 = vdwg.mxu0
  %v615 = vsel %vm457, %v282, 0
  %v618 = vsel %vm457, %v355, 0
  %620 = vmatpush.xpose.msra.mxu0 0.0
  %621 = vmatpush.xpose.msra.mxu0 0.0
  %622 = vmatpush.xpose.msra.mxu0 0.0
  %623 = vmatpush.xpose.msra.mxu0 0.0
  %624 = vmatpush.xpose.msra.mxu0 0.0
  %625 = vmatpush.xpose.msra.mxu0 0.0
  %626 = vmatpush.xpose.msra.mxu0 0.0
  %627 = vmatpush.xpose.msra.mxu0 0.0
  %628 = vmatpush.xpose.msra.mxu0 0.0
  %629 = vmatpush.xpose.msra.mxu0 0.0
  %630 = vmatpush.xpose.msra.mxu0 0.0
  %631 = vmatpush.xpose.msra.mxu0 0.0
  %632 = vmatpush.xpose.msra.mxu0 0.0
  %633 = vmatpush.xpose.msra.mxu0 0.0
  %634 = vmatpush.xpose.msra.mxu0 0.0
  %635 = vmatpush.xpose.msra.mxu0 %v618
  %636 = vmatmul.f32.gmra.mxu0 %v615
  %v637 = vpop.f32.mrf.mxu0
  %v638 = vadd.f32 0.0, %v637
  %639 = vdwg.mxu0
  %v641 = vsel %vm457, %v285, 0
  %v644 = vsel %vm457, %v358, 0
  %646 = vmatpush.xpose.msra.mxu0 0.0
  %647 = vmatpush.xpose.msra.mxu0 0.0
  %648 = vmatpush.xpose.msra.mxu0 0.0
  %649 = vmatpush.xpose.msra.mxu0 0.0
  %650 = vmatpush.xpose.msra.mxu0 0.0
  %651 = vmatpush.xpose.msra.mxu0 0.0
  %652 = vmatpush.xpose.msra.mxu0 0.0
  %653 = vmatpush.xpose.msra.mxu0 0.0
  %654 = vmatpush.xpose.msra.mxu0 0.0
  %655 = vmatpush.xpose.msra.mxu0 0.0
  %656 = vmatpush.xpose.msra.mxu0 0.0
  %657 = vmatpush.xpose.msra.mxu0 0.0
  %658 = vmatpush.xpose.msra.mxu0 0.0
  %659 = vmatpush.xpose.msra.mxu0 0.0
  %660 = vmatpush.xpose.msra.mxu0 0.0
  %661 = vmatpush.xpose.msra.mxu0 %v644
  %662 = vmatmul.f32.gmra.mxu0 %v641
  %v663 = vpop.f32.mrf.mxu0
  %v664 = vadd.f32 0.0, %v663
  %665 = vdwg.mxu0
  %v667 = vsel %vm457, %v288, 0
  %v670 = vsel %vm457, %v361, 0
  %672 = vmatpush.xpose.msra.mxu0 0.0
  %673 = vmatpush.xpose.msra.mxu0 0.0
  %674 = vmatpush.xpose.msra.mxu0 0.0
  %675 = vmatpush.xpose.msra.mxu0 0.0
  %676 = vmatpush.xpose.msra.mxu0 0.0
  %677 = vmatpush.xpose.msra.mxu0 0.0
  %678 = vmatpush.xpose.msra.mxu0 0.0
  %679 = vmatpush.xpose.msra.mxu0 0.0
  %680 = vmatpush.xpose.msra.mxu0 0.0
  %681 = vmatpush.xpose.msra.mxu0 0.0
  %682 = vmatpush.xpose.msra.mxu0 0.0
  %683 = vmatpush.xpose.msra.mxu0 0.0
  %684 = vmatpush.xpose.msra.mxu0 0.0
  %685 = vmatpush.xpose.msra.mxu0 0.0
  %686 = vmatpush.xpose.msra.mxu0 0.0
  %687 = vmatpush.xpose.msra.mxu0 %v670
  %688 = vmatmul.f32.gmra.mxu0 %v667
  %v689 = vpop.f32.mrf.mxu0
  %v690 = vadd.f32 0.0, %v689
  %691 = vdwg.mxu0
  %v693 = vsel %vm457, %v291, 0
  %v696 = vsel %vm457, %v364, 0
  %698 = vmatpush.xpose.msra.mxu0 0.0
  %699 = vmatpush.xpose.msra.mxu0 0.0
  %700 = vmatpush.xpose.msra.mxu0 0.0
  %701 = vmatpush.xpose.msra.mxu0 0.0
  %702 = vmatpush.xpose.msra.mxu0 0.0
  %703 = vmatpush.xpose.msra.mxu0 0.0
  %704 = vmatpush.xpose.msra.mxu0 0.0
  %705 = vmatpush.xpose.msra.mxu0 0.0
  %706 = vmatpush.xpose.msra.mxu0 0.0
  %707 = vmatpush.xpose.msra.mxu0 0.0
  %708 = vmatpush.xpose.msra.mxu0 0.0
  %709 = vmatpush.xpose.msra.mxu0 0.0
  %710 = vmatpush.xpose.msra.mxu0 0.0
  %711 = vmatpush.xpose.msra.mxu0 0.0
  %712 = vmatpush.xpose.msra.mxu0 0.0
  %713 = vmatpush.xpose.msra.mxu0 %v696
  %714 = vmatmul.f32.gmra.mxu0 %v693
  %v715 = vpop.f32.mrf.mxu0
  %v716 = vadd.f32 0.0, %v715
  %717 = vdwg.mxu0
  %v719 = vsel %vm457, %v294, 0
  %v722 = vsel %vm457, %v367, 0
  %724 = vmatpush.xpose.msra.mxu0 0.0
  %725 = vmatpush.xpose.msra.mxu0 0.0
  %726 = vmatpush.xpose.msra.mxu0 0.0
  %727 = vmatpush.xpose.msra.mxu0 0.0
  %728 = vmatpush.xpose.msra.mxu0 0.0
  %729 = vmatpush.xpose.msra.mxu0 0.0
  %730 = vmatpush.xpose.msra.mxu0 0.0
  %731 = vmatpush.xpose.msra.mxu0 0.0
  %732 = vmatpush.xpose.msra.mxu0 0.0
  %733 = vmatpush.xpose.msra.mxu0 0.0
  %734 = vmatpush.xpose.msra.mxu0 0.0
  %735 = vmatpush.xpose.msra.mxu0 0.0
  %736 = vmatpush.xpose.msra.mxu0 0.0
  %737 = vmatpush.xpose.msra.mxu0 0.0
  %738 = vmatpush.xpose.msra.mxu0 0.0
  %739 = vmatpush.xpose.msra.mxu0 %v722
  %740 = vmatmul.f32.gmra.mxu0 %v719
  %v741 = vpop.f32.mrf.mxu0
  %v742 = vadd.f32 0.0, %v741
  %743 = vdwg.mxu0
  %v745 = vsel %vm457, %v297, 0
  %v748 = vsel %vm457, %v370, 0
  %750 = vmatpush.xpose.msra.mxu0 0.0
  %751 = vmatpush.xpose.msra.mxu0 0.0
  %752 = vmatpush.xpose.msra.mxu0 0.0
  %753 = vmatpush.xpose.msra.mxu0 0.0
  %754 = vmatpush.xpose.msra.mxu0 0.0
  %755 = vmatpush.xpose.msra.mxu0 0.0
  %756 = vmatpush.xpose.msra.mxu0 0.0
  %757 = vmatpush.xpose.msra.mxu0 0.0
  %758 = vmatpush.xpose.msra.mxu0 0.0
  %759 = vmatpush.xpose.msra.mxu0 0.0
  %760 = vmatpush.xpose.msra.mxu0 0.0
  %761 = vmatpush.xpose.msra.mxu0 0.0
  %762 = vmatpush.xpose.msra.mxu0 0.0
  %763 = vmatpush.xpose.msra.mxu0 0.0
  %764 = vmatpush.xpose.msra.mxu0 0.0
  %765 = vmatpush.xpose.msra.mxu0 %v748
  %766 = vmatmul.f32.gmra.mxu0 %v745
  %v767 = vpop.f32.mrf.mxu0
  %v768 = vadd.f32 0.0, %v767
  %769 = vdwg.mxu0
  %v771 = vsel %vm457, %v300, 0
  %v774 = vsel %vm457, %v373, 0
  %776 = vmatpush.xpose.msra.mxu0 0.0
  %777 = vmatpush.xpose.msra.mxu0 0.0
  %778 = vmatpush.xpose.msra.mxu0 0.0
  %779 = vmatpush.xpose.msra.mxu0 0.0
  %780 = vmatpush.xpose.msra.mxu0 0.0
  %781 = vmatpush.xpose.msra.mxu0 0.0
  %782 = vmatpush.xpose.msra.mxu0 0.0
  %783 = vmatpush.xpose.msra.mxu0 0.0
  %784 = vmatpush.xpose.msra.mxu0 0.0
  %785 = vmatpush.xpose.msra.mxu0 0.0
  %786 = vmatpush.xpose.msra.mxu0 0.0
  %787 = vmatpush.xpose.msra.mxu0 0.0
  %788 = vmatpush.xpose.msra.mxu0 0.0
  %789 = vmatpush.xpose.msra.mxu0 0.0
  %790 = vmatpush.xpose.msra.mxu0 0.0
  %791 = vmatpush.xpose.msra.mxu0 %v774
  %792 = vmatmul.f32.gmra.mxu0 %v771
  %v793 = vpop.f32.mrf.mxu0
  %v794 = vadd.f32 0.0, %v793
  %795 = vdwg.mxu0
  %v797 = vsel %vm457, %v303, 0
  %v800 = vsel %vm457, %v376, 0
  %802 = vmatpush.xpose.msra.mxu0 0.0
  %803 = vmatpush.xpose.msra.mxu0 0.0
  %804 = vmatpush.xpose.msra.mxu0 0.0
  %805 = vmatpush.xpose.msra.mxu0 0.0
  %806 = vmatpush.xpose.msra.mxu0 0.0
  %807 = vmatpush.xpose.msra.mxu0 0.0
  %808 = vmatpush.xpose.msra.mxu0 0.0
  %809 = vmatpush.xpose.msra.mxu0 0.0
  %810 = vmatpush.xpose.msra.mxu0 0.0
  %811 = vmatpush.xpose.msra.mxu0 0.0
  %812 = vmatpush.xpose.msra.mxu0 0.0
  %813 = vmatpush.xpose.msra.mxu0 0.0
  %814 = vmatpush.xpose.msra.mxu0 0.0
  %815 = vmatpush.xpose.msra.mxu0 0.0
  %816 = vmatpush.xpose.msra.mxu0 0.0
  %817 = vmatpush.xpose.msra.mxu0 %v800
  %818 = vmatmul.f32.gmra.mxu0 %v797
  %v819 = vpop.f32.mrf.mxu0
  %v820 = vadd.f32 0.0, %v819
  %821 = vdwg.mxu0
  %v823 = vsel %vm457, %v306, 0
  %v826 = vsel %vm457, %v379, 0
  %828 = vmatpush.xpose.msra.mxu0 0.0
  %829 = vmatpush.xpose.msra.mxu0 0.0
  %830 = vmatpush.xpose.msra.mxu0 0.0
  %831 = vmatpush.xpose.msra.mxu0 0.0
  %832 = vmatpush.xpose.msra.mxu0 0.0
  %833 = vmatpush.xpose.msra.mxu0 0.0
  %834 = vmatpush.xpose.msra.mxu0 0.0
  %835 = vmatpush.xpose.msra.mxu0 0.0
  %836 = vmatpush.xpose.msra.mxu0 0.0
  %837 = vmatpush.xpose.msra.mxu0 0.0
  %838 = vmatpush.xpose.msra.mxu0 0.0
  %839 = vmatpush.xpose.msra.mxu0 0.0
  %840 = vmatpush.xpose.msra.mxu0 0.0
  %841 = vmatpush.xpose.msra.mxu0 0.0
  %842 = vmatpush.xpose.msra.mxu0 0.0
  %843 = vmatpush.xpose.msra.mxu0 %v826
  %844 = vmatmul.f32.gmra.mxu0 %v823
  %v845 = vpop.f32.mrf.mxu0
  %v846 = vadd.f32 0.0, %v845
  %847 = vdwg.mxu0
  %v849 = vsel %vm457, %v309, 0
  %v852 = vsel %vm457, %v382, 0
  %854 = vmatpush.xpose.msra.mxu0 0.0
  %855 = vmatpush.xpose.msra.mxu0 0.0
  %856 = vmatpush.xpose.msra.mxu0 0.0
  %857 = vmatpush.xpose.msra.mxu0 0.0
  %858 = vmatpush.xpose.msra.mxu0 0.0
  %859 = vmatpush.xpose.msra.mxu0 0.0
  %860 = vmatpush.xpose.msra.mxu0 0.0
  %861 = vmatpush.xpose.msra.mxu0 0.0
  %862 = vmatpush.xpose.msra.mxu0 0.0
  %863 = vmatpush.xpose.msra.mxu0 0.0
  %864 = vmatpush.xpose.msra.mxu0 0.0
  %865 = vmatpush.xpose.msra.mxu0 0.0
  %866 = vmatpush.xpose.msra.mxu0 0.0
  %867 = vmatpush.xpose.msra.mxu0 0.0
  %868 = vmatpush.xpose.msra.mxu0 0.0
  %869 = vmatpush.xpose.msra.mxu0 %v852
  %870 = vmatmul.f32.gmra.mxu0 %v849
  %v871 = vpop.f32.mrf.mxu0
  %v872 = vadd.f32 0.0, %v871
  %873 = vdwg.mxu0
  %v874 = vsel %vm457, %v482, -inf
  %875 = vmax.xlane.f32.xlu0 %v874
  %v876 = vpop.xlane.xlu0 %875
  %v877 = vsel %vm457, %v508, -inf
  %878 = vmax.xlane.f32.xlu0 %v877
  %v879 = vpop.xlane.xlu0 %878
  %v880 = vsel %vm457, %v534, -inf
  %881 = vmax.xlane.f32.xlu0 %v880
  %v882 = vpop.xlane.xlu0 %881
  %v883 = vsel %vm457, %v560, -inf
  %884 = vmax.xlane.f32.xlu0 %v883
  %v885 = vpop.xlane.xlu0 %884
  %v886 = vsel %vm457, %v586, -inf
  %887 = vmax.xlane.f32.xlu0 %v886
  %v888 = vpop.xlane.xlu0 %887
  %v889 = vsel %vm457, %v612, -inf
  %890 = vmax.xlane.f32.xlu0 %v889
  %v891 = vpop.xlane.xlu0 %890
  %v892 = vsel %vm457, %v638, -inf
  %893 = vmax.xlane.f32.xlu0 %v892
  %v894 = vpop.xlane.xlu0 %893
  %v895 = vsel %vm457, %v664, -inf
  %896 = vmax.xlane.f32.xlu0 %v895
  %v897 = vpop.xlane.xlu0 %896
  %v898 = vsel %vm457, %v690, -inf
  %899 = vmax.xlane.f32.xlu0 %v898
  %v900 = vpop.xlane.xlu0 %899
  %v901 = vsel %vm457, %v716, -inf
  %902 = vmax.xlane.f32.xlu0 %v901
  %v903 = vpop.xlane.xlu0 %902
  %v904 = vsel %vm457, %v742, -inf
  %905 = vmax.xlane.f32.xlu0 %v904
  %v906 = vpop.xlane.xlu0 %905
  %v907 = vsel %vm457, %v768, -inf
  %908 = vmax.xlane.f32.xlu0 %v907
  %v909 = vpop.xlane.xlu0 %908
  %v910 = vsel %vm457, %v794, -inf
  %911 = vmax.xlane.f32.xlu0 %v910
  %v912 = vpop.xlane.xlu0 %911
  %v913 = vsel %vm457, %v820, -inf
  %914 = vmax.xlane.f32.xlu0 %v913
  %v915 = vpop.xlane.xlu0 %914
  %v916 = vsel %vm457, %v846, -inf
  %917 = vmax.xlane.f32.xlu0 %v916
  %v918 = vpop.xlane.xlu0 %917
  %v919 = vsel %vm457, %v872, -inf
  %920 = vmax.xlane.f32.xlu0 %v919
  %v921 = vpop.xlane.xlu0 %920
  %v922 = vsub.f32 %v482, %v876
  %v923 = vsub.f32 %v508, %v879
  %v924 = vsub.f32 %v534, %v882
  %v925 = vsub.f32 %v560, %v885
  %v926 = vsub.f32 %v586, %v888
  %v927 = vsub.f32 %v612, %v891
  %v928 = vsub.f32 %v638, %v894
  %v929 = vsub.f32 %v664, %v897
  %v930 = vsub.f32 %v690, %v900
  %v931 = vsub.f32 %v716, %v903
  %v932 = vsub.f32 %v742, %v906
  %v933 = vsub.f32 %v768, %v909
  %v934 = vsub.f32 %v794, %v912
  %v935 = vsub.f32 %v820, %v915
  %v936 = vsub.f32 %v846, %v918
  %v937 = vsub.f32 %v872, %v921
  %v938 = vmul.f32 %v922, 1.442695
  %v939 = vpow.pop %v938
  %v940 = vmul.f32 %v923, 1.442695
  %v941 = vpow.pop %v940
  %v942 = vmul.f32 %v924, 1.442695
  %v943 = vpow.pop %v942
  %v944 = vmul.f32 %v925, 1.442695
  %v945 = vpow.pop %v944
  %v946 = vmul.f32 %v926, 1.442695
  %v947 = vpow.pop %v946
  %v948 = vmul.f32 %v927, 1.442695
  %v949 = vpow.pop %v948
  %v950 = vmul.f32 %v928, 1.442695
  %v951 = vpow.pop %v950
  %v952 = vmul.f32 %v929, 1.442695
  %v953 = vpow.pop %v952
  %v954 = vmul.f32 %v930, 1.442695
  %v955 = vpow.pop %v954
  %v956 = vmul.f32 %v931, 1.442695
  %v957 = vpow.pop %v956
  %v958 = vmul.f32 %v932, 1.442695
  %v959 = vpow.pop %v958
  %v960 = vmul.f32 %v933, 1.442695
  %v961 = vpow.pop %v960
  %v962 = vmul.f32 %v934, 1.442695
  %v963 = vpow.pop %v962
  %v964 = vmul.f32 %v935, 1.442695
  %v965 = vpow.pop %v964
  %v966 = vmul.f32 %v936, 1.442695
  %v967 = vpow.pop %v966
  %v968 = vmul.f32 %v937, 1.442695
  %v969 = vpow.pop %v968
  %v970 = vsel %vm457, %v939, 0.0
  %971 = vadd.xlane.f32.xlu0 %v970
  %v972 = vpop.xlane.xlu0 %971
  %v973 = vsel %vm457, %v941, 0.0
  %974 = vadd.xlane.f32.xlu0 %v973
  %v975 = vpop.xlane.xlu0 %974
  %v976 = vsel %vm457, %v943, 0.0
  %977 = vadd.xlane.f32.xlu0 %v976
  %v978 = vpop.xlane.xlu0 %977
  %v979 = vsel %vm457, %v945, 0.0
  %980 = vadd.xlane.f32.xlu0 %v979
  %v981 = vpop.xlane.xlu0 %980
  %v982 = vsel %vm457, %v947, 0.0
  %983 = vadd.xlane.f32.xlu0 %v982
  %v984 = vpop.xlane.xlu0 %983
  %v985 = vsel %vm457, %v949, 0.0
  %986 = vadd.xlane.f32.xlu0 %v985
  %v987 = vpop.xlane.xlu0 %986
  %v988 = vsel %vm457, %v951, 0.0
  %989 = vadd.xlane.f32.xlu0 %v988
  %v990 = vpop.xlane.xlu0 %989
  %v991 = vsel %vm457, %v953, 0.0
  %992 = vadd.xlane.f32.xlu0 %v991
  %v993 = vpop.xlane.xlu0 %992
  %v994 = vsel %vm457, %v955, 0.0
  %995 = vadd.xlane.f32.xlu0 %v994
  %v996 = vpop.xlane.xlu0 %995
  %v997 = vsel %vm457, %v957, 0.0
  %998 = vadd.xlane.f32.xlu0 %v997
  %v999 = vpop.xlane.xlu0 %998
  %v1000 = vsel %vm457, %v959, 0.0
  %1001 = vadd.xlane.f32.xlu0 %v1000
  %v1002 = vpop.xlane.xlu0 %1001
  %v1003 = vsel %vm457, %v961, 0.0
  %1004 = vadd.xlane.f32.xlu0 %v1003
  %v1005 = vpop.xlane.xlu0 %1004
  %v1006 = vsel %vm457, %v963, 0.0
  %1007 = vadd.xlane.f32.xlu0 %v1006
  %v1008 = vpop.xlane.xlu0 %1007
  %v1009 = vsel %vm457, %v965, 0.0
  %1010 = vadd.xlane.f32.xlu0 %v1009
  %v1011 = vpop.xlane.xlu0 %1010
  %v1012 = vsel %vm457, %v967, 0.0
  %1013 = vadd.xlane.f32.xlu0 %v1012
  %v1014 = vpop.xlane.xlu0 %1013
  %v1015 = vsel %vm457, %v969, 0.0
  %1016 = vadd.xlane.f32.xlu0 %v1015
  %v1017 = vpop.xlane.xlu0 %1016
  %v1018 = vrcp.pop %v972
  %v1019 = vrcp.pop %v975
  %v1020 = vrcp.pop %v978
  %v1021 = vrcp.pop %v981
  %v1022 = vrcp.pop %v984
  %v1023 = vrcp.pop %v987
  %v1024 = vrcp.pop %v990
  %v1025 = vrcp.pop %v993
  %v1026 = vrcp.pop %v996
  %v1027 = vrcp.pop %v999
  %v1028 = vrcp.pop %v1002
  %v1029 = vrcp.pop %v1005
  %v1030 = vrcp.pop %v1008
  %v1031 = vrcp.pop %v1011
  %v1032 = vrcp.pop %v1014
  %v1033 = vrcp.pop %v1017
  %v1034 = vmul.f32 %v939, %v1018
  %v1035 = vmul.f32 %v941, %v1019
  %v1036 = vmul.f32 %v943, %v1020
  %v1037 = vmul.f32 %v945, %v1021
  %v1038 = vmul.f32 %v947, %v1022
  %v1039 = vmul.f32 %v949, %v1023
  %v1040 = vmul.f32 %v951, %v1024
  %v1041 = vmul.f32 %v953, %v1025
  %v1042 = vmul.f32 %v955, %v1026
  %v1043 = vmul.f32 %v957, %v1027
  %v1044 = vmul.f32 %v959, %v1028
  %v1045 = vmul.f32 %v961, %v1029
  %v1046 = vmul.f32 %v963, %v1030
  %v1047 = vmul.f32 %v965, %v1031
  %v1048 = vmul.f32 %v967, %v1032
  %v1049 = vmul.f32 %v969, %v1033
  %1050 = vst.msk [vmem:[%s24] sm:$0xff] %vm457, %v1034
  %1051 = vst.msk [vmem:[%s24 + $0x8] sm:$0xff] %vm457, %v1035
  %1052 = vst.msk [vmem:[%s24 + $0x10] sm:$0xff] %vm457, %v1036
  %1053 = vst.msk [vmem:[%s24 + $0x18] sm:$0xff] %vm457, %v1037
  %1054 = vst.msk [vmem:[%s24 + $0x20] sm:$0xff] %vm457, %v1038
  %1055 = vst.msk [vmem:[%s24 + $0x28] sm:$0xff] %vm457, %v1039
  %1056 = vst.msk [vmem:[%s24 + $0x30] sm:$0xff] %vm457, %v1040
  %1057 = vst.msk [vmem:[%s24 + $0x38] sm:$0xff] %vm457, %v1041
  %1058 = vst.msk [vmem:[%s24 + $0x40] sm:$0xff] %vm457, %v1042
  %1059 = vst.msk [vmem:[%s24 + $0x48] sm:$0xff] %vm457, %v1043
  %1060 = vst.msk [vmem:[%s24 + $0x50] sm:$0xff] %vm457, %v1044
  %1061 = vst.msk [vmem:[%s24 + $0x58] sm:$0xff] %vm457, %v1045
  %1062 = vst.msk [vmem:[%s24 + $0x60] sm:$0xff] %vm457, %v1046
  %1063 = vst.msk [vmem:[%s24 + $0x68] sm:$0xff] %vm457, %v1047
  %1064 = vst.msk [vmem:[%s24 + $0x70] sm:$0xff] %vm457, %v1048
  %1065 = vst.msk [vmem:[%s24 + $0x78] sm:$0xff] %vm457, %v1049
  %v1067 = vsel %vm457, %v1034, 0
  %1069 = vmatpush.msra.mxu0 0.0
  %1070 = vmatpush.msra.mxu0 0.0
  %1071 = vmatpush.msra.mxu0 0.0
  %1072 = vmatpush.msra.mxu0 0.0
  %1073 = vmatpush.msra.mxu0 0.0
  %1074 = vmatpush.msra.mxu0 0.0
  %1075 = vmatpush.msra.mxu0 0.0
  %1076 = vmatpush.msra.mxu0 0.0
  %1077 = vmatpush.msra.mxu0 0.0
  %1078 = vmatpush.msra.mxu0 0.0
  %1079 = vmatpush.msra.mxu0 0.0
  %1080 = vmatpush.msra.mxu0 0.0
  %1081 = vmatpush.msra.mxu0 0.0
  %1082 = vmatpush.msra.mxu0 0.0
  %1083 = vmatpush.msra.mxu0 0.0
  %1084 = vmatpush.msra.mxu0 %v410
  %1085 = vmatmul.f32.gmra.mxu0 %v1067
  %v1086 = vpop.f32.mrf.mxu0
  %v1087 = vadd.f32 0.0, %v1086
  %1088 = vdwg.mxu0
  %v1090 = vsel %vm457, %v1035, 0
  %1092 = vmatpush.msra.mxu0 0.0
  %1093 = vmatpush.msra.mxu0 0.0
  %1094 = vmatpush.msra.mxu0 0.0
  %1095 = vmatpush.msra.mxu0 0.0
  %1096 = vmatpush.msra.mxu0 0.0
  %1097 = vmatpush.msra.mxu0 0.0
  %1098 = vmatpush.msra.mxu0 0.0
  %1099 = vmatpush.msra.mxu0 0.0
  %1100 = vmatpush.msra.mxu0 0.0
  %1101 = vmatpush.msra.mxu0 0.0
  %1102 = vmatpush.msra.mxu0 0.0
  %1103 = vmatpush.msra.mxu0 0.0
  %1104 = vmatpush.msra.mxu0 0.0
  %1105 = vmatpush.msra.mxu0 0.0
  %1106 = vmatpush.msra.mxu0 0.0
  %1107 = vmatpush.msra.mxu0 %v413
  %1108 = vmatmul.f32.gmra.mxu0 %v1090
  %v1109 = vpop.f32.mrf.mxu0
  %v1110 = vadd.f32 0.0, %v1109
  %1111 = vdwg.mxu0
  %v1113 = vsel %vm457, %v1036, 0
  %1115 = vmatpush.msra.mxu0 0.0
  %1116 = vmatpush.msra.mxu0 0.0
  %1117 = vmatpush.msra.mxu0 0.0
  %1118 = vmatpush.msra.mxu0 0.0
  %1119 = vmatpush.msra.mxu0 0.0
  %1120 = vmatpush.msra.mxu0 0.0
  %1121 = vmatpush.msra.mxu0 0.0
  %1122 = vmatpush.msra.mxu0 0.0
  %1123 = vmatpush.msra.mxu0 0.0
  %1124 = vmatpush.msra.mxu0 0.0
  %1125 = vmatpush.msra.mxu0 0.0
  %1126 = vmatpush.msra.mxu0 0.0
  %1127 = vmatpush.msra.mxu0 0.0
  %1128 = vmatpush.msra.mxu0 0.0
  %1129 = vmatpush.msra.mxu0 0.0
  %1130 = vmatpush.msra.mxu0 %v416
  %1131 = vmatmul.f32.gmra.mxu0 %v1113
  %v1132 = vpop.f32.mrf.mxu0
  %v1133 = vadd.f32 0.0, %v1132
  %1134 = vdwg.mxu0
  %v1136 = vsel %vm457, %v1037, 0
  %1138 = vmatpush.msra.mxu0 0.0
  %1139 = vmatpush.msra.mxu0 0.0
  %1140 = vmatpush.msra.mxu0 0.0
  %1141 = vmatpush.msra.mxu0 0.0
  %1142 = vmatpush.msra.mxu0 0.0
  %1143 = vmatpush.msra.mxu0 0.0
  %1144 = vmatpush.msra.mxu0 0.0
  %1145 = vmatpush.msra.mxu0 0.0
  %1146 = vmatpush.msra.mxu0 0.0
  %1147 = vmatpush.msra.mxu0 0.0
  %1148 = vmatpush.msra.mxu0 0.0
  %1149 = vmatpush.msra.mxu0 0.0
  %1150 = vmatpush.msra.mxu0 0.0
  %1151 = vmatpush.msra.mxu0 0.0
  %1152 = vmatpush.msra.mxu0 0.0
  %1153 = vmatpush.msra.mxu0 %v419
  %1154 = vmatmul.f32.gmra.mxu0 %v1136
  %v1155 = vpop.f32.mrf.mxu0
  %v1156 = vadd.f32 0.0, %v1155
  %1157 = vdwg.mxu0
  %v1159 = vsel %vm457, %v1038, 0
  %1161 = vmatpush.msra.mxu0 0.0
  %1162 = vmatpush.msra.mxu0 0.0
  %1163 = vmatpush.msra.mxu0 0.0
  %1164 = vmatpush.msra.mxu0 0.0
  %1165 = vmatpush.msra.mxu0 0.0
  %1166 = vmatpush.msra.mxu0 0.0
  %1167 = vmatpush.msra.mxu0 0.0
  %1168 = vmatpush.msra.mxu0 0.0
  %1169 = vmatpush.msra.mxu0 0.0
  %1170 = vmatpush.msra.mxu0 0.0
  %1171 = vmatpush.msra.mxu0 0.0
  %1172 = vmatpush.msra.mxu0 0.0
  %1173 = vmatpush.msra.mxu0 0.0
  %1174 = vmatpush.msra.mxu0 0.0
  %1175 = vmatpush.msra.mxu0 0.0
  %1176 = vmatpush.msra.mxu0 %v422
  %1177 = vmatmul.f32.gmra.mxu0 %v1159
  %v1178 = vpop.f32.mrf.mxu0
  %v1179 = vadd.f32 0.0, %v1178
  %1180 = vdwg.mxu0
  %v1182 = vsel %vm457, %v1039, 0
  %1184 = vmatpush.msra.mxu0 0.0
  %1185 = vmatpush.msra.mxu0 0.0
  %1186 = vmatpush.msra.mxu0 0.0
  %1187 = vmatpush.msra.mxu0 0.0
  %1188 = vmatpush.msra.mxu0 0.0
  %1189 = vmatpush.msra.mxu0 0.0
  %1190 = vmatpush.msra.mxu0 0.0
  %1191 = vmatpush.msra.mxu0 0.0
  %1192 = vmatpush.msra.mxu0 0.0
  %1193 = vmatpush.msra.mxu0 0.0
  %1194 = vmatpush.msra.mxu0 0.0
  %1195 = vmatpush.msra.mxu0 0.0
  %1196 = vmatpush.msra.mxu0 0.0
  %1197 = vmatpush.msra.mxu0 0.0
  %1198 = vmatpush.msra.mxu0 0.0
  %1199 = vmatpush.msra.mxu0 %v425
  %1200 = vmatmul.f32.gmra.mxu0 %v1182
  %v1201 = vpop.f32.mrf.mxu0
  %v1202 = vadd.f32 0.0, %v1201
  %1203 = vdwg.mxu0
  %v1205 = vsel %vm457, %v1040, 0
  %1207 = vmatpush.msra.mxu0 0.0
  %1208 = vmatpush.msra.mxu0 0.0
  %1209 = vmatpush.msra.mxu0 0.0
  %1210 = vmatpush.msra.mxu0 0.0
  %1211 = vmatpush.msra.mxu0 0.0
  %1212 = vmatpush.msra.mxu0 0.0
  %1213 = vmatpush.msra.mxu0 0.0
  %1214 = vmatpush.msra.mxu0 0.0
  %1215 = vmatpush.msra.mxu0 0.0
  %1216 = vmatpush.msra.mxu0 0.0
  %1217 = vmatpush.msra.mxu0 0.0
  %1218 = vmatpush.msra.mxu0 0.0
  %1219 = vmatpush.msra.mxu0 0.0
  %1220 = vmatpush.msra.mxu0 0.0
  %1221 = vmatpush.msra.mxu0 0.0
  %1222 = vmatpush.msra.mxu0 %v428
  %1223 = vmatmul.f32.gmra.mxu0 %v1205
  %v1224 = vpop.f32.mrf.mxu0
  %v1225 = vadd.f32 0.0, %v1224
  %1226 = vdwg.mxu0
  %v1228 = vsel %vm457, %v1041, 0
  %1230 = vmatpush.msra.mxu0 0.0
  %1231 = vmatpush.msra.mxu0 0.0
  %1232 = vmatpush.msra.mxu0 0.0
  %1233 = vmatpush.msra.mxu0 0.0
  %1234 = vmatpush.msra.mxu0 0.0
  %1235 = vmatpush.msra.mxu0 0.0
  %1236 = vmatpush.msra.mxu0 0.0
  %1237 = vmatpush.msra.mxu0 0.0
  %1238 = vmatpush.msra.mxu0 0.0
  %1239 = vmatpush.msra.mxu0 0.0
  %1240 = vmatpush.msra.mxu0 0.0
  %1241 = vmatpush.msra.mxu0 0.0
  %1242 = vmatpush.msra.mxu0 0.0
  %1243 = vmatpush.msra.mxu0 0.0
  %1244 = vmatpush.msra.mxu0 0.0
  %1245 = vmatpush.msra.mxu0 %v431
  %1246 = vmatmul.f32.gmra.mxu0 %v1228
  %v1247 = vpop.f32.mrf.mxu0
  %v1248 = vadd.f32 0.0, %v1247
  %1249 = vdwg.mxu0
  %v1251 = vsel %vm457, %v1042, 0
  %1253 = vmatpush.msra.mxu0 0.0
  %1254 = vmatpush.msra.mxu0 0.0
  %1255 = vmatpush.msra.mxu0 0.0
  %1256 = vmatpush.msra.mxu0 0.0
  %1257 = vmatpush.msra.mxu0 0.0
  %1258 = vmatpush.msra.mxu0 0.0
  %1259 = vmatpush.msra.mxu0 0.0
  %1260 = vmatpush.msra.mxu0 0.0
  %1261 = vmatpush.msra.mxu0 0.0
  %1262 = vmatpush.msra.mxu0 0.0
  %1263 = vmatpush.msra.mxu0 0.0
  %1264 = vmatpush.msra.mxu0 0.0
  %1265 = vmatpush.msra.mxu0 0.0
  %1266 = vmatpush.msra.mxu0 0.0
  %1267 = vmatpush.msra.mxu0 0.0
  %1268 = vmatpush.msra.mxu0 %v434
  %1269 = vmatmul.f32.gmra.mxu0 %v1251
  %v1270 = vpop.f32.mrf.mxu0
  %v1271 = vadd.f32 0.0, %v1270
  %1272 = vdwg.mxu0
  %v1274 = vsel %vm457, %v1043, 0
  %1276 = vmatpush.msra.mxu0 0.0
  %1277 = vmatpush.msra.mxu0 0.0
  %1278 = vmatpush.msra.mxu0 0.0
  %1279 = vmatpush.msra.mxu0 0.0
  %1280 = vmatpush.msra.mxu0 0.0
  %1281 = vmatpush.msra.mxu0 0.0
  %1282 = vmatpush.msra.mxu0 0.0
  %1283 = vmatpush.msra.mxu0 0.0
  %1284 = vmatpush.msra.mxu0 0.0
  %1285 = vmatpush.msra.mxu0 0.0
  %1286 = vmatpush.msra.mxu0 0.0
  %1287 = vmatpush.msra.mxu0 0.0
  %1288 = vmatpush.msra.mxu0 0.0
  %1289 = vmatpush.msra.mxu0 0.0
  %1290 = vmatpush.msra.mxu0 0.0
  %1291 = vmatpush.msra.mxu0 %v437
  %1292 = vmatmul.f32.gmra.mxu0 %v1274
  %v1293 = vpop.f32.mrf.mxu0
  %v1294 = vadd.f32 0.0, %v1293
  %1295 = vdwg.mxu0
  %v1297 = vsel %vm457, %v1044, 0
  %1299 = vmatpush.msra.mxu0 0.0
  %1300 = vmatpush.msra.mxu0 0.0
  %1301 = vmatpush.msra.mxu0 0.0
  %1302 = vmatpush.msra.mxu0 0.0
  %1303 = vmatpush.msra.mxu0 0.0
  %1304 = vmatpush.msra.mxu0 0.0
  %1305 = vmatpush.msra.mxu0 0.0
  %1306 = vmatpush.msra.mxu0 0.0
  %1307 = vmatpush.msra.mxu0 0.0
  %1308 = vmatpush.msra.mxu0 0.0
  %1309 = vmatpush.msra.mxu0 0.0
  %1310 = vmatpush.msra.mxu0 0.0
  %1311 = vmatpush.msra.mxu0 0.0
  %1312 = vmatpush.msra.mxu0 0.0
  %1313 = vmatpush.msra.mxu0 0.0
  %1314 = vmatpush.msra.mxu0 %v440
  %1315 = vmatmul.f32.gmra.mxu0 %v1297
  %v1316 = vpop.f32.mrf.mxu0
  %v1317 = vadd.f32 0.0, %v1316
  %1318 = vdwg.mxu0
  %v1320 = vsel %vm457, %v1045, 0
  %1322 = vmatpush.msra.mxu0 0.0
  %1323 = vmatpush.msra.mxu0 0.0
  %1324 = vmatpush.msra.mxu0 0.0
  %1325 = vmatpush.msra.mxu0 0.0
  %1326 = vmatpush.msra.mxu0 0.0
  %1327 = vmatpush.msra.mxu0 0.0
  %1328 = vmatpush.msra.mxu0 0.0
  %1329 = vmatpush.msra.mxu0 0.0
  %1330 = vmatpush.msra.mxu0 0.0
  %1331 = vmatpush.msra.mxu0 0.0
  %1332 = vmatpush.msra.mxu0 0.0
  %1333 = vmatpush.msra.mxu0 0.0
  %1334 = vmatpush.msra.mxu0 0.0
  %1335 = vmatpush.msra.mxu0 0.0
  %1336 = vmatpush.msra.mxu0 0.0
  %1337 = vmatpush.msra.mxu0 %v443
  %1338 = vmatmul.f32.gmra.mxu0 %v1320
  %v1339 = vpop.f32.mrf.mxu0
  %v1340 = vadd.f32 0.0, %v1339
  %1341 = vdwg.mxu0
  %v1343 = vsel %vm457, %v1046, 0
  %1345 = vmatpush.msra.mxu0 0.0
  %1346 = vmatpush.msra.mxu0 0.0
  %1347 = vmatpush.msra.mxu0 0.0
  %1348 = vmatpush.msra.mxu0 0.0
  %1349 = vmatpush.msra.mxu0 0.0
  %1350 = vmatpush.msra.mxu0 0.0
  %1351 = vmatpush.msra.mxu0 0.0
  %1352 = vmatpush.msra.mxu0 0.0
  %1353 = vmatpush.msra.mxu0 0.0
  %1354 = vmatpush.msra.mxu0 0.0
  %1355 = vmatpush.msra.mxu0 0.0
  %1356 = vmatpush.msra.mxu0 0.0
  %1357 = vmatpush.msra.mxu0 0.0
  %1358 = vmatpush.msra.mxu0 0.0
  %1359 = vmatpush.msra.mxu0 0.0
  %1360 = vmatpush.msra.mxu0 %v446
  %1361 = vmatmul.f32.gmra.mxu0 %v1343
  %v1362 = vpop.f32.mrf.mxu0
  %v1363 = vadd.f32 0.0, %v1362
  %1364 = vdwg.mxu0
  %v1366 = vsel %vm457, %v1047, 0
  %1368 = vmatpush.msra.mxu0 0.0
  %1369 = vmatpush.msra.mxu0 0.0
  %1370 = vmatpush.msra.mxu0 0.0
  %1371 = vmatpush.msra.mxu0 0.0
  %1372 = vmatpush.msra.mxu0 0.0
  %1373 = vmatpush.msra.mxu0 0.0
  %1374 = vmatpush.msra.mxu0 0.0
  %1375 = vmatpush.msra.mxu0 0.0
  %1376 = vmatpush.msra.mxu0 0.0
  %1377 = vmatpush.msra.mxu0 0.0
  %1378 = vmatpush.msra.mxu0 0.0
  %1379 = vmatpush.msra.mxu0 0.0
  %1380 = vmatpush.msra.mxu0 0.0
  %1381 = vmatpush.msra.mxu0 0.0
  %1382 = vmatpush.msra.mxu0 0.0
  %1383 = vmatpush.msra.mxu0 %v449
  %1384 = vmatmul.f32.gmra.mxu0 %v1366
  %v1385 = vpop.f32.mrf.mxu0
  %v1386 = vadd.f32 0.0, %v1385
  %1387 = vdwg.mxu0
  %v1389 = vsel %vm457, %v1048, 0
  %1391 = vmatpush.msra.mxu0 0.0
  %1392 = vmatpush.msra.mxu0 0.0
  %1393 = vmatpush.msra.mxu0 0.0
  %1394 = vmatpush.msra.mxu0 0.0
  %1395 = vmatpush.msra.mxu0 0.0
  %1396 = vmatpush.msra.mxu0 0.0
  %1397 = vmatpush.msra.mxu0 0.0
  %1398 = vmatpush.msra.mxu0 0.0
  %1399 = vmatpush.msra.mxu0 0.0
  %1400 = vmatpush.msra.mxu0 0.0
  %1401 = vmatpush.msra.mxu0 0.0
  %1402 = vmatpush.msra.mxu0 0.0
  %1403 = vmatpush.msra.mxu0 0.0
  %1404 = vmatpush.msra.mxu0 0.0
  %1405 = vmatpush.msra.mxu0 0.0
  %1406 = vmatpush.msra.mxu0 %v452
  %1407 = vmatmul.f32.gmra.mxu0 %v1389
  %v1408 = vpop.f32.mrf.mxu0
  %v1409 = vadd.f32 0.0, %v1408
  %1410 = vdwg.mxu0
  %v1412 = vsel %vm457, %v1049, 0
  %1414 = vmatpush.msra.mxu0 0.0
  %1415 = vmatpush.msra.mxu0 0.0
  %1416 = vmatpush.msra.mxu0 0.0
  %1417 = vmatpush.msra.mxu0 0.0
  %1418 = vmatpush.msra.mxu0 0.0
  %1419 = vmatpush.msra.mxu0 0.0
  %1420 = vmatpush.msra.mxu0 0.0
  %1421 = vmatpush.msra.mxu0 0.0
  %1422 = vmatpush.msra.mxu0 0.0
  %1423 = vmatpush.msra.mxu0 0.0
  %1424 = vmatpush.msra.mxu0 0.0
  %1425 = vmatpush.msra.mxu0 0.0
  %1426 = vmatpush.msra.mxu0 0.0
  %1427 = vmatpush.msra.mxu0 0.0
  %1428 = vmatpush.msra.mxu0 0.0
  %1429 = vmatpush.msra.mxu0 %v455
  %1430 = vmatmul.f32.gmra.mxu0 %v1412
  %v1431 = vpop.f32.mrf.mxu0
  %v1432 = vadd.f32 0.0, %v1431
  %1433 = vdwg.mxu0
  %v1434 = vld [vmem:[%s9] sm:$0xff]
  %s1435 = scalar_lea.vmem %s3, 32
  %v1436 = vld [vmem:[%s1435] sm:$0xff]
  %v1437 = vld [vmem:[%s1435 + $0x8] sm:$0xff]
  %v1438 = vld [vmem:[%s1435 + $0x10] sm:$0xff]
  %v1439 = vld [vmem:[%s1435 + $0x18] sm:$0xff]
  %s1440 = scalar_lea.vmem %s4, 1
  %v1441 = vld [vmem:[%s1440] sm:$0x1]
  %v1443 = vperm.slane %v1441, 0
  %1445 = vmatpush.msra.mxu0 0.0
  %1446 = vmatpush.msra.mxu0 0.0
  %1447 = vmatpush.msra.mxu0 0.0
  %1448 = vmatpush.msra.mxu0 0.0
  %1449 = vmatpush.msra.mxu0 0.0
  %1450 = vmatpush.msra.mxu0 0.0
  %1451 = vmatpush.msra.mxu0 0.0
  %1452 = vmatpush.msra.mxu0 0.0
  %1453 = vmatpush.msra.mxu0 0.0
  %1454 = vmatpush.msra.mxu0 0.0
  %1455 = vmatpush.msra.mxu0 0.0
  %1456 = vmatpush.msra.mxu0 0.0
  %1457 = vmatpush.msra.mxu0 %v1439
  %1458 = vmatpush.msra.mxu0 %v1438
  %1459 = vmatpush.msra.mxu0 %v1437
  %1460 = vmatpush.msra.mxu0 %v1436
  %1461 = vmatmul.f32.gmra.mxu0 %v199
  %v1462 = vpop.f32.mrf.mxu0
  %v1463 = vadd.f32 %v1443, %v1462
  %1464 = vmatmul.f32.gmra.mxu0 %v202
  %v1465 = vpop.f32.mrf.mxu0
  %v1466 = vadd.f32 %v1443, %v1465
  %1467 = vmatmul.f32.gmra.mxu0 %v205
  %v1468 = vpop.f32.mrf.mxu0
  %v1469 = vadd.f32 %v1443, %v1468
  %1470 = vmatmul.f32.gmra.mxu0 %v208
  %v1471 = vpop.f32.mrf.mxu0
  %v1472 = vadd.f32 %v1443, %v1471
  %1473 = vmatmul.f32.gmra.mxu0 %v211
  %v1474 = vpop.f32.mrf.mxu0
  %v1475 = vadd.f32 %v1443, %v1474
  %1476 = vmatmul.f32.gmra.mxu0 %v214
  %v1477 = vpop.f32.mrf.mxu0
  %v1478 = vadd.f32 %v1443, %v1477
  %1479 = vmatmul.f32.gmra.mxu0 %v217
  %v1480 = vpop.f32.mrf.mxu0
  %v1481 = vadd.f32 %v1443, %v1480
  %1482 = vmatmul.f32.gmra.mxu0 %v220
  %v1483 = vpop.f32.mrf.mxu0
  %v1484 = vadd.f32 %v1443, %v1483
  %1485 = vmatmul.f32.gmra.mxu0 %v223
  %v1486 = vpop.f32.mrf.mxu0
  %v1487 = vadd.f32 %v1443, %v1486
  %1488 = vmatmul.f32.gmra.mxu0 %v226
  %v1489 = vpop.f32.mrf.mxu0
  %v1490 = vadd.f32 %v1443, %v1489
  %1491 = vmatmul.f32.gmra.mxu0 %v229
  %v1492 = vpop.f32.mrf.mxu0
  %v1493 = vadd.f32 %v1443, %v1492
  %1494 = vmatmul.f32.gmra.mxu0 %v232
  %v1495 = vpop.f32.mrf.mxu0
  %v1496 = vadd.f32 %v1443, %v1495
  %1497 = vmatmul.f32.gmra.mxu0 %v235
  %v1498 = vpop.f32.mrf.mxu0
  %v1499 = vadd.f32 %v1443, %v1498
  %1500 = vmatmul.f32.gmra.mxu0 %v238
  %v1501 = vpop.f32.mrf.mxu0
  %v1502 = vadd.f32 %v1443, %v1501
  %1503 = vmatmul.f32.gmra.mxu0 %v241
  %v1504 = vpop.f32.mrf.mxu0
  %v1505 = vadd.f32 %v1443, %v1504
  %1506 = vmatmul.f32.gmra.mxu0 %v244
  %v1507 = vpop.f32.mrf.mxu0
  %v1508 = vadd.f32 %v1443, %v1507
  %1509 = vdwg.mxu0
  %s1510 = scalar_lea.vmem %s5, 32
  %v1511 = vld [vmem:[%s1510] sm:$0xff]
  %v1512 = vld [vmem:[%s1510 + $0x8] sm:$0xff]
  %v1513 = vld [vmem:[%s1510 + $0x10] sm:$0xff]
  %v1514 = vld [vmem:[%s1510 + $0x18] sm:$0xff]
  %s1515 = scalar_lea.vmem %s6, 1
  %v1516 = vld [vmem:[%s1515] sm:$0x1]
  %v1518 = vperm.slane %v1516, 0
  %1520 = vmatpush.msra.mxu0 0.0
  %1521 = vmatpush.msra.mxu0 0.0
  %1522 = vmatpush.msra.mxu0 0.0
  %1523 = vmatpush.msra.mxu0 0.0
  %1524 = vmatpush.msra.mxu0 0.0
  %1525 = vmatpush.msra.mxu0 0.0
  %1526 = vmatpush.msra.mxu0 0.0
  %1527 = vmatpush.msra.mxu0 0.0
  %1528 = vmatpush.msra.mxu0 0.0
  %1529 = vmatpush.msra.mxu0 0.0
  %1530 = vmatpush.msra.mxu0 0.0
  %1531 = vmatpush.msra.mxu0 0.0
  %1532 = vmatpush.msra.mxu0 %v1514
  %1533 = vmatpush.msra.mxu0 %v1513
  %1534 = vmatpush.msra.mxu0 %v1512
  %1535 = vmatpush.msra.mxu0 %v1511
  %1536 = vmatmul.f32.gmra.mxu0 %v199
  %v1537 = vpop.f32.mrf.mxu0
  %v1538 = vadd.f32 %v1518, %v1537
  %1539 = vmatmul.f32.gmra.mxu0 %v202
  %v1540 = vpop.f32.mrf.mxu0
  %v1541 = vadd.f32 %v1518, %v1540
  %1542 = vmatmul.f32.gmra.mxu0 %v205
  %v1543 = vpop.f32.mrf.mxu0
  %v1544 = vadd.f32 %v1518, %v1543
  %1545 = vmatmul.f32.gmra.mxu0 %v208
  %v1546 = vpop.f32.mrf.mxu0
  %v1547 = vadd.f32 %v1518, %v1546
  %1548 = vmatmul.f32.gmra.mxu0 %v211
  %v1549 = vpop.f32.mrf.mxu0
  %v1550 = vadd.f32 %v1518, %v1549
  %1551 = vmatmul.f32.gmra.mxu0 %v214
  %v1552 = vpop.f32.mrf.mxu0
  %v1553 = vadd.f32 %v1518, %v1552
  %1554 = vmatmul.f32.gmra.mxu0 %v217
  %v1555 = vpop.f32.mrf.mxu0
  %v1556 = vadd.f32 %v1518, %v1555
  %1557 = vmatmul.f32.gmra.mxu0 %v220
  %v1558 = vpop.f32.mrf.mxu0
  %v1559 = vadd.f32 %v1518, %v1558
  %1560 = vmatmul.f32.gmra.mxu0 %v223
  %v1561 = vpop.f32.mrf.mxu0
  %v1562 = vadd.f32 %v1518, %v1561
  %1563 = vmatmul.f32.gmra.mxu0 %v226
  %v1564 = vpop.f32.mrf.mxu0
  %v1565 = vadd.f32 %v1518, %v1564
  %1566 = vmatmul.f32.gmra.mxu0 %v229
  %v1567 = vpop.f32.mrf.mxu0
  %v1568 = vadd.f32 %v1518, %v1567
  %1569 = vmatmul.f32.gmra.mxu0 %v232
  %v1570 = vpop.f32.mrf.mxu0
  %v1571 = vadd.f32 %v1518, %v1570
  %1572 = vmatmul.f32.gmra.mxu0 %v235
  %v1573 = vpop.f32.mrf.mxu0
  %v1574 = vadd.f32 %v1518, %v1573
  %1575 = vmatmul.f32.gmra.mxu0 %v238
  %v1576 = vpop.f32.mrf.mxu0
  %v1577 = vadd.f32 %v1518, %v1576
  %1578 = vmatmul.f32.gmra.mxu0 %v241
  %v1579 = vpop.f32.mrf.mxu0
  %v1580 = vadd.f32 %v1518, %v1579
  %1581 = vmatmul.f32.gmra.mxu0 %v244
  %v1582 = vpop.f32.mrf.mxu0
  %v1583 = vadd.f32 %v1518, %v1582
  %1584 = vdwg.mxu0
  %s1585 = scalar_lea.vmem %s7, 32
  %v1586 = vld [vmem:[%s1585] sm:$0xff]
  %v1587 = vld [vmem:[%s1585 + $0x8] sm:$0xff]
  %v1588 = vld [vmem:[%s1585 + $0x10] sm:$0xff]
  %v1589 = vld [vmem:[%s1585 + $0x18] sm:$0xff]
  %s1590 = scalar_lea.vmem %s8, 1
  %v1591 = vld [vmem:[%s1590] sm:$0x1]
  %v1593 = vperm.slane %v1591, 0
  %1595 = vmatpush.msra.mxu0 0.0
  %1596 = vmatpush.msra.mxu0 0.0
  %1597 = vmatpush.msra.mxu0 0.0
  %1598 = vmatpush.msra.mxu0 0.0
  %1599 = vmatpush.msra.mxu0 0.0
  %1600 = vmatpush.msra.mxu0 0.0
  %1601 = vmatpush.msra.mxu0 0.0
  %1602 = vmatpush.msra.mxu0 0.0
  %1603 = vmatpush.msra.mxu0 0.0
  %1604 = vmatpush.msra.mxu0 0.0
  %1605 = vmatpush.msra.mxu0 0.0
  %1606 = vmatpush.msra.mxu0 0.0
  %1607 = vmatpush.msra.mxu0 %v1589
  %1608 = vmatpush.msra.mxu0 %v1588
  %1609 = vmatpush.msra.mxu0 %v1587
  %1610 = vmatpush.msra.mxu0 %v1586
  %1611 = vmatmul.f32.gmra.mxu0 %v199
  %v1612 = vpop.f32.mrf.mxu0
  %v1613 = vadd.f32 %v1593, %v1612
  %1614 = vmatmul.f32.gmra.mxu0 %v202
  %v1615 = vpop.f32.mrf.mxu0
  %v1616 = vadd.f32 %v1593, %v1615
  %1617 = vmatmul.f32.gmra.mxu0 %v205
  %v1618 = vpop.f32.mrf.mxu0
  %v1619 = vadd.f32 %v1593, %v1618
  %1620 = vmatmul.f32.gmra.mxu0 %v208
  %v1621 = vpop.f32.mrf.mxu0
  %v1622 = vadd.f32 %v1593, %v1621
  %1623 = vmatmul.f32.gmra.mxu0 %v211
  %v1624 = vpop.f32.mrf.mxu0
  %v1625 = vadd.f32 %v1593, %v1624
  %1626 = vmatmul.f32.gmra.mxu0 %v214
  %v1627 = vpop.f32.mrf.mxu0
  %v1628 = vadd.f32 %v1593, %v1627
  %1629 = vmatmul.f32.gmra.mxu0 %v217
  %v1630 = vpop.f32.mrf.mxu0
  %v1631 = vadd.f32 %v1593, %v1630
  %1632 = vmatmul.f32.gmra.mxu0 %v220
  %v1633 = vpop.f32.mrf.mxu0
  %v1634 = vadd.f32 %v1593, %v1633
  %1635 = vmatmul.f32.gmra.mxu0 %v223
  %v1636 = vpop.f32.mrf.mxu0
  %v1637 = vadd.f32 %v1593, %v1636
  %1638 = vmatmul.f32.gmra.mxu0 %v226
  %v1639 = vpop.f32.mrf.mxu0
  %v1640 = vadd.f32 %v1593, %v1639
  %1641 = vmatmul.f32.gmra.mxu0 %v229
  %v1642 = vpop.f32.mrf.mxu0
  %v1643 = vadd.f32 %v1593, %v1642
  %1644 = vmatmul.f32.gmra.mxu0 %v232
  %v1645 = vpop.f32.mrf.mxu0
  %v1646 = vadd.f32 %v1593, %v1645
  %1647 = vmatmul.f32.gmra.mxu0 %v235
  %v1648 = vpop.f32.mrf.mxu0
  %v1649 = vadd.f32 %v1593, %v1648
  %1650 = vmatmul.f32.gmra.mxu0 %v238
  %v1651 = vpop.f32.mrf.mxu0
  %v1652 = vadd.f32 %v1593, %v1651
  %1653 = vmatmul.f32.gmra.mxu0 %v241
  %v1654 = vpop.f32.mrf.mxu0
  %v1655 = vadd.f32 %v1593, %v1654
  %1656 = vmatmul.f32.gmra.mxu0 %v244
  %v1657 = vpop.f32.mrf.mxu0
  %v1658 = vadd.f32 %v1593, %v1657
  %1659 = vdwg.mxu0
  %v1661 = vsel %vm457, %v1463, 0
  %v1664 = vsel %vm457, %v1538, 0
  %1666 = vmatpush.xpose.msra.mxu0 0.0
  %1667 = vmatpush.xpose.msra.mxu0 0.0
  %1668 = vmatpush.xpose.msra.mxu0 0.0
  %1669 = vmatpush.xpose.msra.mxu0 0.0
  %1670 = vmatpush.xpose.msra.mxu0 0.0
  %1671 = vmatpush.xpose.msra.mxu0 0.0
  %1672 = vmatpush.xpose.msra.mxu0 0.0
  %1673 = vmatpush.xpose.msra.mxu0 0.0
  %1674 = vmatpush.xpose.msra.mxu0 0.0
  %1675 = vmatpush.xpose.msra.mxu0 0.0
  %1676 = vmatpush.xpose.msra.mxu0 0.0
  %1677 = vmatpush.xpose.msra.mxu0 0.0
  %1678 = vmatpush.xpose.msra.mxu0 0.0
  %1679 = vmatpush.xpose.msra.mxu0 0.0
  %1680 = vmatpush.xpose.msra.mxu0 0.0
  %1681 = vmatpush.xpose.msra.mxu0 %v1664
  %1682 = vmatmul.f32.gmra.mxu0 %v1661
  %v1683 = vpop.f32.mrf.mxu0
  %v1684 = vadd.f32 0.0, %v1683
  %1685 = vdwg.mxu0
  %v1687 = vsel %vm457, %v1466, 0
  %v1690 = vsel %vm457, %v1541, 0
  %1692 = vmatpush.xpose.msra.mxu0 0.0
  %1693 = vmatpush.xpose.msra.mxu0 0.0
  %1694 = vmatpush.xpose.msra.mxu0 0.0
  %1695 = vmatpush.xpose.msra.mxu0 0.0
  %1696 = vmatpush.xpose.msra.mxu0 0.0
  %1697 = vmatpush.xpose.msra.mxu0 0.0
  %1698 = vmatpush.xpose.msra.mxu0 0.0
  %1699 = vmatpush.xpose.msra.mxu0 0.0
  %1700 = vmatpush.xpose.msra.mxu0 0.0
  %1701 = vmatpush.xpose.msra.mxu0 0.0
  %1702 = vmatpush.xpose.msra.mxu0 0.0
  %1703 = vmatpush.xpose.msra.mxu0 0.0
  %1704 = vmatpush.xpose.msra.mxu0 0.0
  %1705 = vmatpush.xpose.msra.mxu0 0.0
  %1706 = vmatpush.xpose.msra.mxu0 0.0
  %1707 = vmatpush.xpose.msra.mxu0 %v1690
  %1708 = vmatmul.f32.gmra.mxu0 %v1687
  %v1709 = vpop.f32.mrf.mxu0
  %v1710 = vadd.f32 0.0, %v1709
  %1711 = vdwg.mxu0
  %v1713 = vsel %vm457, %v1469, 0
  %v1716 = vsel %vm457, %v1544, 0
  %1718 = vmatpush.xpose.msra.mxu0 0.0
  %1719 = vmatpush.xpose.msra.mxu0 0.0
  %1720 = vmatpush.xpose.msra.mxu0 0.0
  %1721 = vmatpush.xpose.msra.mxu0 0.0
  %1722 = vmatpush.xpose.msra.mxu0 0.0
  %1723 = vmatpush.xpose.msra.mxu0 0.0
  %1724 = vmatpush.xpose.msra.mxu0 0.0
  %1725 = vmatpush.xpose.msra.mxu0 0.0
  %1726 = vmatpush.xpose.msra.mxu0 0.0
  %1727 = vmatpush.xpose.msra.mxu0 0.0
  %1728 = vmatpush.xpose.msra.mxu0 0.0
  %1729 = vmatpush.xpose.msra.mxu0 0.0
  %1730 = vmatpush.xpose.msra.mxu0 0.0
  %1731 = vmatpush.xpose.msra.mxu0 0.0
  %1732 = vmatpush.xpose.msra.mxu0 0.0
  %1733 = vmatpush.xpose.msra.mxu0 %v1716
  %1734 = vmatmul.f32.gmra.mxu0 %v1713
  %v1735 = vpop.f32.mrf.mxu0
  %v1736 = vadd.f32 0.0, %v1735
  %1737 = vdwg.mxu0
  %v1739 = vsel %vm457, %v1472, 0
  %v1742 = vsel %vm457, %v1547, 0
  %1744 = vmatpush.xpose.msra.mxu0 0.0
  %1745 = vmatpush.xpose.msra.mxu0 0.0
  %1746 = vmatpush.xpose.msra.mxu0 0.0
  %1747 = vmatpush.xpose.msra.mxu0 0.0
  %1748 = vmatpush.xpose.msra.mxu0 0.0
  %1749 = vmatpush.xpose.msra.mxu0 0.0
  %1750 = vmatpush.xpose.msra.mxu0 0.0
  %1751 = vmatpush.xpose.msra.mxu0 0.0
  %1752 = vmatpush.xpose.msra.mxu0 0.0
  %1753 = vmatpush.xpose.msra.mxu0 0.0
  %1754 = vmatpush.xpose.msra.mxu0 0.0
  %1755 = vmatpush.xpose.msra.mxu0 0.0
  %1756 = vmatpush.xpose.msra.mxu0 0.0
  %1757 = vmatpush.xpose.msra.mxu0 0.0
  %1758 = vmatpush.xpose.msra.mxu0 0.0
  %1759 = vmatpush.xpose.msra.mxu0 %v1742
  %1760 = vmatmul.f32.gmra.mxu0 %v1739
  %v1761 = vpop.f32.mrf.mxu0
  %v1762 = vadd.f32 0.0, %v1761
  %1763 = vdwg.mxu0
  %v1765 = vsel %vm457, %v1475, 0
  %v1768 = vsel %vm457, %v1550, 0
  %1770 = vmatpush.xpose.msra.mxu0 0.0
  %1771 = vmatpush.xpose.msra.mxu0 0.0
  %1772 = vmatpush.xpose.msra.mxu0 0.0
  %1773 = vmatpush.xpose.msra.mxu0 0.0
  %1774 = vmatpush.xpose.msra.mxu0 0.0
  %1775 = vmatpush.xpose.msra.mxu0 0.0
  %1776 = vmatpush.xpose.msra.mxu0 0.0
  %1777 = vmatpush.xpose.msra.mxu0 0.0
  %1778 = vmatpush.xpose.msra.mxu0 0.0
  %1779 = vmatpush.xpose.msra.mxu0 0.0
  %1780 = vmatpush.xpose.msra.mxu0 0.0
  %1781 = vmatpush.xpose.msra.mxu0 0.0
  %1782 = vmatpush.xpose.msra.mxu0 0.0
  %1783 = vmatpush.xpose.msra.mxu0 0.0
  %1784 = vmatpush.xpose.msra.mxu0 0.0
  %1785 = vmatpush.xpose.msra.mxu0 %v1768
  %1786 = vmatmul.f32.gmra.mxu0 %v1765
  %v1787 = vpop.f32.mrf.mxu0
  %v1788 = vadd.f32 0.0, %v1787
  %1789 = vdwg.mxu0
  %v1791 = vsel %vm457, %v1478, 0
  %v1794 = vsel %vm457, %v1553, 0
  %1796 = vmatpush.xpose.msra.mxu0 0.0
  %1797 = vmatpush.xpose.msra.mxu0 0.0
  %1798 = vmatpush.xpose.msra.mxu0 0.0
  %1799 = vmatpush.xpose.msra.mxu0 0.0
  %1800 = vmatpush.xpose.msra.mxu0 0.0
  %1801 = vmatpush.xpose.msra.mxu0 0.0
  %1802 = vmatpush.xpose.msra.mxu0 0.0
  %1803 = vmatpush.xpose.msra.mxu0 0.0
  %1804 = vmatpush.xpose.msra.mxu0 0.0
  %1805 = vmatpush.xpose.msra.mxu0 0.0
  %1806 = vmatpush.xpose.msra.mxu0 0.0
  %1807 = vmatpush.xpose.msra.mxu0 0.0
  %1808 = vmatpush.xpose.msra.mxu0 0.0
  %1809 = vmatpush.xpose.msra.mxu0 0.0
  %1810 = vmatpush.xpose.msra.mxu0 0.0
  %1811 = vmatpush.xpose.msra.mxu0 %v1794
  %1812 = vmatmul.f32.gmra.mxu0 %v1791
  %v1813 = vpop.f32.mrf.mxu0
  %v1814 = vadd.f32 0.0, %v1813
  %1815 = vdwg.mxu0
  %v1817 = vsel %vm457, %v1481, 0
  %v1820 = vsel %vm457, %v1556, 0
  %1822 = vmatpush.xpose.msra.mxu0 0.0
  %1823 = vmatpush.xpose.msra.mxu0 0.0
  %1824 = vmatpush.xpose.msra.mxu0 0.0
  %1825 = vmatpush.xpose.msra.mxu0 0.0
  %1826 = vmatpush.xpose.msra.mxu0 0.0
  %1827 = vmatpush.xpose.msra.mxu0 0.0
  %1828 = vmatpush.xpose.msra.mxu0 0.0
  %1829 = vmatpush.xpose.msra.mxu0 0.0
  %1830 = vmatpush.xpose.msra.mxu0 0.0
  %1831 = vmatpush.xpose.msra.mxu0 0.0
  %1832 = vmatpush.xpose.msra.mxu0 0.0
  %1833 = vmatpush.xpose.msra.mxu0 0.0
  %1834 = vmatpush.xpose.msra.mxu0 0.0
  %1835 = vmatpush.xpose.msra.mxu0 0.0
  %1836 = vmatpush.xpose.msra.mxu0 0.0
  %1837 = vmatpush.xpose.msra.mxu0 %v1820
  %1838 = vmatmul.f32.gmra.mxu0 %v1817
  %v1839 = vpop.f32.mrf.mxu0
  %v1840 = vadd.f32 0.0, %v1839
  %1841 = vdwg.mxu0
  %v1843 = vsel %vm457, %v1484, 0
  %v1846 = vsel %vm457, %v1559, 0
  %1848 = vmatpush.xpose.msra.mxu0 0.0
  %1849 = vmatpush.xpose.msra.mxu0 0.0
  %1850 = vmatpush.xpose.msra.mxu0 0.0
  %1851 = vmatpush.xpose.msra.mxu0 0.0
  %1852 = vmatpush.xpose.msra.mxu0 0.0
  %1853 = vmatpush.xpose.msra.mxu0 0.0
  %1854 = vmatpush.xpose.msra.mxu0 0.0
  %1855 = vmatpush.xpose.msra.mxu0 0.0
  %1856 = vmatpush.xpose.msra.mxu0 0.0
  %1857 = vmatpush.xpose.msra.mxu0 0.0
  %1858 = vmatpush.xpose.msra.mxu0 0.0
  %1859 = vmatpush.xpose.msra.mxu0 0.0
  %1860 = vmatpush.xpose.msra.mxu0 0.0
  %1861 = vmatpush.xpose.msra.mxu0 0.0
  %1862 = vmatpush.xpose.msra.mxu0 0.0
  %1863 = vmatpush.xpose.msra.mxu0 %v1846
  %1864 = vmatmul.f32.gmra.mxu0 %v1843
  %v1865 = vpop.f32.mrf.mxu0
  %v1866 = vadd.f32 0.0, %v1865
  %1867 = vdwg.mxu0
  %v1869 = vsel %vm457, %v1487, 0
  %v1872 = vsel %vm457, %v1562, 0
  %1874 = vmatpush.xpose.msra.mxu0 0.0
  %1875 = vmatpush.xpose.msra.mxu0 0.0
  %1876 = vmatpush.xpose.msra.mxu0 0.0
  %1877 = vmatpush.xpose.msra.mxu0 0.0
  %1878 = vmatpush.xpose.msra.mxu0 0.0
  %1879 = vmatpush.xpose.msra.mxu0 0.0
  %1880 = vmatpush.xpose.msra.mxu0 0.0
  %1881 = vmatpush.xpose.msra.mxu0 0.0
  %1882 = vmatpush.xpose.msra.mxu0 0.0
  %1883 = vmatpush.xpose.msra.mxu0 0.0
  %1884 = vmatpush.xpose.msra.mxu0 0.0
  %1885 = vmatpush.xpose.msra.mxu0 0.0
  %1886 = vmatpush.xpose.msra.mxu0 0.0
  %1887 = vmatpush.xpose.msra.mxu0 0.0
  %1888 = vmatpush.xpose.msra.mxu0 0.0
  %1889 = vmatpush.xpose.msra.mxu0 %v1872
  %1890 = vmatmul.f32.gmra.mxu0 %v1869
  %v1891 = vpop.f32.mrf.mxu0
  %v1892 = vadd.f32 0.0, %v1891
  %1893 = vdwg.mxu0
  %v1895 = vsel %vm457, %v1490, 0
  %v1898 = vsel %vm457, %v1565, 0
  %1900 = vmatpush.xpose.msra.mxu0 0.0
  %1901 = vmatpush.xpose.msra.mxu0 0.0
  %1902 = vmatpush.xpose.msra.mxu0 0.0
  %1903 = vmatpush.xpose.msra.mxu0 0.0
  %1904 = vmatpush.xpose.msra.mxu0 0.0
  %1905 = vmatpush.xpose.msra.mxu0 0.0
  %1906 = vmatpush.xpose.msra.mxu0 0.0
  %1907 = vmatpush.xpose.msra.mxu0 0.0
  %1908 = vmatpush.xpose.msra.mxu0 0.0
  %1909 = vmatpush.xpose.msra.mxu0 0.0
  %1910 = vmatpush.xpose.msra.mxu0 0.0
  %1911 = vmatpush.xpose.msra.mxu0 0.0
  %1912 = vmatpush.xpose.msra.mxu0 0.0
  %1913 = vmatpush.xpose.msra.mxu0 0.0
  %1914 = vmatpush.xpose.msra.mxu0 0.0
  %1915 = vmatpush.xpose.msra.mxu0 %v1898
  %1916 = vmatmul.f32.gmra.mxu0 %v1895
  %v1917 = vpop.f32.mrf.mxu0
  %v1918 = vadd.f32 0.0, %v1917
  %1919 = vdwg.mxu0
  %v1921 = vsel %vm457, %v1493, 0
  %v1924 = vsel %vm457, %v1568, 0
  %1926 = vmatpush.xpose.msra.mxu0 0.0
  %1927 = vmatpush.xpose.msra.mxu0 0.0
  %1928 = vmatpush.xpose.msra.mxu0 0.0
  %1929 = vmatpush.xpose.msra.mxu0 0.0
  %1930 = vmatpush.xpose.msra.mxu0 0.0
  %1931 = vmatpush.xpose.msra.mxu0 0.0
  %1932 = vmatpush.xpose.msra.mxu0 0.0
  %1933 = vmatpush.xpose.msra.mxu0 0.0
  %1934 = vmatpush.xpose.msra.mxu0 0.0
  %1935 = vmatpush.xpose.msra.mxu0 0.0
  %1936 = vmatpush.xpose.msra.mxu0 0.0
  %1937 = vmatpush.xpose.msra.mxu0 0.0
  %1938 = vmatpush.xpose.msra.mxu0 0.0
  %1939 = vmatpush.xpose.msra.mxu0 0.0
  %1940 = vmatpush.xpose.msra.mxu0 0.0
  %1941 = vmatpush.xpose.msra.mxu0 %v1924
  %1942 = vmatmul.f32.gmra.mxu0 %v1921
  %v1943 = vpop.f32.mrf.mxu0
  %v1944 = vadd.f32 0.0, %v1943
  %1945 = vdwg.mxu0
  %v1947 = vsel %vm457, %v1496, 0
  %v1950 = vsel %vm457, %v1571, 0
  %1952 = vmatpush.xpose.msra.mxu0 0.0
  %1953 = vmatpush.xpose.msra.mxu0 0.0
  %1954 = vmatpush.xpose.msra.mxu0 0.0
  %1955 = vmatpush.xpose.msra.mxu0 0.0
  %1956 = vmatpush.xpose.msra.mxu0 0.0
  %1957 = vmatpush.xpose.msra.mxu0 0.0
  %1958 = vmatpush.xpose.msra.mxu0 0.0
  %1959 = vmatpush.xpose.msra.mxu0 0.0
  %1960 = vmatpush.xpose.msra.mxu0 0.0
  %1961 = vmatpush.xpose.msra.mxu0 0.0
  %1962 = vmatpush.xpose.msra.mxu0 0.0
  %1963 = vmatpush.xpose.msra.mxu0 0.0
  %1964 = vmatpush.xpose.msra.mxu0 0.0
  %1965 = vmatpush.xpose.msra.mxu0 0.0
  %1966 = vmatpush.xpose.msra.mxu0 0.0
  %1967 = vmatpush.xpose.msra.mxu0 %v1950
  %1968 = vmatmul.f32.gmra.mxu0 %v1947
  %v1969 = vpop.f32.mrf.mxu0
  %v1970 = vadd.f32 0.0, %v1969
  %1971 = vdwg.mxu0
  %v1973 = vsel %vm457, %v1499, 0
  %v1976 = vsel %vm457, %v1574, 0
  %1978 = vmatpush.xpose.msra.mxu0 0.0
  %1979 = vmatpush.xpose.msra.mxu0 0.0
  %1980 = vmatpush.xpose.msra.mxu0 0.0
  %1981 = vmatpush.xpose.msra.mxu0 0.0
  %1982 = vmatpush.xpose.msra.mxu0 0.0
  %1983 = vmatpush.xpose.msra.mxu0 0.0
  %1984 = vmatpush.xpose.msra.mxu0 0.0
  %1985 = vmatpush.xpose.msra.mxu0 0.0
  %1986 = vmatpush.xpose.msra.mxu0 0.0
  %1987 = vmatpush.xpose.msra.mxu0 0.0
  %1988 = vmatpush.xpose.msra.mxu0 0.0
  %1989 = vmatpush.xpose.msra.mxu0 0.0
  %1990 = vmatpush.xpose.msra.mxu0 0.0
  %1991 = vmatpush.xpose.msra.mxu0 0.0
  %1992 = vmatpush.xpose.msra.mxu0 0.0
  %1993 = vmatpush.xpose.msra.mxu0 %v1976
  %1994 = vmatmul.f32.gmra.mxu0 %v1973
  %v1995 = vpop.f32.mrf.mxu0
  %v1996 = vadd.f32 0.0, %v1995
  %1997 = vdwg.mxu0
  %v1999 = vsel %vm457, %v1502, 0
  %v2002 = vsel %vm457, %v1577, 0
  %2004 = vmatpush.xpose.msra.mxu0 0.0
  %2005 = vmatpush.xpose.msra.mxu0 0.0
  %2006 = vmatpush.xpose.msra.mxu0 0.0
  %2007 = vmatpush.xpose.msra.mxu0 0.0
  %2008 = vmatpush.xpose.msra.mxu0 0.0
  %2009 = vmatpush.xpose.msra.mxu0 0.0
  %2010 = vmatpush.xpose.msra.mxu0 0.0
  %2011 = vmatpush.xpose.msra.mxu0 0.0
  %2012 = vmatpush.xpose.msra.mxu0 0.0
  %2013 = vmatpush.xpose.msra.mxu0 0.0
  %2014 = vmatpush.xpose.msra.mxu0 0.0
  %2015 = vmatpush.xpose.msra.mxu0 0.0
  %2016 = vmatpush.xpose.msra.mxu0 0.0
  %2017 = vmatpush.xpose.msra.mxu0 0.0
  %2018 = vmatpush.xpose.msra.mxu0 0.0
  %2019 = vmatpush.xpose.msra.mxu0 %v2002
  %2020 = vmatmul.f32.gmra.mxu0 %v1999
  %v2021 = vpop.f32.mrf.mxu0
  %v2022 = vadd.f32 0.0, %v2021
  %2023 = vdwg.mxu0
  %v2025 = vsel %vm457, %v1505, 0
  %v2028 = vsel %vm457, %v1580, 0
  %2030 = vmatpush.xpose.msra.mxu0 0.0
  %2031 = vmatpush.xpose.msra.mxu0 0.0
  %2032 = vmatpush.xpose.msra.mxu0 0.0
  %2033 = vmatpush.xpose.msra.mxu0 0.0
  %2034 = vmatpush.xpose.msra.mxu0 0.0
  %2035 = vmatpush.xpose.msra.mxu0 0.0
  %2036 = vmatpush.xpose.msra.mxu0 0.0
  %2037 = vmatpush.xpose.msra.mxu0 0.0
  %2038 = vmatpush.xpose.msra.mxu0 0.0
  %2039 = vmatpush.xpose.msra.mxu0 0.0
  %2040 = vmatpush.xpose.msra.mxu0 0.0
  %2041 = vmatpush.xpose.msra.mxu0 0.0
  %2042 = vmatpush.xpose.msra.mxu0 0.0
  %2043 = vmatpush.xpose.msra.mxu0 0.0
  %2044 = vmatpush.xpose.msra.mxu0 0.0
  %2045 = vmatpush.xpose.msra.mxu0 %v2028
  %2046 = vmatmul.f32.gmra.mxu0 %v2025
  %v2047 = vpop.f32.mrf.mxu0
  %v2048 = vadd.f32 0.0, %v2047
  %2049 = vdwg.mxu0
  %v2051 = vsel %vm457, %v1508, 0
  %v2054 = vsel %vm457, %v1583, 0
  %2056 = vmatpush.xpose.msra.mxu0 0.0
  %2057 = vmatpush.xpose.msra.mxu0 0.0
  %2058 = vmatpush.xpose.msra.mxu0 0.0
  %2059 = vmatpush.xpose.msra.mxu0 0.0
  %2060 = vmatpush.xpose.msra.mxu0 0.0
  %2061 = vmatpush.xpose.msra.mxu0 0.0
  %2062 = vmatpush.xpose.msra.mxu0 0.0
  %2063 = vmatpush.xpose.msra.mxu0 0.0
  %2064 = vmatpush.xpose.msra.mxu0 0.0
  %2065 = vmatpush.xpose.msra.mxu0 0.0
  %2066 = vmatpush.xpose.msra.mxu0 0.0
  %2067 = vmatpush.xpose.msra.mxu0 0.0
  %2068 = vmatpush.xpose.msra.mxu0 0.0
  %2069 = vmatpush.xpose.msra.mxu0 0.0
  %2070 = vmatpush.xpose.msra.mxu0 0.0
  %2071 = vmatpush.xpose.msra.mxu0 %v2054
  %2072 = vmatmul.f32.gmra.mxu0 %v2051
  %v2073 = vpop.f32.mrf.mxu0
  %v2074 = vadd.f32 0.0, %v2073
  %2075 = vdwg.mxu0
  %v2076 = vsel %vm457, %v1684, -inf
  %2077 = vmax.xlane.f32.xlu0 %v2076
  %v2078 = vpop.xlane.xlu0 %2077
  %v2079 = vsel %vm457, %v1710, -inf
  %2080 = vmax.xlane.f32.xlu0 %v2079
  %v2081 = vpop.xlane.xlu0 %2080
  %v2082 = vsel %vm457, %v1736, -inf
  %2083 = vmax.xlane.f32.xlu0 %v2082
  %v2084 = vpop.xlane.xlu0 %2083
  %v2085 = vsel %vm457, %v1762, -inf
  %2086 = vmax.xlane.f32.xlu0 %v2085
  %v2087 = vpop.xlane.xlu0 %2086
  %v2088 = vsel %vm457, %v1788, -inf
  %2089 = vmax.xlane.f32.xlu0 %v2088
  %v2090 = vpop.xlane.xlu0 %2089
  %v2091 = vsel %vm457, %v1814, -inf
  %2092 = vmax.xlane.f32.xlu0 %v2091
  %v2093 = vpop.xlane.xlu0 %2092
  %v2094 = vsel %vm457, %v1840, -inf
  %2095 = vmax.xlane.f32.xlu0 %v2094
  %v2096 = vpop.xlane.xlu0 %2095
  %v2097 = vsel %vm457, %v1866, -inf
  %2098 = vmax.xlane.f32.xlu0 %v2097
  %v2099 = vpop.xlane.xlu0 %2098
  %v2100 = vsel %vm457, %v1892, -inf
  %2101 = vmax.xlane.f32.xlu0 %v2100
  %v2102 = vpop.xlane.xlu0 %2101
  %v2103 = vsel %vm457, %v1918, -inf
  %2104 = vmax.xlane.f32.xlu0 %v2103
  %v2105 = vpop.xlane.xlu0 %2104
  %v2106 = vsel %vm457, %v1944, -inf
  %2107 = vmax.xlane.f32.xlu0 %v2106
  %v2108 = vpop.xlane.xlu0 %2107
  %v2109 = vsel %vm457, %v1970, -inf
  %2110 = vmax.xlane.f32.xlu0 %v2109
  %v2111 = vpop.xlane.xlu0 %2110
  %v2112 = vsel %vm457, %v1996, -inf
  %2113 = vmax.xlane.f32.xlu0 %v2112
  %v2114 = vpop.xlane.xlu0 %2113
  %v2115 = vsel %vm457, %v2022, -inf
  %2116 = vmax.xlane.f32.xlu0 %v2115
  %v2117 = vpop.xlane.xlu0 %2116
  %v2118 = vsel %vm457, %v2048, -inf
  %2119 = vmax.xlane.f32.xlu0 %v2118
  %v2120 = vpop.xlane.xlu0 %2119
  %v2121 = vsel %vm457, %v2074, -inf
  %2122 = vmax.xlane.f32.xlu0 %v2121
  %v2123 = vpop.xlane.xlu0 %2122
  %v2124 = vsub.f32 %v1684, %v2078
  %v2125 = vsub.f32 %v1710, %v2081
  %v2126 = vsub.f32 %v1736, %v2084
  %v2127 = vsub.f32 %v1762, %v2087
  %v2128 = vsub.f32 %v1788, %v2090
  %v2129 = vsub.f32 %v1814, %v2093
  %v2130 = vsub.f32 %v1840, %v2096
  %v2131 = vsub.f32 %v1866, %v2099
  %v2132 = vsub.f32 %v1892, %v2102
  %v2133 = vsub.f32 %v1918, %v2105
  %v2134 = vsub.f32 %v1944, %v2108
  %v2135 = vsub.f32 %v1970, %v2111
  %v2136 = vsub.f32 %v1996, %v2114
  %v2137 = vsub.f32 %v2022, %v2117
  %v2138 = vsub.f32 %v2048, %v2120
  %v2139 = vsub.f32 %v2074, %v2123
  %v2140 = vmul.f32 %v2124, 1.442695
  %v2141 = vpow.pop %v2140
  %v2142 = vmul.f32 %v2125, 1.442695
  %v2143 = vpow.pop %v2142
  %v2144 = vmul.f32 %v2126, 1.442695
  %v2145 = vpow.pop %v2144
  %v2146 = vmul.f32 %v2127, 1.442695
  %v2147 = vpow.pop %v2146
  %v2148 = vmul.f32 %v2128, 1.442695
  %v2149 = vpow.pop %v2148
  %v2150 = vmul.f32 %v2129, 1.442695
  %v2151 = vpow.pop %v2150
  %v2152 = vmul.f32 %v2130, 1.442695
  %v2153 = vpow.pop %v2152
  %v2154 = vmul.f32 %v2131, 1.442695
  %v2155 = vpow.pop %v2154
  %v2156 = vmul.f32 %v2132, 1.442695
  %v2157 = vpow.pop %v2156
  %v2158 = vmul.f32 %v2133, 1.442695
  %v2159 = vpow.pop %v2158
  %v2160 = vmul.f32 %v2134, 1.442695
  %v2161 = vpow.pop %v2160
  %v2162 = vmul.f32 %v2135, 1.442695
  %v2163 = vpow.pop %v2162
  %v2164 = vmul.f32 %v2136, 1.442695
  %v2165 = vpow.pop %v2164
  %v2166 = vmul.f32 %v2137, 1.442695
  %v2167 = vpow.pop %v2166
  %v2168 = vmul.f32 %v2138, 1.442695
  %v2169 = vpow.pop %v2168
  %v2170 = vmul.f32 %v2139, 1.442695
  %v2171 = vpow.pop %v2170
  %v2172 = vsel %vm457, %v2141, 0.0
  %2173 = vadd.xlane.f32.xlu0 %v2172
  %v2174 = vpop.xlane.xlu0 %2173
  %v2175 = vsel %vm457, %v2143, 0.0
  %2176 = vadd.xlane.f32.xlu0 %v2175
  %v2177 = vpop.xlane.xlu0 %2176
  %v2178 = vsel %vm457, %v2145, 0.0
  %2179 = vadd.xlane.f32.xlu0 %v2178
  %v2180 = vpop.xlane.xlu0 %2179
  %v2181 = vsel %vm457, %v2147, 0.0
  %2182 = vadd.xlane.f32.xlu0 %v2181
  %v2183 = vpop.xlane.xlu0 %2182
  %v2184 = vsel %vm457, %v2149, 0.0
  %2185 = vadd.xlane.f32.xlu0 %v2184
  %v2186 = vpop.xlane.xlu0 %2185
  %v2187 = vsel %vm457, %v2151, 0.0
  %2188 = vadd.xlane.f32.xlu0 %v2187
  %v2189 = vpop.xlane.xlu0 %2188
  %v2190 = vsel %vm457, %v2153, 0.0
  %2191 = vadd.xlane.f32.xlu0 %v2190
  %v2192 = vpop.xlane.xlu0 %2191
  %v2193 = vsel %vm457, %v2155, 0.0
  %2194 = vadd.xlane.f32.xlu0 %v2193
  %v2195 = vpop.xlane.xlu0 %2194
  %v2196 = vsel %vm457, %v2157, 0.0
  %2197 = vadd.xlane.f32.xlu0 %v2196
  %v2198 = vpop.xlane.xlu0 %2197
  %v2199 = vsel %vm457, %v2159, 0.0
  %2200 = vadd.xlane.f32.xlu0 %v2199
  %v2201 = vpop.xlane.xlu0 %2200
  %v2202 = vsel %vm457, %v2161, 0.0
  %2203 = vadd.xlane.f32.xlu0 %v2202
  %v2204 = vpop.xlane.xlu0 %2203
  %v2205 = vsel %vm457, %v2163, 0.0
  %2206 = vadd.xlane.f32.xlu0 %v2205
  %v2207 = vpop.xlane.xlu0 %2206
  %v2208 = vsel %vm457, %v2165, 0.0
  %2209 = vadd.xlane.f32.xlu0 %v2208
  %v2210 = vpop.xlane.xlu0 %2209
  %v2211 = vsel %vm457, %v2167, 0.0
  %2212 = vadd.xlane.f32.xlu0 %v2211
  %v2213 = vpop.xlane.xlu0 %2212
  %v2214 = vsel %vm457, %v2169, 0.0
  %2215 = vadd.xlane.f32.xlu0 %v2214
  %v2216 = vpop.xlane.xlu0 %2215
  %v2217 = vsel %vm457, %v2171, 0.0
  %2218 = vadd.xlane.f32.xlu0 %v2217
  %v2219 = vpop.xlane.xlu0 %2218
  %v2220 = vrcp.pop %v2174
  %v2221 = vrcp.pop %v2177
  %v2222 = vrcp.pop %v2180
  %v2223 = vrcp.pop %v2183
  %v2224 = vrcp.pop %v2186
  %v2225 = vrcp.pop %v2189
  %v2226 = vrcp.pop %v2192
  %v2227 = vrcp.pop %v2195
  %v2228 = vrcp.pop %v2198
  %v2229 = vrcp.pop %v2201
  %v2230 = vrcp.pop %v2204
  %v2231 = vrcp.pop %v2207
  %v2232 = vrcp.pop %v2210
  %v2233 = vrcp.pop %v2213
  %v2234 = vrcp.pop %v2216
  %v2235 = vrcp.pop %v2219
  %v2236 = vmul.f32 %v2141, %v2220
  %v2237 = vmul.f32 %v2143, %v2221
  %v2238 = vmul.f32 %v2145, %v2222
  %v2239 = vmul.f32 %v2147, %v2223
  %v2240 = vmul.f32 %v2149, %v2224
  %v2241 = vmul.f32 %v2151, %v2225
  %v2242 = vmul.f32 %v2153, %v2226
  %v2243 = vmul.f32 %v2155, %v2227
  %v2244 = vmul.f32 %v2157, %v2228
  %v2245 = vmul.f32 %v2159, %v2229
  %v2246 = vmul.f32 %v2161, %v2230
  %v2247 = vmul.f32 %v2163, %v2231
  %v2248 = vmul.f32 %v2165, %v2232
  %v2249 = vmul.f32 %v2167, %v2233
  %v2250 = vmul.f32 %v2169, %v2234
  %v2251 = vmul.f32 %v2171, %v2235
  %s2252 = scalar_lea.vmem %s24, 128
  %2253 = vst.msk [vmem:[%s2252] sm:$0xff] %vm457, %v2236
  %2254 = vst.msk [vmem:[%s2252 + $0x8] sm:$0xff] %vm457, %v2237
  %2255 = vst.msk [vmem:[%s2252 + $0x10] sm:$0xff] %vm457, %v2238
  %2256 = vst.msk [vmem:[%s2252 + $0x18] sm:$0xff] %vm457, %v2239
  %2257 = vst.msk [vmem:[%s2252 + $0x20] sm:$0xff] %vm457, %v2240
  %2258 = vst.msk [vmem:[%s2252 + $0x28] sm:$0xff] %vm457, %v2241
  %2259 = vst.msk [vmem:[%s2252 + $0x30] sm:$0xff] %vm457, %v2242
  %2260 = vst.msk [vmem:[%s2252 + $0x38] sm:$0xff] %vm457, %v2243
  %2261 = vst.msk [vmem:[%s2252 + $0x40] sm:$0xff] %vm457, %v2244
  %2262 = vst.msk [vmem:[%s2252 + $0x48] sm:$0xff] %vm457, %v2245
  %2263 = vst.msk [vmem:[%s2252 + $0x50] sm:$0xff] %vm457, %v2246
  %2264 = vst.msk [vmem:[%s2252 + $0x58] sm:$0xff] %vm457, %v2247
  %2265 = vst.msk [vmem:[%s2252 + $0x60] sm:$0xff] %vm457, %v2248
  %2266 = vst.msk [vmem:[%s2252 + $0x68] sm:$0xff] %vm457, %v2249
  %2267 = vst.msk [vmem:[%s2252 + $0x70] sm:$0xff] %vm457, %v2250
  %2268 = vst.msk [vmem:[%s2252 + $0x78] sm:$0xff] %vm457, %v2251
  %v2270 = vsel %vm457, %v2236, 0
  %2272 = vmatpush.msra.mxu0 0.0
  %2273 = vmatpush.msra.mxu0 0.0
  %2274 = vmatpush.msra.mxu0 0.0
  %2275 = vmatpush.msra.mxu0 0.0
  %2276 = vmatpush.msra.mxu0 0.0
  %2277 = vmatpush.msra.mxu0 0.0
  %2278 = vmatpush.msra.mxu0 0.0
  %2279 = vmatpush.msra.mxu0 0.0
  %2280 = vmatpush.msra.mxu0 0.0
  %2281 = vmatpush.msra.mxu0 0.0
  %2282 = vmatpush.msra.mxu0 0.0
  %2283 = vmatpush.msra.mxu0 0.0
  %2284 = vmatpush.msra.mxu0 0.0
  %2285 = vmatpush.msra.mxu0 0.0
  %2286 = vmatpush.msra.mxu0 0.0
  %2287 = vmatpush.msra.mxu0 %v1613
  %2288 = vmatmul.f32.gmra.mxu0 %v2270
  %v2289 = vpop.f32.mrf.mxu0
  %v2290 = vadd.f32 0.0, %v2289
  %2291 = vdwg.mxu0
  %v2293 = vsel %vm457, %v2237, 0
  %2295 = vmatpush.msra.mxu0 0.0
  %2296 = vmatpush.msra.mxu0 0.0
  %2297 = vmatpush.msra.mxu0 0.0
  %2298 = vmatpush.msra.mxu0 0.0
  %2299 = vmatpush.msra.mxu0 0.0
  %2300 = vmatpush.msra.mxu0 0.0
  %2301 = vmatpush.msra.mxu0 0.0
  %2302 = vmatpush.msra.mxu0 0.0
  %2303 = vmatpush.msra.mxu0 0.0
  %2304 = vmatpush.msra.mxu0 0.0
  %2305 = vmatpush.msra.mxu0 0.0
  %2306 = vmatpush.msra.mxu0 0.0
  %2307 = vmatpush.msra.mxu0 0.0
  %2308 = vmatpush.msra.mxu0 0.0
  %2309 = vmatpush.msra.mxu0 0.0
  %2310 = vmatpush.msra.mxu0 %v1616
  %2311 = vmatmul.f32.gmra.mxu0 %v2293
  %v2312 = vpop.f32.mrf.mxu0
  %v2313 = vadd.f32 0.0, %v2312
  %2314 = vdwg.mxu0
  %v2316 = vsel %vm457, %v2238, 0
  %2318 = vmatpush.msra.mxu0 0.0
  %2319 = vmatpush.msra.mxu0 0.0
  %2320 = vmatpush.msra.mxu0 0.0
  %2321 = vmatpush.msra.mxu0 0.0
  %2322 = vmatpush.msra.mxu0 0.0
  %2323 = vmatpush.msra.mxu0 0.0
  %2324 = vmatpush.msra.mxu0 0.0
  %2325 = vmatpush.msra.mxu0 0.0
  %2326 = vmatpush.msra.mxu0 0.0
  %2327 = vmatpush.msra.mxu0 0.0
  %2328 = vmatpush.msra.mxu0 0.0
  %2329 = vmatpush.msra.mxu0 0.0
  %2330 = vmatpush.msra.mxu0 0.0
  %2331 = vmatpush.msra.mxu0 0.0
  %2332 = vmatpush.msra.mxu0 0.0
  %2333 = vmatpush.msra.mxu0 %v1619
  %2334 = vmatmul.f32.gmra.mxu0 %v2316
  %v2335 = vpop.f32.mrf.mxu0
  %v2336 = vadd.f32 0.0, %v2335
  %2337 = vdwg.mxu0
  %v2339 = vsel %vm457, %v2239, 0
  %2341 = vmatpush.msra.mxu0 0.0
  %2342 = vmatpush.msra.mxu0 0.0
  %2343 = vmatpush.msra.mxu0 0.0
  %2344 = vmatpush.msra.mxu0 0.0
  %2345 = vmatpush.msra.mxu0 0.0
  %2346 = vmatpush.msra.mxu0 0.0
  %2347 = vmatpush.msra.mxu0 0.0
  %2348 = vmatpush.msra.mxu0 0.0
  %2349 = vmatpush.msra.mxu0 0.0
  %2350 = vmatpush.msra.mxu0 0.0
  %2351 = vmatpush.msra.mxu0 0.0
  %2352 = vmatpush.msra.mxu0 0.0
  %2353 = vmatpush.msra.mxu0 0.0
  %2354 = vmatpush.msra.mxu0 0.0
  %2355 = vmatpush.msra.mxu0 0.0
  %2356 = vmatpush.msra.mxu0 %v1622
  %2357 = vmatmul.f32.gmra.mxu0 %v2339
  %v2358 = vpop.f32.mrf.mxu0
  %v2359 = vadd.f32 0.0, %v2358
  %2360 = vdwg.mxu0
  %v2362 = vsel %vm457, %v2240, 0
  %2364 = vmatpush.msra.mxu0 0.0
  %2365 = vmatpush.msra.mxu0 0.0
  %2366 = vmatpush.msra.mxu0 0.0
  %2367 = vmatpush.msra.mxu0 0.0
  %2368 = vmatpush.msra.mxu0 0.0
  %2369 = vmatpush.msra.mxu0 0.0
  %2370 = vmatpush.msra.mxu0 0.0
  %2371 = vmatpush.msra.mxu0 0.0
  %2372 = vmatpush.msra.mxu0 0.0
  %2373 = vmatpush.msra.mxu0 0.0
  %2374 = vmatpush.msra.mxu0 0.0
  %2375 = vmatpush.msra.mxu0 0.0
  %2376 = vmatpush.msra.mxu0 0.0
  %2377 = vmatpush.msra.mxu0 0.0
  %2378 = vmatpush.msra.mxu0 0.0
  %2379 = vmatpush.msra.mxu0 %v1625
  %2380 = vmatmul.f32.gmra.mxu0 %v2362
  %v2381 = vpop.f32.mrf.mxu0
  %v2382 = vadd.f32 0.0, %v2381
  %2383 = vdwg.mxu0
  %v2385 = vsel %vm457, %v2241, 0
  %2387 = vmatpush.msra.mxu0 0.0
  %2388 = vmatpush.msra.mxu0 0.0
  %2389 = vmatpush.msra.mxu0 0.0
  %2390 = vmatpush.msra.mxu0 0.0
  %2391 = vmatpush.msra.mxu0 0.0
  %2392 = vmatpush.msra.mxu0 0.0
  %2393 = vmatpush.msra.mxu0 0.0
  %2394 = vmatpush.msra.mxu0 0.0
  %2395 = vmatpush.msra.mxu0 0.0
  %2396 = vmatpush.msra.mxu0 0.0
  %2397 = vmatpush.msra.mxu0 0.0
  %2398 = vmatpush.msra.mxu0 0.0
  %2399 = vmatpush.msra.mxu0 0.0
  %2400 = vmatpush.msra.mxu0 0.0
  %2401 = vmatpush.msra.mxu0 0.0
  %2402 = vmatpush.msra.mxu0 %v1628
  %2403 = vmatmul.f32.gmra.mxu0 %v2385
  %v2404 = vpop.f32.mrf.mxu0
  %v2405 = vadd.f32 0.0, %v2404
  %2406 = vdwg.mxu0
  %v2408 = vsel %vm457, %v2242, 0
  %2410 = vmatpush.msra.mxu0 0.0
  %2411 = vmatpush.msra.mxu0 0.0
  %2412 = vmatpush.msra.mxu0 0.0
  %2413 = vmatpush.msra.mxu0 0.0
  %2414 = vmatpush.msra.mxu0 0.0
  %2415 = vmatpush.msra.mxu0 0.0
  %2416 = vmatpush.msra.mxu0 0.0
  %2417 = vmatpush.msra.mxu0 0.0
  %2418 = vmatpush.msra.mxu0 0.0
  %2419 = vmatpush.msra.mxu0 0.0
  %2420 = vmatpush.msra.mxu0 0.0
  %2421 = vmatpush.msra.mxu0 0.0
  %2422 = vmatpush.msra.mxu0 0.0
  %2423 = vmatpush.msra.mxu0 0.0
  %2424 = vmatpush.msra.mxu0 0.0
  %2425 = vmatpush.msra.mxu0 %v1631
  %2426 = vmatmul.f32.gmra.mxu0 %v2408
  %v2427 = vpop.f32.mrf.mxu0
  %v2428 = vadd.f32 0.0, %v2427
  %2429 = vdwg.mxu0
  %v2431 = vsel %vm457, %v2243, 0
  %2433 = vmatpush.msra.mxu0 0.0
  %2434 = vmatpush.msra.mxu0 0.0
  %2435 = vmatpush.msra.mxu0 0.0
  %2436 = vmatpush.msra.mxu0 0.0
  %2437 = vmatpush.msra.mxu0 0.0
  %2438 = vmatpush.msra.mxu0 0.0
  %2439 = vmatpush.msra.mxu0 0.0
  %2440 = vmatpush.msra.mxu0 0.0
  %2441 = vmatpush.msra.mxu0 0.0
  %2442 = vmatpush.msra.mxu0 0.0
  %2443 = vmatpush.msra.mxu0 0.0
  %2444 = vmatpush.msra.mxu0 0.0
  %2445 = vmatpush.msra.mxu0 0.0
  %2446 = vmatpush.msra.mxu0 0.0
  %2447 = vmatpush.msra.mxu0 0.0
  %2448 = vmatpush.msra.mxu0 %v1634
  %2449 = vmatmul.f32.gmra.mxu0 %v2431
  %v2450 = vpop.f32.mrf.mxu0
  %v2451 = vadd.f32 0.0, %v2450
  %2452 = vdwg.mxu0
  %v2454 = vsel %vm457, %v2244, 0
  %2456 = vmatpush.msra.mxu0 0.0
  %2457 = vmatpush.msra.mxu0 0.0
  %2458 = vmatpush.msra.mxu0 0.0
  %2459 = vmatpush.msra.mxu0 0.0
  %2460 = vmatpush.msra.mxu0 0.0
  %2461 = vmatpush.msra.mxu0 0.0
  %2462 = vmatpush.msra.mxu0 0.0
  %2463 = vmatpush.msra.mxu0 0.0
  %2464 = vmatpush.msra.mxu0 0.0
  %2465 = vmatpush.msra.mxu0 0.0
  %2466 = vmatpush.msra.mxu0 0.0
  %2467 = vmatpush.msra.mxu0 0.0
  %2468 = vmatpush.msra.mxu0 0.0
  %2469 = vmatpush.msra.mxu0 0.0
  %2470 = vmatpush.msra.mxu0 0.0
  %2471 = vmatpush.msra.mxu0 %v1637
  %2472 = vmatmul.f32.gmra.mxu0 %v2454
  %v2473 = vpop.f32.mrf.mxu0
  %v2474 = vadd.f32 0.0, %v2473
  %2475 = vdwg.mxu0
  %v2477 = vsel %vm457, %v2245, 0
  %2479 = vmatpush.msra.mxu0 0.0
  %2480 = vmatpush.msra.mxu0 0.0
  %2481 = vmatpush.msra.mxu0 0.0
  %2482 = vmatpush.msra.mxu0 0.0
  %2483 = vmatpush.msra.mxu0 0.0
  %2484 = vmatpush.msra.mxu0 0.0
  %2485 = vmatpush.msra.mxu0 0.0
  %2486 = vmatpush.msra.mxu0 0.0
  %2487 = vmatpush.msra.mxu0 0.0
  %2488 = vmatpush.msra.mxu0 0.0
  %2489 = vmatpush.msra.mxu0 0.0
  %2490 = vmatpush.msra.mxu0 0.0
  %2491 = vmatpush.msra.mxu0 0.0
  %2492 = vmatpush.msra.mxu0 0.0
  %2493 = vmatpush.msra.mxu0 0.0
  %2494 = vmatpush.msra.mxu0 %v1640
  %2495 = vmatmul.f32.gmra.mxu0 %v2477
  %v2496 = vpop.f32.mrf.mxu0
  %v2497 = vadd.f32 0.0, %v2496
  %2498 = vdwg.mxu0
  %v2500 = vsel %vm457, %v2246, 0
  %2502 = vmatpush.msra.mxu0 0.0
  %2503 = vmatpush.msra.mxu0 0.0
  %2504 = vmatpush.msra.mxu0 0.0
  %2505 = vmatpush.msra.mxu0 0.0
  %2506 = vmatpush.msra.mxu0 0.0
  %2507 = vmatpush.msra.mxu0 0.0
  %2508 = vmatpush.msra.mxu0 0.0
  %2509 = vmatpush.msra.mxu0 0.0
  %2510 = vmatpush.msra.mxu0 0.0
  %2511 = vmatpush.msra.mxu0 0.0
  %2512 = vmatpush.msra.mxu0 0.0
  %2513 = vmatpush.msra.mxu0 0.0
  %2514 = vmatpush.msra.mxu0 0.0
  %2515 = vmatpush.msra.mxu0 0.0
  %2516 = vmatpush.msra.mxu0 0.0
  %2517 = vmatpush.msra.mxu0 %v1643
  %2518 = vmatmul.f32.gmra.mxu0 %v2500
  %v2519 = vpop.f32.mrf.mxu0
  %v2520 = vadd.f32 0.0, %v2519
  %2521 = vdwg.mxu0
  %v2523 = vsel %vm457, %v2247, 0
  %2525 = vmatpush.msra.mxu0 0.0
  %2526 = vmatpush.msra.mxu0 0.0
  %2527 = vmatpush.msra.mxu0 0.0
  %2528 = vmatpush.msra.mxu0 0.0
  %2529 = vmatpush.msra.mxu0 0.0
  %2530 = vmatpush.msra.mxu0 0.0
  %2531 = vmatpush.msra.mxu0 0.0
  %2532 = vmatpush.msra.mxu0 0.0
  %2533 = vmatpush.msra.mxu0 0.0
  %2534 = vmatpush.msra.mxu0 0.0
  %2535 = vmatpush.msra.mxu0 0.0
  %2536 = vmatpush.msra.mxu0 0.0
  %2537 = vmatpush.msra.mxu0 0.0
  %2538 = vmatpush.msra.mxu0 0.0
  %2539 = vmatpush.msra.mxu0 0.0
  %2540 = vmatpush.msra.mxu0 %v1646
  %2541 = vmatmul.f32.gmra.mxu0 %v2523
  %v2542 = vpop.f32.mrf.mxu0
  %v2543 = vadd.f32 0.0, %v2542
  %2544 = vdwg.mxu0
  %v2546 = vsel %vm457, %v2248, 0
  %2548 = vmatpush.msra.mxu0 0.0
  %2549 = vmatpush.msra.mxu0 0.0
  %2550 = vmatpush.msra.mxu0 0.0
  %2551 = vmatpush.msra.mxu0 0.0
  %2552 = vmatpush.msra.mxu0 0.0
  %2553 = vmatpush.msra.mxu0 0.0
  %2554 = vmatpush.msra.mxu0 0.0
  %2555 = vmatpush.msra.mxu0 0.0
  %2556 = vmatpush.msra.mxu0 0.0
  %2557 = vmatpush.msra.mxu0 0.0
  %2558 = vmatpush.msra.mxu0 0.0
  %2559 = vmatpush.msra.mxu0 0.0
  %2560 = vmatpush.msra.mxu0 0.0
  %2561 = vmatpush.msra.mxu0 0.0
  %2562 = vmatpush.msra.mxu0 0.0
  %2563 = vmatpush.msra.mxu0 %v1649
  %2564 = vmatmul.f32.gmra.mxu0 %v2546
  %v2565 = vpop.f32.mrf.mxu0
  %v2566 = vadd.f32 0.0, %v2565
  %2567 = vdwg.mxu0
  %v2569 = vsel %vm457, %v2249, 0
  %2571 = vmatpush.msra.mxu0 0.0
  %2572 = vmatpush.msra.mxu0 0.0
  %2573 = vmatpush.msra.mxu0 0.0
  %2574 = vmatpush.msra.mxu0 0.0
  %2575 = vmatpush.msra.mxu0 0.0
  %2576 = vmatpush.msra.mxu0 0.0
  %2577 = vmatpush.msra.mxu0 0.0
  %2578 = vmatpush.msra.mxu0 0.0
  %2579 = vmatpush.msra.mxu0 0.0
  %2580 = vmatpush.msra.mxu0 0.0
  %2581 = vmatpush.msra.mxu0 0.0
  %2582 = vmatpush.msra.mxu0 0.0
  %2583 = vmatpush.msra.mxu0 0.0
  %2584 = vmatpush.msra.mxu0 0.0
  %2585 = vmatpush.msra.mxu0 0.0
  %2586 = vmatpush.msra.mxu0 %v1652
  %2587 = vmatmul.f32.gmra.mxu0 %v2569
  %v2588 = vpop.f32.mrf.mxu0
  %v2589 = vadd.f32 0.0, %v2588
  %2590 = vdwg.mxu0
  %v2592 = vsel %vm457, %v2250, 0
  %2594 = vmatpush.msra.mxu0 0.0
  %2595 = vmatpush.msra.mxu0 0.0
  %2596 = vmatpush.msra.mxu0 0.0
  %2597 = vmatpush.msra.mxu0 0.0
  %2598 = vmatpush.msra.mxu0 0.0
  %2599 = vmatpush.msra.mxu0 0.0
  %2600 = vmatpush.msra.mxu0 0.0
  %2601 = vmatpush.msra.mxu0 0.0
  %2602 = vmatpush.msra.mxu0 0.0
  %2603 = vmatpush.msra.mxu0 0.0
  %2604 = vmatpush.msra.mxu0 0.0
  %2605 = vmatpush.msra.mxu0 0.0
  %2606 = vmatpush.msra.mxu0 0.0
  %2607 = vmatpush.msra.mxu0 0.0
  %2608 = vmatpush.msra.mxu0 0.0
  %2609 = vmatpush.msra.mxu0 %v1655
  %2610 = vmatmul.f32.gmra.mxu0 %v2592
  %v2611 = vpop.f32.mrf.mxu0
  %v2612 = vadd.f32 0.0, %v2611
  %2613 = vdwg.mxu0
  %v2615 = vsel %vm457, %v2251, 0
  %2617 = vmatpush.msra.mxu0 0.0
  %2618 = vmatpush.msra.mxu0 0.0
  %2619 = vmatpush.msra.mxu0 0.0
  %2620 = vmatpush.msra.mxu0 0.0
  %2621 = vmatpush.msra.mxu0 0.0
  %2622 = vmatpush.msra.mxu0 0.0
  %2623 = vmatpush.msra.mxu0 0.0
  %2624 = vmatpush.msra.mxu0 0.0
  %2625 = vmatpush.msra.mxu0 0.0
  %2626 = vmatpush.msra.mxu0 0.0
  %2627 = vmatpush.msra.mxu0 0.0
  %2628 = vmatpush.msra.mxu0 0.0
  %2629 = vmatpush.msra.mxu0 0.0
  %2630 = vmatpush.msra.mxu0 0.0
  %2631 = vmatpush.msra.mxu0 0.0
  %2632 = vmatpush.msra.mxu0 %v1658
  %2633 = vmatmul.f32.gmra.mxu0 %v2615
  %v2634 = vpop.f32.mrf.mxu0
  %v2635 = vadd.f32 0.0, %v2634
  %2636 = vdwg.mxu0
  %s2637 = scalar_lea.vmem %s9, 8
  %v2638 = vld [vmem:[%s2637] sm:$0xff]
  %v2640 = vsel %vm457, %v2290, 0
  %v2643 = vsel %vm457, %v2313, 0
  %v2646 = vsel %vm457, %v2336, 0
  %v2649 = vsel %vm457, %v2359, 0
  %v2652 = vsel %vm457, %v2382, 0
  %v2655 = vsel %vm457, %v2405, 0
  %v2658 = vsel %vm457, %v2428, 0
  %v2661 = vsel %vm457, %v2451, 0
  %v2664 = vsel %vm457, %v2474, 0
  %v2667 = vsel %vm457, %v2497, 0
  %v2670 = vsel %vm457, %v2520, 0
  %v2673 = vsel %vm457, %v2543, 0
  %v2676 = vsel %vm457, %v2566, 0
  %v2679 = vsel %vm457, %v2589, 0
  %v2682 = vsel %vm457, %v2612, 0
  %v2685 = vsel %vm457, %v2635, 0
  %2687 = vmatpush.msra.mxu0 0.0
  %2688 = vmatpush.msra.mxu0 0.0
  %2689 = vmatpush.msra.mxu0 0.0
  %2690 = vmatpush.msra.mxu0 0.0
  %2691 = vmatpush.msra.mxu0 0.0
  %2692 = vmatpush.msra.mxu0 0.0
  %2693 = vmatpush.msra.mxu0 0.0
  %2694 = vmatpush.msra.mxu0 0.0
  %2695 = vmatpush.msra.mxu0 0.0
  %2696 = vmatpush.msra.mxu0 0.0
  %2697 = vmatpush.msra.mxu0 0.0
  %2698 = vmatpush.msra.mxu0 0.0
  %2699 = vmatpush.msra.mxu0 0.0
  %2700 = vmatpush.msra.mxu0 0.0
  %2701 = vmatpush.msra.mxu0 0.0
  %2702 = vmatpush.msra.mxu0 %v2638
  %2703 = vmatmul.f32.gmra.mxu0 %v2640
  %v2704 = vpop.f32.mrf.mxu0
  %v2705 = vadd.f32 0.0, %v2704
  %2706 = vmatmul.f32.gmra.mxu0 %v2643
  %v2707 = vpop.f32.mrf.mxu0
  %v2708 = vadd.f32 0.0, %v2707
  %2709 = vmatmul.f32.gmra.mxu0 %v2646
  %v2710 = vpop.f32.mrf.mxu0
  %v2711 = vadd.f32 0.0, %v2710
  %2712 = vmatmul.f32.gmra.mxu0 %v2649
  %v2713 = vpop.f32.mrf.mxu0
  %v2714 = vadd.f32 0.0, %v2713
  %2715 = vmatmul.f32.gmra.mxu0 %v2652
  %v2716 = vpop.f32.mrf.mxu0
  %v2717 = vadd.f32 0.0, %v2716
  %2718 = vmatmul.f32.gmra.mxu0 %v2655
  %v2719 = vpop.f32.mrf.mxu0
  %v2720 = vadd.f32 0.0, %v2719
  %2721 = vmatmul.f32.gmra.mxu0 %v2658
  %v2722 = vpop.f32.mrf.mxu0
  %v2723 = vadd.f32 0.0, %v2722
  %2724 = vmatmul.f32.gmra.mxu0 %v2661
  %v2725 = vpop.f32.mrf.mxu0
  %v2726 = vadd.f32 0.0, %v2725
  %2727 = vmatmul.f32.gmra.mxu0 %v2664
  %v2728 = vpop.f32.mrf.mxu0
  %v2729 = vadd.f32 0.0, %v2728
  %2730 = vmatmul.f32.gmra.mxu0 %v2667
  %v2731 = vpop.f32.mrf.mxu0
  %v2732 = vadd.f32 0.0, %v2731
  %2733 = vmatmul.f32.gmra.mxu0 %v2670
  %v2734 = vpop.f32.mrf.mxu0
  %v2735 = vadd.f32 0.0, %v2734
  %2736 = vmatmul.f32.gmra.mxu0 %v2673
  %v2737 = vpop.f32.mrf.mxu0
  %v2738 = vadd.f32 0.0, %v2737
  %2739 = vmatmul.f32.gmra.mxu0 %v2676
  %v2740 = vpop.f32.mrf.mxu0
  %v2741 = vadd.f32 0.0, %v2740
  %2742 = vmatmul.f32.gmra.mxu0 %v2679
  %v2743 = vpop.f32.mrf.mxu0
  %v2744 = vadd.f32 0.0, %v2743
  %2745 = vmatmul.f32.gmra.mxu0 %v2682
  %v2746 = vpop.f32.mrf.mxu0
  %v2747 = vadd.f32 0.0, %v2746
  %2748 = vmatmul.f32.gmra.mxu0 %v2685
  %v2749 = vpop.f32.mrf.mxu0
  %v2750 = vadd.f32 0.0, %v2749
  %2751 = vdwg.mxu0
  %v2753 = vsel %vm457, %v1087, 0
  %v2756 = vsel %vm457, %v1110, 0
  %v2759 = vsel %vm457, %v1133, 0
  %v2762 = vsel %vm457, %v1156, 0
  %v2765 = vsel %vm457, %v1179, 0
  %v2768 = vsel %vm457, %v1202, 0
  %v2771 = vsel %vm457, %v1225, 0
  %v2774 = vsel %vm457, %v1248, 0
  %v2777 = vsel %vm457, %v1271, 0
  %v2780 = vsel %vm457, %v1294, 0
  %v2783 = vsel %vm457, %v1317, 0
  %v2786 = vsel %vm457, %v1340, 0
  %v2789 = vsel %vm457, %v1363, 0
  %v2792 = vsel %vm457, %v1386, 0
  %v2795 = vsel %vm457, %v1409, 0
  %v2798 = vsel %vm457, %v1432, 0
  %2800 = vmatpush.msra.mxu0 0.0
  %2801 = vmatpush.msra.mxu0 0.0
  %2802 = vmatpush.msra.mxu0 0.0
  %2803 = vmatpush.msra.mxu0 0.0
  %2804 = vmatpush.msra.mxu0 0.0
  %2805 = vmatpush.msra.mxu0 0.0
  %2806 = vmatpush.msra.mxu0 0.0
  %2807 = vmatpush.msra.mxu0 0.0
  %2808 = vmatpush.msra.mxu0 0.0
  %2809 = vmatpush.msra.mxu0 0.0
  %2810 = vmatpush.msra.mxu0 0.0
  %2811 = vmatpush.msra.mxu0 0.0
  %2812 = vmatpush.msra.mxu0 0.0
  %2813 = vmatpush.msra.mxu0 0.0
  %2814 = vmatpush.msra.mxu0 0.0
  %2815 = vmatpush.msra.mxu0 %v1434
  %2816 = vmatmul.f32.gmra.mxu0 %v2753
  %v2817 = vpop.f32.mrf.mxu0
  %v2818 = vadd.f32 %v2705, %v2817
  %2819 = vmatmul.f32.gmra.mxu0 %v2756
  %v2820 = vpop.f32.mrf.mxu0
  %v2821 = vadd.f32 %v2708, %v2820
  %2822 = vmatmul.f32.gmra.mxu0 %v2759
  %v2823 = vpop.f32.mrf.mxu0
  %v2824 = vadd.f32 %v2711, %v2823
  %2825 = vmatmul.f32.gmra.mxu0 %v2762
  %v2826 = vpop.f32.mrf.mxu0
  %v2827 = vadd.f32 %v2714, %v2826
  %2828 = vmatmul.f32.gmra.mxu0 %v2765
  %v2829 = vpop.f32.mrf.mxu0
  %v2830 = vadd.f32 %v2717, %v2829
  %2831 = vmatmul.f32.gmra.mxu0 %v2768
  %v2832 = vpop.f32.mrf.mxu0
  %v2833 = vadd.f32 %v2720, %v2832
  %2834 = vmatmul.f32.gmra.mxu0 %v2771
  %v2835 = vpop.f32.mrf.mxu0
  %v2836 = vadd.f32 %v2723, %v2835
  %2837 = vmatmul.f32.gmra.mxu0 %v2774
  %v2838 = vpop.f32.mrf.mxu0
  %v2839 = vadd.f32 %v2726, %v2838
  %2840 = vmatmul.f32.gmra.mxu0 %v2777
  %v2841 = vpop.f32.mrf.mxu0
  %v2842 = vadd.f32 %v2729, %v2841
  %2843 = vmatmul.f32.gmra.mxu0 %v2780
  %v2844 = vpop.f32.mrf.mxu0
  %v2845 = vadd.f32 %v2732, %v2844
  %2846 = vmatmul.f32.gmra.mxu0 %v2783
  %v2847 = vpop.f32.mrf.mxu0
  %v2848 = vadd.f32 %v2735, %v2847
  %2849 = vmatmul.f32.gmra.mxu0 %v2786
  %v2850 = vpop.f32.mrf.mxu0
  %v2851 = vadd.f32 %v2738, %v2850
  %2852 = vmatmul.f32.gmra.mxu0 %v2789
  %v2853 = vpop.f32.mrf.mxu0
  %v2854 = vadd.f32 %v2741, %v2853
  %2855 = vmatmul.f32.gmra.mxu0 %v2792
  %v2856 = vpop.f32.mrf.mxu0
  %v2857 = vadd.f32 %v2744, %v2856
  %2858 = vmatmul.f32.gmra.mxu0 %v2795
  %v2859 = vpop.f32.mrf.mxu0
  %v2860 = vadd.f32 %v2747, %v2859
  %2861 = vmatmul.f32.gmra.mxu0 %v2798
  %v2862 = vpop.f32.mrf.mxu0
  %v2863 = vadd.f32 %v2750, %v2862
  %2864 = vdwg.mxu0
  %s2865 = scalar_lea.vmem %s3, 64
  %v2866 = vld [vmem:[%s2865] sm:$0xff]
  %v2867 = vld [vmem:[%s2865 + $0x8] sm:$0xff]
  %v2868 = vld [vmem:[%s2865 + $0x10] sm:$0xff]
  %v2869 = vld [vmem:[%s2865 + $0x18] sm:$0xff]
  %s2870 = scalar_lea.vmem %s4, 2
  %v2871 = vld [vmem:[%s2870] sm:$0x1]
  %v2873 = vperm.slane %v2871, 0
  %2875 = vmatpush.msra.mxu0 0.0
  %2876 = vmatpush.msra.mxu0 0.0
  %2877 = vmatpush.msra.mxu0 0.0
  %2878 = vmatpush.msra.mxu0 0.0
  %2879 = vmatpush.msra.mxu0 0.0
  %2880 = vmatpush.msra.mxu0 0.0
  %2881 = vmatpush.msra.mxu0 0.0
  %2882 = vmatpush.msra.mxu0 0.0
  %2883 = vmatpush.msra.mxu0 0.0
  %2884 = vmatpush.msra.mxu0 0.0
  %2885 = vmatpush.msra.mxu0 0.0
  %2886 = vmatpush.msra.mxu0 0.0
  %2887 = vmatpush.msra.mxu0 %v2869
  %2888 = vmatpush.msra.mxu0 %v2868
  %2889 = vmatpush.msra.mxu0 %v2867
  %2890 = vmatpush.msra.mxu0 %v2866
  %2891 = vmatmul.f32.gmra.mxu0 %v199
  %v2892 = vpop.f32.mrf.mxu0
  %v2893 = vadd.f32 %v2873, %v2892
  %2894 = vmatmul.f32.gmra.mxu0 %v202
  %v2895 = vpop.f32.mrf.mxu0
  %v2896 = vadd.f32 %v2873, %v2895
  %2897 = vmatmul.f32.gmra.mxu0 %v205
  %v2898 = vpop.f32.mrf.mxu0
  %v2899 = vadd.f32 %v2873, %v2898
  %2900 = vmatmul.f32.gmra.mxu0 %v208
  %v2901 = vpop.f32.mrf.mxu0
  %v2902 = vadd.f32 %v2873, %v2901
  %2903 = vmatmul.f32.gmra.mxu0 %v211
  %v2904 = vpop.f32.mrf.mxu0
  %v2905 = vadd.f32 %v2873, %v2904
  %2906 = vmatmul.f32.gmra.mxu0 %v214
  %v2907 = vpop.f32.mrf.mxu0
  %v2908 = vadd.f32 %v2873, %v2907
  %2909 = vmatmul.f32.gmra.mxu0 %v217
  %v2910 = vpop.f32.mrf.mxu0
  %v2911 = vadd.f32 %v2873, %v2910
  %2912 = vmatmul.f32.gmra.mxu0 %v220
  %v2913 = vpop.f32.mrf.mxu0
  %v2914 = vadd.f32 %v2873, %v2913
  %2915 = vmatmul.f32.gmra.mxu0 %v223
  %v2916 = vpop.f32.mrf.mxu0
  %v2917 = vadd.f32 %v2873, %v2916
  %2918 = vmatmul.f32.gmra.mxu0 %v226
  %v2919 = vpop.f32.mrf.mxu0
  %v2920 = vadd.f32 %v2873, %v2919
  %2921 = vmatmul.f32.gmra.mxu0 %v229
  %v2922 = vpop.f32.mrf.mxu0
  %v2923 = vadd.f32 %v2873, %v2922
  %2924 = vmatmul.f32.gmra.mxu0 %v232
  %v2925 = vpop.f32.mrf.mxu0
  %v2926 = vadd.f32 %v2873, %v2925
  %2927 = vmatmul.f32.gmra.mxu0 %v235
  %v2928 = vpop.f32.mrf.mxu0
  %v2929 = vadd.f32 %v2873, %v2928
  %2930 = vmatmul.f32.gmra.mxu0 %v238
  %v2931 = vpop.f32.mrf.mxu0
  %v2932 = vadd.f32 %v2873, %v2931
  %2933 = vmatmul.f32.gmra.mxu0 %v241
  %v2934 = vpop.f32.mrf.mxu0
  %v2935 = vadd.f32 %v2873, %v2934
  %2936 = vmatmul.f32.gmra.mxu0 %v244
  %v2937 = vpop.f32.mrf.mxu0
  %v2938 = vadd.f32 %v2873, %v2937
  %2939 = vdwg.mxu0
  %s2940 = scalar_lea.vmem %s5, 64
  %v2941 = vld [vmem:[%s2940] sm:$0xff]
  %v2942 = vld [vmem:[%s2940 + $0x8] sm:$0xff]
  %v2943 = vld [vmem:[%s2940 + $0x10] sm:$0xff]
  %v2944 = vld [vmem:[%s2940 + $0x18] sm:$0xff]
  %s2945 = scalar_lea.vmem %s6, 2
  %v2946 = vld [vmem:[%s2945] sm:$0x1]
  %v2948 = vperm.slane %v2946, 0
  %2950 = vmatpush.msra.mxu0 0.0
  %2951 = vmatpush.msra.mxu0 0.0
  %2952 = vmatpush.msra.mxu0 0.0
  %2953 = vmatpush.msra.mxu0 0.0
  %2954 = vmatpush.msra.mxu0 0.0
  %2955 = vmatpush.msra.mxu0 0.0
  %2956 = vmatpush.msra.mxu0 0.0
  %2957 = vmatpush.msra.mxu0 0.0
  %2958 = vmatpush.msra.mxu0 0.0
  %2959 = vmatpush.msra.mxu0 0.0
  %2960 = vmatpush.msra.mxu0 0.0
  %2961 = vmatpush.msra.mxu0 0.0
  %2962 = vmatpush.msra.mxu0 %v2944
  %2963 = vmatpush.msra.mxu0 %v2943
  %2964 = vmatpush.msra.mxu0 %v2942
  %2965 = vmatpush.msra.mxu0 %v2941
  %2966 = vmatmul.f32.gmra.mxu0 %v199
  %v2967 = vpop.f32.mrf.mxu0
  %v2968 = vadd.f32 %v2948, %v2967
  %2969 = vmatmul.f32.gmra.mxu0 %v202
  %v2970 = vpop.f32.mrf.mxu0
  %v2971 = vadd.f32 %v2948, %v2970
  %2972 = vmatmul.f32.gmra.mxu0 %v205
  %v2973 = vpop.f32.mrf.mxu0
  %v2974 = vadd.f32 %v2948, %v2973
  %2975 = vmatmul.f32.gmra.mxu0 %v208
  %v2976 = vpop.f32.mrf.mxu0
  %v2977 = vadd.f32 %v2948, %v2976
  %2978 = vmatmul.f32.gmra.mxu0 %v211
  %v2979 = vpop.f32.mrf.mxu0
  %v2980 = vadd.f32 %v2948, %v2979
  %2981 = vmatmul.f32.gmra.mxu0 %v214
  %v2982 = vpop.f32.mrf.mxu0
  %v2983 = vadd.f32 %v2948, %v2982
  %2984 = vmatmul.f32.gmra.mxu0 %v217
  %v2985 = vpop.f32.mrf.mxu0
  %v2986 = vadd.f32 %v2948, %v2985
  %2987 = vmatmul.f32.gmra.mxu0 %v220
  %v2988 = vpop.f32.mrf.mxu0
  %v2989 = vadd.f32 %v2948, %v2988
  %2990 = vmatmul.f32.gmra.mxu0 %v223
  %v2991 = vpop.f32.mrf.mxu0
  %v2992 = vadd.f32 %v2948, %v2991
  %2993 = vmatmul.f32.gmra.mxu0 %v226
  %v2994 = vpop.f32.mrf.mxu0
  %v2995 = vadd.f32 %v2948, %v2994
  %2996 = vmatmul.f32.gmra.mxu0 %v229
  %v2997 = vpop.f32.mrf.mxu0
  %v2998 = vadd.f32 %v2948, %v2997
  %2999 = vmatmul.f32.gmra.mxu0 %v232
  %v3000 = vpop.f32.mrf.mxu0
  %v3001 = vadd.f32 %v2948, %v3000
  %3002 = vmatmul.f32.gmra.mxu0 %v235
  %v3003 = vpop.f32.mrf.mxu0
  %v3004 = vadd.f32 %v2948, %v3003
  %3005 = vmatmul.f32.gmra.mxu0 %v238
  %v3006 = vpop.f32.mrf.mxu0
  %v3007 = vadd.f32 %v2948, %v3006
  %3008 = vmatmul.f32.gmra.mxu0 %v241
  %v3009 = vpop.f32.mrf.mxu0
  %v3010 = vadd.f32 %v2948, %v3009
  %3011 = vmatmul.f32.gmra.mxu0 %v244
  %v3012 = vpop.f32.mrf.mxu0
  %v3013 = vadd.f32 %v2948, %v3012
  %3014 = vdwg.mxu0
  %s3015 = scalar_lea.vmem %s7, 64
  %v3016 = vld [vmem:[%s3015] sm:$0xff]
  %v3017 = vld [vmem:[%s3015 + $0x8] sm:$0xff]
  %v3018 = vld [vmem:[%s3015 + $0x10] sm:$0xff]
  %v3019 = vld [vmem:[%s3015 + $0x18] sm:$0xff]
  %s3020 = scalar_lea.vmem %s8, 2
  %v3021 = vld [vmem:[%s3020] sm:$0x1]
  %v3023 = vperm.slane %v3021, 0
  %3025 = vmatpush.msra.mxu0 0.0
  %3026 = vmatpush.msra.mxu0 0.0
  %3027 = vmatpush.msra.mxu0 0.0
  %3028 = vmatpush.msra.mxu0 0.0
  %3029 = vmatpush.msra.mxu0 0.0
  %3030 = vmatpush.msra.mxu0 0.0
  %3031 = vmatpush.msra.mxu0 0.0
  %3032 = vmatpush.msra.mxu0 0.0
  %3033 = vmatpush.msra.mxu0 0.0
  %3034 = vmatpush.msra.mxu0 0.0
  %3035 = vmatpush.msra.mxu0 0.0
  %3036 = vmatpush.msra.mxu0 0.0
  %3037 = vmatpush.msra.mxu0 %v3019
  %3038 = vmatpush.msra.mxu0 %v3018
  %3039 = vmatpush.msra.mxu0 %v3017
  %3040 = vmatpush.msra.mxu0 %v3016
  %3041 = vmatmul.f32.gmra.mxu0 %v199
  %v3042 = vpop.f32.mrf.mxu0
  %v3043 = vadd.f32 %v3023, %v3042
  %3044 = vmatmul.f32.gmra.mxu0 %v202
  %v3045 = vpop.f32.mrf.mxu0
  %v3046 = vadd.f32 %v3023, %v3045
  %3047 = vmatmul.f32.gmra.mxu0 %v205
  %v3048 = vpop.f32.mrf.mxu0
  %v3049 = vadd.f32 %v3023, %v3048
  %3050 = vmatmul.f32.gmra.mxu0 %v208
  %v3051 = vpop.f32.mrf.mxu0
  %v3052 = vadd.f32 %v3023, %v3051
  %3053 = vmatmul.f32.gmra.mxu0 %v211
  %v3054 = vpop.f32.mrf.mxu0
  %v3055 = vadd.f32 %v3023, %v3054
  %3056 = vmatmul.f32.gmra.mxu0 %v214
  %v3057 = vpop.f32.mrf.mxu0
  %v3058 = vadd.f32 %v3023, %v3057
  %3059 = vmatmul.f32.gmra.mxu0 %v217
  %v3060 = vpop.f32.mrf.mxu0
  %v3061 = vadd.f32 %v3023, %v3060
  %3062 = vmatmul.f32.gmra.mxu0 %v220
  %v3063 = vpop.f32.mrf.mxu0
  %v3064 = vadd.f32 %v3023, %v3063
  %3065 = vmatmul.f32.gmra.mxu0 %v223
  %v3066 = vpop.f32.mrf.mxu0
  %v3067 = vadd.f32 %v3023, %v3066
  %3068 = vmatmul.f32.gmra.mxu0 %v226
  %v3069 = vpop.f32.mrf.mxu0
  %v3070 = vadd.f32 %v3023, %v3069
  %3071 = vmatmul.f32.gmra.mxu0 %v229
  %v3072 = vpop.f32.mrf.mxu0
  %v3073 = vadd.f32 %v3023, %v3072
  %3074 = vmatmul.f32.gmra.mxu0 %v232
  %v3075 = vpop.f32.mrf.mxu0
  %v3076 = vadd.f32 %v3023, %v3075
  %3077 = vmatmul.f32.gmra.mxu0 %v235
  %v3078 = vpop.f32.mrf.mxu0
  %v3079 = vadd.f32 %v3023, %v3078
  %3080 = vmatmul.f32.gmra.mxu0 %v238
  %v3081 = vpop.f32.mrf.mxu0
  %v3082 = vadd.f32 %v3023, %v3081
  %3083 = vmatmul.f32.gmra.mxu0 %v241
  %v3084 = vpop.f32.mrf.mxu0
  %v3085 = vadd.f32 %v3023, %v3084
  %3086 = vmatmul.f32.gmra.mxu0 %v244
  %v3087 = vpop.f32.mrf.mxu0
  %v3088 = vadd.f32 %v3023, %v3087
  %3089 = vdwg.mxu0
  %v3091 = vsel %vm457, %v2893, 0
  %v3094 = vsel %vm457, %v2968, 0
  %3096 = vmatpush.xpose.msra.mxu0 0.0
  %3097 = vmatpush.xpose.msra.mxu0 0.0
  %3098 = vmatpush.xpose.msra.mxu0 0.0
  %3099 = vmatpush.xpose.msra.mxu0 0.0
  %3100 = vmatpush.xpose.msra.mxu0 0.0
  %3101 = vmatpush.xpose.msra.mxu0 0.0
  %3102 = vmatpush.xpose.msra.mxu0 0.0
  %3103 = vmatpush.xpose.msra.mxu0 0.0
  %3104 = vmatpush.xpose.msra.mxu0 0.0
  %3105 = vmatpush.xpose.msra.mxu0 0.0
  %3106 = vmatpush.xpose.msra.mxu0 0.0
  %3107 = vmatpush.xpose.msra.mxu0 0.0
  %3108 = vmatpush.xpose.msra.mxu0 0.0
  %3109 = vmatpush.xpose.msra.mxu0 0.0
  %3110 = vmatpush.xpose.msra.mxu0 0.0
  %3111 = vmatpush.xpose.msra.mxu0 %v3094
  %3112 = vmatmul.f32.gmra.mxu0 %v3091
  %v3113 = vpop.f32.mrf.mxu0
  %v3114 = vadd.f32 0.0, %v3113
  %3115 = vdwg.mxu0
  %v3117 = vsel %vm457, %v2896, 0
  %v3120 = vsel %vm457, %v2971, 0
  %3122 = vmatpush.xpose.msra.mxu0 0.0
  %3123 = vmatpush.xpose.msra.mxu0 0.0
  %3124 = vmatpush.xpose.msra.mxu0 0.0
  %3125 = vmatpush.xpose.msra.mxu0 0.0
  %3126 = vmatpush.xpose.msra.mxu0 0.0
  %3127 = vmatpush.xpose.msra.mxu0 0.0
  %3128 = vmatpush.xpose.msra.mxu0 0.0
  %3129 = vmatpush.xpose.msra.mxu0 0.0
  %3130 = vmatpush.xpose.msra.mxu0 0.0
  %3131 = vmatpush.xpose.msra.mxu0 0.0
  %3132 = vmatpush.xpose.msra.mxu0 0.0
  %3133 = vmatpush.xpose.msra.mxu0 0.0
  %3134 = vmatpush.xpose.msra.mxu0 0.0
  %3135 = vmatpush.xpose.msra.mxu0 0.0
  %3136 = vmatpush.xpose.msra.mxu0 0.0
  %3137 = vmatpush.xpose.msra.mxu0 %v3120
  %3138 = vmatmul.f32.gmra.mxu0 %v3117
  %v3139 = vpop.f32.mrf.mxu0
  %v3140 = vadd.f32 0.0, %v3139
  %3141 = vdwg.mxu0
  %v3143 = vsel %vm457, %v2899, 0
  %v3146 = vsel %vm457, %v2974, 0
  %3148 = vmatpush.xpose.msra.mxu0 0.0
  %3149 = vmatpush.xpose.msra.mxu0 0.0
  %3150 = vmatpush.xpose.msra.mxu0 0.0
  %3151 = vmatpush.xpose.msra.mxu0 0.0
  %3152 = vmatpush.xpose.msra.mxu0 0.0
  %3153 = vmatpush.xpose.msra.mxu0 0.0
  %3154 = vmatpush.xpose.msra.mxu0 0.0
  %3155 = vmatpush.xpose.msra.mxu0 0.0
  %3156 = vmatpush.xpose.msra.mxu0 0.0
  %3157 = vmatpush.xpose.msra.mxu0 0.0
  %3158 = vmatpush.xpose.msra.mxu0 0.0
  %3159 = vmatpush.xpose.msra.mxu0 0.0
  %3160 = vmatpush.xpose.msra.mxu0 0.0
  %3161 = vmatpush.xpose.msra.mxu0 0.0
  %3162 = vmatpush.xpose.msra.mxu0 0.0
  %3163 = vmatpush.xpose.msra.mxu0 %v3146
  %3164 = vmatmul.f32.gmra.mxu0 %v3143
  %v3165 = vpop.f32.mrf.mxu0
  %v3166 = vadd.f32 0.0, %v3165
  %3167 = vdwg.mxu0
  %v3169 = vsel %vm457, %v2902, 0
  %v3172 = vsel %vm457, %v2977, 0
  %3174 = vmatpush.xpose.msra.mxu0 0.0
  %3175 = vmatpush.xpose.msra.mxu0 0.0
  %3176 = vmatpush.xpose.msra.mxu0 0.0
  %3177 = vmatpush.xpose.msra.mxu0 0.0
  %3178 = vmatpush.xpose.msra.mxu0 0.0
  %3179 = vmatpush.xpose.msra.mxu0 0.0
  %3180 = vmatpush.xpose.msra.mxu0 0.0
  %3181 = vmatpush.xpose.msra.mxu0 0.0
  %3182 = vmatpush.xpose.msra.mxu0 0.0
  %3183 = vmatpush.xpose.msra.mxu0 0.0
  %3184 = vmatpush.xpose.msra.mxu0 0.0
  %3185 = vmatpush.xpose.msra.mxu0 0.0
  %3186 = vmatpush.xpose.msra.mxu0 0.0
  %3187 = vmatpush.xpose.msra.mxu0 0.0
  %3188 = vmatpush.xpose.msra.mxu0 0.0
  %3189 = vmatpush.xpose.msra.mxu0 %v3172
  %3190 = vmatmul.f32.gmra.mxu0 %v3169
  %v3191 = vpop.f32.mrf.mxu0
  %v3192 = vadd.f32 0.0, %v3191
  %3193 = vdwg.mxu0
  %v3195 = vsel %vm457, %v2905, 0
  %v3198 = vsel %vm457, %v2980, 0
  %3200 = vmatpush.xpose.msra.mxu0 0.0
  %3201 = vmatpush.xpose.msra.mxu0 0.0
  %3202 = vmatpush.xpose.msra.mxu0 0.0
  %3203 = vmatpush.xpose.msra.mxu0 0.0
  %3204 = vmatpush.xpose.msra.mxu0 0.0
  %3205 = vmatpush.xpose.msra.mxu0 0.0
  %3206 = vmatpush.xpose.msra.mxu0 0.0
  %3207 = vmatpush.xpose.msra.mxu0 0.0
  %3208 = vmatpush.xpose.msra.mxu0 0.0
  %3209 = vmatpush.xpose.msra.mxu0 0.0
  %3210 = vmatpush.xpose.msra.mxu0 0.0
  %3211 = vmatpush.xpose.msra.mxu0 0.0
  %3212 = vmatpush.xpose.msra.mxu0 0.0
  %3213 = vmatpush.xpose.msra.mxu0 0.0
  %3214 = vmatpush.xpose.msra.mxu0 0.0
  %3215 = vmatpush.xpose.msra.mxu0 %v3198
  %3216 = vmatmul.f32.gmra.mxu0 %v3195
  %v3217 = vpop.f32.mrf.mxu0
  %v3218 = vadd.f32 0.0, %v3217
  %3219 = vdwg.mxu0
  %v3221 = vsel %vm457, %v2908, 0
  %v3224 = vsel %vm457, %v2983, 0
  %3226 = vmatpush.xpose.msra.mxu0 0.0
  %3227 = vmatpush.xpose.msra.mxu0 0.0
  %3228 = vmatpush.xpose.msra.mxu0 0.0
  %3229 = vmatpush.xpose.msra.mxu0 0.0
  %3230 = vmatpush.xpose.msra.mxu0 0.0
  %3231 = vmatpush.xpose.msra.mxu0 0.0
  %3232 = vmatpush.xpose.msra.mxu0 0.0
  %3233 = vmatpush.xpose.msra.mxu0 0.0
  %3234 = vmatpush.xpose.msra.mxu0 0.0
  %3235 = vmatpush.xpose.msra.mxu0 0.0
  %3236 = vmatpush.xpose.msra.mxu0 0.0
  %3237 = vmatpush.xpose.msra.mxu0 0.0
  %3238 = vmatpush.xpose.msra.mxu0 0.0
  %3239 = vmatpush.xpose.msra.mxu0 0.0
  %3240 = vmatpush.xpose.msra.mxu0 0.0
  %3241 = vmatpush.xpose.msra.mxu0 %v3224
  %3242 = vmatmul.f32.gmra.mxu0 %v3221
  %v3243 = vpop.f32.mrf.mxu0
  %v3244 = vadd.f32 0.0, %v3243
  %3245 = vdwg.mxu0
  %v3247 = vsel %vm457, %v2911, 0
  %v3250 = vsel %vm457, %v2986, 0
  %3252 = vmatpush.xpose.msra.mxu0 0.0
  %3253 = vmatpush.xpose.msra.mxu0 0.0
  %3254 = vmatpush.xpose.msra.mxu0 0.0
  %3255 = vmatpush.xpose.msra.mxu0 0.0
  %3256 = vmatpush.xpose.msra.mxu0 0.0
  %3257 = vmatpush.xpose.msra.mxu0 0.0
  %3258 = vmatpush.xpose.msra.mxu0 0.0
  %3259 = vmatpush.xpose.msra.mxu0 0.0
  %3260 = vmatpush.xpose.msra.mxu0 0.0
  %3261 = vmatpush.xpose.msra.mxu0 0.0
  %3262 = vmatpush.xpose.msra.mxu0 0.0
  %3263 = vmatpush.xpose.msra.mxu0 0.0
  %3264 = vmatpush.xpose.msra.mxu0 0.0
  %3265 = vmatpush.xpose.msra.mxu0 0.0
  %3266 = vmatpush.xpose.msra.mxu0 0.0
  %3267 = vmatpush.xpose.msra.mxu0 %v3250
  %3268 = vmatmul.f32.gmra.mxu0 %v3247
  %v3269 = vpop.f32.mrf.mxu0
  %v3270 = vadd.f32 0.0, %v3269
  %3271 = vdwg.mxu0
  %v3273 = vsel %vm457, %v2914, 0
  %v3276 = vsel %vm457, %v2989, 0
  %3278 = vmatpush.xpose.msra.mxu0 0.0
  %3279 = vmatpush.xpose.msra.mxu0 0.0
  %3280 = vmatpush.xpose.msra.mxu0 0.0
  %3281 = vmatpush.xpose.msra.mxu0 0.0
  %3282 = vmatpush.xpose.msra.mxu0 0.0
  %3283 = vmatpush.xpose.msra.mxu0 0.0
  %3284 = vmatpush.xpose.msra.mxu0 0.0
  %3285 = vmatpush.xpose.msra.mxu0 0.0
  %3286 = vmatpush.xpose.msra.mxu0 0.0
  %3287 = vmatpush.xpose.msra.mxu0 0.0
  %3288 = vmatpush.xpose.msra.mxu0 0.0
  %3289 = vmatpush.xpose.msra.mxu0 0.0
  %3290 = vmatpush.xpose.msra.mxu0 0.0
  %3291 = vmatpush.xpose.msra.mxu0 0.0
  %3292 = vmatpush.xpose.msra.mxu0 0.0
  %3293 = vmatpush.xpose.msra.mxu0 %v3276
  %3294 = vmatmul.f32.gmra.mxu0 %v3273
  %v3295 = vpop.f32.mrf.mxu0
  %v3296 = vadd.f32 0.0, %v3295
  %3297 = vdwg.mxu0
  %v3299 = vsel %vm457, %v2917, 0
  %v3302 = vsel %vm457, %v2992, 0
  %3304 = vmatpush.xpose.msra.mxu0 0.0
  %3305 = vmatpush.xpose.msra.mxu0 0.0
  %3306 = vmatpush.xpose.msra.mxu0 0.0
  %3307 = vmatpush.xpose.msra.mxu0 0.0
  %3308 = vmatpush.xpose.msra.mxu0 0.0
  %3309 = vmatpush.xpose.msra.mxu0 0.0
  %3310 = vmatpush.xpose.msra.mxu0 0.0
  %3311 = vmatpush.xpose.msra.mxu0 0.0
  %3312 = vmatpush.xpose.msra.mxu0 0.0
  %3313 = vmatpush.xpose.msra.mxu0 0.0
  %3314 = vmatpush.xpose.msra.mxu0 0.0
  %3315 = vmatpush.xpose.msra.mxu0 0.0
  %3316 = vmatpush.xpose.msra.mxu0 0.0
  %3317 = vmatpush.xpose.msra.mxu0 0.0
  %3318 = vmatpush.xpose.msra.mxu0 0.0
  %3319 = vmatpush.xpose.msra.mxu0 %v3302
  %3320 = vmatmul.f32.gmra.mxu0 %v3299
  %v3321 = vpop.f32.mrf.mxu0
  %v3322 = vadd.f32 0.0, %v3321
  %3323 = vdwg.mxu0
  %v3325 = vsel %vm457, %v2920, 0
  %v3328 = vsel %vm457, %v2995, 0
  %3330 = vmatpush.xpose.msra.mxu0 0.0
  %3331 = vmatpush.xpose.msra.mxu0 0.0
  %3332 = vmatpush.xpose.msra.mxu0 0.0
  %3333 = vmatpush.xpose.msra.mxu0 0.0
  %3334 = vmatpush.xpose.msra.mxu0 0.0
  %3335 = vmatpush.xpose.msra.mxu0 0.0
  %3336 = vmatpush.xpose.msra.mxu0 0.0
  %3337 = vmatpush.xpose.msra.mxu0 0.0
  %3338 = vmatpush.xpose.msra.mxu0 0.0
  %3339 = vmatpush.xpose.msra.mxu0 0.0
  %3340 = vmatpush.xpose.msra.mxu0 0.0
  %3341 = vmatpush.xpose.msra.mxu0 0.0
  %3342 = vmatpush.xpose.msra.mxu0 0.0
  %3343 = vmatpush.xpose.msra.mxu0 0.0
  %3344 = vmatpush.xpose.msra.mxu0 0.0
  %3345 = vmatpush.xpose.msra.mxu0 %v3328
  %3346 = vmatmul.f32.gmra.mxu0 %v3325
  %v3347 = vpop.f32.mrf.mxu0
  %v3348 = vadd.f32 0.0, %v3347
  %3349 = vdwg.mxu0
  %v3351 = vsel %vm457, %v2923, 0
  %v3354 = vsel %vm457, %v2998, 0
  %3356 = vmatpush.xpose.msra.mxu0 0.0
  %3357 = vmatpush.xpose.msra.mxu0 0.0
  %3358 = vmatpush.xpose.msra.mxu0 0.0
  %3359 = vmatpush.xpose.msra.mxu0 0.0
  %3360 = vmatpush.xpose.msra.mxu0 0.0
  %3361 = vmatpush.xpose.msra.mxu0 0.0
  %3362 = vmatpush.xpose.msra.mxu0 0.0
  %3363 = vmatpush.xpose.msra.mxu0 0.0
  %3364 = vmatpush.xpose.msra.mxu0 0.0
  %3365 = vmatpush.xpose.msra.mxu0 0.0
  %3366 = vmatpush.xpose.msra.mxu0 0.0
  %3367 = vmatpush.xpose.msra.mxu0 0.0
  %3368 = vmatpush.xpose.msra.mxu0 0.0
  %3369 = vmatpush.xpose.msra.mxu0 0.0
  %3370 = vmatpush.xpose.msra.mxu0 0.0
  %3371 = vmatpush.xpose.msra.mxu0 %v3354
  %3372 = vmatmul.f32.gmra.mxu0 %v3351
  %v3373 = vpop.f32.mrf.mxu0
  %v3374 = vadd.f32 0.0, %v3373
  %3375 = vdwg.mxu0
  %v3377 = vsel %vm457, %v2926, 0
  %v3380 = vsel %vm457, %v3001, 0
  %3382 = vmatpush.xpose.msra.mxu0 0.0
  %3383 = vmatpush.xpose.msra.mxu0 0.0
  %3384 = vmatpush.xpose.msra.mxu0 0.0
  %3385 = vmatpush.xpose.msra.mxu0 0.0
  %3386 = vmatpush.xpose.msra.mxu0 0.0
  %3387 = vmatpush.xpose.msra.mxu0 0.0
  %3388 = vmatpush.xpose.msra.mxu0 0.0
  %3389 = vmatpush.xpose.msra.mxu0 0.0
  %3390 = vmatpush.xpose.msra.mxu0 0.0
  %3391 = vmatpush.xpose.msra.mxu0 0.0
  %3392 = vmatpush.xpose.msra.mxu0 0.0
  %3393 = vmatpush.xpose.msra.mxu0 0.0
  %3394 = vmatpush.xpose.msra.mxu0 0.0
  %3395 = vmatpush.xpose.msra.mxu0 0.0
  %3396 = vmatpush.xpose.msra.mxu0 0.0
  %3397 = vmatpush.xpose.msra.mxu0 %v3380
  %3398 = vmatmul.f32.gmra.mxu0 %v3377
  %v3399 = vpop.f32.mrf.mxu0
  %v3400 = vadd.f32 0.0, %v3399
  %3401 = vdwg.mxu0
  %v3403 = vsel %vm457, %v2929, 0
  %v3406 = vsel %vm457, %v3004, 0
  %3408 = vmatpush.xpose.msra.mxu0 0.0
  %3409 = vmatpush.xpose.msra.mxu0 0.0
  %3410 = vmatpush.xpose.msra.mxu0 0.0
  %3411 = vmatpush.xpose.msra.mxu0 0.0
  %3412 = vmatpush.xpose.msra.mxu0 0.0
  %3413 = vmatpush.xpose.msra.mxu0 0.0
  %3414 = vmatpush.xpose.msra.mxu0 0.0
  %3415 = vmatpush.xpose.msra.mxu0 0.0
  %3416 = vmatpush.xpose.msra.mxu0 0.0
  %3417 = vmatpush.xpose.msra.mxu0 0.0
  %3418 = vmatpush.xpose.msra.mxu0 0.0
  %3419 = vmatpush.xpose.msra.mxu0 0.0
  %3420 = vmatpush.xpose.msra.mxu0 0.0
  %3421 = vmatpush.xpose.msra.mxu0 0.0
  %3422 = vmatpush.xpose.msra.mxu0 0.0
  %3423 = vmatpush.xpose.msra.mxu0 %v3406
  %3424 = vmatmul.f32.gmra.mxu0 %v3403
  %v3425 = vpop.f32.mrf.mxu0
  %v3426 = vadd.f32 0.0, %v3425
  %3427 = vdwg.mxu0
  %v3429 = vsel %vm457, %v2932, 0
  %v3432 = vsel %vm457, %v3007, 0
  %3434 = vmatpush.xpose.msra.mxu0 0.0
  %3435 = vmatpush.xpose.msra.mxu0 0.0
  %3436 = vmatpush.xpose.msra.mxu0 0.0
  %3437 = vmatpush.xpose.msra.mxu0 0.0
  %3438 = vmatpush.xpose.msra.mxu0 0.0
  %3439 = vmatpush.xpose.msra.mxu0 0.0
  %3440 = vmatpush.xpose.msra.mxu0 0.0
  %3441 = vmatpush.xpose.msra.mxu0 0.0
  %3442 = vmatpush.xpose.msra.mxu0 0.0
  %3443 = vmatpush.xpose.msra.mxu0 0.0
  %3444 = vmatpush.xpose.msra.mxu0 0.0
  %3445 = vmatpush.xpose.msra.mxu0 0.0
  %3446 = vmatpush.xpose.msra.mxu0 0.0
  %3447 = vmatpush.xpose.msra.mxu0 0.0
  %3448 = vmatpush.xpose.msra.mxu0 0.0
  %3449 = vmatpush.xpose.msra.mxu0 %v3432
  %3450 = vmatmul.f32.gmra.mxu0 %v3429
  %v3451 = vpop.f32.mrf.mxu0
  %v3452 = vadd.f32 0.0, %v3451
  %3453 = vdwg.mxu0
  %v3455 = vsel %vm457, %v2935, 0
  %v3458 = vsel %vm457, %v3010, 0
  %3460 = vmatpush.xpose.msra.mxu0 0.0
  %3461 = vmatpush.xpose.msra.mxu0 0.0
  %3462 = vmatpush.xpose.msra.mxu0 0.0
  %3463 = vmatpush.xpose.msra.mxu0 0.0
  %3464 = vmatpush.xpose.msra.mxu0 0.0
  %3465 = vmatpush.xpose.msra.mxu0 0.0
  %3466 = vmatpush.xpose.msra.mxu0 0.0
  %3467 = vmatpush.xpose.msra.mxu0 0.0
  %3468 = vmatpush.xpose.msra.mxu0 0.0
  %3469 = vmatpush.xpose.msra.mxu0 0.0
  %3470 = vmatpush.xpose.msra.mxu0 0.0
  %3471 = vmatpush.xpose.msra.mxu0 0.0
  %3472 = vmatpush.xpose.msra.mxu0 0.0
  %3473 = vmatpush.xpose.msra.mxu0 0.0
  %3474 = vmatpush.xpose.msra.mxu0 0.0
  %3475 = vmatpush.xpose.msra.mxu0 %v3458
  %3476 = vmatmul.f32.gmra.mxu0 %v3455
  %v3477 = vpop.f32.mrf.mxu0
  %v3478 = vadd.f32 0.0, %v3477
  %3479 = vdwg.mxu0
  %v3481 = vsel %vm457, %v2938, 0
  %v3484 = vsel %vm457, %v3013, 0
  %3486 = vmatpush.xpose.msra.mxu0 0.0
  %3487 = vmatpush.xpose.msra.mxu0 0.0
  %3488 = vmatpush.xpose.msra.mxu0 0.0
  %3489 = vmatpush.xpose.msra.mxu0 0.0
  %3490 = vmatpush.xpose.msra.mxu0 0.0
  %3491 = vmatpush.xpose.msra.mxu0 0.0
  %3492 = vmatpush.xpose.msra.mxu0 0.0
  %3493 = vmatpush.xpose.msra.mxu0 0.0
  %3494 = vmatpush.xpose.msra.mxu0 0.0
  %3495 = vmatpush.xpose.msra.mxu0 0.0
  %3496 = vmatpush.xpose.msra.mxu0 0.0
  %3497 = vmatpush.xpose.msra.mxu0 0.0
  %3498 = vmatpush.xpose.msra.mxu0 0.0
  %3499 = vmatpush.xpose.msra.mxu0 0.0
  %3500 = vmatpush.xpose.msra.mxu0 0.0
  %3501 = vmatpush.xpose.msra.mxu0 %v3484
  %3502 = vmatmul.f32.gmra.mxu0 %v3481
  %v3503 = vpop.f32.mrf.mxu0
  %v3504 = vadd.f32 0.0, %v3503
  %3505 = vdwg.mxu0
  %v3506 = vsel %vm457, %v3114, -inf
  %3507 = vmax.xlane.f32.xlu0 %v3506
  %v3508 = vpop.xlane.xlu0 %3507
  %v3509 = vsel %vm457, %v3140, -inf
  %3510 = vmax.xlane.f32.xlu0 %v3509
  %v3511 = vpop.xlane.xlu0 %3510
  %v3512 = vsel %vm457, %v3166, -inf
  %3513 = vmax.xlane.f32.xlu0 %v3512
  %v3514 = vpop.xlane.xlu0 %3513
  %v3515 = vsel %vm457, %v3192, -inf
  %3516 = vmax.xlane.f32.xlu0 %v3515
  %v3517 = vpop.xlane.xlu0 %3516
  %v3518 = vsel %vm457, %v3218, -inf
  %3519 = vmax.xlane.f32.xlu0 %v3518
  %v3520 = vpop.xlane.xlu0 %3519
  %v3521 = vsel %vm457, %v3244, -inf
  %3522 = vmax.xlane.f32.xlu0 %v3521
  %v3523 = vpop.xlane.xlu0 %3522
  %v3524 = vsel %vm457, %v3270, -inf
  %3525 = vmax.xlane.f32.xlu0 %v3524
  %v3526 = vpop.xlane.xlu0 %3525
  %v3527 = vsel %vm457, %v3296, -inf
  %3528 = vmax.xlane.f32.xlu0 %v3527
  %v3529 = vpop.xlane.xlu0 %3528
  %v3530 = vsel %vm457, %v3322, -inf
  %3531 = vmax.xlane.f32.xlu0 %v3530
  %v3532 = vpop.xlane.xlu0 %3531
  %v3533 = vsel %vm457, %v3348, -inf
  %3534 = vmax.xlane.f32.xlu0 %v3533
  %v3535 = vpop.xlane.xlu0 %3534
  %v3536 = vsel %vm457, %v3374, -inf
  %3537 = vmax.xlane.f32.xlu0 %v3536
  %v3538 = vpop.xlane.xlu0 %3537
  %v3539 = vsel %vm457, %v3400, -inf
  %3540 = vmax.xlane.f32.xlu0 %v3539
  %v3541 = vpop.xlane.xlu0 %3540
  %v3542 = vsel %vm457, %v3426, -inf
  %3543 = vmax.xlane.f32.xlu0 %v3542
  %v3544 = vpop.xlane.xlu0 %3543
  %v3545 = vsel %vm457, %v3452, -inf
  %3546 = vmax.xlane.f32.xlu0 %v3545
  %v3547 = vpop.xlane.xlu0 %3546
  %v3548 = vsel %vm457, %v3478, -inf
  %3549 = vmax.xlane.f32.xlu0 %v3548
  %v3550 = vpop.xlane.xlu0 %3549
  %v3551 = vsel %vm457, %v3504, -inf
  %3552 = vmax.xlane.f32.xlu0 %v3551
  %v3553 = vpop.xlane.xlu0 %3552
  %v3554 = vsub.f32 %v3114, %v3508
  %v3555 = vsub.f32 %v3140, %v3511
  %v3556 = vsub.f32 %v3166, %v3514
  %v3557 = vsub.f32 %v3192, %v3517
  %v3558 = vsub.f32 %v3218, %v3520
  %v3559 = vsub.f32 %v3244, %v3523
  %v3560 = vsub.f32 %v3270, %v3526
  %v3561 = vsub.f32 %v3296, %v3529
  %v3562 = vsub.f32 %v3322, %v3532
  %v3563 = vsub.f32 %v3348, %v3535
  %v3564 = vsub.f32 %v3374, %v3538
  %v3565 = vsub.f32 %v3400, %v3541
  %v3566 = vsub.f32 %v3426, %v3544
  %v3567 = vsub.f32 %v3452, %v3547
  %v3568 = vsub.f32 %v3478, %v3550
  %v3569 = vsub.f32 %v3504, %v3553
  %v3570 = vmul.f32 %v3554, 1.442695
  %v3571 = vpow.pop %v3570
  %v3572 = vmul.f32 %v3555, 1.442695
  %v3573 = vpow.pop %v3572
  %v3574 = vmul.f32 %v3556, 1.442695
  %v3575 = vpow.pop %v3574
  %v3576 = vmul.f32 %v3557, 1.442695
  %v3577 = vpow.pop %v3576
  %v3578 = vmul.f32 %v3558, 1.442695
  %v3579 = vpow.pop %v3578
  %v3580 = vmul.f32 %v3559, 1.442695
  %v3581 = vpow.pop %v3580
  %v3582 = vmul.f32 %v3560, 1.442695
  %v3583 = vpow.pop %v3582
  %v3584 = vmul.f32 %v3561, 1.442695
  %v3585 = vpow.pop %v3584
  %v3586 = vmul.f32 %v3562, 1.442695
  %v3587 = vpow.pop %v3586
  %v3588 = vmul.f32 %v3563, 1.442695
  %v3589 = vpow.pop %v3588
  %v3590 = vmul.f32 %v3564, 1.442695
  %v3591 = vpow.pop %v3590
  %v3592 = vmul.f32 %v3565, 1.442695
  %v3593 = vpow.pop %v3592
  %v3594 = vmul.f32 %v3566, 1.442695
  %v3595 = vpow.pop %v3594
  %v3596 = vmul.f32 %v3567, 1.442695
  %v3597 = vpow.pop %v3596
  %v3598 = vmul.f32 %v3568, 1.442695
  %v3599 = vpow.pop %v3598
  %v3600 = vmul.f32 %v3569, 1.442695
  %v3601 = vpow.pop %v3600
  %v3602 = vsel %vm457, %v3571, 0.0
  %3603 = vadd.xlane.f32.xlu0 %v3602
  %v3604 = vpop.xlane.xlu0 %3603
  %v3605 = vsel %vm457, %v3573, 0.0
  %3606 = vadd.xlane.f32.xlu0 %v3605
  %v3607 = vpop.xlane.xlu0 %3606
  %v3608 = vsel %vm457, %v3575, 0.0
  %3609 = vadd.xlane.f32.xlu0 %v3608
  %v3610 = vpop.xlane.xlu0 %3609
  %v3611 = vsel %vm457, %v3577, 0.0
  %3612 = vadd.xlane.f32.xlu0 %v3611
  %v3613 = vpop.xlane.xlu0 %3612
  %v3614 = vsel %vm457, %v3579, 0.0
  %3615 = vadd.xlane.f32.xlu0 %v3614
  %v3616 = vpop.xlane.xlu0 %3615
  %v3617 = vsel %vm457, %v3581, 0.0
  %3618 = vadd.xlane.f32.xlu0 %v3617
  %v3619 = vpop.xlane.xlu0 %3618
  %v3620 = vsel %vm457, %v3583, 0.0
  %3621 = vadd.xlane.f32.xlu0 %v3620
  %v3622 = vpop.xlane.xlu0 %3621
  %v3623 = vsel %vm457, %v3585, 0.0
  %3624 = vadd.xlane.f32.xlu0 %v3623
  %v3625 = vpop.xlane.xlu0 %3624
  %v3626 = vsel %vm457, %v3587, 0.0
  %3627 = vadd.xlane.f32.xlu0 %v3626
  %v3628 = vpop.xlane.xlu0 %3627
  %v3629 = vsel %vm457, %v3589, 0.0
  %3630 = vadd.xlane.f32.xlu0 %v3629
  %v3631 = vpop.xlane.xlu0 %3630
  %v3632 = vsel %vm457, %v3591, 0.0
  %3633 = vadd.xlane.f32.xlu0 %v3632
  %v3634 = vpop.xlane.xlu0 %3633
  %v3635 = vsel %vm457, %v3593, 0.0
  %3636 = vadd.xlane.f32.xlu0 %v3635
  %v3637 = vpop.xlane.xlu0 %3636
  %v3638 = vsel %vm457, %v3595, 0.0
  %3639 = vadd.xlane.f32.xlu0 %v3638
  %v3640 = vpop.xlane.xlu0 %3639
  %v3641 = vsel %vm457, %v3597, 0.0
  %3642 = vadd.xlane.f32.xlu0 %v3641
  %v3643 = vpop.xlane.xlu0 %3642
  %v3644 = vsel %vm457, %v3599, 0.0
  %3645 = vadd.xlane.f32.xlu0 %v3644
  %v3646 = vpop.xlane.xlu0 %3645
  %v3647 = vsel %vm457, %v3601, 0.0
  %3648 = vadd.xlane.f32.xlu0 %v3647
  %v3649 = vpop.xlane.xlu0 %3648
  %v3650 = vrcp.pop %v3604
  %v3651 = vrcp.pop %v3607
  %v3652 = vrcp.pop %v3610
  %v3653 = vrcp.pop %v3613
  %v3654 = vrcp.pop %v3616
  %v3655 = vrcp.pop %v3619
  %v3656 = vrcp.pop %v3622
  %v3657 = vrcp.pop %v3625
  %v3658 = vrcp.pop %v3628
  %v3659 = vrcp.pop %v3631
  %v3660 = vrcp.pop %v3634
  %v3661 = vrcp.pop %v3637
  %v3662 = vrcp.pop %v3640
  %v3663 = vrcp.pop %v3643
  %v3664 = vrcp.pop %v3646
  %v3665 = vrcp.pop %v3649
  %v3666 = vmul.f32 %v3571, %v3650
  %v3667 = vmul.f32 %v3573, %v3651
  %v3668 = vmul.f32 %v3575, %v3652
  %v3669 = vmul.f32 %v3577, %v3653
  %v3670 = vmul.f32 %v3579, %v3654
  %v3671 = vmul.f32 %v3581, %v3655
  %v3672 = vmul.f32 %v3583, %v3656
  %v3673 = vmul.f32 %v3585, %v3657
  %v3674 = vmul.f32 %v3587, %v3658
  %v3675 = vmul.f32 %v3589, %v3659
  %v3676 = vmul.f32 %v3591, %v3660
  %v3677 = vmul.f32 %v3593, %v3661
  %v3678 = vmul.f32 %v3595, %v3662
  %v3679 = vmul.f32 %v3597, %v3663
  %v3680 = vmul.f32 %v3599, %v3664
  %v3681 = vmul.f32 %v3601, %v3665
  %s3682 = scalar_lea.vmem %s24, 256
  %3683 = vst.msk [vmem:[%s3682] sm:$0xff] %vm457, %v3666
  %3684 = vst.msk [vmem:[%s3682 + $0x8] sm:$0xff] %vm457, %v3667
  %3685 = vst.msk [vmem:[%s3682 + $0x10] sm:$0xff] %vm457, %v3668
  %3686 = vst.msk [vmem:[%s3682 + $0x18] sm:$0xff] %vm457, %v3669
  %3687 = vst.msk [vmem:[%s3682 + $0x20] sm:$0xff] %vm457, %v3670
  %3688 = vst.msk [vmem:[%s3682 + $0x28] sm:$0xff] %vm457, %v3671
  %3689 = vst.msk [vmem:[%s3682 + $0x30] sm:$0xff] %vm457, %v3672
  %3690 = vst.msk [vmem:[%s3682 + $0x38] sm:$0xff] %vm457, %v3673
  %3691 = vst.msk [vmem:[%s3682 + $0x40] sm:$0xff] %vm457, %v3674
  %3692 = vst.msk [vmem:[%s3682 + $0x48] sm:$0xff] %vm457, %v3675
  %3693 = vst.msk [vmem:[%s3682 + $0x50] sm:$0xff] %vm457, %v3676
  %3694 = vst.msk [vmem:[%s3682 + $0x58] sm:$0xff] %vm457, %v3677
  %3695 = vst.msk [vmem:[%s3682 + $0x60] sm:$0xff] %vm457, %v3678
  %3696 = vst.msk [vmem:[%s3682 + $0x68] sm:$0xff] %vm457, %v3679
  %3697 = vst.msk [vmem:[%s3682 + $0x70] sm:$0xff] %vm457, %v3680
  %3698 = vst.msk [vmem:[%s3682 + $0x78] sm:$0xff] %vm457, %v3681
  %v3700 = vsel %vm457, %v3666, 0
  %3702 = vmatpush.msra.mxu0 0.0
  %3703 = vmatpush.msra.mxu0 0.0
  %3704 = vmatpush.msra.mxu0 0.0
  %3705 = vmatpush.msra.mxu0 0.0
  %3706 = vmatpush.msra.mxu0 0.0
  %3707 = vmatpush.msra.mxu0 0.0
  %3708 = vmatpush.msra.mxu0 0.0
  %3709 = vmatpush.msra.mxu0 0.0
  %3710 = vmatpush.msra.mxu0 0.0
  %3711 = vmatpush.msra.mxu0 0.0
  %3712 = vmatpush.msra.mxu0 0.0
  %3713 = vmatpush.msra.mxu0 0.0
  %3714 = vmatpush.msra.mxu0 0.0
  %3715 = vmatpush.msra.mxu0 0.0
  %3716 = vmatpush.msra.mxu0 0.0
  %3717 = vmatpush.msra.mxu0 %v3043
  %3718 = vmatmul.f32.gmra.mxu0 %v3700
  %v3719 = vpop.f32.mrf.mxu0
  %v3720 = vadd.f32 0.0, %v3719
  %3721 = vdwg.mxu0
  %v3723 = vsel %vm457, %v3667, 0
  %3725 = vmatpush.msra.mxu0 0.0
  %3726 = vmatpush.msra.mxu0 0.0
  %3727 = vmatpush.msra.mxu0 0.0
  %3728 = vmatpush.msra.mxu0 0.0
  %3729 = vmatpush.msra.mxu0 0.0
  %3730 = vmatpush.msra.mxu0 0.0
  %3731 = vmatpush.msra.mxu0 0.0
  %3732 = vmatpush.msra.mxu0 0.0
  %3733 = vmatpush.msra.mxu0 0.0
  %3734 = vmatpush.msra.mxu0 0.0
  %3735 = vmatpush.msra.mxu0 0.0
  %3736 = vmatpush.msra.mxu0 0.0
  %3737 = vmatpush.msra.mxu0 0.0
  %3738 = vmatpush.msra.mxu0 0.0
  %3739 = vmatpush.msra.mxu0 0.0
  %3740 = vmatpush.msra.mxu0 %v3046
  %3741 = vmatmul.f32.gmra.mxu0 %v3723
  %v3742 = vpop.f32.mrf.mxu0
  %v3743 = vadd.f32 0.0, %v3742
  %3744 = vdwg.mxu0
  %v3746 = vsel %vm457, %v3668, 0
  %3748 = vmatpush.msra.mxu0 0.0
  %3749 = vmatpush.msra.mxu0 0.0
  %3750 = vmatpush.msra.mxu0 0.0
  %3751 = vmatpush.msra.mxu0 0.0
  %3752 = vmatpush.msra.mxu0 0.0
  %3753 = vmatpush.msra.mxu0 0.0
  %3754 = vmatpush.msra.mxu0 0.0
  %3755 = vmatpush.msra.mxu0 0.0
  %3756 = vmatpush.msra.mxu0 0.0
  %3757 = vmatpush.msra.mxu0 0.0
  %3758 = vmatpush.msra.mxu0 0.0
  %3759 = vmatpush.msra.mxu0 0.0
  %3760 = vmatpush.msra.mxu0 0.0
  %3761 = vmatpush.msra.mxu0 0.0
  %3762 = vmatpush.msra.mxu0 0.0
  %3763 = vmatpush.msra.mxu0 %v3049
  %3764 = vmatmul.f32.gmra.mxu0 %v3746
  %v3765 = vpop.f32.mrf.mxu0
  %v3766 = vadd.f32 0.0, %v3765
  %3767 = vdwg.mxu0
  %v3769 = vsel %vm457, %v3669, 0
  %3771 = vmatpush.msra.mxu0 0.0
  %3772 = vmatpush.msra.mxu0 0.0
  %3773 = vmatpush.msra.mxu0 0.0
  %3774 = vmatpush.msra.mxu0 0.0
  %3775 = vmatpush.msra.mxu0 0.0
  %3776 = vmatpush.msra.mxu0 0.0
  %3777 = vmatpush.msra.mxu0 0.0
  %3778 = vmatpush.msra.mxu0 0.0
  %3779 = vmatpush.msra.mxu0 0.0
  %3780 = vmatpush.msra.mxu0 0.0
  %3781 = vmatpush.msra.mxu0 0.0
  %3782 = vmatpush.msra.mxu0 0.0
  %3783 = vmatpush.msra.mxu0 0.0
  %3784 = vmatpush.msra.mxu0 0.0
  %3785 = vmatpush.msra.mxu0 0.0
  %3786 = vmatpush.msra.mxu0 %v3052
  %3787 = vmatmul.f32.gmra.mxu0 %v3769
  %v3788 = vpop.f32.mrf.mxu0
  %v3789 = vadd.f32 0.0, %v3788
  %3790 = vdwg.mxu0
  %v3792 = vsel %vm457, %v3670, 0
  %3794 = vmatpush.msra.mxu0 0.0
  %3795 = vmatpush.msra.mxu0 0.0
  %3796 = vmatpush.msra.mxu0 0.0
  %3797 = vmatpush.msra.mxu0 0.0
  %3798 = vmatpush.msra.mxu0 0.0
  %3799 = vmatpush.msra.mxu0 0.0
  %3800 = vmatpush.msra.mxu0 0.0
  %3801 = vmatpush.msra.mxu0 0.0
  %3802 = vmatpush.msra.mxu0 0.0
  %3803 = vmatpush.msra.mxu0 0.0
  %3804 = vmatpush.msra.mxu0 0.0
  %3805 = vmatpush.msra.mxu0 0.0
  %3806 = vmatpush.msra.mxu0 0.0
  %3807 = vmatpush.msra.mxu0 0.0
  %3808 = vmatpush.msra.mxu0 0.0
  %3809 = vmatpush.msra.mxu0 %v3055
  %3810 = vmatmul.f32.gmra.mxu0 %v3792
  %v3811 = vpop.f32.mrf.mxu0
  %v3812 = vadd.f32 0.0, %v3811
  %3813 = vdwg.mxu0
  %v3815 = vsel %vm457, %v3671, 0
  %3817 = vmatpush.msra.mxu0 0.0
  %3818 = vmatpush.msra.mxu0 0.0
  %3819 = vmatpush.msra.mxu0 0.0
  %3820 = vmatpush.msra.mxu0 0.0
  %3821 = vmatpush.msra.mxu0 0.0
  %3822 = vmatpush.msra.mxu0 0.0
  %3823 = vmatpush.msra.mxu0 0.0
  %3824 = vmatpush.msra.mxu0 0.0
  %3825 = vmatpush.msra.mxu0 0.0
  %3826 = vmatpush.msra.mxu0 0.0
  %3827 = vmatpush.msra.mxu0 0.0
  %3828 = vmatpush.msra.mxu0 0.0
  %3829 = vmatpush.msra.mxu0 0.0
  %3830 = vmatpush.msra.mxu0 0.0
  %3831 = vmatpush.msra.mxu0 0.0
  %3832 = vmatpush.msra.mxu0 %v3058
  %3833 = vmatmul.f32.gmra.mxu0 %v3815
  %v3834 = vpop.f32.mrf.mxu0
  %v3835 = vadd.f32 0.0, %v3834
  %3836 = vdwg.mxu0
  %v3838 = vsel %vm457, %v3672, 0
  %3840 = vmatpush.msra.mxu0 0.0
  %3841 = vmatpush.msra.mxu0 0.0
  %3842 = vmatpush.msra.mxu0 0.0
  %3843 = vmatpush.msra.mxu0 0.0
  %3844 = vmatpush.msra.mxu0 0.0
  %3845 = vmatpush.msra.mxu0 0.0
  %3846 = vmatpush.msra.mxu0 0.0
  %3847 = vmatpush.msra.mxu0 0.0
  %3848 = vmatpush.msra.mxu0 0.0
  %3849 = vmatpush.msra.mxu0 0.0
  %3850 = vmatpush.msra.mxu0 0.0
  %3851 = vmatpush.msra.mxu0 0.0
  %3852 = vmatpush.msra.mxu0 0.0
  %3853 = vmatpush.msra.mxu0 0.0
  %3854 = vmatpush.msra.mxu0 0.0
  %3855 = vmatpush.msra.mxu0 %v3061
  %3856 = vmatmul.f32.gmra.mxu0 %v3838
  %v3857 = vpop.f32.mrf.mxu0
  %v3858 = vadd.f32 0.0, %v3857
  %3859 = vdwg.mxu0
  %v3861 = vsel %vm457, %v3673, 0
  %3863 = vmatpush.msra.mxu0 0.0
  %3864 = vmatpush.msra.mxu0 0.0
  %3865 = vmatpush.msra.mxu0 0.0
  %3866 = vmatpush.msra.mxu0 0.0
  %3867 = vmatpush.msra.mxu0 0.0
  %3868 = vmatpush.msra.mxu0 0.0
  %3869 = vmatpush.msra.mxu0 0.0
  %3870 = vmatpush.msra.mxu0 0.0
  %3871 = vmatpush.msra.mxu0 0.0
  %3872 = vmatpush.msra.mxu0 0.0
  %3873 = vmatpush.msra.mxu0 0.0
  %3874 = vmatpush.msra.mxu0 0.0
  %3875 = vmatpush.msra.mxu0 0.0
  %3876 = vmatpush.msra.mxu0 0.0
  %3877 = vmatpush.msra.mxu0 0.0
  %3878 = vmatpush.msra.mxu0 %v3064
  %3879 = vmatmul.f32.gmra.mxu0 %v3861
  %v3880 = vpop.f32.mrf.mxu0
  %v3881 = vadd.f32 0.0, %v3880
  %3882 = vdwg.mxu0
  %v3884 = vsel %vm457, %v3674, 0
  %3886 = vmatpush.msra.mxu0 0.0
  %3887 = vmatpush.msra.mxu0 0.0
  %3888 = vmatpush.msra.mxu0 0.0
  %3889 = vmatpush.msra.mxu0 0.0
  %3890 = vmatpush.msra.mxu0 0.0
  %3891 = vmatpush.msra.mxu0 0.0
  %3892 = vmatpush.msra.mxu0 0.0
  %3893 = vmatpush.msra.mxu0 0.0
  %3894 = vmatpush.msra.mxu0 0.0
  %3895 = vmatpush.msra.mxu0 0.0
  %3896 = vmatpush.msra.mxu0 0.0
  %3897 = vmatpush.msra.mxu0 0.0
  %3898 = vmatpush.msra.mxu0 0.0
  %3899 = vmatpush.msra.mxu0 0.0
  %3900 = vmatpush.msra.mxu0 0.0
  %3901 = vmatpush.msra.mxu0 %v3067
  %3902 = vmatmul.f32.gmra.mxu0 %v3884
  %v3903 = vpop.f32.mrf.mxu0
  %v3904 = vadd.f32 0.0, %v3903
  %3905 = vdwg.mxu0
  %v3907 = vsel %vm457, %v3675, 0
  %3909 = vmatpush.msra.mxu0 0.0
  %3910 = vmatpush.msra.mxu0 0.0
  %3911 = vmatpush.msra.mxu0 0.0
  %3912 = vmatpush.msra.mxu0 0.0
  %3913 = vmatpush.msra.mxu0 0.0
  %3914 = vmatpush.msra.mxu0 0.0
  %3915 = vmatpush.msra.mxu0 0.0
  %3916 = vmatpush.msra.mxu0 0.0
  %3917 = vmatpush.msra.mxu0 0.0
  %3918 = vmatpush.msra.mxu0 0.0
  %3919 = vmatpush.msra.mxu0 0.0
  %3920 = vmatpush.msra.mxu0 0.0
  %3921 = vmatpush.msra.mxu0 0.0
  %3922 = vmatpush.msra.mxu0 0.0
  %3923 = vmatpush.msra.mxu0 0.0
  %3924 = vmatpush.msra.mxu0 %v3070
  %3925 = vmatmul.f32.gmra.mxu0 %v3907
  %v3926 = vpop.f32.mrf.mxu0
  %v3927 = vadd.f32 0.0, %v3926
  %3928 = vdwg.mxu0
  %v3930 = vsel %vm457, %v3676, 0
  %3932 = vmatpush.msra.mxu0 0.0
  %3933 = vmatpush.msra.mxu0 0.0
  %3934 = vmatpush.msra.mxu0 0.0
  %3935 = vmatpush.msra.mxu0 0.0
  %3936 = vmatpush.msra.mxu0 0.0
  %3937 = vmatpush.msra.mxu0 0.0
  %3938 = vmatpush.msra.mxu0 0.0
  %3939 = vmatpush.msra.mxu0 0.0
  %3940 = vmatpush.msra.mxu0 0.0
  %3941 = vmatpush.msra.mxu0 0.0
  %3942 = vmatpush.msra.mxu0 0.0
  %3943 = vmatpush.msra.mxu0 0.0
  %3944 = vmatpush.msra.mxu0 0.0
  %3945 = vmatpush.msra.mxu0 0.0
  %3946 = vmatpush.msra.mxu0 0.0
  %3947 = vmatpush.msra.mxu0 %v3073
  %3948 = vmatmul.f32.gmra.mxu0 %v3930
  %v3949 = vpop.f32.mrf.mxu0
  %v3950 = vadd.f32 0.0, %v3949
  %3951 = vdwg.mxu0
  %v3953 = vsel %vm457, %v3677, 0
  %3955 = vmatpush.msra.mxu0 0.0
  %3956 = vmatpush.msra.mxu0 0.0
  %3957 = vmatpush.msra.mxu0 0.0
  %3958 = vmatpush.msra.mxu0 0.0
  %3959 = vmatpush.msra.mxu0 0.0
  %3960 = vmatpush.msra.mxu0 0.0
  %3961 = vmatpush.msra.mxu0 0.0
  %3962 = vmatpush.msra.mxu0 0.0
  %3963 = vmatpush.msra.mxu0 0.0
  %3964 = vmatpush.msra.mxu0 0.0
  %3965 = vmatpush.msra.mxu0 0.0
  %3966 = vmatpush.msra.mxu0 0.0
  %3967 = vmatpush.msra.mxu0 0.0
  %3968 = vmatpush.msra.mxu0 0.0
  %3969 = vmatpush.msra.mxu0 0.0
  %3970 = vmatpush.msra.mxu0 %v3076
  %3971 = vmatmul.f32.gmra.mxu0 %v3953
  %v3972 = vpop.f32.mrf.mxu0
  %v3973 = vadd.f32 0.0, %v3972
  %3974 = vdwg.mxu0
  %v3976 = vsel %vm457, %v3678, 0
  %3978 = vmatpush.msra.mxu0 0.0
  %3979 = vmatpush.msra.mxu0 0.0
  %3980 = vmatpush.msra.mxu0 0.0
  %3981 = vmatpush.msra.mxu0 0.0
  %3982 = vmatpush.msra.mxu0 0.0
  %3983 = vmatpush.msra.mxu0 0.0
  %3984 = vmatpush.msra.mxu0 0.0
  %3985 = vmatpush.msra.mxu0 0.0
  %3986 = vmatpush.msra.mxu0 0.0
  %3987 = vmatpush.msra.mxu0 0.0
  %3988 = vmatpush.msra.mxu0 0.0
  %3989 = vmatpush.msra.mxu0 0.0
  %3990 = vmatpush.msra.mxu0 0.0
  %3991 = vmatpush.msra.mxu0 0.0
  %3992 = vmatpush.msra.mxu0 0.0
  %3993 = vmatpush.msra.mxu0 %v3079
  %3994 = vmatmul.f32.gmra.mxu0 %v3976
  %v3995 = vpop.f32.mrf.mxu0
  %v3996 = vadd.f32 0.0, %v3995
  %3997 = vdwg.mxu0
  %v3999 = vsel %vm457, %v3679, 0
  %4001 = vmatpush.msra.mxu0 0.0
  %4002 = vmatpush.msra.mxu0 0.0
  %4003 = vmatpush.msra.mxu0 0.0
  %4004 = vmatpush.msra.mxu0 0.0
  %4005 = vmatpush.msra.mxu0 0.0
  %4006 = vmatpush.msra.mxu0 0.0
  %4007 = vmatpush.msra.mxu0 0.0
  %4008 = vmatpush.msra.mxu0 0.0
  %4009 = vmatpush.msra.mxu0 0.0
  %4010 = vmatpush.msra.mxu0 0.0
  %4011 = vmatpush.msra.mxu0 0.0
  %4012 = vmatpush.msra.mxu0 0.0
  %4013 = vmatpush.msra.mxu0 0.0
  %4014 = vmatpush.msra.mxu0 0.0
  %4015 = vmatpush.msra.mxu0 0.0
  %4016 = vmatpush.msra.mxu0 %v3082
  %4017 = vmatmul.f32.gmra.mxu0 %v3999
  %v4018 = vpop.f32.mrf.mxu0
  %v4019 = vadd.f32 0.0, %v4018
  %4020 = vdwg.mxu0
  %v4022 = vsel %vm457, %v3680, 0
  %4024 = vmatpush.msra.mxu0 0.0
  %4025 = vmatpush.msra.mxu0 0.0
  %4026 = vmatpush.msra.mxu0 0.0
  %4027 = vmatpush.msra.mxu0 0.0
  %4028 = vmatpush.msra.mxu0 0.0
  %4029 = vmatpush.msra.mxu0 0.0
  %4030 = vmatpush.msra.mxu0 0.0
  %4031 = vmatpush.msra.mxu0 0.0
  %4032 = vmatpush.msra.mxu0 0.0
  %4033 = vmatpush.msra.mxu0 0.0
  %4034 = vmatpush.msra.mxu0 0.0
  %4035 = vmatpush.msra.mxu0 0.0
  %4036 = vmatpush.msra.mxu0 0.0
  %4037 = vmatpush.msra.mxu0 0.0
  %4038 = vmatpush.msra.mxu0 0.0
  %4039 = vmatpush.msra.mxu0 %v3085
  %4040 = vmatmul.f32.gmra.mxu0 %v4022
  %v4041 = vpop.f32.mrf.mxu0
  %v4042 = vadd.f32 0.0, %v4041
  %4043 = vdwg.mxu0
  %v4045 = vsel %vm457, %v3681, 0
  %4047 = vmatpush.msra.mxu0 0.0
  %4048 = vmatpush.msra.mxu0 0.0
  %4049 = vmatpush.msra.mxu0 0.0
  %4050 = vmatpush.msra.mxu0 0.0
  %4051 = vmatpush.msra.mxu0 0.0
  %4052 = vmatpush.msra.mxu0 0.0
  %4053 = vmatpush.msra.mxu0 0.0
  %4054 = vmatpush.msra.mxu0 0.0
  %4055 = vmatpush.msra.mxu0 0.0
  %4056 = vmatpush.msra.mxu0 0.0
  %4057 = vmatpush.msra.mxu0 0.0
  %4058 = vmatpush.msra.mxu0 0.0
  %4059 = vmatpush.msra.mxu0 0.0
  %4060 = vmatpush.msra.mxu0 0.0
  %4061 = vmatpush.msra.mxu0 0.0
  %4062 = vmatpush.msra.mxu0 %v3088
  %4063 = vmatmul.f32.gmra.mxu0 %v4045
  %v4064 = vpop.f32.mrf.mxu0
  %v4065 = vadd.f32 0.0, %v4064
  %4066 = vdwg.mxu0
  %s4067 = scalar_lea.vmem %s9, 16
  %v4068 = vld [vmem:[%s4067] sm:$0xff]
  %v4070 = vsel %vm457, %v3720, 0
  %v4073 = vsel %vm457, %v3743, 0
  %v4076 = vsel %vm457, %v3766, 0
  %v4079 = vsel %vm457, %v3789, 0
  %v4082 = vsel %vm457, %v3812, 0
  %v4085 = vsel %vm457, %v3835, 0
  %v4088 = vsel %vm457, %v3858, 0
  %v4091 = vsel %vm457, %v3881, 0
  %v4094 = vsel %vm457, %v3904, 0
  %v4097 = vsel %vm457, %v3927, 0
  %v4100 = vsel %vm457, %v3950, 0
  %v4103 = vsel %vm457, %v3973, 0
  %v4106 = vsel %vm457, %v3996, 0
  %v4109 = vsel %vm457, %v4019, 0
  %v4112 = vsel %vm457, %v4042, 0
  %v4115 = vsel %vm457, %v4065, 0
  %4117 = vmatpush.msra.mxu0 0.0
  %4118 = vmatpush.msra.mxu0 0.0
  %4119 = vmatpush.msra.mxu0 0.0
  %4120 = vmatpush.msra.mxu0 0.0
  %4121 = vmatpush.msra.mxu0 0.0
  %4122 = vmatpush.msra.mxu0 0.0
  %4123 = vmatpush.msra.mxu0 0.0
  %4124 = vmatpush.msra.mxu0 0.0
  %4125 = vmatpush.msra.mxu0 0.0
  %4126 = vmatpush.msra.mxu0 0.0
  %4127 = vmatpush.msra.mxu0 0.0
  %4128 = vmatpush.msra.mxu0 0.0
  %4129 = vmatpush.msra.mxu0 0.0
  %4130 = vmatpush.msra.mxu0 0.0
  %4131 = vmatpush.msra.mxu0 0.0
  %4132 = vmatpush.msra.mxu0 %v4068
  %4133 = vmatmul.f32.gmra.mxu0 %v4070
  %v4134 = vpop.f32.mrf.mxu0
  %v4135 = vadd.f32 0.0, %v4134
  %4136 = vmatmul.f32.gmra.mxu0 %v4073
  %v4137 = vpop.f32.mrf.mxu0
  %v4138 = vadd.f32 0.0, %v4137
  %4139 = vmatmul.f32.gmra.mxu0 %v4076
  %v4140 = vpop.f32.mrf.mxu0
  %v4141 = vadd.f32 0.0, %v4140
  %4142 = vmatmul.f32.gmra.mxu0 %v4079
  %v4143 = vpop.f32.mrf.mxu0
  %v4144 = vadd.f32 0.0, %v4143
  %4145 = vmatmul.f32.gmra.mxu0 %v4082
  %v4146 = vpop.f32.mrf.mxu0
  %v4147 = vadd.f32 0.0, %v4146
  %4148 = vmatmul.f32.gmra.mxu0 %v4085
  %v4149 = vpop.f32.mrf.mxu0
  %v4150 = vadd.f32 0.0, %v4149
  %4151 = vmatmul.f32.gmra.mxu0 %v4088
  %v4152 = vpop.f32.mrf.mxu0
  %v4153 = vadd.f32 0.0, %v4152
  %4154 = vmatmul.f32.gmra.mxu0 %v4091
  %v4155 = vpop.f32.mrf.mxu0
  %v4156 = vadd.f32 0.0, %v4155
  %4157 = vmatmul.f32.gmra.mxu0 %v4094
  %v4158 = vpop.f32.mrf.mxu0
  %v4159 = vadd.f32 0.0, %v4158
  %4160 = vmatmul.f32.gmra.mxu0 %v4097
  %v4161 = vpop.f32.mrf.mxu0
  %v4162 = vadd.f32 0.0, %v4161
  %4163 = vmatmul.f32.gmra.mxu0 %v4100
  %v4164 = vpop.f32.mrf.mxu0
  %v4165 = vadd.f32 0.0, %v4164
  %4166 = vmatmul.f32.gmra.mxu0 %v4103
  %v4167 = vpop.f32.mrf.mxu0
  %v4168 = vadd.f32 0.0, %v4167
  %4169 = vmatmul.f32.gmra.mxu0 %v4106
  %v4170 = vpop.f32.mrf.mxu0
  %v4171 = vadd.f32 0.0, %v4170
  %4172 = vmatmul.f32.gmra.mxu0 %v4109
  %v4173 = vpop.f32.mrf.mxu0
  %v4174 = vadd.f32 0.0, %v4173
  %4175 = vmatmul.f32.gmra.mxu0 %v4112
  %v4176 = vpop.f32.mrf.mxu0
  %v4177 = vadd.f32 0.0, %v4176
  %4178 = vmatmul.f32.gmra.mxu0 %v4115
  %v4179 = vpop.f32.mrf.mxu0
  %v4180 = vadd.f32 0.0, %v4179
  %4181 = vdwg.mxu0
  %v4182 = vadd.f32 %v2818, %v4135
  %v4183 = vadd.f32 %v2821, %v4138
  %v4184 = vadd.f32 %v2824, %v4141
  %v4185 = vadd.f32 %v2827, %v4144
  %v4186 = vadd.f32 %v2830, %v4147
  %v4187 = vadd.f32 %v2833, %v4150
  %v4188 = vadd.f32 %v2836, %v4153
  %v4189 = vadd.f32 %v2839, %v4156
  %v4190 = vadd.f32 %v2842, %v4159
  %v4191 = vadd.f32 %v2845, %v4162
  %v4192 = vadd.f32 %v2848, %v4165
  %v4193 = vadd.f32 %v2851, %v4168
  %v4194 = vadd.f32 %v2854, %v4171
  %v4195 = vadd.f32 %v2857, %v4174
  %v4196 = vadd.f32 %v2860, %v4177
  %v4197 = vadd.f32 %v2863, %v4180
  %s4198 = scalar_lea.vmem %s3, 96
  %v4199 = vld [vmem:[%s4198] sm:$0xff]
  %v4200 = vld [vmem:[%s4198 + $0x8] sm:$0xff]
  %v4201 = vld [vmem:[%s4198 + $0x10] sm:$0xff]
  %v4202 = vld [vmem:[%s4198 + $0x18] sm:$0xff]
  %s4203 = scalar_lea.vmem %s4, 3
  %v4204 = vld [vmem:[%s4203] sm:$0x1]
  %v4206 = vperm.slane %v4204, 0
  %4208 = vmatpush.msra.mxu0 0.0
  %4209 = vmatpush.msra.mxu0 0.0
  %4210 = vmatpush.msra.mxu0 0.0
  %4211 = vmatpush.msra.mxu0 0.0
  %4212 = vmatpush.msra.mxu0 0.0
  %4213 = vmatpush.msra.mxu0 0.0
  %4214 = vmatpush.msra.mxu0 0.0
  %4215 = vmatpush.msra.mxu0 0.0
  %4216 = vmatpush.msra.mxu0 0.0
  %4217 = vmatpush.msra.mxu0 0.0
  %4218 = vmatpush.msra.mxu0 0.0
  %4219 = vmatpush.msra.mxu0 0.0
  %4220 = vmatpush.msra.mxu0 %v4202
  %4221 = vmatpush.msra.mxu0 %v4201
  %4222 = vmatpush.msra.mxu0 %v4200
  %4223 = vmatpush.msra.mxu0 %v4199
  %4224 = vmatmul.f32.gmra.mxu0 %v199
  %v4225 = vpop.f32.mrf.mxu0
  %v4226 = vadd.f32 %v4206, %v4225
  %4227 = vmatmul.f32.gmra.mxu0 %v202
  %v4228 = vpop.f32.mrf.mxu0
  %v4229 = vadd.f32 %v4206, %v4228
  %4230 = vmatmul.f32.gmra.mxu0 %v205
  %v4231 = vpop.f32.mrf.mxu0
  %v4232 = vadd.f32 %v4206, %v4231
  %4233 = vmatmul.f32.gmra.mxu0 %v208
  %v4234 = vpop.f32.mrf.mxu0
  %v4235 = vadd.f32 %v4206, %v4234
  %4236 = vmatmul.f32.gmra.mxu0 %v211
  %v4237 = vpop.f32.mrf.mxu0
  %v4238 = vadd.f32 %v4206, %v4237
  %4239 = vmatmul.f32.gmra.mxu0 %v214
  %v4240 = vpop.f32.mrf.mxu0
  %v4241 = vadd.f32 %v4206, %v4240
  %4242 = vmatmul.f32.gmra.mxu0 %v217
  %v4243 = vpop.f32.mrf.mxu0
  %v4244 = vadd.f32 %v4206, %v4243
  %4245 = vmatmul.f32.gmra.mxu0 %v220
  %v4246 = vpop.f32.mrf.mxu0
  %v4247 = vadd.f32 %v4206, %v4246
  %4248 = vmatmul.f32.gmra.mxu0 %v223
  %v4249 = vpop.f32.mrf.mxu0
  %v4250 = vadd.f32 %v4206, %v4249
  %4251 = vmatmul.f32.gmra.mxu0 %v226
  %v4252 = vpop.f32.mrf.mxu0
  %v4253 = vadd.f32 %v4206, %v4252
  %4254 = vmatmul.f32.gmra.mxu0 %v229
  %v4255 = vpop.f32.mrf.mxu0
  %v4256 = vadd.f32 %v4206, %v4255
  %4257 = vmatmul.f32.gmra.mxu0 %v232
  %v4258 = vpop.f32.mrf.mxu0
  %v4259 = vadd.f32 %v4206, %v4258
  %4260 = vmatmul.f32.gmra.mxu0 %v235
  %v4261 = vpop.f32.mrf.mxu0
  %v4262 = vadd.f32 %v4206, %v4261
  %4263 = vmatmul.f32.gmra.mxu0 %v238
  %v4264 = vpop.f32.mrf.mxu0
  %v4265 = vadd.f32 %v4206, %v4264
  %4266 = vmatmul.f32.gmra.mxu0 %v241
  %v4267 = vpop.f32.mrf.mxu0
  %v4268 = vadd.f32 %v4206, %v4267
  %4269 = vmatmul.f32.gmra.mxu0 %v244
  %v4270 = vpop.f32.mrf.mxu0
  %v4271 = vadd.f32 %v4206, %v4270
  %4272 = vdwg.mxu0
  %s4273 = scalar_lea.vmem %s5, 96
  %v4274 = vld [vmem:[%s4273] sm:$0xff]
  %v4275 = vld [vmem:[%s4273 + $0x8] sm:$0xff]
  %v4276 = vld [vmem:[%s4273 + $0x10] sm:$0xff]
  %v4277 = vld [vmem:[%s4273 + $0x18] sm:$0xff]
  %s4278 = scalar_lea.vmem %s6, 3
  %v4279 = vld [vmem:[%s4278] sm:$0x1]
  %v4281 = vperm.slane %v4279, 0
  %4283 = vmatpush.msra.mxu0 0.0
  %4284 = vmatpush.msra.mxu0 0.0
  %4285 = vmatpush.msra.mxu0 0.0
  %4286 = vmatpush.msra.mxu0 0.0
  %4287 = vmatpush.msra.mxu0 0.0
  %4288 = vmatpush.msra.mxu0 0.0
  %4289 = vmatpush.msra.mxu0 0.0
  %4290 = vmatpush.msra.mxu0 0.0
  %4291 = vmatpush.msra.mxu0 0.0
  %4292 = vmatpush.msra.mxu0 0.0
  %4293 = vmatpush.msra.mxu0 0.0
  %4294 = vmatpush.msra.mxu0 0.0
  %4295 = vmatpush.msra.mxu0 %v4277
  %4296 = vmatpush.msra.mxu0 %v4276
  %4297 = vmatpush.msra.mxu0 %v4275
  %4298 = vmatpush.msra.mxu0 %v4274
  %4299 = vmatmul.f32.gmra.mxu0 %v199
  %v4300 = vpop.f32.mrf.mxu0
  %v4301 = vadd.f32 %v4281, %v4300
  %4302 = vmatmul.f32.gmra.mxu0 %v202
  %v4303 = vpop.f32.mrf.mxu0
  %v4304 = vadd.f32 %v4281, %v4303
  %4305 = vmatmul.f32.gmra.mxu0 %v205
  %v4306 = vpop.f32.mrf.mxu0
  %v4307 = vadd.f32 %v4281, %v4306
  %4308 = vmatmul.f32.gmra.mxu0 %v208
  %v4309 = vpop.f32.mrf.mxu0
  %v4310 = vadd.f32 %v4281, %v4309
  %4311 = vmatmul.f32.gmra.mxu0 %v211
  %v4312 = vpop.f32.mrf.mxu0
  %v4313 = vadd.f32 %v4281, %v4312
  %4314 = vmatmul.f32.gmra.mxu0 %v214
  %v4315 = vpop.f32.mrf.mxu0
  %v4316 = vadd.f32 %v4281, %v4315
  %4317 = vmatmul.f32.gmra.mxu0 %v217
  %v4318 = vpop.f32.mrf.mxu0
  %v4319 = vadd.f32 %v4281, %v4318
  %4320 = vmatmul.f32.gmra.mxu0 %v220
  %v4321 = vpop.f32.mrf.mxu0
  %v4322 = vadd.f32 %v4281, %v4321
  %4323 = vmatmul.f32.gmra.mxu0 %v223
  %v4324 = vpop.f32.mrf.mxu0
  %v4325 = vadd.f32 %v4281, %v4324
  %4326 = vmatmul.f32.gmra.mxu0 %v226
  %v4327 = vpop.f32.mrf.mxu0
  %v4328 = vadd.f32 %v4281, %v4327
  %4329 = vmatmul.f32.gmra.mxu0 %v229
  %v4330 = vpop.f32.mrf.mxu0
  %v4331 = vadd.f32 %v4281, %v4330
  %4332 = vmatmul.f32.gmra.mxu0 %v232
  %v4333 = vpop.f32.mrf.mxu0
  %v4334 = vadd.f32 %v4281, %v4333
  %4335 = vmatmul.f32.gmra.mxu0 %v235
  %v4336 = vpop.f32.mrf.mxu0
  %v4337 = vadd.f32 %v4281, %v4336
  %4338 = vmatmul.f32.gmra.mxu0 %v238
  %v4339 = vpop.f32.mrf.mxu0
  %v4340 = vadd.f32 %v4281, %v4339
  %4341 = vmatmul.f32.gmra.mxu0 %v241
  %v4342 = vpop.f32.mrf.mxu0
  %v4343 = vadd.f32 %v4281, %v4342
  %4344 = vmatmul.f32.gmra.mxu0 %v244
  %v4345 = vpop.f32.mrf.mxu0
  %v4346 = vadd.f32 %v4281, %v4345
  %4347 = vdwg.mxu0
  %s4348 = scalar_lea.vmem %s7, 96
  %v4349 = vld [vmem:[%s4348] sm:$0xff]
  %v4350 = vld [vmem:[%s4348 + $0x8] sm:$0xff]
  %v4351 = vld [vmem:[%s4348 + $0x10] sm:$0xff]
  %v4352 = vld [vmem:[%s4348 + $0x18] sm:$0xff]
  %s4353 = scalar_lea.vmem %s8, 3
  %v4354 = vld [vmem:[%s4353] sm:$0x1]
  %v4356 = vperm.slane %v4354, 0
  %4358 = vmatpush.msra.mxu0 0.0
  %4359 = vmatpush.msra.mxu0 0.0
  %4360 = vmatpush.msra.mxu0 0.0
  %4361 = vmatpush.msra.mxu0 0.0
  %4362 = vmatpush.msra.mxu0 0.0
  %4363 = vmatpush.msra.mxu0 0.0
  %4364 = vmatpush.msra.mxu0 0.0
  %4365 = vmatpush.msra.mxu0 0.0
  %4366 = vmatpush.msra.mxu0 0.0
  %4367 = vmatpush.msra.mxu0 0.0
  %4368 = vmatpush.msra.mxu0 0.0
  %4369 = vmatpush.msra.mxu0 0.0
  %4370 = vmatpush.msra.mxu0 %v4352
  %4371 = vmatpush.msra.mxu0 %v4351
  %4372 = vmatpush.msra.mxu0 %v4350
  %4373 = vmatpush.msra.mxu0 %v4349
  %4374 = vmatmul.f32.gmra.mxu0 %v199
  %v4375 = vpop.f32.mrf.mxu0
  %v4376 = vadd.f32 %v4356, %v4375
  %4377 = vmatmul.f32.gmra.mxu0 %v202
  %v4378 = vpop.f32.mrf.mxu0
  %v4379 = vadd.f32 %v4356, %v4378
  %4380 = vmatmul.f32.gmra.mxu0 %v205
  %v4381 = vpop.f32.mrf.mxu0
  %v4382 = vadd.f32 %v4356, %v4381
  %4383 = vmatmul.f32.gmra.mxu0 %v208
  %v4384 = vpop.f32.mrf.mxu0
  %v4385 = vadd.f32 %v4356, %v4384
  %4386 = vmatmul.f32.gmra.mxu0 %v211
  %v4387 = vpop.f32.mrf.mxu0
  %v4388 = vadd.f32 %v4356, %v4387
  %4389 = vmatmul.f32.gmra.mxu0 %v214
  %v4390 = vpop.f32.mrf.mxu0
  %v4391 = vadd.f32 %v4356, %v4390
  %4392 = vmatmul.f32.gmra.mxu0 %v217
  %v4393 = vpop.f32.mrf.mxu0
  %v4394 = vadd.f32 %v4356, %v4393
  %4395 = vmatmul.f32.gmra.mxu0 %v220
  %v4396 = vpop.f32.mrf.mxu0
  %v4397 = vadd.f32 %v4356, %v4396
  %4398 = vmatmul.f32.gmra.mxu0 %v223
  %v4399 = vpop.f32.mrf.mxu0
  %v4400 = vadd.f32 %v4356, %v4399
  %4401 = vmatmul.f32.gmra.mxu0 %v226
  %v4402 = vpop.f32.mrf.mxu0
  %v4403 = vadd.f32 %v4356, %v4402
  %4404 = vmatmul.f32.gmra.mxu0 %v229
  %v4405 = vpop.f32.mrf.mxu0
  %v4406 = vadd.f32 %v4356, %v4405
  %4407 = vmatmul.f32.gmra.mxu0 %v232
  %v4408 = vpop.f32.mrf.mxu0
  %v4409 = vadd.f32 %v4356, %v4408
  %4410 = vmatmul.f32.gmra.mxu0 %v235
  %v4411 = vpop.f32.mrf.mxu0
  %v4412 = vadd.f32 %v4356, %v4411
  %4413 = vmatmul.f32.gmra.mxu0 %v238
  %v4414 = vpop.f32.mrf.mxu0
  %v4415 = vadd.f32 %v4356, %v4414
  %4416 = vmatmul.f32.gmra.mxu0 %v241
  %v4417 = vpop.f32.mrf.mxu0
  %v4418 = vadd.f32 %v4356, %v4417
  %4419 = vmatmul.f32.gmra.mxu0 %v244
  %v4420 = vpop.f32.mrf.mxu0
  %v4421 = vadd.f32 %v4356, %v4420
  %4422 = vdwg.mxu0
  %v4424 = vsel %vm457, %v4226, 0
  %v4427 = vsel %vm457, %v4301, 0
  %4429 = vmatpush.xpose.msra.mxu0 0.0
  %4430 = vmatpush.xpose.msra.mxu0 0.0
  %4431 = vmatpush.xpose.msra.mxu0 0.0
  %4432 = vmatpush.xpose.msra.mxu0 0.0
  %4433 = vmatpush.xpose.msra.mxu0 0.0
  %4434 = vmatpush.xpose.msra.mxu0 0.0
  %4435 = vmatpush.xpose.msra.mxu0 0.0
  %4436 = vmatpush.xpose.msra.mxu0 0.0
  %4437 = vmatpush.xpose.msra.mxu0 0.0
  %4438 = vmatpush.xpose.msra.mxu0 0.0
  %4439 = vmatpush.xpose.msra.mxu0 0.0
  %4440 = vmatpush.xpose.msra.mxu0 0.0
  %4441 = vmatpush.xpose.msra.mxu0 0.0
  %4442 = vmatpush.xpose.msra.mxu0 0.0
  %4443 = vmatpush.xpose.msra.mxu0 0.0
  %4444 = vmatpush.xpose.msra.mxu0 %v4427
  %4445 = vmatmul.f32.gmra.mxu0 %v4424
  %v4446 = vpop.f32.mrf.mxu0
  %v4447 = vadd.f32 0.0, %v4446
  %4448 = vdwg.mxu0
  %v4450 = vsel %vm457, %v4229, 0
  %v4453 = vsel %vm457, %v4304, 0
  %4455 = vmatpush.xpose.msra.mxu0 0.0
  %4456 = vmatpush.xpose.msra.mxu0 0.0
  %4457 = vmatpush.xpose.msra.mxu0 0.0
  %4458 = vmatpush.xpose.msra.mxu0 0.0
  %4459 = vmatpush.xpose.msra.mxu0 0.0
  %4460 = vmatpush.xpose.msra.mxu0 0.0
  %4461 = vmatpush.xpose.msra.mxu0 0.0
  %4462 = vmatpush.xpose.msra.mxu0 0.0
  %4463 = vmatpush.xpose.msra.mxu0 0.0
  %4464 = vmatpush.xpose.msra.mxu0 0.0
  %4465 = vmatpush.xpose.msra.mxu0 0.0
  %4466 = vmatpush.xpose.msra.mxu0 0.0
  %4467 = vmatpush.xpose.msra.mxu0 0.0
  %4468 = vmatpush.xpose.msra.mxu0 0.0
  %4469 = vmatpush.xpose.msra.mxu0 0.0
  %4470 = vmatpush.xpose.msra.mxu0 %v4453
  %4471 = vmatmul.f32.gmra.mxu0 %v4450
  %v4472 = vpop.f32.mrf.mxu0
  %v4473 = vadd.f32 0.0, %v4472
  %4474 = vdwg.mxu0
  %v4476 = vsel %vm457, %v4232, 0
  %v4479 = vsel %vm457, %v4307, 0
  %4481 = vmatpush.xpose.msra.mxu0 0.0
  %4482 = vmatpush.xpose.msra.mxu0 0.0
  %4483 = vmatpush.xpose.msra.mxu0 0.0
  %4484 = vmatpush.xpose.msra.mxu0 0.0
  %4485 = vmatpush.xpose.msra.mxu0 0.0
  %4486 = vmatpush.xpose.msra.mxu0 0.0
  %4487 = vmatpush.xpose.msra.mxu0 0.0
  %4488 = vmatpush.xpose.msra.mxu0 0.0
  %4489 = vmatpush.xpose.msra.mxu0 0.0
  %4490 = vmatpush.xpose.msra.mxu0 0.0
  %4491 = vmatpush.xpose.msra.mxu0 0.0
  %4492 = vmatpush.xpose.msra.mxu0 0.0
  %4493 = vmatpush.xpose.msra.mxu0 0.0
  %4494 = vmatpush.xpose.msra.mxu0 0.0
  %4495 = vmatpush.xpose.msra.mxu0 0.0
  %4496 = vmatpush.xpose.msra.mxu0 %v4479
  %4497 = vmatmul.f32.gmra.mxu0 %v4476
  %v4498 = vpop.f32.mrf.mxu0
  %v4499 = vadd.f32 0.0, %v4498
  %4500 = vdwg.mxu0
  %v4502 = vsel %vm457, %v4235, 0
  %v4505 = vsel %vm457, %v4310, 0
  %4507 = vmatpush.xpose.msra.mxu0 0.0
  %4508 = vmatpush.xpose.msra.mxu0 0.0
  %4509 = vmatpush.xpose.msra.mxu0 0.0
  %4510 = vmatpush.xpose.msra.mxu0 0.0
  %4511 = vmatpush.xpose.msra.mxu0 0.0
  %4512 = vmatpush.xpose.msra.mxu0 0.0
  %4513 = vmatpush.xpose.msra.mxu0 0.0
  %4514 = vmatpush.xpose.msra.mxu0 0.0
  %4515 = vmatpush.xpose.msra.mxu0 0.0
  %4516 = vmatpush.xpose.msra.mxu0 0.0
  %4517 = vmatpush.xpose.msra.mxu0 0.0
  %4518 = vmatpush.xpose.msra.mxu0 0.0
  %4519 = vmatpush.xpose.msra.mxu0 0.0
  %4520 = vmatpush.xpose.msra.mxu0 0.0
  %4521 = vmatpush.xpose.msra.mxu0 0.0
  %4522 = vmatpush.xpose.msra.mxu0 %v4505
  %4523 = vmatmul.f32.gmra.mxu0 %v4502
  %v4524 = vpop.f32.mrf.mxu0
  %v4525 = vadd.f32 0.0, %v4524
  %4526 = vdwg.mxu0
  %v4528 = vsel %vm457, %v4238, 0
  %v4531 = vsel %vm457, %v4313, 0
  %4533 = vmatpush.xpose.msra.mxu0 0.0
  %4534 = vmatpush.xpose.msra.mxu0 0.0
  %4535 = vmatpush.xpose.msra.mxu0 0.0
  %4536 = vmatpush.xpose.msra.mxu0 0.0
  %4537 = vmatpush.xpose.msra.mxu0 0.0
  %4538 = vmatpush.xpose.msra.mxu0 0.0
  %4539 = vmatpush.xpose.msra.mxu0 0.0
  %4540 = vmatpush.xpose.msra.mxu0 0.0
  %4541 = vmatpush.xpose.msra.mxu0 0.0
  %4542 = vmatpush.xpose.msra.mxu0 0.0
  %4543 = vmatpush.xpose.msra.mxu0 0.0
  %4544 = vmatpush.xpose.msra.mxu0 0.0
  %4545 = vmatpush.xpose.msra.mxu0 0.0
  %4546 = vmatpush.xpose.msra.mxu0 0.0
  %4547 = vmatpush.xpose.msra.mxu0 0.0
  %4548 = vmatpush.xpose.msra.mxu0 %v4531
  %4549 = vmatmul.f32.gmra.mxu0 %v4528
  %v4550 = vpop.f32.mrf.mxu0
  %v4551 = vadd.f32 0.0, %v4550
  %4552 = vdwg.mxu0
  %v4554 = vsel %vm457, %v4241, 0
  %v4557 = vsel %vm457, %v4316, 0
  %4559 = vmatpush.xpose.msra.mxu0 0.0
  %4560 = vmatpush.xpose.msra.mxu0 0.0
  %4561 = vmatpush.xpose.msra.mxu0 0.0
  %4562 = vmatpush.xpose.msra.mxu0 0.0
  %4563 = vmatpush.xpose.msra.mxu0 0.0
  %4564 = vmatpush.xpose.msra.mxu0 0.0
  %4565 = vmatpush.xpose.msra.mxu0 0.0
  %4566 = vmatpush.xpose.msra.mxu0 0.0
  %4567 = vmatpush.xpose.msra.mxu0 0.0
  %4568 = vmatpush.xpose.msra.mxu0 0.0
  %4569 = vmatpush.xpose.msra.mxu0 0.0
  %4570 = vmatpush.xpose.msra.mxu0 0.0
  %4571 = vmatpush.xpose.msra.mxu0 0.0
  %4572 = vmatpush.xpose.msra.mxu0 0.0
  %4573 = vmatpush.xpose.msra.mxu0 0.0
  %4574 = vmatpush.xpose.msra.mxu0 %v4557
  %4575 = vmatmul.f32.gmra.mxu0 %v4554
  %v4576 = vpop.f32.mrf.mxu0
  %v4577 = vadd.f32 0.0, %v4576
  %4578 = vdwg.mxu0
  %v4580 = vsel %vm457, %v4244, 0
  %v4583 = vsel %vm457, %v4319, 0
  %4585 = vmatpush.xpose.msra.mxu0 0.0
  %4586 = vmatpush.xpose.msra.mxu0 0.0
  %4587 = vmatpush.xpose.msra.mxu0 0.0
  %4588 = vmatpush.xpose.msra.mxu0 0.0
  %4589 = vmatpush.xpose.msra.mxu0 0.0
  %4590 = vmatpush.xpose.msra.mxu0 0.0
  %4591 = vmatpush.xpose.msra.mxu0 0.0
  %4592 = vmatpush.xpose.msra.mxu0 0.0
  %4593 = vmatpush.xpose.msra.mxu0 0.0
  %4594 = vmatpush.xpose.msra.mxu0 0.0
  %4595 = vmatpush.xpose.msra.mxu0 0.0
  %4596 = vmatpush.xpose.msra.mxu0 0.0
  %4597 = vmatpush.xpose.msra.mxu0 0.0
  %4598 = vmatpush.xpose.msra.mxu0 0.0
  %4599 = vmatpush.xpose.msra.mxu0 0.0
  %4600 = vmatpush.xpose.msra.mxu0 %v4583
  %4601 = vmatmul.f32.gmra.mxu0 %v4580
  %v4602 = vpop.f32.mrf.mxu0
  %v4603 = vadd.f32 0.0, %v4602
  %4604 = vdwg.mxu0
  %v4606 = vsel %vm457, %v4247, 0
  %v4609 = vsel %vm457, %v4322, 0
  %4611 = vmatpush.xpose.msra.mxu0 0.0
  %4612 = vmatpush.xpose.msra.mxu0 0.0
  %4613 = vmatpush.xpose.msra.mxu0 0.0
  %4614 = vmatpush.xpose.msra.mxu0 0.0
  %4615 = vmatpush.xpose.msra.mxu0 0.0
  %4616 = vmatpush.xpose.msra.mxu0 0.0
  %4617 = vmatpush.xpose.msra.mxu0 0.0
  %4618 = vmatpush.xpose.msra.mxu0 0.0
  %4619 = vmatpush.xpose.msra.mxu0 0.0
  %4620 = vmatpush.xpose.msra.mxu0 0.0
  %4621 = vmatpush.xpose.msra.mxu0 0.0
  %4622 = vmatpush.xpose.msra.mxu0 0.0
  %4623 = vmatpush.xpose.msra.mxu0 0.0
  %4624 = vmatpush.xpose.msra.mxu0 0.0
  %4625 = vmatpush.xpose.msra.mxu0 0.0
  %4626 = vmatpush.xpose.msra.mxu0 %v4609
  %4627 = vmatmul.f32.gmra.mxu0 %v4606
  %v4628 = vpop.f32.mrf.mxu0
  %v4629 = vadd.f32 0.0, %v4628
  %4630 = vdwg.mxu0
  %v4632 = vsel %vm457, %v4250, 0
  %v4635 = vsel %vm457, %v4325, 0
  %4637 = vmatpush.xpose.msra.mxu0 0.0
  %4638 = vmatpush.xpose.msra.mxu0 0.0
  %4639 = vmatpush.xpose.msra.mxu0 0.0
  %4640 = vmatpush.xpose.msra.mxu0 0.0
  %4641 = vmatpush.xpose.msra.mxu0 0.0
  %4642 = vmatpush.xpose.msra.mxu0 0.0
  %4643 = vmatpush.xpose.msra.mxu0 0.0
  %4644 = vmatpush.xpose.msra.mxu0 0.0
  %4645 = vmatpush.xpose.msra.mxu0 0.0
  %4646 = vmatpush.xpose.msra.mxu0 0.0
  %4647 = vmatpush.xpose.msra.mxu0 0.0
  %4648 = vmatpush.xpose.msra.mxu0 0.0
  %4649 = vmatpush.xpose.msra.mxu0 0.0
  %4650 = vmatpush.xpose.msra.mxu0 0.0
  %4651 = vmatpush.xpose.msra.mxu0 0.0
  %4652 = vmatpush.xpose.msra.mxu0 %v4635
  %4653 = vmatmul.f32.gmra.mxu0 %v4632
  %v4654 = vpop.f32.mrf.mxu0
  %v4655 = vadd.f32 0.0, %v4654
  %4656 = vdwg.mxu0
  %v4658 = vsel %vm457, %v4253, 0
  %v4661 = vsel %vm457, %v4328, 0
  %4663 = vmatpush.xpose.msra.mxu0 0.0
  %4664 = vmatpush.xpose.msra.mxu0 0.0
  %4665 = vmatpush.xpose.msra.mxu0 0.0
  %4666 = vmatpush.xpose.msra.mxu0 0.0
  %4667 = vmatpush.xpose.msra.mxu0 0.0
  %4668 = vmatpush.xpose.msra.mxu0 0.0
  %4669 = vmatpush.xpose.msra.mxu0 0.0
  %4670 = vmatpush.xpose.msra.mxu0 0.0
  %4671 = vmatpush.xpose.msra.mxu0 0.0
  %4672 = vmatpush.xpose.msra.mxu0 0.0
  %4673 = vmatpush.xpose.msra.mxu0 0.0
  %4674 = vmatpush.xpose.msra.mxu0 0.0
  %4675 = vmatpush.xpose.msra.mxu0 0.0
  %4676 = vmatpush.xpose.msra.mxu0 0.0
  %4677 = vmatpush.xpose.msra.mxu0 0.0
  %4678 = vmatpush.xpose.msra.mxu0 %v4661
  %4679 = vmatmul.f32.gmra.mxu0 %v4658
  %v4680 = vpop.f32.mrf.mxu0
  %v4681 = vadd.f32 0.0, %v4680
  %4682 = vdwg.mxu0
  %v4684 = vsel %vm457, %v4256, 0
  %v4687 = vsel %vm457, %v4331, 0
  %4689 = vmatpush.xpose.msra.mxu0 0.0
  %4690 = vmatpush.xpose.msra.mxu0 0.0
  %4691 = vmatpush.xpose.msra.mxu0 0.0
  %4692 = vmatpush.xpose.msra.mxu0 0.0
  %4693 = vmatpush.xpose.msra.mxu0 0.0
  %4694 = vmatpush.xpose.msra.mxu0 0.0
  %4695 = vmatpush.xpose.msra.mxu0 0.0
  %4696 = vmatpush.xpose.msra.mxu0 0.0
  %4697 = vmatpush.xpose.msra.mxu0 0.0
  %4698 = vmatpush.xpose.msra.mxu0 0.0
  %4699 = vmatpush.xpose.msra.mxu0 0.0
  %4700 = vmatpush.xpose.msra.mxu0 0.0
  %4701 = vmatpush.xpose.msra.mxu0 0.0
  %4702 = vmatpush.xpose.msra.mxu0 0.0
  %4703 = vmatpush.xpose.msra.mxu0 0.0
  %4704 = vmatpush.xpose.msra.mxu0 %v4687
  %4705 = vmatmul.f32.gmra.mxu0 %v4684
  %v4706 = vpop.f32.mrf.mxu0
  %v4707 = vadd.f32 0.0, %v4706
  %4708 = vdwg.mxu0
  %v4710 = vsel %vm457, %v4259, 0
  %v4713 = vsel %vm457, %v4334, 0
  %4715 = vmatpush.xpose.msra.mxu0 0.0
  %4716 = vmatpush.xpose.msra.mxu0 0.0
  %4717 = vmatpush.xpose.msra.mxu0 0.0
  %4718 = vmatpush.xpose.msra.mxu0 0.0
  %4719 = vmatpush.xpose.msra.mxu0 0.0
  %4720 = vmatpush.xpose.msra.mxu0 0.0
  %4721 = vmatpush.xpose.msra.mxu0 0.0
  %4722 = vmatpush.xpose.msra.mxu0 0.0
  %4723 = vmatpush.xpose.msra.mxu0 0.0
  %4724 = vmatpush.xpose.msra.mxu0 0.0
  %4725 = vmatpush.xpose.msra.mxu0 0.0
  %4726 = vmatpush.xpose.msra.mxu0 0.0
  %4727 = vmatpush.xpose.msra.mxu0 0.0
  %4728 = vmatpush.xpose.msra.mxu0 0.0
  %4729 = vmatpush.xpose.msra.mxu0 0.0
  %4730 = vmatpush.xpose.msra.mxu0 %v4713
  %4731 = vmatmul.f32.gmra.mxu0 %v4710
  %v4732 = vpop.f32.mrf.mxu0
  %v4733 = vadd.f32 0.0, %v4732
  %4734 = vdwg.mxu0
  %v4736 = vsel %vm457, %v4262, 0
  %v4739 = vsel %vm457, %v4337, 0
  %4741 = vmatpush.xpose.msra.mxu0 0.0
  %4742 = vmatpush.xpose.msra.mxu0 0.0
  %4743 = vmatpush.xpose.msra.mxu0 0.0
  %4744 = vmatpush.xpose.msra.mxu0 0.0
  %4745 = vmatpush.xpose.msra.mxu0 0.0
  %4746 = vmatpush.xpose.msra.mxu0 0.0
  %4747 = vmatpush.xpose.msra.mxu0 0.0
  %4748 = vmatpush.xpose.msra.mxu0 0.0
  %4749 = vmatpush.xpose.msra.mxu0 0.0
  %4750 = vmatpush.xpose.msra.mxu0 0.0
  %4751 = vmatpush.xpose.msra.mxu0 0.0
  %4752 = vmatpush.xpose.msra.mxu0 0.0
  %4753 = vmatpush.xpose.msra.mxu0 0.0
  %4754 = vmatpush.xpose.msra.mxu0 0.0
  %4755 = vmatpush.xpose.msra.mxu0 0.0
  %4756 = vmatpush.xpose.msra.mxu0 %v4739
  %4757 = vmatmul.f32.gmra.mxu0 %v4736
  %v4758 = vpop.f32.mrf.mxu0
  %v4759 = vadd.f32 0.0, %v4758
  %4760 = vdwg.mxu0
  %v4762 = vsel %vm457, %v4265, 0
  %v4765 = vsel %vm457, %v4340, 0
  %4767 = vmatpush.xpose.msra.mxu0 0.0
  %4768 = vmatpush.xpose.msra.mxu0 0.0
  %4769 = vmatpush.xpose.msra.mxu0 0.0
  %4770 = vmatpush.xpose.msra.mxu0 0.0
  %4771 = vmatpush.xpose.msra.mxu0 0.0
  %4772 = vmatpush.xpose.msra.mxu0 0.0
  %4773 = vmatpush.xpose.msra.mxu0 0.0
  %4774 = vmatpush.xpose.msra.mxu0 0.0
  %4775 = vmatpush.xpose.msra.mxu0 0.0
  %4776 = vmatpush.xpose.msra.mxu0 0.0
  %4777 = vmatpush.xpose.msra.mxu0 0.0
  %4778 = vmatpush.xpose.msra.mxu0 0.0
  %4779 = vmatpush.xpose.msra.mxu0 0.0
  %4780 = vmatpush.xpose.msra.mxu0 0.0
  %4781 = vmatpush.xpose.msra.mxu0 0.0
  %4782 = vmatpush.xpose.msra.mxu0 %v4765
  %4783 = vmatmul.f32.gmra.mxu0 %v4762
  %v4784 = vpop.f32.mrf.mxu0
  %v4785 = vadd.f32 0.0, %v4784
  %4786 = vdwg.mxu0
  %v4788 = vsel %vm457, %v4268, 0
  %v4791 = vsel %vm457, %v4343, 0
  %4793 = vmatpush.xpose.msra.mxu0 0.0
  %4794 = vmatpush.xpose.msra.mxu0 0.0
  %4795 = vmatpush.xpose.msra.mxu0 0.0
  %4796 = vmatpush.xpose.msra.mxu0 0.0
  %4797 = vmatpush.xpose.msra.mxu0 0.0
  %4798 = vmatpush.xpose.msra.mxu0 0.0
  %4799 = vmatpush.xpose.msra.mxu0 0.0
  %4800 = vmatpush.xpose.msra.mxu0 0.0
  %4801 = vmatpush.xpose.msra.mxu0 0.0
  %4802 = vmatpush.xpose.msra.mxu0 0.0
  %4803 = vmatpush.xpose.msra.mxu0 0.0
  %4804 = vmatpush.xpose.msra.mxu0 0.0
  %4805 = vmatpush.xpose.msra.mxu0 0.0
  %4806 = vmatpush.xpose.msra.mxu0 0.0
  %4807 = vmatpush.xpose.msra.mxu0 0.0
  %4808 = vmatpush.xpose.msra.mxu0 %v4791
  %4809 = vmatmul.f32.gmra.mxu0 %v4788
  %v4810 = vpop.f32.mrf.mxu0
  %v4811 = vadd.f32 0.0, %v4810
  %4812 = vdwg.mxu0
  %v4814 = vsel %vm457, %v4271, 0
  %v4817 = vsel %vm457, %v4346, 0
  %4819 = vmatpush.xpose.msra.mxu0 0.0
  %4820 = vmatpush.xpose.msra.mxu0 0.0
  %4821 = vmatpush.xpose.msra.mxu0 0.0
  %4822 = vmatpush.xpose.msra.mxu0 0.0
  %4823 = vmatpush.xpose.msra.mxu0 0.0
  %4824 = vmatpush.xpose.msra.mxu0 0.0
  %4825 = vmatpush.xpose.msra.mxu0 0.0
  %4826 = vmatpush.xpose.msra.mxu0 0.0
  %4827 = vmatpush.xpose.msra.mxu0 0.0
  %4828 = vmatpush.xpose.msra.mxu0 0.0
  %4829 = vmatpush.xpose.msra.mxu0 0.0
  %4830 = vmatpush.xpose.msra.mxu0 0.0
  %4831 = vmatpush.xpose.msra.mxu0 0.0
  %4832 = vmatpush.xpose.msra.mxu0 0.0
  %4833 = vmatpush.xpose.msra.mxu0 0.0
  %4834 = vmatpush.xpose.msra.mxu0 %v4817
  %4835 = vmatmul.f32.gmra.mxu0 %v4814
  %v4836 = vpop.f32.mrf.mxu0
  %v4837 = vadd.f32 0.0, %v4836
  %4838 = vdwg.mxu0
  %v4839 = vsel %vm457, %v4447, -inf
  %4840 = vmax.xlane.f32.xlu0 %v4839
  %v4841 = vpop.xlane.xlu0 %4840
  %v4842 = vsel %vm457, %v4473, -inf
  %4843 = vmax.xlane.f32.xlu0 %v4842
  %v4844 = vpop.xlane.xlu0 %4843
  %v4845 = vsel %vm457, %v4499, -inf
  %4846 = vmax.xlane.f32.xlu0 %v4845
  %v4847 = vpop.xlane.xlu0 %4846
  %v4848 = vsel %vm457, %v4525, -inf
  %4849 = vmax.xlane.f32.xlu0 %v4848
  %v4850 = vpop.xlane.xlu0 %4849
  %v4851 = vsel %vm457, %v4551, -inf
  %4852 = vmax.xlane.f32.xlu0 %v4851
  %v4853 = vpop.xlane.xlu0 %4852
  %v4854 = vsel %vm457, %v4577, -inf
  %4855 = vmax.xlane.f32.xlu0 %v4854
  %v4856 = vpop.xlane.xlu0 %4855
  %v4857 = vsel %vm457, %v4603, -inf
  %4858 = vmax.xlane.f32.xlu0 %v4857
  %v4859 = vpop.xlane.xlu0 %4858
  %v4860 = vsel %vm457, %v4629, -inf
  %4861 = vmax.xlane.f32.xlu0 %v4860
  %v4862 = vpop.xlane.xlu0 %4861
  %v4863 = vsel %vm457, %v4655, -inf
  %4864 = vmax.xlane.f32.xlu0 %v4863
  %v4865 = vpop.xlane.xlu0 %4864
  %v4866 = vsel %vm457, %v4681, -inf
  %4867 = vmax.xlane.f32.xlu0 %v4866
  %v4868 = vpop.xlane.xlu0 %4867
  %v4869 = vsel %vm457, %v4707, -inf
  %4870 = vmax.xlane.f32.xlu0 %v4869
  %v4871 = vpop.xlane.xlu0 %4870
  %v4872 = vsel %vm457, %v4733, -inf
  %4873 = vmax.xlane.f32.xlu0 %v4872
  %v4874 = vpop.xlane.xlu0 %4873
  %v4875 = vsel %vm457, %v4759, -inf
  %4876 = vmax.xlane.f32.xlu0 %v4875
  %v4877 = vpop.xlane.xlu0 %4876
  %v4878 = vsel %vm457, %v4785, -inf
  %4879 = vmax.xlane.f32.xlu0 %v4878
  %v4880 = vpop.xlane.xlu0 %4879
  %v4881 = vsel %vm457, %v4811, -inf
  %4882 = vmax.xlane.f32.xlu0 %v4881
  %v4883 = vpop.xlane.xlu0 %4882
  %v4884 = vsel %vm457, %v4837, -inf
  %4885 = vmax.xlane.f32.xlu0 %v4884
  %v4886 = vpop.xlane.xlu0 %4885
  %v4887 = vsub.f32 %v4447, %v4841
  %v4888 = vsub.f32 %v4473, %v4844
  %v4889 = vsub.f32 %v4499, %v4847
  %v4890 = vsub.f32 %v4525, %v4850
  %v4891 = vsub.f32 %v4551, %v4853
  %v4892 = vsub.f32 %v4577, %v4856
  %v4893 = vsub.f32 %v4603, %v4859
  %v4894 = vsub.f32 %v4629, %v4862
  %v4895 = vsub.f32 %v4655, %v4865
  %v4896 = vsub.f32 %v4681, %v4868
  %v4897 = vsub.f32 %v4707, %v4871
  %v4898 = vsub.f32 %v4733, %v4874
  %v4899 = vsub.f32 %v4759, %v4877
  %v4900 = vsub.f32 %v4785, %v4880
  %v4901 = vsub.f32 %v4811, %v4883
  %v4902 = vsub.f32 %v4837, %v4886
  %v4903 = vmul.f32 %v4887, 1.442695
  %v4904 = vpow.pop %v4903
  %v4905 = vmul.f32 %v4888, 1.442695
  %v4906 = vpow.pop %v4905
  %v4907 = vmul.f32 %v4889, 1.442695
  %v4908 = vpow.pop %v4907
  %v4909 = vmul.f32 %v4890, 1.442695
  %v4910 = vpow.pop %v4909
  %v4911 = vmul.f32 %v4891, 1.442695
  %v4912 = vpow.pop %v4911
  %v4913 = vmul.f32 %v4892, 1.442695
  %v4914 = vpow.pop %v4913
  %v4915 = vmul.f32 %v4893, 1.442695
  %v4916 = vpow.pop %v4915
  %v4917 = vmul.f32 %v4894, 1.442695
  %v4918 = vpow.pop %v4917
  %v4919 = vmul.f32 %v4895, 1.442695
  %v4920 = vpow.pop %v4919
  %v4921 = vmul.f32 %v4896, 1.442695
  %v4922 = vpow.pop %v4921
  %v4923 = vmul.f32 %v4897, 1.442695
  %v4924 = vpow.pop %v4923
  %v4925 = vmul.f32 %v4898, 1.442695
  %v4926 = vpow.pop %v4925
  %v4927 = vmul.f32 %v4899, 1.442695
  %v4928 = vpow.pop %v4927
  %v4929 = vmul.f32 %v4900, 1.442695
  %v4930 = vpow.pop %v4929
  %v4931 = vmul.f32 %v4901, 1.442695
  %v4932 = vpow.pop %v4931
  %v4933 = vmul.f32 %v4902, 1.442695
  %v4934 = vpow.pop %v4933
  %v4935 = vsel %vm457, %v4904, 0.0
  %4936 = vadd.xlane.f32.xlu0 %v4935
  %v4937 = vpop.xlane.xlu0 %4936
  %v4938 = vsel %vm457, %v4906, 0.0
  %4939 = vadd.xlane.f32.xlu0 %v4938
  %v4940 = vpop.xlane.xlu0 %4939
  %v4941 = vsel %vm457, %v4908, 0.0
  %4942 = vadd.xlane.f32.xlu0 %v4941
  %v4943 = vpop.xlane.xlu0 %4942
  %v4944 = vsel %vm457, %v4910, 0.0
  %4945 = vadd.xlane.f32.xlu0 %v4944
  %v4946 = vpop.xlane.xlu0 %4945
  %v4947 = vsel %vm457, %v4912, 0.0
  %4948 = vadd.xlane.f32.xlu0 %v4947
  %v4949 = vpop.xlane.xlu0 %4948
  %v4950 = vsel %vm457, %v4914, 0.0
  %4951 = vadd.xlane.f32.xlu0 %v4950
  %v4952 = vpop.xlane.xlu0 %4951
  %v4953 = vsel %vm457, %v4916, 0.0
  %4954 = vadd.xlane.f32.xlu0 %v4953
  %v4955 = vpop.xlane.xlu0 %4954
  %v4956 = vsel %vm457, %v4918, 0.0
  %4957 = vadd.xlane.f32.xlu0 %v4956
  %v4958 = vpop.xlane.xlu0 %4957
  %v4959 = vsel %vm457, %v4920, 0.0
  %4960 = vadd.xlane.f32.xlu0 %v4959
  %v4961 = vpop.xlane.xlu0 %4960
  %v4962 = vsel %vm457, %v4922, 0.0
  %4963 = vadd.xlane.f32.xlu0 %v4962
  %v4964 = vpop.xlane.xlu0 %4963
  %v4965 = vsel %vm457, %v4924, 0.0
  %4966 = vadd.xlane.f32.xlu0 %v4965
  %v4967 = vpop.xlane.xlu0 %4966
  %v4968 = vsel %vm457, %v4926, 0.0
  %4969 = vadd.xlane.f32.xlu0 %v4968
  %v4970 = vpop.xlane.xlu0 %4969
  %v4971 = vsel %vm457, %v4928, 0.0
  %4972 = vadd.xlane.f32.xlu0 %v4971
  %v4973 = vpop.xlane.xlu0 %4972
  %v4974 = vsel %vm457, %v4930, 0.0
  %4975 = vadd.xlane.f32.xlu0 %v4974
  %v4976 = vpop.xlane.xlu0 %4975
  %v4977 = vsel %vm457, %v4932, 0.0
  %4978 = vadd.xlane.f32.xlu0 %v4977
  %v4979 = vpop.xlane.xlu0 %4978
  %v4980 = vsel %vm457, %v4934, 0.0
  %4981 = vadd.xlane.f32.xlu0 %v4980
  %v4982 = vpop.xlane.xlu0 %4981
  %v4983 = vrcp.pop %v4937
  %v4984 = vrcp.pop %v4940
  %v4985 = vrcp.pop %v4943
  %v4986 = vrcp.pop %v4946
  %v4987 = vrcp.pop %v4949
  %v4988 = vrcp.pop %v4952
  %v4989 = vrcp.pop %v4955
  %v4990 = vrcp.pop %v4958
  %v4991 = vrcp.pop %v4961
  %v4992 = vrcp.pop %v4964
  %v4993 = vrcp.pop %v4967
  %v4994 = vrcp.pop %v4970
  %v4995 = vrcp.pop %v4973
  %v4996 = vrcp.pop %v4976
  %v4997 = vrcp.pop %v4979
  %v4998 = vrcp.pop %v4982
  %v4999 = vmul.f32 %v4904, %v4983
  %v5000 = vmul.f32 %v4906, %v4984
  %v5001 = vmul.f32 %v4908, %v4985
  %v5002 = vmul.f32 %v4910, %v4986
  %v5003 = vmul.f32 %v4912, %v4987
  %v5004 = vmul.f32 %v4914, %v4988
  %v5005 = vmul.f32 %v4916, %v4989
  %v5006 = vmul.f32 %v4918, %v4990
  %v5007 = vmul.f32 %v4920, %v4991
  %v5008 = vmul.f32 %v4922, %v4992
  %v5009 = vmul.f32 %v4924, %v4993
  %v5010 = vmul.f32 %v4926, %v4994
  %v5011 = vmul.f32 %v4928, %v4995
  %v5012 = vmul.f32 %v4930, %v4996
  %v5013 = vmul.f32 %v4932, %v4997
  %v5014 = vmul.f32 %v4934, %v4998
  %s5015 = scalar_lea.vmem %s24, 384
  %5016 = vst.msk [vmem:[%s5015] sm:$0xff] %vm457, %v4999
  %5017 = vst.msk [vmem:[%s5015 + $0x8] sm:$0xff] %vm457, %v5000
  %5018 = vst.msk [vmem:[%s5015 + $0x10] sm:$0xff] %vm457, %v5001
  %5019 = vst.msk [vmem:[%s5015 + $0x18] sm:$0xff] %vm457, %v5002
  %5020 = vst.msk [vmem:[%s5015 + $0x20] sm:$0xff] %vm457, %v5003
  %5021 = vst.msk [vmem:[%s5015 + $0x28] sm:$0xff] %vm457, %v5004
  %5022 = vst.msk [vmem:[%s5015 + $0x30] sm:$0xff] %vm457, %v5005
  %5023 = vst.msk [vmem:[%s5015 + $0x38] sm:$0xff] %vm457, %v5006
  %5024 = vst.msk [vmem:[%s5015 + $0x40] sm:$0xff] %vm457, %v5007
  %5025 = vst.msk [vmem:[%s5015 + $0x48] sm:$0xff] %vm457, %v5008
  %5026 = vst.msk [vmem:[%s5015 + $0x50] sm:$0xff] %vm457, %v5009
  %5027 = vst.msk [vmem:[%s5015 + $0x58] sm:$0xff] %vm457, %v5010
  %5028 = vst.msk [vmem:[%s5015 + $0x60] sm:$0xff] %vm457, %v5011
  %5029 = vst.msk [vmem:[%s5015 + $0x68] sm:$0xff] %vm457, %v5012
  %5030 = vst.msk [vmem:[%s5015 + $0x70] sm:$0xff] %vm457, %v5013
  %5031 = vst.msk [vmem:[%s5015 + $0x78] sm:$0xff] %vm457, %v5014
  %v5033 = vsel %vm457, %v4999, 0
  %5035 = vmatpush.msra.mxu0 0.0
  %5036 = vmatpush.msra.mxu0 0.0
  %5037 = vmatpush.msra.mxu0 0.0
  %5038 = vmatpush.msra.mxu0 0.0
  %5039 = vmatpush.msra.mxu0 0.0
  %5040 = vmatpush.msra.mxu0 0.0
  %5041 = vmatpush.msra.mxu0 0.0
  %5042 = vmatpush.msra.mxu0 0.0
  %5043 = vmatpush.msra.mxu0 0.0
  %5044 = vmatpush.msra.mxu0 0.0
  %5045 = vmatpush.msra.mxu0 0.0
  %5046 = vmatpush.msra.mxu0 0.0
  %5047 = vmatpush.msra.mxu0 0.0
  %5048 = vmatpush.msra.mxu0 0.0
  %5049 = vmatpush.msra.mxu0 0.0
  %5050 = vmatpush.msra.mxu0 %v4376
  %5051 = vmatmul.f32.gmra.mxu0 %v5033
  %v5052 = vpop.f32.mrf.mxu0
  %v5053 = vadd.f32 0.0, %v5052
  %5054 = vdwg.mxu0
  %v5056 = vsel %vm457, %v5000, 0
  %5058 = vmatpush.msra.mxu0 0.0
  %5059 = vmatpush.msra.mxu0 0.0
  %5060 = vmatpush.msra.mxu0 0.0
  %5061 = vmatpush.msra.mxu0 0.0
  %5062 = vmatpush.msra.mxu0 0.0
  %5063 = vmatpush.msra.mxu0 0.0
  %5064 = vmatpush.msra.mxu0 0.0
  %5065 = vmatpush.msra.mxu0 0.0
  %5066 = vmatpush.msra.mxu0 0.0
  %5067 = vmatpush.msra.mxu0 0.0
  %5068 = vmatpush.msra.mxu0 0.0
  %5069 = vmatpush.msra.mxu0 0.0
  %5070 = vmatpush.msra.mxu0 0.0
  %5071 = vmatpush.msra.mxu0 0.0
  %5072 = vmatpush.msra.mxu0 0.0
  %5073 = vmatpush.msra.mxu0 %v4379
  %5074 = vmatmul.f32.gmra.mxu0 %v5056
  %v5075 = vpop.f32.mrf.mxu0
  %v5076 = vadd.f32 0.0, %v5075
  %5077 = vdwg.mxu0
  %v5079 = vsel %vm457, %v5001, 0
  %5081 = vmatpush.msra.mxu0 0.0
  %5082 = vmatpush.msra.mxu0 0.0
  %5083 = vmatpush.msra.mxu0 0.0
  %5084 = vmatpush.msra.mxu0 0.0
  %5085 = vmatpush.msra.mxu0 0.0
  %5086 = vmatpush.msra.mxu0 0.0
  %5087 = vmatpush.msra.mxu0 0.0
  %5088 = vmatpush.msra.mxu0 0.0
  %5089 = vmatpush.msra.mxu0 0.0
  %5090 = vmatpush.msra.mxu0 0.0
  %5091 = vmatpush.msra.mxu0 0.0
  %5092 = vmatpush.msra.mxu0 0.0
  %5093 = vmatpush.msra.mxu0 0.0
  %5094 = vmatpush.msra.mxu0 0.0
  %5095 = vmatpush.msra.mxu0 0.0
  %5096 = vmatpush.msra.mxu0 %v4382
  %5097 = vmatmul.f32.gmra.mxu0 %v5079
  %v5098 = vpop.f32.mrf.mxu0
  %v5099 = vadd.f32 0.0, %v5098
  %5100 = vdwg.mxu0
  %v5102 = vsel %vm457, %v5002, 0
  %5104 = vmatpush.msra.mxu0 0.0
  %5105 = vmatpush.msra.mxu0 0.0
  %5106 = vmatpush.msra.mxu0 0.0
  %5107 = vmatpush.msra.mxu0 0.0
  %5108 = vmatpush.msra.mxu0 0.0
  %5109 = vmatpush.msra.mxu0 0.0
  %5110 = vmatpush.msra.mxu0 0.0
  %5111 = vmatpush.msra.mxu0 0.0
  %5112 = vmatpush.msra.mxu0 0.0
  %5113 = vmatpush.msra.mxu0 0.0
  %5114 = vmatpush.msra.mxu0 0.0
  %5115 = vmatpush.msra.mxu0 0.0
  %5116 = vmatpush.msra.mxu0 0.0
  %5117 = vmatpush.msra.mxu0 0.0
  %5118 = vmatpush.msra.mxu0 0.0
  %5119 = vmatpush.msra.mxu0 %v4385
  %5120 = vmatmul.f32.gmra.mxu0 %v5102
  %v5121 = vpop.f32.mrf.mxu0
  %v5122 = vadd.f32 0.0, %v5121
  %5123 = vdwg.mxu0
  %v5125 = vsel %vm457, %v5003, 0
  %5127 = vmatpush.msra.mxu0 0.0
  %5128 = vmatpush.msra.mxu0 0.0
  %5129 = vmatpush.msra.mxu0 0.0
  %5130 = vmatpush.msra.mxu0 0.0
  %5131 = vmatpush.msra.mxu0 0.0
  %5132 = vmatpush.msra.mxu0 0.0
  %5133 = vmatpush.msra.mxu0 0.0
  %5134 = vmatpush.msra.mxu0 0.0
  %5135 = vmatpush.msra.mxu0 0.0
  %5136 = vmatpush.msra.mxu0 0.0
  %5137 = vmatpush.msra.mxu0 0.0
  %5138 = vmatpush.msra.mxu0 0.0
  %5139 = vmatpush.msra.mxu0 0.0
  %5140 = vmatpush.msra.mxu0 0.0
  %5141 = vmatpush.msra.mxu0 0.0
  %5142 = vmatpush.msra.mxu0 %v4388
  %5143 = vmatmul.f32.gmra.mxu0 %v5125
  %v5144 = vpop.f32.mrf.mxu0
  %v5145 = vadd.f32 0.0, %v5144
  %5146 = vdwg.mxu0
  %v5148 = vsel %vm457, %v5004, 0
  %5150 = vmatpush.msra.mxu0 0.0
  %5151 = vmatpush.msra.mxu0 0.0
  %5152 = vmatpush.msra.mxu0 0.0
  %5153 = vmatpush.msra.mxu0 0.0
  %5154 = vmatpush.msra.mxu0 0.0
  %5155 = vmatpush.msra.mxu0 0.0
  %5156 = vmatpush.msra.mxu0 0.0
  %5157 = vmatpush.msra.mxu0 0.0
  %5158 = vmatpush.msra.mxu0 0.0
  %5159 = vmatpush.msra.mxu0 0.0
  %5160 = vmatpush.msra.mxu0 0.0
  %5161 = vmatpush.msra.mxu0 0.0
  %5162 = vmatpush.msra.mxu0 0.0
  %5163 = vmatpush.msra.mxu0 0.0
  %5164 = vmatpush.msra.mxu0 0.0
  %5165 = vmatpush.msra.mxu0 %v4391
  %5166 = vmatmul.f32.gmra.mxu0 %v5148
  %v5167 = vpop.f32.mrf.mxu0
  %v5168 = vadd.f32 0.0, %v5167
  %5169 = vdwg.mxu0
  %v5171 = vsel %vm457, %v5005, 0
  %5173 = vmatpush.msra.mxu0 0.0
  %5174 = vmatpush.msra.mxu0 0.0
  %5175 = vmatpush.msra.mxu0 0.0
  %5176 = vmatpush.msra.mxu0 0.0
  %5177 = vmatpush.msra.mxu0 0.0
  %5178 = vmatpush.msra.mxu0 0.0
  %5179 = vmatpush.msra.mxu0 0.0
  %5180 = vmatpush.msra.mxu0 0.0
  %5181 = vmatpush.msra.mxu0 0.0
  %5182 = vmatpush.msra.mxu0 0.0
  %5183 = vmatpush.msra.mxu0 0.0
  %5184 = vmatpush.msra.mxu0 0.0
  %5185 = vmatpush.msra.mxu0 0.0
  %5186 = vmatpush.msra.mxu0 0.0
  %5187 = vmatpush.msra.mxu0 0.0
  %5188 = vmatpush.msra.mxu0 %v4394
  %5189 = vmatmul.f32.gmra.mxu0 %v5171
  %v5190 = vpop.f32.mrf.mxu0
  %v5191 = vadd.f32 0.0, %v5190
  %5192 = vdwg.mxu0
  %v5194 = vsel %vm457, %v5006, 0
  %5196 = vmatpush.msra.mxu0 0.0
  %5197 = vmatpush.msra.mxu0 0.0
  %5198 = vmatpush.msra.mxu0 0.0
  %5199 = vmatpush.msra.mxu0 0.0
  %5200 = vmatpush.msra.mxu0 0.0
  %5201 = vmatpush.msra.mxu0 0.0
  %5202 = vmatpush.msra.mxu0 0.0
  %5203 = vmatpush.msra.mxu0 0.0
  %5204 = vmatpush.msra.mxu0 0.0
  %5205 = vmatpush.msra.mxu0 0.0
  %5206 = vmatpush.msra.mxu0 0.0
  %5207 = vmatpush.msra.mxu0 0.0
  %5208 = vmatpush.msra.mxu0 0.0
  %5209 = vmatpush.msra.mxu0 0.0
  %5210 = vmatpush.msra.mxu0 0.0
  %5211 = vmatpush.msra.mxu0 %v4397
  %5212 = vmatmul.f32.gmra.mxu0 %v5194
  %v5213 = vpop.f32.mrf.mxu0
  %v5214 = vadd.f32 0.0, %v5213
  %5215 = vdwg.mxu0
  %v5217 = vsel %vm457, %v5007, 0
  %5219 = vmatpush.msra.mxu0 0.0
  %5220 = vmatpush.msra.mxu0 0.0
  %5221 = vmatpush.msra.mxu0 0.0
  %5222 = vmatpush.msra.mxu0 0.0
  %5223 = vmatpush.msra.mxu0 0.0
  %5224 = vmatpush.msra.mxu0 0.0
  %5225 = vmatpush.msra.mxu0 0.0
  %5226 = vmatpush.msra.mxu0 0.0
  %5227 = vmatpush.msra.mxu0 0.0
  %5228 = vmatpush.msra.mxu0 0.0
  %5229 = vmatpush.msra.mxu0 0.0
  %5230 = vmatpush.msra.mxu0 0.0
  %5231 = vmatpush.msra.mxu0 0.0
  %5232 = vmatpush.msra.mxu0 0.0
  %5233 = vmatpush.msra.mxu0 0.0
  %5234 = vmatpush.msra.mxu0 %v4400
  %5235 = vmatmul.f32.gmra.mxu0 %v5217
  %v5236 = vpop.f32.mrf.mxu0
  %v5237 = vadd.f32 0.0, %v5236
  %5238 = vdwg.mxu0
  %v5240 = vsel %vm457, %v5008, 0
  %5242 = vmatpush.msra.mxu0 0.0
  %5243 = vmatpush.msra.mxu0 0.0
  %5244 = vmatpush.msra.mxu0 0.0
  %5245 = vmatpush.msra.mxu0 0.0
  %5246 = vmatpush.msra.mxu0 0.0
  %5247 = vmatpush.msra.mxu0 0.0
  %5248 = vmatpush.msra.mxu0 0.0
  %5249 = vmatpush.msra.mxu0 0.0
  %5250 = vmatpush.msra.mxu0 0.0
  %5251 = vmatpush.msra.mxu0 0.0
  %5252 = vmatpush.msra.mxu0 0.0
  %5253 = vmatpush.msra.mxu0 0.0
  %5254 = vmatpush.msra.mxu0 0.0
  %5255 = vmatpush.msra.mxu0 0.0
  %5256 = vmatpush.msra.mxu0 0.0
  %5257 = vmatpush.msra.mxu0 %v4403
  %5258 = vmatmul.f32.gmra.mxu0 %v5240
  %v5259 = vpop.f32.mrf.mxu0
  %v5260 = vadd.f32 0.0, %v5259
  %5261 = vdwg.mxu0
  %v5263 = vsel %vm457, %v5009, 0
  %5265 = vmatpush.msra.mxu0 0.0
  %5266 = vmatpush.msra.mxu0 0.0
  %5267 = vmatpush.msra.mxu0 0.0
  %5268 = vmatpush.msra.mxu0 0.0
  %5269 = vmatpush.msra.mxu0 0.0
  %5270 = vmatpush.msra.mxu0 0.0
  %5271 = vmatpush.msra.mxu0 0.0
  %5272 = vmatpush.msra.mxu0 0.0
  %5273 = vmatpush.msra.mxu0 0.0
  %5274 = vmatpush.msra.mxu0 0.0
  %5275 = vmatpush.msra.mxu0 0.0
  %5276 = vmatpush.msra.mxu0 0.0
  %5277 = vmatpush.msra.mxu0 0.0
  %5278 = vmatpush.msra.mxu0 0.0
  %5279 = vmatpush.msra.mxu0 0.0
  %5280 = vmatpush.msra.mxu0 %v4406
  %5281 = vmatmul.f32.gmra.mxu0 %v5263
  %v5282 = vpop.f32.mrf.mxu0
  %v5283 = vadd.f32 0.0, %v5282
  %5284 = vdwg.mxu0
  %v5286 = vsel %vm457, %v5010, 0
  %5288 = vmatpush.msra.mxu0 0.0
  %5289 = vmatpush.msra.mxu0 0.0
  %5290 = vmatpush.msra.mxu0 0.0
  %5291 = vmatpush.msra.mxu0 0.0
  %5292 = vmatpush.msra.mxu0 0.0
  %5293 = vmatpush.msra.mxu0 0.0
  %5294 = vmatpush.msra.mxu0 0.0
  %5295 = vmatpush.msra.mxu0 0.0
  %5296 = vmatpush.msra.mxu0 0.0
  %5297 = vmatpush.msra.mxu0 0.0
  %5298 = vmatpush.msra.mxu0 0.0
  %5299 = vmatpush.msra.mxu0 0.0
  %5300 = vmatpush.msra.mxu0 0.0
  %5301 = vmatpush.msra.mxu0 0.0
  %5302 = vmatpush.msra.mxu0 0.0
  %5303 = vmatpush.msra.mxu0 %v4409
  %5304 = vmatmul.f32.gmra.mxu0 %v5286
  %v5305 = vpop.f32.mrf.mxu0
  %v5306 = vadd.f32 0.0, %v5305
  %5307 = vdwg.mxu0
  %v5309 = vsel %vm457, %v5011, 0
  %5311 = vmatpush.msra.mxu0 0.0
  %5312 = vmatpush.msra.mxu0 0.0
  %5313 = vmatpush.msra.mxu0 0.0
  %5314 = vmatpush.msra.mxu0 0.0
  %5315 = vmatpush.msra.mxu0 0.0
  %5316 = vmatpush.msra.mxu0 0.0
  %5317 = vmatpush.msra.mxu0 0.0
  %5318 = vmatpush.msra.mxu0 0.0
  %5319 = vmatpush.msra.mxu0 0.0
  %5320 = vmatpush.msra.mxu0 0.0
  %5321 = vmatpush.msra.mxu0 0.0
  %5322 = vmatpush.msra.mxu0 0.0
  %5323 = vmatpush.msra.mxu0 0.0
  %5324 = vmatpush.msra.mxu0 0.0
  %5325 = vmatpush.msra.mxu0 0.0
  %5326 = vmatpush.msra.mxu0 %v4412
  %5327 = vmatmul.f32.gmra.mxu0 %v5309
  %v5328 = vpop.f32.mrf.mxu0
  %v5329 = vadd.f32 0.0, %v5328
  %5330 = vdwg.mxu0
  %v5332 = vsel %vm457, %v5012, 0
  %5334 = vmatpush.msra.mxu0 0.0
  %5335 = vmatpush.msra.mxu0 0.0
  %5336 = vmatpush.msra.mxu0 0.0
  %5337 = vmatpush.msra.mxu0 0.0
  %5338 = vmatpush.msra.mxu0 0.0
  %5339 = vmatpush.msra.mxu0 0.0
  %5340 = vmatpush.msra.mxu0 0.0
  %5341 = vmatpush.msra.mxu0 0.0
  %5342 = vmatpush.msra.mxu0 0.0
  %5343 = vmatpush.msra.mxu0 0.0
  %5344 = vmatpush.msra.mxu0 0.0
  %5345 = vmatpush.msra.mxu0 0.0
  %5346 = vmatpush.msra.mxu0 0.0
  %5347 = vmatpush.msra.mxu0 0.0
  %5348 = vmatpush.msra.mxu0 0.0
  %5349 = vmatpush.msra.mxu0 %v4415
  %5350 = vmatmul.f32.gmra.mxu0 %v5332
  %v5351 = vpop.f32.mrf.mxu0
  %v5352 = vadd.f32 0.0, %v5351
  %5353 = vdwg.mxu0
  %v5355 = vsel %vm457, %v5013, 0
  %5357 = vmatpush.msra.mxu0 0.0
  %5358 = vmatpush.msra.mxu0 0.0
  %5359 = vmatpush.msra.mxu0 0.0
  %5360 = vmatpush.msra.mxu0 0.0
  %5361 = vmatpush.msra.mxu0 0.0
  %5362 = vmatpush.msra.mxu0 0.0
  %5363 = vmatpush.msra.mxu0 0.0
  %5364 = vmatpush.msra.mxu0 0.0
  %5365 = vmatpush.msra.mxu0 0.0
  %5366 = vmatpush.msra.mxu0 0.0
  %5367 = vmatpush.msra.mxu0 0.0
  %5368 = vmatpush.msra.mxu0 0.0
  %5369 = vmatpush.msra.mxu0 0.0
  %5370 = vmatpush.msra.mxu0 0.0
  %5371 = vmatpush.msra.mxu0 0.0
  %5372 = vmatpush.msra.mxu0 %v4418
  %5373 = vmatmul.f32.gmra.mxu0 %v5355
  %v5374 = vpop.f32.mrf.mxu0
  %v5375 = vadd.f32 0.0, %v5374
  %5376 = vdwg.mxu0
  %v5378 = vsel %vm457, %v5014, 0
  %5380 = vmatpush.msra.mxu0 0.0
  %5381 = vmatpush.msra.mxu0 0.0
  %5382 = vmatpush.msra.mxu0 0.0
  %5383 = vmatpush.msra.mxu0 0.0
  %5384 = vmatpush.msra.mxu0 0.0
  %5385 = vmatpush.msra.mxu0 0.0
  %5386 = vmatpush.msra.mxu0 0.0
  %5387 = vmatpush.msra.mxu0 0.0
  %5388 = vmatpush.msra.mxu0 0.0
  %5389 = vmatpush.msra.mxu0 0.0
  %5390 = vmatpush.msra.mxu0 0.0
  %5391 = vmatpush.msra.mxu0 0.0
  %5392 = vmatpush.msra.mxu0 0.0
  %5393 = vmatpush.msra.mxu0 0.0
  %5394 = vmatpush.msra.mxu0 0.0
  %5395 = vmatpush.msra.mxu0 %v4421
  %5396 = vmatmul.f32.gmra.mxu0 %v5378
  %v5397 = vpop.f32.mrf.mxu0
  %v5398 = vadd.f32 0.0, %v5397
  %5399 = vdwg.mxu0
  %s5400 = scalar_lea.vmem %s9, 24
  %v5401 = vld [vmem:[%s5400] sm:$0xff]
  %v5403 = vsel %vm457, %v5053, 0
  %v5406 = vsel %vm457, %v5076, 0
  %v5409 = vsel %vm457, %v5099, 0
  %v5412 = vsel %vm457, %v5122, 0
  %v5415 = vsel %vm457, %v5145, 0
  %v5418 = vsel %vm457, %v5168, 0
  %v5421 = vsel %vm457, %v5191, 0
  %v5424 = vsel %vm457, %v5214, 0
  %v5427 = vsel %vm457, %v5237, 0
  %v5430 = vsel %vm457, %v5260, 0
  %v5433 = vsel %vm457, %v5283, 0
  %v5436 = vsel %vm457, %v5306, 0
  %v5439 = vsel %vm457, %v5329, 0
  %v5442 = vsel %vm457, %v5352, 0
  %v5445 = vsel %vm457, %v5375, 0
  %v5448 = vsel %vm457, %v5398, 0
  %5450 = vmatpush.msra.mxu0 0.0
  %5451 = vmatpush.msra.mxu0 0.0
  %5452 = vmatpush.msra.mxu0 0.0
  %5453 = vmatpush.msra.mxu0 0.0
  %5454 = vmatpush.msra.mxu0 0.0
  %5455 = vmatpush.msra.mxu0 0.0
  %5456 = vmatpush.msra.mxu0 0.0
  %5457 = vmatpush.msra.mxu0 0.0
  %5458 = vmatpush.msra.mxu0 0.0
  %5459 = vmatpush.msra.mxu0 0.0
  %5460 = vmatpush.msra.mxu0 0.0
  %5461 = vmatpush.msra.mxu0 0.0
  %5462 = vmatpush.msra.mxu0 0.0
  %5463 = vmatpush.msra.mxu0 0.0
  %5464 = vmatpush.msra.mxu0 0.0
  %5465 = vmatpush.msra.mxu0 %v5401
  %5466 = vmatmul.f32.gmra.mxu0 %v5403
  %v5467 = vpop.f32.mrf.mxu0
  %v5468 = vadd.f32 0.0, %v5467
  %5469 = vmatmul.f32.gmra.mxu0 %v5406
  %v5470 = vpop.f32.mrf.mxu0
  %v5471 = vadd.f32 0.0, %v5470
  %5472 = vmatmul.f32.gmra.mxu0 %v5409
  %v5473 = vpop.f32.mrf.mxu0
  %v5474 = vadd.f32 0.0, %v5473
  %5475 = vmatmul.f32.gmra.mxu0 %v5412
  %v5476 = vpop.f32.mrf.mxu0
  %v5477 = vadd.f32 0.0, %v5476
  %5478 = vmatmul.f32.gmra.mxu0 %v5415
  %v5479 = vpop.f32.mrf.mxu0
  %v5480 = vadd.f32 0.0, %v5479
  %5481 = vmatmul.f32.gmra.mxu0 %v5418
  %v5482 = vpop.f32.mrf.mxu0
  %v5483 = vadd.f32 0.0, %v5482
  %5484 = vmatmul.f32.gmra.mxu0 %v5421
  %v5485 = vpop.f32.mrf.mxu0
  %v5486 = vadd.f32 0.0, %v5485
  %5487 = vmatmul.f32.gmra.mxu0 %v5424
  %v5488 = vpop.f32.mrf.mxu0
  %v5489 = vadd.f32 0.0, %v5488
  %5490 = vmatmul.f32.gmra.mxu0 %v5427
  %v5491 = vpop.f32.mrf.mxu0
  %v5492 = vadd.f32 0.0, %v5491
  %5493 = vmatmul.f32.gmra.mxu0 %v5430
  %v5494 = vpop.f32.mrf.mxu0
  %v5495 = vadd.f32 0.0, %v5494
  %5496 = vmatmul.f32.gmra.mxu0 %v5433
  %v5497 = vpop.f32.mrf.mxu0
  %v5498 = vadd.f32 0.0, %v5497
  %5499 = vmatmul.f32.gmra.mxu0 %v5436
  %v5500 = vpop.f32.mrf.mxu0
  %v5501 = vadd.f32 0.0, %v5500
  %5502 = vmatmul.f32.gmra.mxu0 %v5439
  %v5503 = vpop.f32.mrf.mxu0
  %v5504 = vadd.f32 0.0, %v5503
  %5505 = vmatmul.f32.gmra.mxu0 %v5442
  %v5506 = vpop.f32.mrf.mxu0
  %v5507 = vadd.f32 0.0, %v5506
  %5508 = vmatmul.f32.gmra.mxu0 %v5445
  %v5509 = vpop.f32.mrf.mxu0
  %v5510 = vadd.f32 0.0, %v5509
  %5511 = vmatmul.f32.gmra.mxu0 %v5448
  %v5512 = vpop.f32.mrf.mxu0
  %v5513 = vadd.f32 0.0, %v5512
  %5514 = vdwg.mxu0
  %v5515 = vadd.f32 %v4182, %v5468
  %v5516 = vadd.f32 %v4183, %v5471
  %v5517 = vadd.f32 %v4184, %v5474
  %v5518 = vadd.f32 %v4185, %v5477
  %v5519 = vadd.f32 %v4186, %v5480
  %v5520 = vadd.f32 %v4187, %v5483
  %v5521 = vadd.f32 %v4188, %v5486
  %v5522 = vadd.f32 %v4189, %v5489
  %v5523 = vadd.f32 %v4190, %v5492
  %v5524 = vadd.f32 %v4191, %v5495
  %v5525 = vadd.f32 %v4192, %v5498
  %v5526 = vadd.f32 %v4193, %v5501
  %v5527 = vadd.f32 %v4194, %v5504
  %v5528 = vadd.f32 %v4195, %v5507
  %v5529 = vadd.f32 %v4196, %v5510
  %v5530 = vadd.f32 %v4197, %v5513
  %v5531 = vadd.f32 %v142, %v5515
  %v5532 = vadd.f32 %v145, %v5516
  %v5533 = vadd.f32 %v148, %v5517
  %v5534 = vadd.f32 %v151, %v5518
  %v5535 = vadd.f32 %v154, %v5519
  %v5536 = vadd.f32 %v157, %v5520
  %v5537 = vadd.f32 %v160, %v5521
  %v5538 = vadd.f32 %v163, %v5522
  %v5539 = vadd.f32 %v166, %v5523
  %v5540 = vadd.f32 %v169, %v5524
  %v5541 = vadd.f32 %v172, %v5525
  %v5542 = vadd.f32 %v175, %v5526
  %v5543 = vadd.f32 %v178, %v5527
  %v5544 = vadd.f32 %v181, %v5528
  %v5545 = vadd.f32 %v184, %v5529
  %v5546 = vadd.f32 %v187, %v5530
  %v5547 = vld [vmem:[%s10] sm:$0x1]
  %v5549 = vperm.slane %v5547, 0
  %v5551 = vadd.f32 %v5531, %v5549
  %v5552 = vadd.f32 %v5532, %v5549
  %v5553 = vadd.f32 %v5533, %v5549
  %v5554 = vadd.f32 %v5534, %v5549
  %v5555 = vadd.f32 %v5535, %v5549
  %v5556 = vadd.f32 %v5536, %v5549
  %v5557 = vadd.f32 %v5537, %v5549
  %v5558 = vadd.f32 %v5538, %v5549
  %v5559 = vadd.f32 %v5539, %v5549
  %v5560 = vadd.f32 %v5540, %v5549
  %v5561 = vadd.f32 %v5541, %v5549
  %v5562 = vadd.f32 %v5542, %v5549
  %v5563 = vadd.f32 %v5543, %v5549
  %v5564 = vadd.f32 %v5544, %v5549
  %v5565 = vadd.f32 %v5545, %v5549
  %v5566 = vadd.f32 %v5546, %v5549
  %v5567 = vld [vmem:[%s11] sm:$0x1]
  %v5568 = vld [vmem:[%s12] sm:$0x1]
  %v5569 = vsel %vm197, %v5551, 0.0
  %5570 = vadd.xlane.f32.xlu0 %v5569
  %v5571 = vpop.xlane.xlu0 %5570
  %v5572 = vsel %vm197, %v5552, 0.0
  %5573 = vadd.xlane.f32.xlu0 %v5572
  %v5574 = vpop.xlane.xlu0 %5573
  %v5575 = vsel %vm197, %v5553, 0.0
  %5576 = vadd.xlane.f32.xlu0 %v5575
  %v5577 = vpop.xlane.xlu0 %5576
  %v5578 = vsel %vm197, %v5554, 0.0
  %5579 = vadd.xlane.f32.xlu0 %v5578
  %v5580 = vpop.xlane.xlu0 %5579
  %v5581 = vsel %vm197, %v5555, 0.0
  %5582 = vadd.xlane.f32.xlu0 %v5581
  %v5583 = vpop.xlane.xlu0 %5582
  %v5584 = vsel %vm197, %v5556, 0.0
  %5585 = vadd.xlane.f32.xlu0 %v5584
  %v5586 = vpop.xlane.xlu0 %5585
  %v5587 = vsel %vm197, %v5557, 0.0
  %5588 = vadd.xlane.f32.xlu0 %v5587
  %v5589 = vpop.xlane.xlu0 %5588
  %v5590 = vsel %vm197, %v5558, 0.0
  %5591 = vadd.xlane.f32.xlu0 %v5590
  %v5592 = vpop.xlane.xlu0 %5591
  %v5593 = vsel %vm197, %v5559, 0.0
  %5594 = vadd.xlane.f32.xlu0 %v5593
  %v5595 = vpop.xlane.xlu0 %5594
  %v5596 = vsel %vm197, %v5560, 0.0
  %5597 = vadd.xlane.f32.xlu0 %v5596
  %v5598 = vpop.xlane.xlu0 %5597
  %v5599 = vsel %vm197, %v5561, 0.0
  %5600 = vadd.xlane.f32.xlu0 %v5599
  %v5601 = vpop.xlane.xlu0 %5600
  %v5602 = vsel %vm197, %v5562, 0.0
  %5603 = vadd.xlane.f32.xlu0 %v5602
  %v5604 = vpop.xlane.xlu0 %5603
  %v5605 = vsel %vm197, %v5563, 0.0
  %5606 = vadd.xlane.f32.xlu0 %v5605
  %v5607 = vpop.xlane.xlu0 %5606
  %v5608 = vsel %vm197, %v5564, 0.0
  %5609 = vadd.xlane.f32.xlu0 %v5608
  %v5610 = vpop.xlane.xlu0 %5609
  %v5611 = vsel %vm197, %v5565, 0.0
  %5612 = vadd.xlane.f32.xlu0 %v5611
  %v5613 = vpop.xlane.xlu0 %5612
  %v5614 = vsel %vm197, %v5566, 0.0
  %5615 = vadd.xlane.f32.xlu0 %v5614
  %v5616 = vpop.xlane.xlu0 %5615
  %v5617 = vrcp.pop 32.0
  %v5618 = vmul.f32 32.0, %v5617
  %v5619 = vsub.f32 1.0, %v5618
  %v5620 = vmul.f32 %v5617, %v5619
  %v5621 = vadd.f32 %v5617, %v5620
  %vm5622 = vweird.f32 %v5617
  %v5623 = vsel %vm5622, %v5617, %v5621
  %v5624 = vmul.f32 %v5571, %v5623
  %v5625 = vmul.f32 %v5574, %v5623
  %v5626 = vmul.f32 %v5577, %v5623
  %v5627 = vmul.f32 %v5580, %v5623
  %v5628 = vmul.f32 %v5583, %v5623
  %v5629 = vmul.f32 %v5586, %v5623
  %v5630 = vmul.f32 %v5589, %v5623
  %v5631 = vmul.f32 %v5592, %v5623
  %v5632 = vmul.f32 %v5595, %v5623
  %v5633 = vmul.f32 %v5598, %v5623
  %v5634 = vmul.f32 %v5601, %v5623
  %v5635 = vmul.f32 %v5604, %v5623
  %v5636 = vmul.f32 %v5607, %v5623
  %v5637 = vmul.f32 %v5610, %v5623
  %v5638 = vmul.f32 %v5613, %v5623
  %v5639 = vmul.f32 %v5616, %v5623
  %v5640 = vsub.f32 %v5551, %v5624
  %v5641 = vsub.f32 %v5552, %v5625
  %v5642 = vsub.f32 %v5553, %v5626
  %v5643 = vsub.f32 %v5554, %v5627
  %v5644 = vsub.f32 %v5555, %v5628
  %v5645 = vsub.f32 %v5556, %v5629
  %v5646 = vsub.f32 %v5557, %v5630
  %v5647 = vsub.f32 %v5558, %v5631
  %v5648 = vsub.f32 %v5559, %v5632
  %v5649 = vsub.f32 %v5560, %v5633
  %v5650 = vsub.f32 %v5561, %v5634
  %v5651 = vsub.f32 %v5562, %v5635
  %v5652 = vsub.f32 %v5563, %v5636
  %v5653 = vsub.f32 %v5564, %v5637
  %v5654 = vsub.f32 %v5565, %v5638
  %v5655 = vsub.f32 %v5566, %v5639
  %v5656 = vmul.f32 %v5640, %v5640
  %v5657 = vmul.f32 %v5641, %v5641
  %v5658 = vmul.f32 %v5642, %v5642
  %v5659 = vmul.f32 %v5643, %v5643
  %v5660 = vmul.f32 %v5644, %v5644
  %v5661 = vmul.f32 %v5645, %v5645
  %v5662 = vmul.f32 %v5646, %v5646
  %v5663 = vmul.f32 %v5647, %v5647
  %v5664 = vmul.f32 %v5648, %v5648
  %v5665 = vmul.f32 %v5649, %v5649
  %v5666 = vmul.f32 %v5650, %v5650
  %v5667 = vmul.f32 %v5651, %v5651
  %v5668 = vmul.f32 %v5652, %v5652
  %v5669 = vmul.f32 %v5653, %v5653
  %v5670 = vmul.f32 %v5654, %v5654
  %v5671 = vmul.f32 %v5655, %v5655
  %v5672 = vsel %vm197, %v5656, 0.0
  %5673 = vadd.xlane.f32.xlu0 %v5672
  %v5674 = vpop.xlane.xlu0 %5673
  %v5675 = vsel %vm197, %v5657, 0.0
  %5676 = vadd.xlane.f32.xlu0 %v5675
  %v5677 = vpop.xlane.xlu0 %5676
  %v5678 = vsel %vm197, %v5658, 0.0
  %5679 = vadd.xlane.f32.xlu0 %v5678
  %v5680 = vpop.xlane.xlu0 %5679
  %v5681 = vsel %vm197, %v5659, 0.0
  %5682 = vadd.xlane.f32.xlu0 %v5681
  %v5683 = vpop.xlane.xlu0 %5682
  %v5684 = vsel %vm197, %v5660, 0.0
  %5685 = vadd.xlane.f32.xlu0 %v5684
  %v5686 = vpop.xlane.xlu0 %5685
  %v5687 = vsel %vm197, %v5661, 0.0
  %5688 = vadd.xlane.f32.xlu0 %v5687
  %v5689 = vpop.xlane.xlu0 %5688
  %v5690 = vsel %vm197, %v5662, 0.0
  %5691 = vadd.xlane.f32.xlu0 %v5690
  %v5692 = vpop.xlane.xlu0 %5691
  %v5693 = vsel %vm197, %v5663, 0.0
  %5694 = vadd.xlane.f32.xlu0 %v5693
  %v5695 = vpop.xlane.xlu0 %5694
  %v5696 = vsel %vm197, %v5664, 0.0
  %5697 = vadd.xlane.f32.xlu0 %v5696
  %v5698 = vpop.xlane.xlu0 %5697
  %v5699 = vsel %vm197, %v5665, 0.0
  %5700 = vadd.xlane.f32.xlu0 %v5699
  %v5701 = vpop.xlane.xlu0 %5700
  %v5702 = vsel %vm197, %v5666, 0.0
  %5703 = vadd.xlane.f32.xlu0 %v5702
  %v5704 = vpop.xlane.xlu0 %5703
  %v5705 = vsel %vm197, %v5667, 0.0
  %5706 = vadd.xlane.f32.xlu0 %v5705
  %v5707 = vpop.xlane.xlu0 %5706
  %v5708 = vsel %vm197, %v5668, 0.0
  %5709 = vadd.xlane.f32.xlu0 %v5708
  %v5710 = vpop.xlane.xlu0 %5709
  %v5711 = vsel %vm197, %v5669, 0.0
  %5712 = vadd.xlane.f32.xlu0 %v5711
  %v5713 = vpop.xlane.xlu0 %5712
  %v5714 = vsel %vm197, %v5670, 0.0
  %5715 = vadd.xlane.f32.xlu0 %v5714
  %v5716 = vpop.xlane.xlu0 %5715
  %v5717 = vsel %vm197, %v5671, 0.0
  %5718 = vadd.xlane.f32.xlu0 %v5717
  %v5719 = vpop.xlane.xlu0 %5718
  %v5720 = vmul.f32 %v5674, %v5623
  %v5721 = vmul.f32 %v5677, %v5623
  %v5722 = vmul.f32 %v5680, %v5623
  %v5723 = vmul.f32 %v5683, %v5623
  %v5724 = vmul.f32 %v5686, %v5623
  %v5725 = vmul.f32 %v5689, %v5623
  %v5726 = vmul.f32 %v5692, %v5623
  %v5727 = vmul.f32 %v5695, %v5623
  %v5728 = vmul.f32 %v5698, %v5623
  %v5729 = vmul.f32 %v5701, %v5623
  %v5730 = vmul.f32 %v5704, %v5623
  %v5731 = vmul.f32 %v5707, %v5623
  %v5732 = vmul.f32 %v5710, %v5623
  %v5733 = vmul.f32 %v5713, %v5623
  %v5734 = vmul.f32 %v5716, %v5623
  %v5735 = vmul.f32 %v5719, %v5623
  %v5736 = vadd.f32 %v5720, 1e-05
  %v5737 = vadd.f32 %v5721, 1e-05
  %v5738 = vadd.f32 %v5722, 1e-05
  %v5739 = vadd.f32 %v5723, 1e-05
  %v5740 = vadd.f32 %v5724, 1e-05
  %v5741 = vadd.f32 %v5725, 1e-05
  %v5742 = vadd.f32 %v5726, 1e-05
  %v5743 = vadd.f32 %v5727, 1e-05
  %v5744 = vadd.f32 %v5728, 1e-05
  %v5745 = vadd.f32 %v5729, 1e-05
  %v5746 = vadd.f32 %v5730, 1e-05
  %v5747 = vadd.f32 %v5731, 1e-05
  %v5748 = vadd.f32 %v5732, 1e-05
  %v5749 = vadd.f32 %v5733, 1e-05
  %v5750 = vadd.f32 %v5734, 1e-05
  %v5751 = vadd.f32 %v5735, 1e-05
  %v5752 = vrsqrt.pop %v5736
  %v5753 = vmul.f32 %v5752, %v5736
  %v5754 = vmul.f32 %v5753, %v5752
  %v5755 = vmul.f32 0.5, %v5754
  %v5756 = vsub.f32 1.5, %v5755
  %v5757 = vmul.f32 %v5752, %v5756
  %vm5758 = vweird.f32 %v5736
  %vm5759 = vweird.f32 %v5752
  %vm5760 = vmor %vm5758, %vm5759
  %v5761 = vsel %vm5760, %v5752, %v5757
  %v5762 = vrsqrt.pop %v5737
  %v5763 = vmul.f32 %v5762, %v5737
  %v5764 = vmul.f32 %v5763, %v5762
  %v5765 = vmul.f32 0.5, %v5764
  %v5766 = vsub.f32 1.5, %v5765
  %v5767 = vmul.f32 %v5762, %v5766
  %vm5768 = vweird.f32 %v5737
  %vm5769 = vweird.f32 %v5762
  %vm5770 = vmor %vm5768, %vm5769
  %v5771 = vsel %vm5770, %v5762, %v5767
  %v5772 = vrsqrt.pop %v5738
  %v5773 = vmul.f32 %v5772, %v5738
  %v5774 = vmul.f32 %v5773, %v5772
  %v5775 = vmul.f32 0.5, %v5774
  %v5776 = vsub.f32 1.5, %v5775
  %v5777 = vmul.f32 %v5772, %v5776
  %vm5778 = vweird.f32 %v5738
  %vm5779 = vweird.f32 %v5772
  %vm5780 = vmor %vm5778, %vm5779
  %v5781 = vsel %vm5780, %v5772, %v5777
  %v5782 = vrsqrt.pop %v5739
  %v5783 = vmul.f32 %v5782, %v5739
  %v5784 = vmul.f32 %v5783, %v5782
  %v5785 = vmul.f32 0.5, %v5784
  %v5786 = vsub.f32 1.5, %v5785
  %v5787 = vmul.f32 %v5782, %v5786
  %vm5788 = vweird.f32 %v5739
  %vm5789 = vweird.f32 %v5782
  %vm5790 = vmor %vm5788, %vm5789
  %v5791 = vsel %vm5790, %v5782, %v5787
  %v5792 = vrsqrt.pop %v5740
  %v5793 = vmul.f32 %v5792, %v5740
  %v5794 = vmul.f32 %v5793, %v5792
  %v5795 = vmul.f32 0.5, %v5794
  %v5796 = vsub.f32 1.5, %v5795
  %v5797 = vmul.f32 %v5792, %v5796
  %vm5798 = vweird.f32 %v5740
  %vm5799 = vweird.f32 %v5792
  %vm5800 = vmor %vm5798, %vm5799
  %v5801 = vsel %vm5800, %v5792, %v5797
  %v5802 = vrsqrt.pop %v5741
  %v5803 = vmul.f32 %v5802, %v5741
  %v5804 = vmul.f32 %v5803, %v5802
  %v5805 = vmul.f32 0.5, %v5804
  %v5806 = vsub.f32 1.5, %v5805
  %v5807 = vmul.f32 %v5802, %v5806
  %vm5808 = vweird.f32 %v5741
  %vm5809 = vweird.f32 %v5802
  %vm5810 = vmor %vm5808, %vm5809
  %v5811 = vsel %vm5810, %v5802, %v5807
  %v5812 = vrsqrt.pop %v5742
  %v5813 = vmul.f32 %v5812, %v5742
  %v5814 = vmul.f32 %v5813, %v5812
  %v5815 = vmul.f32 0.5, %v5814
  %v5816 = vsub.f32 1.5, %v5815
  %v5817 = vmul.f32 %v5812, %v5816
  %vm5818 = vweird.f32 %v5742
  %vm5819 = vweird.f32 %v5812
  %vm5820 = vmor %vm5818, %vm5819
  %v5821 = vsel %vm5820, %v5812, %v5817
  %v5822 = vrsqrt.pop %v5743
  %v5823 = vmul.f32 %v5822, %v5743
  %v5824 = vmul.f32 %v5823, %v5822
  %v5825 = vmul.f32 0.5, %v5824
  %v5826 = vsub.f32 1.5, %v5825
  %v5827 = vmul.f32 %v5822, %v5826
  %vm5828 = vweird.f32 %v5743
  %vm5829 = vweird.f32 %v5822
  %vm5830 = vmor %vm5828, %vm5829
  %v5831 = vsel %vm5830, %v5822, %v5827
  %v5832 = vrsqrt.pop %v5744
  %v5833 = vmul.f32 %v5832, %v5744
  %v5834 = vmul.f32 %v5833, %v5832
  %v5835 = vmul.f32 0.5, %v5834
  %v5836 = vsub.f32 1.5, %v5835
  %v5837 = vmul.f32 %v5832, %v5836
  %vm5838 = vweird.f32 %v5744
  %vm5839 = vweird.f32 %v5832
  %vm5840 = vmor %vm5838, %vm5839
  %v5841 = vsel %vm5840, %v5832, %v5837
  %v5842 = vrsqrt.pop %v5745
  %v5843 = vmul.f32 %v5842, %v5745
  %v5844 = vmul.f32 %v5843, %v5842
  %v5845 = vmul.f32 0.5, %v5844
  %v5846 = vsub.f32 1.5, %v5845
  %v5847 = vmul.f32 %v5842, %v5846
  %vm5848 = vweird.f32 %v5745
  %vm5849 = vweird.f32 %v5842
  %vm5850 = vmor %vm5848, %vm5849
  %v5851 = vsel %vm5850, %v5842, %v5847
  %v5852 = vrsqrt.pop %v5746
  %v5853 = vmul.f32 %v5852, %v5746
  %v5854 = vmul.f32 %v5853, %v5852
  %v5855 = vmul.f32 0.5, %v5854
  %v5856 = vsub.f32 1.5, %v5855
  %v5857 = vmul.f32 %v5852, %v5856
  %vm5858 = vweird.f32 %v5746
  %vm5859 = vweird.f32 %v5852
  %vm5860 = vmor %vm5858, %vm5859
  %v5861 = vsel %vm5860, %v5852, %v5857
  %v5862 = vrsqrt.pop %v5747
  %v5863 = vmul.f32 %v5862, %v5747
  %v5864 = vmul.f32 %v5863, %v5862
  %v5865 = vmul.f32 0.5, %v5864
  %v5866 = vsub.f32 1.5, %v5865
  %v5867 = vmul.f32 %v5862, %v5866
  %vm5868 = vweird.f32 %v5747
  %vm5869 = vweird.f32 %v5862
  %vm5870 = vmor %vm5868, %vm5869
  %v5871 = vsel %vm5870, %v5862, %v5867
  %v5872 = vrsqrt.pop %v5748
  %v5873 = vmul.f32 %v5872, %v5748
  %v5874 = vmul.f32 %v5873, %v5872
  %v5875 = vmul.f32 0.5, %v5874
  %v5876 = vsub.f32 1.5, %v5875
  %v5877 = vmul.f32 %v5872, %v5876
  %vm5878 = vweird.f32 %v5748
  %vm5879 = vweird.f32 %v5872
  %vm5880 = vmor %vm5878, %vm5879
  %v5881 = vsel %vm5880, %v5872, %v5877
  %v5882 = vrsqrt.pop %v5749
  %v5883 = vmul.f32 %v5882, %v5749
  %v5884 = vmul.f32 %v5883, %v5882
  %v5885 = vmul.f32 0.5, %v5884
  %v5886 = vsub.f32 1.5, %v5885
  %v5887 = vmul.f32 %v5882, %v5886
  %vm5888 = vweird.f32 %v5749
  %vm5889 = vweird.f32 %v5882
  %vm5890 = vmor %vm5888, %vm5889
  %v5891 = vsel %vm5890, %v5882, %v5887
  %v5892 = vrsqrt.pop %v5750
  %v5893 = vmul.f32 %v5892, %v5750
  %v5894 = vmul.f32 %v5893, %v5892
  %v5895 = vmul.f32 0.5, %v5894
  %v5896 = vsub.f32 1.5, %v5895
  %v5897 = vmul.f32 %v5892, %v5896
  %vm5898 = vweird.f32 %v5750
  %vm5899 = vweird.f32 %v5892
  %vm5900 = vmor %vm5898, %vm5899
  %v5901 = vsel %vm5900, %v5892, %v5897
  %v5902 = vrsqrt.pop %v5751
  %v5903 = vmul.f32 %v5902, %v5751
  %v5904 = vmul.f32 %v5903, %v5902
  %v5905 = vmul.f32 0.5, %v5904
  %v5906 = vsub.f32 1.5, %v5905
  %v5907 = vmul.f32 %v5902, %v5906
  %vm5908 = vweird.f32 %v5751
  %vm5909 = vweird.f32 %v5902
  %vm5910 = vmor %vm5908, %vm5909
  %v5911 = vsel %vm5910, %v5902, %v5907
  %v5912 = vmul.f32 %v5640, %v5761
  %v5913 = vmul.f32 %v5641, %v5771
  %v5914 = vmul.f32 %v5642, %v5781
  %v5915 = vmul.f32 %v5643, %v5791
  %v5916 = vmul.f32 %v5644, %v5801
  %v5917 = vmul.f32 %v5645, %v5811
  %v5918 = vmul.f32 %v5646, %v5821
  %v5919 = vmul.f32 %v5647, %v5831
  %v5920 = vmul.f32 %v5648, %v5841
  %v5921 = vmul.f32 %v5649, %v5851
  %v5922 = vmul.f32 %v5650, %v5861
  %v5923 = vmul.f32 %v5651, %v5871
  %v5924 = vmul.f32 %v5652, %v5881
  %v5925 = vmul.f32 %v5653, %v5891
  %v5926 = vmul.f32 %v5654, %v5901
  %v5927 = vmul.f32 %v5655, %v5911
  %v5929 = vperm.slane %v5567, 0
  %v5931 = vmul.f32 %v5912, %v5929
  %v5932 = vmul.f32 %v5913, %v5929
  %v5933 = vmul.f32 %v5914, %v5929
  %v5934 = vmul.f32 %v5915, %v5929
  %v5935 = vmul.f32 %v5916, %v5929
  %v5936 = vmul.f32 %v5917, %v5929
  %v5937 = vmul.f32 %v5918, %v5929
  %v5938 = vmul.f32 %v5919, %v5929
  %v5939 = vmul.f32 %v5920, %v5929
  %v5940 = vmul.f32 %v5921, %v5929
  %v5941 = vmul.f32 %v5922, %v5929
  %v5942 = vmul.f32 %v5923, %v5929
  %v5943 = vmul.f32 %v5924, %v5929
  %v5944 = vmul.f32 %v5925, %v5929
  %v5945 = vmul.f32 %v5926, %v5929
  %v5946 = vmul.f32 %v5927, %v5929
  %v5948 = vperm.slane %v5568, 0
  %v5950 = vadd.f32 %v5931, %v5948
  %v5951 = vadd.f32 %v5932, %v5948
  %v5952 = vadd.f32 %v5933, %v5948
  %v5953 = vadd.f32 %v5934, %v5948
  %v5954 = vadd.f32 %v5935, %v5948
  %v5955 = vadd.f32 %v5936, %v5948
  %v5956 = vadd.f32 %v5937, %v5948
  %v5957 = vadd.f32 %v5938, %v5948
  %v5958 = vadd.f32 %v5939, %v5948
  %v5959 = vadd.f32 %v5940, %v5948
  %v5960 = vadd.f32 %v5941, %v5948
  %v5961 = vadd.f32 %v5942, %v5948
  %v5962 = vadd.f32 %v5943, %v5948
  %v5963 = vadd.f32 %v5944, %v5948
  %v5964 = vadd.f32 %v5945, %v5948
  %v5965 = vadd.f32 %v5946, %v5948
  %v5966 = vld [vmem:[%s13] sm:$0xff]
  %v5967 = vld [vmem:[%s13 + $0x8] sm:$0xff]
  %v5968 = vld [vmem:[%s13 + $0x10] sm:$0xff]
  %v5969 = vld [vmem:[%s13 + $0x18] sm:$0xff]
  %v5970 = vld [vmem:[%s14] sm:$0x1]
  %v5972 = vperm.slane %v5970, 0
  %v5975 = vsel %vm197, %v5950, 0
  %v5978 = vsel %vm197, %v5951, 0
  %v5981 = vsel %vm197, %v5952, 0
  %v5984 = vsel %vm197, %v5953, 0
  %v5987 = vsel %vm197, %v5954, 0
  %v5990 = vsel %vm197, %v5955, 0
  %v5993 = vsel %vm197, %v5956, 0
  %v5996 = vsel %vm197, %v5957, 0
  %v5999 = vsel %vm197, %v5958, 0
  %v6002 = vsel %vm197, %v5959, 0
  %v6005 = vsel %vm197, %v5960, 0
  %v6008 = vsel %vm197, %v5961, 0
  %v6011 = vsel %vm197, %v5962, 0
  %v6014 = vsel %vm197, %v5963, 0
  %v6017 = vsel %vm197, %v5964, 0
  %v6020 = vsel %vm197, %v5965, 0
  %6022 = vmatpush.msra.mxu0 0.0
  %6023 = vmatpush.msra.mxu0 0.0
  %6024 = vmatpush.msra.mxu0 0.0
  %6025 = vmatpush.msra.mxu0 0.0
  %6026 = vmatpush.msra.mxu0 0.0
  %6027 = vmatpush.msra.mxu0 0.0
  %6028 = vmatpush.msra.mxu0 0.0
  %6029 = vmatpush.msra.mxu0 0.0
  %6030 = vmatpush.msra.mxu0 0.0
  %6031 = vmatpush.msra.mxu0 0.0
  %6032 = vmatpush.msra.mxu0 0.0
  %6033 = vmatpush.msra.mxu0 0.0
  %6034 = vmatpush.msra.mxu0 %v5969
  %6035 = vmatpush.msra.mxu0 %v5968
  %6036 = vmatpush.msra.mxu0 %v5967
  %6037 = vmatpush.msra.mxu0 %v5966
  %6038 = vmatmul.f32.gmra.mxu0 %v5975
  %v6039 = vpop.f32.mrf.mxu0
  %v6040 = vadd.f32 %v5972, %v6039
  %6041 = vmatmul.f32.gmra.mxu0 %v5978
  %v6042 = vpop.f32.mrf.mxu0
  %v6043 = vadd.f32 %v5972, %v6042
  %6044 = vmatmul.f32.gmra.mxu0 %v5981
  %v6045 = vpop.f32.mrf.mxu0
  %v6046 = vadd.f32 %v5972, %v6045
  %6047 = vmatmul.f32.gmra.mxu0 %v5984
  %v6048 = vpop.f32.mrf.mxu0
  %v6049 = vadd.f32 %v5972, %v6048
  %6050 = vmatmul.f32.gmra.mxu0 %v5987
  %v6051 = vpop.f32.mrf.mxu0
  %v6052 = vadd.f32 %v5972, %v6051
  %6053 = vmatmul.f32.gmra.mxu0 %v5990
  %v6054 = vpop.f32.mrf.mxu0
  %v6055 = vadd.f32 %v5972, %v6054
  %6056 = vmatmul.f32.gmra.mxu0 %v5993
  %v6057 = vpop.f32.mrf.mxu0
  %v6058 = vadd.f32 %v5972, %v6057
  %6059 = vmatmul.f32.gmra.mxu0 %v5996
  %v6060 = vpop.f32.mrf.mxu0
  %v6061 = vadd.f32 %v5972, %v6060
  %6062 = vmatmul.f32.gmra.mxu0 %v5999
  %v6063 = vpop.f32.mrf.mxu0
  %v6064 = vadd.f32 %v5972, %v6063
  %6065 = vmatmul.f32.gmra.mxu0 %v6002
  %v6066 = vpop.f32.mrf.mxu0
  %v6067 = vadd.f32 %v5972, %v6066
  %6068 = vmatmul.f32.gmra.mxu0 %v6005
  %v6069 = vpop.f32.mrf.mxu0
  %v6070 = vadd.f32 %v5972, %v6069
  %6071 = vmatmul.f32.gmra.mxu0 %v6008
  %v6072 = vpop.f32.mrf.mxu0
  %v6073 = vadd.f32 %v5972, %v6072
  %6074 = vmatmul.f32.gmra.mxu0 %v6011
  %v6075 = vpop.f32.mrf.mxu0
  %v6076 = vadd.f32 %v5972, %v6075
  %6077 = vmatmul.f32.gmra.mxu0 %v6014
  %v6078 = vpop.f32.mrf.mxu0
  %v6079 = vadd.f32 %v5972, %v6078
  %6080 = vmatmul.f32.gmra.mxu0 %v6017
  %v6081 = vpop.f32.mrf.mxu0
  %v6082 = vadd.f32 %v5972, %v6081
  %6083 = vmatmul.f32.gmra.mxu0 %v6020
  %v6084 = vpop.f32.mrf.mxu0
  %v6085 = vadd.f32 %v5972, %v6084
  %6086 = vdwg.mxu0
  %v6087 = vmax.f32 %v6040, 0.0
  %v6088 = vmax.f32 %v6043, 0.0
  %v6089 = vmax.f32 %v6046, 0.0
  %v6090 = vmax.f32 %v6049, 0.0
  %v6091 = vmax.f32 %v6052, 0.0
  %v6092 = vmax.f32 %v6055, 0.0
  %v6093 = vmax.f32 %v6058, 0.0
  %v6094 = vmax.f32 %v6061, 0.0
  %v6095 = vmax.f32 %v6064, 0.0
  %v6096 = vmax.f32 %v6067, 0.0
  %v6097 = vmax.f32 %v6070, 0.0
  %v6098 = vmax.f32 %v6073, 0.0
  %v6099 = vmax.f32 %v6076, 0.0
  %v6100 = vmax.f32 %v6079, 0.0
  %v6101 = vmax.f32 %v6082, 0.0
  %v6102 = vmax.f32 %v6085, 0.0
  %v6103 = vld [vmem:[%s15] sm:$0xff]
  %v6104 = vld [vmem:[%s15 + $0x8] sm:$0xff]
  %v6105 = vld [vmem:[%s15 + $0x10] sm:$0xff]
  %v6106 = vld [vmem:[%s15 + $0x18] sm:$0xff]
  %v6107 = vld [vmem:[%s15 + $0x20] sm:$0xff]
  %v6108 = vld [vmem:[%s15 + $0x28] sm:$0xff]
  %v6109 = vld [vmem:[%s15 + $0x30] sm:$0xff]
  %v6110 = vld [vmem:[%s15 + $0x38] sm:$0xff]
  %v6111 = vld [vmem:[%s15 + $0x40] sm:$0xff]
  %v6112 = vld [vmem:[%s15 + $0x48] sm:$0xff]
  %v6113 = vld [vmem:[%s15 + $0x50] sm:$0xff]
  %v6114 = vld [vmem:[%s15 + $0x58] sm:$0xff]
  %v6115 = vld [vmem:[%s15 + $0x60] sm:$0xff]
  %v6116 = vld [vmem:[%s15 + $0x68] sm:$0xff]
  %v6117 = vld [vmem:[%s15 + $0x70] sm:$0xff]
  %v6118 = vld [vmem:[%s15 + $0x78] sm:$0xff]
  %v6119 = vld [vmem:[%s16] sm:$0x1]
  %v6121 = vperm.slane %v6119, 0
  %6123 = vmatpush.msra.mxu0 %v6118
  %6124 = vmatpush.msra.mxu0 %v6117
  %6125 = vmatpush.msra.mxu0 %v6116
  %6126 = vmatpush.msra.mxu0 %v6115
  %6127 = vmatpush.msra.mxu0 %v6114
  %6128 = vmatpush.msra.mxu0 %v6113
  %6129 = vmatpush.msra.mxu0 %v6112
  %6130 = vmatpush.msra.mxu0 %v6111
  %6131 = vmatpush.msra.mxu0 %v6110
  %6132 = vmatpush.msra.mxu0 %v6109
  %6133 = vmatpush.msra.mxu0 %v6108
  %6134 = vmatpush.msra.mxu0 %v6107
  %6135 = vmatpush.msra.mxu0 %v6106
  %6136 = vmatpush.msra.mxu0 %v6105
  %6137 = vmatpush.msra.mxu0 %v6104
  %6138 = vmatpush.msra.mxu0 %v6103
  %6139 = vmatmul.f32.gmra.mxu0 %v6087
  %v6140 = vpop.f32.mrf.mxu0
  %v6141 = vadd.f32 %v6121, %v6140
  %6142 = vmatmul.f32.gmra.mxu0 %v6088
  %v6143 = vpop.f32.mrf.mxu0
  %v6144 = vadd.f32 %v6121, %v6143
  %6145 = vmatmul.f32.gmra.mxu0 %v6089
  %v6146 = vpop.f32.mrf.mxu0
  %v6147 = vadd.f32 %v6121, %v6146
  %6148 = vmatmul.f32.gmra.mxu0 %v6090
  %v6149 = vpop.f32.mrf.mxu0
  %v6150 = vadd.f32 %v6121, %v6149
  %6151 = vmatmul.f32.gmra.mxu0 %v6091
  %v6152 = vpop.f32.mrf.mxu0
  %v6153 = vadd.f32 %v6121, %v6152
  %6154 = vmatmul.f32.gmra.mxu0 %v6092
  %v6155 = vpop.f32.mrf.mxu0
  %v6156 = vadd.f32 %v6121, %v6155
  %6157 = vmatmul.f32.gmra.mxu0 %v6093
  %v6158 = vpop.f32.mrf.mxu0
  %v6159 = vadd.f32 %v6121, %v6158
  %6160 = vmatmul.f32.gmra.mxu0 %v6094
  %v6161 = vpop.f32.mrf.mxu0
  %v6162 = vadd.f32 %v6121, %v6161
  %6163 = vmatmul.f32.gmra.mxu0 %v6095
  %v6164 = vpop.f32.mrf.mxu0
  %v6165 = vadd.f32 %v6121, %v6164
  %6166 = vmatmul.f32.gmra.mxu0 %v6096
  %v6167 = vpop.f32.mrf.mxu0
  %v6168 = vadd.f32 %v6121, %v6167
  %6169 = vmatmul.f32.gmra.mxu0 %v6097
  %v6170 = vpop.f32.mrf.mxu0
  %v6171 = vadd.f32 %v6121, %v6170
  %6172 = vmatmul.f32.gmra.mxu0 %v6098
  %v6173 = vpop.f32.mrf.mxu0
  %v6174 = vadd.f32 %v6121, %v6173
  %6175 = vmatmul.f32.gmra.mxu0 %v6099
  %v6176 = vpop.f32.mrf.mxu0
  %v6177 = vadd.f32 %v6121, %v6176
  %6178 = vmatmul.f32.gmra.mxu0 %v6100
  %v6179 = vpop.f32.mrf.mxu0
  %v6180 = vadd.f32 %v6121, %v6179
  %6181 = vmatmul.f32.gmra.mxu0 %v6101
  %v6182 = vpop.f32.mrf.mxu0
  %v6183 = vadd.f32 %v6121, %v6182
  %6184 = vmatmul.f32.gmra.mxu0 %v6102
  %v6185 = vpop.f32.mrf.mxu0
  %v6186 = vadd.f32 %v6121, %v6185
  %6187 = vdwg.mxu0
  %v6188 = vadd.f32 %v5950, %v6141
  %v6189 = vadd.f32 %v5951, %v6144
  %v6190 = vadd.f32 %v5952, %v6147
  %v6191 = vadd.f32 %v5953, %v6150
  %v6192 = vadd.f32 %v5954, %v6153
  %v6193 = vadd.f32 %v5955, %v6156
  %v6194 = vadd.f32 %v5956, %v6159
  %v6195 = vadd.f32 %v5957, %v6162
  %v6196 = vadd.f32 %v5958, %v6165
  %v6197 = vadd.f32 %v5959, %v6168
  %v6198 = vadd.f32 %v5960, %v6171
  %v6199 = vadd.f32 %v5961, %v6174
  %v6200 = vadd.f32 %v5962, %v6177
  %v6201 = vadd.f32 %v5963, %v6180
  %v6202 = vadd.f32 %v5964, %v6183
  %v6203 = vadd.f32 %v5965, %v6186
  %v6204 = vld [vmem:[%s17] sm:$0x1]
  %v6205 = vld [vmem:[%s18] sm:$0x1]
  %v6206 = vsel %vm197, %v6188, 0.0
  %6207 = vadd.xlane.f32.xlu0 %v6206
  %v6208 = vpop.xlane.xlu0 %6207
  %v6209 = vsel %vm197, %v6189, 0.0
  %6210 = vadd.xlane.f32.xlu0 %v6209
  %v6211 = vpop.xlane.xlu0 %6210
  %v6212 = vsel %vm197, %v6190, 0.0
  %6213 = vadd.xlane.f32.xlu0 %v6212
  %v6214 = vpop.xlane.xlu0 %6213
  %v6215 = vsel %vm197, %v6191, 0.0
  %6216 = vadd.xlane.f32.xlu0 %v6215
  %v6217 = vpop.xlane.xlu0 %6216
  %v6218 = vsel %vm197, %v6192, 0.0
  %6219 = vadd.xlane.f32.xlu0 %v6218
  %v6220 = vpop.xlane.xlu0 %6219
  %v6221 = vsel %vm197, %v6193, 0.0
  %6222 = vadd.xlane.f32.xlu0 %v6221
  %v6223 = vpop.xlane.xlu0 %6222
  %v6224 = vsel %vm197, %v6194, 0.0
  %6225 = vadd.xlane.f32.xlu0 %v6224
  %v6226 = vpop.xlane.xlu0 %6225
  %v6227 = vsel %vm197, %v6195, 0.0
  %6228 = vadd.xlane.f32.xlu0 %v6227
  %v6229 = vpop.xlane.xlu0 %6228
  %v6230 = vsel %vm197, %v6196, 0.0
  %6231 = vadd.xlane.f32.xlu0 %v6230
  %v6232 = vpop.xlane.xlu0 %6231
  %v6233 = vsel %vm197, %v6197, 0.0
  %6234 = vadd.xlane.f32.xlu0 %v6233
  %v6235 = vpop.xlane.xlu0 %6234
  %v6236 = vsel %vm197, %v6198, 0.0
  %6237 = vadd.xlane.f32.xlu0 %v6236
  %v6238 = vpop.xlane.xlu0 %6237
  %v6239 = vsel %vm197, %v6199, 0.0
  %6240 = vadd.xlane.f32.xlu0 %v6239
  %v6241 = vpop.xlane.xlu0 %6240
  %v6242 = vsel %vm197, %v6200, 0.0
  %6243 = vadd.xlane.f32.xlu0 %v6242
  %v6244 = vpop.xlane.xlu0 %6243
  %v6245 = vsel %vm197, %v6201, 0.0
  %6246 = vadd.xlane.f32.xlu0 %v6245
  %v6247 = vpop.xlane.xlu0 %6246
  %v6248 = vsel %vm197, %v6202, 0.0
  %6249 = vadd.xlane.f32.xlu0 %v6248
  %v6250 = vpop.xlane.xlu0 %6249
  %v6251 = vsel %vm197, %v6203, 0.0
  %6252 = vadd.xlane.f32.xlu0 %v6251
  %v6253 = vpop.xlane.xlu0 %6252
  %v6254 = vmul.f32 %v6208, %v5623
  %v6255 = vmul.f32 %v6211, %v5623
  %v6256 = vmul.f32 %v6214, %v5623
  %v6257 = vmul.f32 %v6217, %v5623
  %v6258 = vmul.f32 %v6220, %v5623
  %v6259 = vmul.f32 %v6223, %v5623
  %v6260 = vmul.f32 %v6226, %v5623
  %v6261 = vmul.f32 %v6229, %v5623
  %v6262 = vmul.f32 %v6232, %v5623
  %v6263 = vmul.f32 %v6235, %v5623
  %v6264 = vmul.f32 %v6238, %v5623
  %v6265 = vmul.f32 %v6241, %v5623
  %v6266 = vmul.f32 %v6244, %v5623
  %v6267 = vmul.f32 %v6247, %v5623
  %v6268 = vmul.f32 %v6250, %v5623
  %v6269 = vmul.f32 %v6253, %v5623
  %v6270 = vsub.f32 %v6188, %v6254
  %v6271 = vsub.f32 %v6189, %v6255
  %v6272 = vsub.f32 %v6190, %v6256
  %v6273 = vsub.f32 %v6191, %v6257
  %v6274 = vsub.f32 %v6192, %v6258
  %v6275 = vsub.f32 %v6193, %v6259
  %v6276 = vsub.f32 %v6194, %v6260
  %v6277 = vsub.f32 %v6195, %v6261
  %v6278 = vsub.f32 %v6196, %v6262
  %v6279 = vsub.f32 %v6197, %v6263
  %v6280 = vsub.f32 %v6198, %v6264
  %v6281 = vsub.f32 %v6199, %v6265
  %v6282 = vsub.f32 %v6200, %v6266
  %v6283 = vsub.f32 %v6201, %v6267
  %v6284 = vsub.f32 %v6202, %v6268
  %v6285 = vsub.f32 %v6203, %v6269
  %v6286 = vmul.f32 %v6270, %v6270
  %v6287 = vmul.f32 %v6271, %v6271
  %v6288 = vmul.f32 %v6272, %v6272
  %v6289 = vmul.f32 %v6273, %v6273
  %v6290 = vmul.f32 %v6274, %v6274
  %v6291 = vmul.f32 %v6275, %v6275
  %v6292 = vmul.f32 %v6276, %v6276
  %v6293 = vmul.f32 %v6277, %v6277
  %v6294 = vmul.f32 %v6278, %v6278
  %v6295 = vmul.f32 %v6279, %v6279
  %v6296 = vmul.f32 %v6280, %v6280
  %v6297 = vmul.f32 %v6281, %v6281
  %v6298 = vmul.f32 %v6282, %v6282
  %v6299 = vmul.f32 %v6283, %v6283
  %v6300 = vmul.f32 %v6284, %v6284
  %v6301 = vmul.f32 %v6285, %v6285
  %v6302 = vsel %vm197, %v6286, 0.0
  %6303 = vadd.xlane.f32.xlu0 %v6302
  %v6304 = vpop.xlane.xlu0 %6303
  %v6305 = vsel %vm197, %v6287, 0.0
  %6306 = vadd.xlane.f32.xlu0 %v6305
  %v6307 = vpop.xlane.xlu0 %6306
  %v6308 = vsel %vm197, %v6288, 0.0
  %6309 = vadd.xlane.f32.xlu0 %v6308
  %v6310 = vpop.xlane.xlu0 %6309
  %v6311 = vsel %vm197, %v6289, 0.0
  %6312 = vadd.xlane.f32.xlu0 %v6311
  %v6313 = vpop.xlane.xlu0 %6312
  %v6314 = vsel %vm197, %v6290, 0.0
  %6315 = vadd.xlane.f32.xlu0 %v6314
  %v6316 = vpop.xlane.xlu0 %6315
  %v6317 = vsel %vm197, %v6291, 0.0
  %6318 = vadd.xlane.f32.xlu0 %v6317
  %v6319 = vpop.xlane.xlu0 %6318
  %v6320 = vsel %vm197, %v6292, 0.0
  %6321 = vadd.xlane.f32.xlu0 %v6320
  %v6322 = vpop.xlane.xlu0 %6321
  %v6323 = vsel %vm197, %v6293, 0.0
  %6324 = vadd.xlane.f32.xlu0 %v6323
  %v6325 = vpop.xlane.xlu0 %6324
  %v6326 = vsel %vm197, %v6294, 0.0
  %6327 = vadd.xlane.f32.xlu0 %v6326
  %v6328 = vpop.xlane.xlu0 %6327
  %v6329 = vsel %vm197, %v6295, 0.0
  %6330 = vadd.xlane.f32.xlu0 %v6329
  %v6331 = vpop.xlane.xlu0 %6330
  %v6332 = vsel %vm197, %v6296, 0.0
  %6333 = vadd.xlane.f32.xlu0 %v6332
  %v6334 = vpop.xlane.xlu0 %6333
  %v6335 = vsel %vm197, %v6297, 0.0
  %6336 = vadd.xlane.f32.xlu0 %v6335
  %v6337 = vpop.xlane.xlu0 %6336
  %v6338 = vsel %vm197, %v6298, 0.0
  %6339 = vadd.xlane.f32.xlu0 %v6338
  %v6340 = vpop.xlane.xlu0 %6339
  %v6341 = vsel %vm197, %v6299, 0.0
  %6342 = vadd.xlane.f32.xlu0 %v6341
  %v6343 = vpop.xlane.xlu0 %6342
  %v6344 = vsel %vm197, %v6300, 0.0
  %6345 = vadd.xlane.f32.xlu0 %v6344
  %v6346 = vpop.xlane.xlu0 %6345
  %v6347 = vsel %vm197, %v6301, 0.0
  %6348 = vadd.xlane.f32.xlu0 %v6347
  %v6349 = vpop.xlane.xlu0 %6348
  %v6350 = vmul.f32 %v6304, %v5623
  %v6351 = vmul.f32 %v6307, %v5623
  %v6352 = vmul.f32 %v6310, %v5623
  %v6353 = vmul.f32 %v6313, %v5623
  %v6354 = vmul.f32 %v6316, %v5623
  %v6355 = vmul.f32 %v6319, %v5623
  %v6356 = vmul.f32 %v6322, %v5623
  %v6357 = vmul.f32 %v6325, %v5623
  %v6358 = vmul.f32 %v6328, %v5623
  %v6359 = vmul.f32 %v6331, %v5623
  %v6360 = vmul.f32 %v6334, %v5623
  %v6361 = vmul.f32 %v6337, %v5623
  %v6362 = vmul.f32 %v6340, %v5623
  %v6363 = vmul.f32 %v6343, %v5623
  %v6364 = vmul.f32 %v6346, %v5623
  %v6365 = vmul.f32 %v6349, %v5623
  %v6366 = vadd.f32 %v6350, 1e-05
  %v6367 = vadd.f32 %v6351, 1e-05
  %v6368 = vadd.f32 %v6352, 1e-05
  %v6369 = vadd.f32 %v6353, 1e-05
  %v6370 = vadd.f32 %v6354, 1e-05
  %v6371 = vadd.f32 %v6355, 1e-05
  %v6372 = vadd.f32 %v6356, 1e-05
  %v6373 = vadd.f32 %v6357, 1e-05
  %v6374 = vadd.f32 %v6358, 1e-05
  %v6375 = vadd.f32 %v6359, 1e-05
  %v6376 = vadd.f32 %v6360, 1e-05
  %v6377 = vadd.f32 %v6361, 1e-05
  %v6378 = vadd.f32 %v6362, 1e-05
  %v6379 = vadd.f32 %v6363, 1e-05
  %v6380 = vadd.f32 %v6364, 1e-05
  %v6381 = vadd.f32 %v6365, 1e-05
  %v6382 = vrsqrt.pop %v6366
  %v6383 = vmul.f32 %v6382, %v6366
  %v6384 = vmul.f32 %v6383, %v6382
  %v6385 = vmul.f32 0.5, %v6384
  %v6386 = vsub.f32 1.5, %v6385
  %v6387 = vmul.f32 %v6382, %v6386
  %vm6388 = vweird.f32 %v6366
  %vm6389 = vweird.f32 %v6382
  %vm6390 = vmor %vm6388, %vm6389
  %v6391 = vsel %vm6390, %v6382, %v6387
  %v6392 = vrsqrt.pop %v6367
  %v6393 = vmul.f32 %v6392, %v6367
  %v6394 = vmul.f32 %v6393, %v6392
  %v6395 = vmul.f32 0.5, %v6394
  %v6396 = vsub.f32 1.5, %v6395
  %v6397 = vmul.f32 %v6392, %v6396
  %vm6398 = vweird.f32 %v6367
  %vm6399 = vweird.f32 %v6392
  %vm6400 = vmor %vm6398, %vm6399
  %v6401 = vsel %vm6400, %v6392, %v6397
  %v6402 = vrsqrt.pop %v6368
  %v6403 = vmul.f32 %v6402, %v6368
  %v6404 = vmul.f32 %v6403, %v6402
  %v6405 = vmul.f32 0.5, %v6404
  %v6406 = vsub.f32 1.5, %v6405
  %v6407 = vmul.f32 %v6402, %v6406
  %vm6408 = vweird.f32 %v6368
  %vm6409 = vweird.f32 %v6402
  %vm6410 = vmor %vm6408, %vm6409
  %v6411 = vsel %vm6410, %v6402, %v6407
  %v6412 = vrsqrt.pop %v6369
  %v6413 = vmul.f32 %v6412, %v6369
  %v6414 = vmul.f32 %v6413, %v6412
  %v6415 = vmul.f32 0.5, %v6414
  %v6416 = vsub.f32 1.5, %v6415
  %v6417 = vmul.f32 %v6412, %v6416
  %vm6418 = vweird.f32 %v6369
  %vm6419 = vweird.f32 %v6412
  %vm6420 = vmor %vm6418, %vm6419
  %v6421 = vsel %vm6420, %v6412, %v6417
  %v6422 = vrsqrt.pop %v6370
  %v6423 = vmul.f32 %v6422, %v6370
  %v6424 = vmul.f32 %v6423, %v6422
  %v6425 = vmul.f32 0.5, %v6424
  %v6426 = vsub.f32 1.5, %v6425
  %v6427 = vmul.f32 %v6422, %v6426
  %vm6428 = vweird.f32 %v6370
  %vm6429 = vweird.f32 %v6422
  %vm6430 = vmor %vm6428, %vm6429
  %v6431 = vsel %vm6430, %v6422, %v6427
  %v6432 = vrsqrt.pop %v6371
  %v6433 = vmul.f32 %v6432, %v6371
  %v6434 = vmul.f32 %v6433, %v6432
  %v6435 = vmul.f32 0.5, %v6434
  %v6436 = vsub.f32 1.5, %v6435
  %v6437 = vmul.f32 %v6432, %v6436
  %vm6438 = vweird.f32 %v6371
  %vm6439 = vweird.f32 %v6432
  %vm6440 = vmor %vm6438, %vm6439
  %v6441 = vsel %vm6440, %v6432, %v6437
  %v6442 = vrsqrt.pop %v6372
  %v6443 = vmul.f32 %v6442, %v6372
  %v6444 = vmul.f32 %v6443, %v6442
  %v6445 = vmul.f32 0.5, %v6444
  %v6446 = vsub.f32 1.5, %v6445
  %v6447 = vmul.f32 %v6442, %v6446
  %vm6448 = vweird.f32 %v6372
  %vm6449 = vweird.f32 %v6442
  %vm6450 = vmor %vm6448, %vm6449
  %v6451 = vsel %vm6450, %v6442, %v6447
  %v6452 = vrsqrt.pop %v6373
  %v6453 = vmul.f32 %v6452, %v6373
  %v6454 = vmul.f32 %v6453, %v6452
  %v6455 = vmul.f32 0.5, %v6454
  %v6456 = vsub.f32 1.5, %v6455
  %v6457 = vmul.f32 %v6452, %v6456
  %vm6458 = vweird.f32 %v6373
  %vm6459 = vweird.f32 %v6452
  %vm6460 = vmor %vm6458, %vm6459
  %v6461 = vsel %vm6460, %v6452, %v6457
  %v6462 = vrsqrt.pop %v6374
  %v6463 = vmul.f32 %v6462, %v6374
  %v6464 = vmul.f32 %v6463, %v6462
  %v6465 = vmul.f32 0.5, %v6464
  %v6466 = vsub.f32 1.5, %v6465
  %v6467 = vmul.f32 %v6462, %v6466
  %vm6468 = vweird.f32 %v6374
  %vm6469 = vweird.f32 %v6462
  %vm6470 = vmor %vm6468, %vm6469
  %v6471 = vsel %vm6470, %v6462, %v6467
  %v6472 = vrsqrt.pop %v6375
  %v6473 = vmul.f32 %v6472, %v6375
  %v6474 = vmul.f32 %v6473, %v6472
  %v6475 = vmul.f32 0.5, %v6474
  %v6476 = vsub.f32 1.5, %v6475
  %v6477 = vmul.f32 %v6472, %v6476
  %vm6478 = vweird.f32 %v6375
  %vm6479 = vweird.f32 %v6472
  %vm6480 = vmor %vm6478, %vm6479
  %v6481 = vsel %vm6480, %v6472, %v6477
  %v6482 = vrsqrt.pop %v6376
  %v6483 = vmul.f32 %v6482, %v6376
  %v6484 = vmul.f32 %v6483, %v6482
  %v6485 = vmul.f32 0.5, %v6484
  %v6486 = vsub.f32 1.5, %v6485
  %v6487 = vmul.f32 %v6482, %v6486
  %vm6488 = vweird.f32 %v6376
  %vm6489 = vweird.f32 %v6482
  %vm6490 = vmor %vm6488, %vm6489
  %v6491 = vsel %vm6490, %v6482, %v6487
  %v6492 = vrsqrt.pop %v6377
  %v6493 = vmul.f32 %v6492, %v6377
  %v6494 = vmul.f32 %v6493, %v6492
  %v6495 = vmul.f32 0.5, %v6494
  %v6496 = vsub.f32 1.5, %v6495
  %v6497 = vmul.f32 %v6492, %v6496
  %vm6498 = vweird.f32 %v6377
  %vm6499 = vweird.f32 %v6492
  %vm6500 = vmor %vm6498, %vm6499
  %v6501 = vsel %vm6500, %v6492, %v6497
  %v6502 = vrsqrt.pop %v6378
  %v6503 = vmul.f32 %v6502, %v6378
  %v6504 = vmul.f32 %v6503, %v6502
  %v6505 = vmul.f32 0.5, %v6504
  %v6506 = vsub.f32 1.5, %v6505
  %v6507 = vmul.f32 %v6502, %v6506
  %vm6508 = vweird.f32 %v6378
  %vm6509 = vweird.f32 %v6502
  %vm6510 = vmor %vm6508, %vm6509
  %v6511 = vsel %vm6510, %v6502, %v6507
  %v6512 = vrsqrt.pop %v6379
  %v6513 = vmul.f32 %v6512, %v6379
  %v6514 = vmul.f32 %v6513, %v6512
  %v6515 = vmul.f32 0.5, %v6514
  %v6516 = vsub.f32 1.5, %v6515
  %v6517 = vmul.f32 %v6512, %v6516
  %vm6518 = vweird.f32 %v6379
  %vm6519 = vweird.f32 %v6512
  %vm6520 = vmor %vm6518, %vm6519
  %v6521 = vsel %vm6520, %v6512, %v6517
  %v6522 = vrsqrt.pop %v6380
  %v6523 = vmul.f32 %v6522, %v6380
  %v6524 = vmul.f32 %v6523, %v6522
  %v6525 = vmul.f32 0.5, %v6524
  %v6526 = vsub.f32 1.5, %v6525
  %v6527 = vmul.f32 %v6522, %v6526
  %vm6528 = vweird.f32 %v6380
  %vm6529 = vweird.f32 %v6522
  %vm6530 = vmor %vm6528, %vm6529
  %v6531 = vsel %vm6530, %v6522, %v6527
  %v6532 = vrsqrt.pop %v6381
  %v6533 = vmul.f32 %v6532, %v6381
  %v6534 = vmul.f32 %v6533, %v6532
  %v6535 = vmul.f32 0.5, %v6534
  %v6536 = vsub.f32 1.5, %v6535
  %v6537 = vmul.f32 %v6532, %v6536
  %vm6538 = vweird.f32 %v6381
  %vm6539 = vweird.f32 %v6532
  %vm6540 = vmor %vm6538, %vm6539
  %v6541 = vsel %vm6540, %v6532, %v6537
  %v6542 = vmul.f32 %v6270, %v6391
  %v6543 = vmul.f32 %v6271, %v6401
  %v6544 = vmul.f32 %v6272, %v6411
  %v6545 = vmul.f32 %v6273, %v6421
  %v6546 = vmul.f32 %v6274, %v6431
  %v6547 = vmul.f32 %v6275, %v6441
  %v6548 = vmul.f32 %v6276, %v6451
  %v6549 = vmul.f32 %v6277, %v6461
  %v6550 = vmul.f32 %v6278, %v6471
  %v6551 = vmul.f32 %v6279, %v6481
  %v6552 = vmul.f32 %v6280, %v6491
  %v6553 = vmul.f32 %v6281, %v6501
  %v6554 = vmul.f32 %v6282, %v6511
  %v6555 = vmul.f32 %v6283, %v6521
  %v6556 = vmul.f32 %v6284, %v6531
  %v6557 = vmul.f32 %v6285, %v6541
  %v6559 = vperm.slane %v6204, 0
  %v6561 = vmul.f32 %v6542, %v6559
  %v6562 = vmul.f32 %v6543, %v6559
  %v6563 = vmul.f32 %v6544, %v6559
  %v6564 = vmul.f32 %v6545, %v6559
  %v6565 = vmul.f32 %v6546, %v6559
  %v6566 = vmul.f32 %v6547, %v6559
  %v6567 = vmul.f32 %v6548, %v6559
  %v6568 = vmul.f32 %v6549, %v6559
  %v6569 = vmul.f32 %v6550, %v6559
  %v6570 = vmul.f32 %v6551, %v6559
  %v6571 = vmul.f32 %v6552, %v6559
  %v6572 = vmul.f32 %v6553, %v6559
  %v6573 = vmul.f32 %v6554, %v6559
  %v6574 = vmul.f32 %v6555, %v6559
  %v6575 = vmul.f32 %v6556, %v6559
  %v6576 = vmul.f32 %v6557, %v6559
  %v6578 = vperm.slane %v6205, 0
  %v6580 = vadd.f32 %v6561, %v6578
  %v6581 = vadd.f32 %v6562, %v6578
  %v6582 = vadd.f32 %v6563, %v6578
  %v6583 = vadd.f32 %v6564, %v6578
  %v6584 = vadd.f32 %v6565, %v6578
  %v6585 = vadd.f32 %v6566, %v6578
  %v6586 = vadd.f32 %v6567, %v6578
  %v6587 = vadd.f32 %v6568, %v6578
  %v6588 = vadd.f32 %v6569, %v6578
  %v6589 = vadd.f32 %v6570, %v6578
  %v6590 = vadd.f32 %v6571, %v6578
  %v6591 = vadd.f32 %v6572, %v6578
  %v6592 = vadd.f32 %v6573, %v6578
  %v6593 = vadd.f32 %v6574, %v6578
  %v6594 = vadd.f32 %v6575, %v6578
  %v6595 = vadd.f32 %v6576, %v6578
  %v6596 = vld [vmem:[%s19] sm:$0xff]
  %v6597 = vld [vmem:[%s20] sm:$0xff]
  %6599 = vset.pattern.permute.xlu0 0
  %6600 = vperm.xlu0 %6599, %v6597
  %v6601 = vpop.permute.xlu0 %6600
  %6603 = vmatpush.msra.mxu0 %v6595
  %6604 = vmatpush.msra.mxu0 %v6594
  %6605 = vmatpush.msra.mxu0 %v6593
  %6606 = vmatpush.msra.mxu0 %v6592
  %6607 = vmatpush.msra.mxu0 %v6591
  %6608 = vmatpush.msra.mxu0 %v6590
  %6609 = vmatpush.msra.mxu0 %v6589
  %6610 = vmatpush.msra.mxu0 %v6588
  %6611 = vmatpush.msra.mxu0 %v6587
  %6612 = vmatpush.msra.mxu0 %v6586
  %6613 = vmatpush.msra.mxu0 %v6585
  %6614 = vmatpush.msra.mxu0 %v6584
  %6615 = vmatpush.msra.mxu0 %v6583
  %6616 = vmatpush.msra.mxu0 %v6582
  %6617 = vmatpush.msra.mxu0 %v6581
  %6618 = vmatpush.msra.mxu0 %v6580
  %6619 = vmatmul.f32.gmra.mxu0 %v6596
  %v6620 = vpop.f32.mrf.mxu0
  %v6621 = vadd.f32 %v6601, %v6620
  %6622 = vdwg.mxu0
  %v6623 = vld [vmem:[%s21] sm:$0xff]
  %v6624 = vld [vmem:[%s21 + $0x8] sm:$0xff]
  %v6625 = vld [vmem:[%s21 + $0x10] sm:$0xff]
  %v6626 = vld [vmem:[%s21 + $0x18] sm:$0xff]
  %v6627 = vld [vmem:[%s22] sm:$0x1]
  %v6629 = vperm.slane %v6627, 0
  %v6632 = vsel %vm197, %v6621, 0
  %6634 = vmatpush.msra.mxu0 0.0
  %6635 = vmatpush.msra.mxu0 0.0
  %6636 = vmatpush.msra.mxu0 0.0
  %6637 = vmatpush.msra.mxu0 0.0
  %6638 = vmatpush.msra.mxu0 0.0
  %6639 = vmatpush.msra.mxu0 0.0
  %6640 = vmatpush.msra.mxu0 0.0
  %6641 = vmatpush.msra.mxu0 0.0
  %6642 = vmatpush.msra.mxu0 0.0
  %6643 = vmatpush.msra.mxu0 0.0
  %6644 = vmatpush.msra.mxu0 0.0
  %6645 = vmatpush.msra.mxu0 0.0
  %6646 = vmatpush.msra.mxu0 %v6626
  %6647 = vmatpush.msra.mxu0 %v6625
  %6648 = vmatpush.msra.mxu0 %v6624
  %6649 = vmatpush.msra.mxu0 %v6623
  %6650 = vmatmul.f32.gmra.mxu0 %v6632
  %v6651 = vpop.f32.mrf.mxu0
  %v6652 = vadd.f32 %v6629, %v6651
  %6653 = vdwg.mxu0
  %vm6654 = vcmask 15360
  %6655 = vst.msk [vmem:[%s23] sm:$0xff] %vm6654, %v6652
  // Predicated region
  $region94: #{dagct_bls_forward.1} parent=0 // pred_check
    _
  $region95: #{dagct_bls_forward.1} parent=0 // pred_check_branch
    %6657 = sbr.rel (0) target = $region97
  $region96: #{dagct_bls_forward.1} parent=0 // pred_region
    _
  $region97: #{dagct_bls_forward.1} parent=0 // pred_fallthru
    _
  // Predicated region
  $region98: #{dagct_bls_forward.1} parent=0 // pred_check
    _
  $region99: #{dagct_bls_forward.1} parent=0 // pred_check_branch
    %6659 = sbr.rel (0) target = $region101
  $region100: #{dagct_bls_forward.1} parent=0 // pred_region
    _
  $region101: #{dagct_bls_forward.1} parent=0 // pred_fallthru
    _
  // Predicated region
  $region102: #{dagct_bls_forward.1} parent=0 // pred_check
    _
  $region103: #{dagct_bls_forward.1} parent=0 // pred_check_branch
    %6661 = sbr.rel (0) target = $region105
  $region104: #{dagct_bls_forward.1} parent=0 // pred_region
    _
  $region105: #{dagct_bls_forward.1} parent=0 // pred_fallthru
    _
  // Predicated region
  $region106: #{dagct_bls_forward.1} parent=0 // pred_check
    _
  $region107: #{dagct_bls_forward.1} parent=0 // pred_check_branch
    %6663 = sbr.rel (0) target = $region109
  $region108: #{dagct_bls_forward.1} parent=0 // pred_region
    _
  $region109: #{dagct_bls_forward.1} parent=0 // pred_fallthru
    _

</llo_original>
